<compile_context>
chip_gen: v7x
topology: tpu7x:2x2x1
jax: 0.10.0
libtpu: 0.0.40
codegen_flags: <defaults>
</compile_context>

<pallas_src>
import functools

import numpy as np
import jax
import jax.numpy as jnp
from jax.experimental import pallas as pl
from jax.experimental.pallas import tpu as pltpu

# Model constants from Moudle2.__init__
D_IN, D_OUT = 1, 1
D1, D2 = 20, 20
C1P = 24                      # D1 padded to a multiple of 8 (tile-aligned slabs)
DENSE1, DENSE2, DENSE3 = 400, 200, 200
BN_EPS = 1e-5


def _moudle2_kernel(x_ref, m1_ref, w1_ref, s1_ref, t1_ref,
                    m2_ref, w2_ref, s2_ref, t2_ref,
                    avg_ref, wl1q_ref, bl1_ref, wl2_ref, bl2_ref,
                    wl3_ref, bl3_ref, wl4_ref, bl4_ref,
                    out_ref, patch_ref, *, H, W, b_tile):
    f32 = jnp.float32
    HW = H * W
    NL = b_tile * HW                      # total lanes = batch tile * image
    c1p = w1_ref.shape[0]                 # padded conv1 output channels (24)
    taps = [(t // 3 - 1, t % 3 - 1) for t in range(9)]

    def shift(v, d):
        # y[:, i] = v[:, (i + d) mod NL].  Wrapped / cross-image lanes are
        # either zeroed by the m1/m2 validity masks or land on odd (h, w)
        # lanes that are never consumed by the sparse even-lane pooling.
        if d == 0:
            return v
        return pltpu.roll(v, shift=(-d) % NL, axis=1)

    x = x_ref[0]                                                  # (1, NL)

    # ---- Conv2d(1, D1, 3, pad=1): single MXU matmul over the 9 taps ----
    patches1 = jnp.concatenate(
        [shift(x, dy * W + dx) for dy, dx in taps], axis=0) * m1_ref[...]
    acc1 = jnp.dot(w1_ref[...], patches1,
                   preferred_element_type=f32)                    # (C1P, NL)
    r1 = jnp.maximum(acc1 * s1_ref[...] + t1_ref[...], 0.0)       # BN + ReLU

    # ---- MaxPool2d(2, stride=2); result kept sparse on even (h, w) lanes ----
    p1 = jnp.maximum(r1, shift(r1, 1))
    p1 = jnp.maximum(p1, shift(p1, W))

    # ---- Conv2d(D1, D2, 3, pad=1): ONE (C2, 9*C1P) @ (9*C1P, NL) matmul ----
    m2 = m2_ref[...]
    for t, (dy, dx) in enumerate(taps):
        # 24-row slab, 8-aligned start; pad channels of p1 are exactly zero.
        patch_ref[t * c1p:(t + 1) * c1p, :] = (
            m2[t:t + 1] * shift(p1, 2 * (dy * W + dx)))
    acc2 = jnp.dot(w2_ref[...], patch_ref[...],
                   preferred_element_type=f32)                    # (C2, NL)
    r2 = jnp.maximum(acc2 * s2_ref[...] + t2_ref[...], 0.0)

    # ---- MaxPool2d(2, stride=1), still on the sparse even-lane grid ----
    p2 = jnp.maximum(r2, shift(r2, 2))
    p2 = jnp.maximum(p2, shift(p2, 2 * W))

    # ---- AdaptiveAvgPool2d((2,2)): block-diagonal averaging matmul ----
    # ge[c, q*B + b] = pooled feature (channel c, position q) of image b.
    ge = jnp.dot(p2, avg_ref[...], preferred_element_type=f32)    # (C2, 4*B)

    # ---- MLP (Dropout == identity in eval), batch kept in lanes ----
    # torch.flatten order is folded into wl1 via the 4 column-strided slices.
    acc = jnp.zeros((bl1_ref.shape[0], b_tile), f32)
    for q in range(4):
        acc = acc + jnp.dot(wl1q_ref[q], ge[:, q * b_tile:(q + 1) * b_tile],
                            preferred_element_type=f32)
    h1 = jnp.maximum(acc + bl1_ref[...], 0.0)                     # (400, B)
    h2 = jnp.maximum(jnp.dot(wl2_ref[...], h1, preferred_element_type=f32)
                     + bl2_ref[...], 0.0)                         # (200, B)
    h3 = jnp.maximum(jnp.dot(wl3_ref[...], h2, preferred_element_type=f32)
                     + bl3_ref[...], 0.0)                         # (200, B)
    # final (1,200) x (200,B) kept as a VPU/XLU reduction (MXU matvec is M=1)
    out_ref[0] = (jnp.sum(wl4_ref[...] * h3, axis=0, keepdims=True)
                  + bl4_ref[...])                                 # (1, B)


def moudle2_forward(x, params, b_tile=None):
    """x: (N, 1, H, W) float32 NCHW exactly like the PyTorch module. Returns (N, 1)."""
    (w1, b1, g1, be1, rm1, rv1,
     w2, b2, g2, be2, rm2, rv2,
     wl1, bl1, wl2, bl2, wl3, bl3, wl4, bl4) = params
    n, cin, H, W = x.shape
    assert cin == D_IN and H % 2 == 0 and W % 2 == 0 and H >= 4 and W >= 4
    HW = H * W
    Hh, Wh = H // 2, W // 2

    if b_tile is None:
        # keep >= 2 grid steps when possible (v7x has 2 TensorCores)
        b_tile = max(1, min(8, (n + 1) // 2))
    num_steps = (n + b_tile - 1) // b_tile
    n_pad = num_steps * b_tile
    NL = b_tile * HW

    # --- input repack: batch tile widened along lanes -> (steps, 1, B*HW) ---
    xk = x.reshape(n, HW).astype(jnp.float32)
    if n_pad != n:
        xk = jnp.concatenate([xk, jnp.zeros((n_pad - n, HW), jnp.float32)], 0)
    xk = xk.reshape(num_steps, 1, NL)

    # --- conv weights repacked for single-matmul tap contraction ---
    w1mat = jnp.zeros((C1P, 9), jnp.float32).at[:D1].set(
        w1.reshape(D1, 9).astype(jnp.float32))                    # (24, 9)
    w2t = jnp.transpose(w2.reshape(D2, D1, 9), (0, 2, 1))         # (C2, 9, C1)
    w2mat = jnp.pad(w2t.astype(jnp.float32),
                    ((0, 0), (0, 0), (0, C1P - D1))).reshape(D2, 9 * C1P)

    # --- fold BatchNorm (running stats) + conv bias into scale/shift ---
    s1 = (g1 / jnp.sqrt(rv1 + BN_EPS)).astype(jnp.float32)
    t1 = (be1 + (b1 - rm1) * s1).astype(jnp.float32)
    s2 = (g2 / jnp.sqrt(rv2 + BN_EPS)).astype(jnp.float32)
    t2 = (be2 + (b2 - rm2) * s2).astype(jnp.float32)
    s1p = jnp.zeros((C1P, 1), jnp.float32).at[:D1, 0].set(s1)     # pad chans -> 0
    t1p = jnp.zeros((C1P, 1), jnp.float32).at[:D1, 0].set(t1)

    # --- conv tap validity masks (zero padding + even-lane sparsity), tiled ---
    lane = np.arange(HW)
    lh, lw = lane // W, lane % W
    even = (lh % 2 == 0) & (lw % 2 == 0)
    la, lb = lh // 2, lw // 2
    m1_np = np.zeros((9, HW), np.float32)
    m2_np = np.zeros((9, HW), np.float32)
    for t in range(9):
        dy, dx = t // 3 - 1, t % 3 - 1
        m1_np[t] = ((lh + dy >= 0) & (lh + dy < H) &
                    (lw + dx >= 0) & (lw + dx < W)).astype(np.float32)
        m2_np[t] = (even & (la + dy >= 0) & (la + dy < Hh) &
                    (lb + dx >= 0) & (lb + dx < Wh)).astype(np.float32)
    m1_b = jnp.asarray(np.tile(m1_np, (1, b_tile)))               # (9, NL)
    m2_b = jnp.asarray(np.tile(m2_np, (1, b_tile)))               # (9, NL)

    # --- AdaptiveAvgPool2d((2,2)) block-diagonal table (PyTorch bin rule) ---
    Hq, Wq = Hh - 1, Wh - 1                 # spatial size after MaxPool(2, s=1)
    bh = [(i * Hq // 2, -(-(i + 1) * Hq // 2)) for i in range(2)]
    bw = [(i * Wq // 2, -(-(i + 1) * Wq // 2)) for i in range(2)]
    avg_np = np.zeros((HW, 4), np.float32)
    for ph in range(2):
        for pw in range(2):
            (h0, h1e), (w0, w1e) = bh[ph], bw[pw]
            wgt = 1.0 / float((h1e - h0) * (w1e - w0))
            for a in range(h0, h1e):
                for b in range(w0, w1e):
                    avg_np[(2 * a) * W + 2 * b, ph * 2 + pw] = wgt
    A_np = np.zeros((NL, 4 * b_tile), np.float32)
    for b in range(b_tile):
        for q in range(4):
            A_np[b * HW:(b + 1) * HW, q * b_tile + b] = avg_np[:, q]
    A = jnp.asarray(A_np)                                         # (NL, 4*B)

    # --- fold flatten order (feat idx = 4*c + q) into linear1 ---
    wl1q = jnp.stack([wl1[:, q::4] for q in range(4)], axis=0)    # (4, 400, 20)

    args = (xk, m1_b, w1mat, s1p, t1p,
            m2_b, w2mat, s2.reshape(D2, 1), t2.reshape(D2, 1),
            A, wl1q, bl1.reshape(DENSE1, 1),
            wl2, bl2.reshape(DENSE2, 1),
            wl3, bl3.reshape(DENSE3, 1),
            wl4.reshape(DENSE3, 1), bl4.reshape(1, D_OUT))

    def full_spec(a):
        shape = tuple(a.shape)
        rank = len(shape)
        return pl.BlockSpec(shape, lambda i, _r=rank: (0,) * _r)

    in_specs = [pl.BlockSpec((1, 1, NL), lambda i: (i, 0, 0))]
    in_specs += [full_spec(a) for a in args[1:]]

    out = pl.pallas_call(
        functools.partial(_moudle2_kernel, H=H, W=W, b_tile=b_tile),
        out_shape=jax.ShapeDtypeStruct((num_steps, 1, b_tile), jnp.float32),
        grid=(num_steps,),
        in_specs=in_specs,
        out_specs=pl.BlockSpec((1, 1, b_tile), lambda i: (i, 0, 0)),
        scratch_shapes=[pltpu.VMEM((9 * C1P, NL), jnp.float32)],
        compiler_params=pltpu.CompilerParams(
            dimension_semantics=("parallel",)),
    )(*args)
    return out.reshape(n_pad, 1)[:n]


if __name__ == "__main__":
    key = jax.random.PRNGKey(0)
    ks = jax.random.split(key, 16)

    def uinit(k, shape, fan_in):
        bound = 1.0 / np.sqrt(fan_in)
        return jax.random.uniform(k, shape, jnp.float32, -bound, bound)

    params = (
        uinit(ks[0], (D1, D_IN, 3, 3), D_IN * 9),   # conv1 weight (Cout,Cin,3,3)
        uinit(ks[1], (D1,), D_IN * 9),              # conv1 bias
        jnp.ones((D1,), jnp.float32),               # bn1 gamma
        jnp.zeros((D1,), jnp.float32),              # bn1 beta
        jnp.zeros((D1,), jnp.float32),              # bn1 running_mean
        jnp.ones((D1,), jnp.float32),               # bn1 running_var
        uinit(ks[2], (D2, D1, 3, 3), D1 * 9),       # conv2 weight
        uinit(ks[3], (D2,), D1 * 9),                # conv2 bias
        jnp.ones((D2,), jnp.float32),               # bn2 gamma
        jnp.zeros((D2,), jnp.float32),              # bn2 beta
        jnp.zeros((D2,), jnp.float32),              # bn2 running_mean
        jnp.ones((D2,), jnp.float32),               # bn2 running_var
        uinit(ks[4], (DENSE1, D2 * 4), D2 * 4),     # linear1 weight (out,in)
        uinit(ks[5], (DENSE1,), D2 * 4),            # linear1 bias
        uinit(ks[6], (DENSE2, DENSE1), DENSE1),     # linear2
        uinit(ks[7], (DENSE2,), DENSE1),
        uinit(ks[8], (DENSE3, DENSE2), DENSE2),     # linear3
        uinit(ks[9], (DENSE3,), DENSE2),
        uinit(ks[10], (D_OUT, DENSE3), DENSE3),     # linear4
        uinit(ks[11], (D_OUT,), DENSE3),
    )
    x = jax.random.normal(ks[12], (8, 1, 16, 16), jnp.float32)  # NCHW input

    out = moudle2_forward(x, params)   # b_tile defaults to 4 -> grid=(2,)
    jax.block_until_ready(out)
    assert out.shape == (8, 1) and out.dtype == jnp.float32
    print("KERNEL_OK")
</pallas_src>

<mosaic_0001>
module attributes {stable_mosaic.version = 11 : i64} {
  func.func @_moudle2_kernel(%arg0: i32, %arg1: memref<1x1x1024xf32, #tpu.memory_space<vmem>>, %arg2: memref<9x1024xf32, #tpu.memory_space<vmem>>, %arg3: memref<24x9xf32, #tpu.memory_space<vmem>>, %arg4: memref<24x1xf32, #tpu.memory_space<vmem>>, %arg5: memref<24x1xf32, #tpu.memory_space<vmem>>, %arg6: memref<9x1024xf32, #tpu.memory_space<vmem>>, %arg7: memref<20x216xf32, #tpu.memory_space<vmem>>, %arg8: memref<20x1xf32, #tpu.memory_space<vmem>>, %arg9: memref<20x1xf32, #tpu.memory_space<vmem>>, %arg10: memref<1024x16xf32, #tpu.memory_space<vmem>>, %arg11: memref<4x400x20xf32, #tpu.memory_space<vmem>>, %arg12: memref<400x1xf32, #tpu.memory_space<vmem>>, %arg13: memref<200x400xf32, #tpu.memory_space<vmem>>, %arg14: memref<200x1xf32, #tpu.memory_space<vmem>>, %arg15: memref<200x200xf32, #tpu.memory_space<vmem>>, %arg16: memref<200x1xf32, #tpu.memory_space<vmem>>, %arg17: memref<200x1xf32, #tpu.memory_space<vmem>>, %arg18: memref<1x1xf32, #tpu.memory_space<vmem>>, %arg19: memref<1x1x4xf32, #tpu.memory_space<vmem>>, %arg20: memref<216x1024xf32, #tpu.memory_space<vmem>>) attributes {dimension_semantics = [#tpu.dimension_semantics<parallel>], iteration_bounds = array<i64: 2>, scalar_prefetch = 0 : i64, scratch_operands = 1 : i64, tpu.core_type = #tpu.core_type<tc>, window_params = [{transform_indices = @transform_0, window_bounds = array<i64: 1, 1, 1024>}, {pipeline_mode = #tpu.pipeline_mode<synchronous>, transform_indices = @transform_1, window_bounds = array<i64: 9, 1024>}, {pipeline_mode = #tpu.pipeline_mode<synchronous>, transform_indices = @transform_2, window_bounds = array<i64: 24, 9>}, {pipeline_mode = #tpu.pipeline_mode<synchronous>, transform_indices = @transform_3, window_bounds = array<i64: 24, 1>}, {pipeline_mode = #tpu.pipeline_mode<synchronous>, transform_indices = @transform_4, window_bounds = array<i64: 24, 1>}, {pipeline_mode = #tpu.pipeline_mode<synchronous>, transform_indices = @transform_5, window_bounds = array<i64: 9, 1024>}, {pipeline_mode = #tpu.pipeline_mode<synchronous>, transform_indices = @transform_6, window_bounds = array<i64: 20, 216>}, {pipeline_mode = #tpu.pipeline_mode<synchronous>, transform_indices = @transform_7, window_bounds = array<i64: 20, 1>}, {pipeline_mode = #tpu.pipeline_mode<synchronous>, transform_indices = @transform_8, window_bounds = array<i64: 20, 1>}, {pipeline_mode = #tpu.pipeline_mode<synchronous>, transform_indices = @transform_9, window_bounds = array<i64: 1024, 16>}, {pipeline_mode = #tpu.pipeline_mode<synchronous>, transform_indices = @transform_10, window_bounds = array<i64: 4, 400, 20>}, {pipeline_mode = #tpu.pipeline_mode<synchronous>, transform_indices = @transform_11, window_bounds = array<i64: 400, 1>}, {pipeline_mode = #tpu.pipeline_mode<synchronous>, transform_indices = @transform_12, window_bounds = array<i64: 200, 400>}, {pipeline_mode = #tpu.pipeline_mode<synchronous>, transform_indices = @transform_13, window_bounds = array<i64: 200, 1>}, {pipeline_mode = #tpu.pipeline_mode<synchronous>, transform_indices = @transform_14, window_bounds = array<i64: 200, 200>}, {pipeline_mode = #tpu.pipeline_mode<synchronous>, transform_indices = @transform_15, window_bounds = array<i64: 200, 1>}, {pipeline_mode = #tpu.pipeline_mode<synchronous>, transform_indices = @transform_16, window_bounds = array<i64: 200, 1>}, {pipeline_mode = #tpu.pipeline_mode<synchronous>, transform_indices = @transform_17, window_bounds = array<i64: 1, 1>}, {transform_indices = @transform_18, window_bounds = array<i64: 1, 1, 4>}]} {
    %c0 = arith.constant 0 : index
    %c0_0 = arith.constant 0 : index
    %c0_1 = arith.constant 0 : index
    %0 = vector.load %arg1[%c0, %c0_0, %c0_1] : memref<1x1x1024xf32, #tpu.memory_space<vmem>>, vector<1x1x1024xf32>
    %1 = vector.shape_cast %0 : vector<1x1x1024xf32> to vector<1x1024xf32>
    %c17_i32 = arith.constant 17 : i32
    %2 = tpu.dynamic_rotate %1 by %c17_i32 dim 1 : vector<1x1024xf32>, i32 -> vector<1x1024xf32>
    %c16_i32 = arith.constant 16 : i32
    %3 = tpu.dynamic_rotate %1 by %c16_i32 dim 1 : vector<1x1024xf32>, i32 -> vector<1x1024xf32>
    %c15_i32 = arith.constant 15 : i32
    %4 = tpu.dynamic_rotate %1 by %c15_i32 dim 1 : vector<1x1024xf32>, i32 -> vector<1x1024xf32>
    %c1_i32 = arith.constant 1 : i32
    %5 = tpu.dynamic_rotate %1 by %c1_i32 dim 1 : vector<1x1024xf32>, i32 -> vector<1x1024xf32>
    %c1023_i32 = arith.constant 1023 : i32
    %6 = tpu.dynamic_rotate %1 by %c1023_i32 dim 1 : vector<1x1024xf32>, i32 -> vector<1x1024xf32>
    %c1009_i32 = arith.constant 1009 : i32
    %7 = tpu.dynamic_rotate %1 by %c1009_i32 dim 1 : vector<1x1024xf32>, i32 -> vector<1x1024xf32>
    %c1008_i32 = arith.constant 1008 : i32
    %8 = tpu.dynamic_rotate %1 by %c1008_i32 dim 1 : vector<1x1024xf32>, i32 -> vector<1x1024xf32>
    %c1007_i32 = arith.constant 1007 : i32
    %9 = tpu.dynamic_rotate %1 by %c1007_i32 dim 1 : vector<1x1024xf32>, i32 -> vector<1x1024xf32>
    %10 = tpu.concatenate %2, %3, %4, %5, %1, %6, %7, %8, %9 in 0 : vector<1x1024xf32>, vector<1x1024xf32>, vector<1x1024xf32>, vector<1x1024xf32>, vector<1x1024xf32>, vector<1x1024xf32>, vector<1x1024xf32>, vector<1x1024xf32>, vector<1x1024xf32> -> vector<9x1024xf32>
    %c0_2 = arith.constant 0 : index
    %c0_3 = arith.constant 0 : index
    %11 = vector.load %arg2[%c0_2, %c0_3] : memref<9x1024xf32, #tpu.memory_space<vmem>>, vector<9x1024xf32>
    %12 = arith.mulf %10, %11 : vector<9x1024xf32>
    %c0_4 = arith.constant 0 : index
    %c0_5 = arith.constant 0 : index
    %13 = vector.load %arg3[%c0_4, %c0_5] : memref<24x9xf32, #tpu.memory_space<vmem>>, vector<24x9xf32>
    %cst = arith.constant dense<0.000000e+00> : vector<24x1024xf32>
    %14 = tpu.matmul %13, %12, %cst {dimension_numbers = #tpu.dot_dimension_numbers<[1], [0], [0], [1], [0, 0, 1, 1], [], []>} : vector<24x9xf32>, vector<9x1024xf32>, vector<24x1024xf32> -> vector<24x1024xf32>
    %c0_6 = arith.constant 0 : index
    %c0_7 = arith.constant 0 : index
    %15 = vector.load %arg4[%c0_6, %c0_7] : memref<24x1xf32, #tpu.memory_space<vmem>>, vector<24x1xf32>
    %16 = vector.broadcast %15 : vector<24x1xf32> to vector<24x1024xf32>
    %17 = arith.mulf %14, %16 : vector<24x1024xf32>
    %c0_8 = arith.constant 0 : index
    %c0_9 = arith.constant 0 : index
    %18 = vector.load %arg5[%c0_8, %c0_9] : memref<24x1xf32, #tpu.memory_space<vmem>>, vector<24x1xf32>
    %19 = vector.broadcast %18 : vector<24x1xf32> to vector<24x1024xf32>
    %20 = arith.addf %17, %19 : vector<24x1024xf32>
    %cst_10 = arith.constant 0.000000e+00 : f32
    %21 = vector.broadcast %cst_10 : f32 to vector<24x1024xf32>
    %22 = arith.maximumf %20, %21 : vector<24x1024xf32>
    %c1023_i32_11 = arith.constant 1023 : i32
    %23 = tpu.dynamic_rotate %22 by %c1023_i32_11 dim 1 : vector<24x1024xf32>, i32 -> vector<24x1024xf32>
    %24 = arith.maximumf %22, %23 : vector<24x1024xf32>
    %c1008_i32_12 = arith.constant 1008 : i32
    %25 = tpu.dynamic_rotate %24 by %c1008_i32_12 dim 1 : vector<24x1024xf32>, i32 -> vector<24x1024xf32>
    %26 = arith.maximumf %24, %25 : vector<24x1024xf32>
    %c0_13 = arith.constant 0 : index
    %c0_14 = arith.constant 0 : index
    %27 = vector.load %arg6[%c0_13, %c0_14] : memref<9x1024xf32, #tpu.memory_space<vmem>>, vector<9x1024xf32>
    %28 = vector.extract_strided_slice %27 {offsets = [0, 0], sizes = [1, 1024], strides = [1, 1]} : vector<9x1024xf32> to vector<1x1024xf32>
    %c34_i32 = arith.constant 34 : i32
    %29 = tpu.dynamic_rotate %26 by %c34_i32 dim 1 : vector<24x1024xf32>, i32 -> vector<24x1024xf32>
    %30 = vector.broadcast %28 : vector<1x1024xf32> to vector<24x1024xf32>
    %31 = arith.mulf %30, %29 : vector<24x1024xf32>
    %c0_15 = arith.constant 0 : index
    %c0_16 = arith.constant 0 : index
    %32 = vector.load %arg20[%c0_15, %c0_16] : memref<216x1024xf32, #tpu.memory_space<vmem>>, vector<24x1024xf32>
    tpu.vector_store %arg20[%c0_15, %c0_16], %31 {strides = array<i32>} : memref<216x1024xf32, #tpu.memory_space<vmem>>, vector<24x1024xf32>,
    %33 = vector.extract_strided_slice %27 {offsets = [1, 0], sizes = [1, 1024], strides = [1, 1]} : vector<9x1024xf32> to vector<1x1024xf32>
    %c32_i32 = arith.constant 32 : i32
    %34 = tpu.dynamic_rotate %26 by %c32_i32 dim 1 : vector<24x1024xf32>, i32 -> vector<24x1024xf32>
    %35 = vector.broadcast %33 : vector<1x1024xf32> to vector<24x1024xf32>
    %36 = arith.mulf %35, %34 : vector<24x1024xf32>
    %c24 = arith.constant 24 : index
    %c0_17 = arith.constant 0 : index
    %37 = vector.load %arg20[%c24, %c0_17] : memref<216x1024xf32, #tpu.memory_space<vmem>>, vector<24x1024xf32>
    tpu.vector_store %arg20[%c24, %c0_17], %36 {strides = array<i32>} : memref<216x1024xf32, #tpu.memory_space<vmem>>, vector<24x1024xf32>,
    %38 = vector.extract_strided_slice %27 {offsets = [2, 0], sizes = [1, 1024], strides = [1, 1]} : vector<9x1024xf32> to vector<1x1024xf32>
    %c30_i32 = arith.constant 30 : i32
    %39 = tpu.dynamic_rotate %26 by %c30_i32 dim 1 : vector<24x1024xf32>, i32 -> vector<24x1024xf32>
    %40 = vector.broadcast %38 : vector<1x1024xf32> to vector<24x1024xf32>
    %41 = arith.mulf %40, %39 : vector<24x1024xf32>
    %c48 = arith.constant 48 : index
    %c0_18 = arith.constant 0 : index
    %42 = vector.load %arg20[%c48, %c0_18] : memref<216x1024xf32, #tpu.memory_space<vmem>>, vector<24x1024xf32>
    tpu.vector_store %arg20[%c48, %c0_18], %41 {strides = array<i32>} : memref<216x1024xf32, #tpu.memory_space<vmem>>, vector<24x1024xf32>,
    %43 = vector.extract_strided_slice %27 {offsets = [3, 0], sizes = [1, 1024], strides = [1, 1]} : vector<9x1024xf32> to vector<1x1024xf32>
    %c2_i32 = arith.constant 2 : i32
    %44 = tpu.dynamic_rotate %26 by %c2_i32 dim 1 : vector<24x1024xf32>, i32 -> vector<24x1024xf32>
    %45 = vector.broadcast %43 : vector<1x1024xf32> to vector<24x1024xf32>
    %46 = arith.mulf %45, %44 : vector<24x1024xf32>
    %c72 = arith.constant 72 : index
    %c0_19 = arith.constant 0 : index
    %47 = vector.load %arg20[%c72, %c0_19] : memref<216x1024xf32, #tpu.memory_space<vmem>>, vector<24x1024xf32>
    tpu.vector_store %arg20[%c72, %c0_19], %46 {strides = array<i32>} : memref<216x1024xf32, #tpu.memory_space<vmem>>, vector<24x1024xf32>,
    %48 = vector.extract_strided_slice %27 {offsets = [4, 0], sizes = [1, 1024], strides = [1, 1]} : vector<9x1024xf32> to vector<1x1024xf32>
    %49 = vector.broadcast %48 : vector<1x1024xf32> to vector<24x1024xf32>
    %50 = arith.mulf %49, %26 : vector<24x1024xf32>
    %c96 = arith.constant 96 : index
    %c0_20 = arith.constant 0 : index
    %51 = vector.load %arg20[%c96, %c0_20] : memref<216x1024xf32, #tpu.memory_space<vmem>>, vector<24x1024xf32>
    tpu.vector_store %arg20[%c96, %c0_20], %50 {strides = array<i32>} : memref<216x1024xf32, #tpu.memory_space<vmem>>, vector<24x1024xf32>,
    %52 = vector.extract_strided_slice %27 {offsets = [5, 0], sizes = [1, 1024], strides = [1, 1]} : vector<9x1024xf32> to vector<1x1024xf32>
    %c1022_i32 = arith.constant 1022 : i32
    %53 = tpu.dynamic_rotate %26 by %c1022_i32 dim 1 : vector<24x1024xf32>, i32 -> vector<24x1024xf32>
    %54 = vector.broadcast %52 : vector<1x1024xf32> to vector<24x1024xf32>
    %55 = arith.mulf %54, %53 : vector<24x1024xf32>
    %c120 = arith.constant 120 : index
    %c0_21 = arith.constant 0 : index
    %56 = vector.load %arg20[%c120, %c0_21] : memref<216x1024xf32, #tpu.memory_space<vmem>>, vector<24x1024xf32>
    tpu.vector_store %arg20[%c120, %c0_21], %55 {strides = array<i32>} : memref<216x1024xf32, #tpu.memory_space<vmem>>, vector<24x1024xf32>,
    %57 = vector.extract_strided_slice %27 {offsets = [6, 0], sizes = [1, 1024], strides = [1, 1]} : vector<9x1024xf32> to vector<1x1024xf32>
    %c994_i32 = arith.constant 994 : i32
    %58 = tpu.dynamic_rotate %26 by %c994_i32 dim 1 : vector<24x1024xf32>, i32 -> vector<24x1024xf32>
    %59 = vector.broadcast %57 : vector<1x1024xf32> to vector<24x1024xf32>
    %60 = arith.mulf %59, %58 : vector<24x1024xf32>
    %c144 = arith.constant 144 : index
    %c0_22 = arith.constant 0 : index
    %61 = vector.load %arg20[%c144, %c0_22] : memref<216x1024xf32, #tpu.memory_space<vmem>>, vector<24x1024xf32>
    tpu.vector_store %arg20[%c144, %c0_22], %60 {strides = array<i32>} : memref<216x1024xf32, #tpu.memory_space<vmem>>, vector<24x1024xf32>,
    %62 = vector.extract_strided_slice %27 {offsets = [7, 0], sizes = [1, 1024], strides = [1, 1]} : vector<9x1024xf32> to vector<1x1024xf32>
    %c992_i32 = arith.constant 992 : i32
    %63 = tpu.dynamic_rotate %26 by %c992_i32 dim 1 : vector<24x1024xf32>, i32 -> vector<24x1024xf32>
    %64 = vector.broadcast %62 : vector<1x1024xf32> to vector<24x1024xf32>
    %65 = arith.mulf %64, %63 : vector<24x1024xf32>
    %c168 = arith.constant 168 : index
    %c0_23 = arith.constant 0 : index
    %66 = vector.load %arg20[%c168, %c0_23] : memref<216x1024xf32, #tpu.memory_space<vmem>>, vector<24x1024xf32>
    tpu.vector_store %arg20[%c168, %c0_23], %65 {strides = array<i32>} : memref<216x1024xf32, #tpu.memory_space<vmem>>, vector<24x1024xf32>,
    %67 = vector.extract_strided_slice %27 {offsets = [8, 0], sizes = [1, 1024], strides = [1, 1]} : vector<9x1024xf32> to vector<1x1024xf32>
    %c990_i32 = arith.constant 990 : i32
    %68 = tpu.dynamic_rotate %26 by %c990_i32 dim 1 : vector<24x1024xf32>, i32 -> vector<24x1024xf32>
    %69 = vector.broadcast %67 : vector<1x1024xf32> to vector<24x1024xf32>
    %70 = arith.mulf %69, %68 : vector<24x1024xf32>
    %c192 = arith.constant 192 : index
    %c0_24 = arith.constant 0 : index
    %71 = vector.load %arg20[%c192, %c0_24] : memref<216x1024xf32, #tpu.memory_space<vmem>>, vector<24x1024xf32>
    tpu.vector_store %arg20[%c192, %c0_24], %70 {strides = array<i32>} : memref<216x1024xf32, #tpu.memory_space<vmem>>, vector<24x1024xf32>,
    %c0_25 = arith.constant 0 : index
    %c0_26 = arith.constant 0 : index
    %72 = vector.load %arg7[%c0_25, %c0_26] : memref<20x216xf32, #tpu.memory_space<vmem>>, vector<20x216xf32>
    %c0_27 = arith.constant 0 : index
    %c0_28 = arith.constant 0 : index
    %73 = vector.load %arg20[%c0_27, %c0_28] : memref<216x1024xf32, #tpu.memory_space<vmem>>, vector<216x1024xf32>
    %cst_29 = arith.constant dense<0.000000e+00> : vector<20x1024xf32>
    %74 = tpu.matmul %72, %73, %cst_29 {dimension_numbers = #tpu.dot_dimension_numbers<[1], [0], [0], [1], [0, 0, 1, 1], [], []>} : vector<20x216xf32>, vector<216x1024xf32>, vector<20x1024xf32> -> vector<20x1024xf32>
    %c0_30 = arith.constant 0 : index
    %c0_31 = arith.constant 0 : index
    %75 = vector.load %arg8[%c0_30, %c0_31] : memref<20x1xf32, #tpu.memory_space<vmem>>, vector<20x1xf32>
    %76 = vector.broadcast %75 : vector<20x1xf32> to vector<20x1024xf32>
    %77 = arith.mulf %74, %76 : vector<20x1024xf32>
    %c0_32 = arith.constant 0 : index
    %c0_33 = arith.constant 0 : index
    %78 = vector.load %arg9[%c0_32, %c0_33] : memref<20x1xf32, #tpu.memory_space<vmem>>, vector<20x1xf32>
    %79 = vector.broadcast %78 : vector<20x1xf32> to vector<20x1024xf32>
    %80 = arith.addf %77, %79 : vector<20x1024xf32>
    %cst_34 = arith.constant 0.000000e+00 : f32
    %81 = vector.broadcast %cst_34 : f32 to vector<20x1024xf32>
    %82 = arith.maximumf %80, %81 : vector<20x1024xf32>
    %c1022_i32_35 = arith.constant 1022 : i32
    %83 = tpu.dynamic_rotate %82 by %c1022_i32_35 dim 1 : vector<20x1024xf32>, i32 -> vector<20x1024xf32>
    %84 = arith.maximumf %82, %83 : vector<20x1024xf32>
    %c992_i32_36 = arith.constant 992 : i32
    %85 = tpu.dynamic_rotate %84 by %c992_i32_36 dim 1 : vector<20x1024xf32>, i32 -> vector<20x1024xf32>
    %86 = arith.maximumf %84, %85 : vector<20x1024xf32>
    %c0_37 = arith.constant 0 : index
    %c0_38 = arith.constant 0 : index
    %87 = vector.load %arg10[%c0_37, %c0_38] : memref<1024x16xf32, #tpu.memory_space<vmem>>, vector<1024x16xf32>
    %cst_39 = arith.constant dense<0.000000e+00> : vector<20x16xf32>
    %88 = tpu.matmul %86, %87, %cst_39 {dimension_numbers = #tpu.dot_dimension_numbers<[1], [0], [0], [1], [0, 0, 1, 1], [], []>} : vector<20x1024xf32>, vector<1024x16xf32>, vector<20x16xf32> -> vector<20x16xf32>
    %cst_40 = arith.constant 0.000000e+00 : f32
    %89 = vector.broadcast %cst_40 : f32 to vector<400x4xf32>
    %c0_41 = arith.constant 0 : index
    %c0_42 = arith.constant 0 : index
    %c0_43 = arith.constant 0 : index
    %90 = vector.load %arg11[%c0_41, %c0_42, %c0_43] : memref<4x400x20xf32, #tpu.memory_space<vmem>>, vector<1x400x20xf32>
    %91 = vector.shape_cast %90 : vector<1x400x20xf32> to vector<400x20xf32>
    %92 = vector.extract_strided_slice %88 {offsets = [0, 0], sizes = [20, 4], strides = [1, 1]} : vector<20x16xf32> to vector<20x4xf32>
    %cst_44 = arith.constant dense<0.000000e+00> : vector<400x4xf32>
    %93 = tpu.matmul %91, %92, %cst_44 {dimension_numbers = #tpu.dot_dimension_numbers<[1], [0], [0], [1], [0, 0, 1, 1], [], []>} : vector<400x20xf32>, vector<20x4xf32>, vector<400x4xf32> -> vector<400x4xf32>
    %94 = arith.addf %89, %93 : vector<400x4xf32>
    %c1 = arith.constant 1 : index
    %c0_45 = arith.constant 0 : index
    %c0_46 = arith.constant 0 : index
    %95 = vector.load %arg11[%c1, %c0_45, %c0_46] : memref<4x400x20xf32, #tpu.memory_space<vmem>>, vector<1x400x20xf32>
    %96 = vector.shape_cast %95 : vector<1x400x20xf32> to vector<400x20xf32>
    %97 = vector.extract_strided_slice %88 {offsets = [0, 4], sizes = [20, 4], strides = [1, 1]} : vector<20x16xf32> to vector<20x4xf32>
    %cst_47 = arith.constant dense<0.000000e+00> : vector<400x4xf32>
    %98 = tpu.matmul %96, %97, %cst_47 {dimension_numbers = #tpu.dot_dimension_numbers<[1], [0], [0], [1], [0, 0, 1, 1], [], []>} : vector<400x20xf32>, vector<20x4xf32>, vector<400x4xf32> -> vector<400x4xf32>
    %99 = arith.addf %94, %98 : vector<400x4xf32>
    %c2 = arith.constant 2 : index
    %c0_48 = arith.constant 0 : index
    %c0_49 = arith.constant 0 : index
    %100 = vector.load %arg11[%c2, %c0_48, %c0_49] : memref<4x400x20xf32, #tpu.memory_space<vmem>>, vector<1x400x20xf32>
    %101 = vector.shape_cast %100 : vector<1x400x20xf32> to vector<400x20xf32>
    %102 = vector.extract_strided_slice %88 {offsets = [0, 8], sizes = [20, 4], strides = [1, 1]} : vector<20x16xf32> to vector<20x4xf32>
    %cst_50 = arith.constant dense<0.000000e+00> : vector<400x4xf32>
    %103 = tpu.matmul %101, %102, %cst_50 {dimension_numbers = #tpu.dot_dimension_numbers<[1], [0], [0], [1], [0, 0, 1, 1], [], []>} : vector<400x20xf32>, vector<20x4xf32>, vector<400x4xf32> -> vector<400x4xf32>
    %104 = arith.addf %99, %103 : vector<400x4xf32>
    %c3 = arith.constant 3 : index
    %c0_51 = arith.constant 0 : index
    %c0_52 = arith.constant 0 : index
    %105 = vector.load %arg11[%c3, %c0_51, %c0_52] : memref<4x400x20xf32, #tpu.memory_space<vmem>>, vector<1x400x20xf32>
    %106 = vector.shape_cast %105 : vector<1x400x20xf32> to vector<400x20xf32>
    %107 = vector.extract_strided_slice %88 {offsets = [0, 12], sizes = [20, 4], strides = [1, 1]} : vector<20x16xf32> to vector<20x4xf32>
    %cst_53 = arith.constant dense<0.000000e+00> : vector<400x4xf32>
    %108 = tpu.matmul %106, %107, %cst_53 {dimension_numbers = #tpu.dot_dimension_numbers<[1], [0], [0], [1], [0, 0, 1, 1], [], []>} : vector<400x20xf32>, vector<20x4xf32>, vector<400x4xf32> -> vector<400x4xf32>
    %109 = arith.addf %104, %108 : vector<400x4xf32>
    %c0_54 = arith.constant 0 : index
    %c0_55 = arith.constant 0 : index
    %110 = vector.load %arg12[%c0_54, %c0_55] : memref<400x1xf32, #tpu.memory_space<vmem>>, vector<400x1xf32>
    %111 = vector.broadcast %110 : vector<400x1xf32> to vector<400x4xf32>
    %112 = arith.addf %109, %111 : vector<400x4xf32>
    %cst_56 = arith.constant 0.000000e+00 : f32
    %113 = vector.broadcast %cst_56 : f32 to vector<400x4xf32>
    %114 = arith.maximumf %112, %113 : vector<400x4xf32>
    %c0_57 = arith.constant 0 : index
    %c0_58 = arith.constant 0 : index
    %115 = vector.load %arg13[%c0_57, %c0_58] : memref<200x400xf32, #tpu.memory_space<vmem>>, vector<200x400xf32>
    %cst_59 = arith.constant dense<0.000000e+00> : vector<200x4xf32>
    %116 = tpu.matmul %115, %114, %cst_59 {dimension_numbers = #tpu.dot_dimension_numbers<[1], [0], [0], [1], [0, 0, 1, 1], [], []>} : vector<200x400xf32>, vector<400x4xf32>, vector<200x4xf32> -> vector<200x4xf32>
    %c0_60 = arith.constant 0 : index
    %c0_61 = arith.constant 0 : index
    %117 = vector.load %arg14[%c0_60, %c0_61] : memref<200x1xf32, #tpu.memory_space<vmem>>, vector<200x1xf32>
    %118 = vector.broadcast %117 : vector<200x1xf32> to vector<200x4xf32>
    %119 = arith.addf %116, %118 : vector<200x4xf32>
    %cst_62 = arith.constant 0.000000e+00 : f32
    %120 = vector.broadcast %cst_62 : f32 to vector<200x4xf32>
    %121 = arith.maximumf %119, %120 : vector<200x4xf32>
    %c0_63 = arith.constant 0 : index
    %c0_64 = arith.constant 0 : index
    %122 = vector.load %arg15[%c0_63, %c0_64] : memref<200x200xf32, #tpu.memory_space<vmem>>, vector<200x200xf32>
    %cst_65 = arith.constant dense<0.000000e+00> : vector<200x4xf32>
    %123 = tpu.matmul %122, %121, %cst_65 {dimension_numbers = #tpu.dot_dimension_numbers<[1], [0], [0], [1], [0, 0, 1, 1], [], []>} : vector<200x200xf32>, vector<200x4xf32>, vector<200x4xf32> -> vector<200x4xf32>
    %c0_66 = arith.constant 0 : index
    %c0_67 = arith.constant 0 : index
    %124 = vector.load %arg16[%c0_66, %c0_67] : memref<200x1xf32, #tpu.memory_space<vmem>>, vector<200x1xf32>
    %125 = vector.broadcast %124 : vector<200x1xf32> to vector<200x4xf32>
    %126 = arith.addf %123, %125 : vector<200x4xf32>
    %cst_68 = arith.constant 0.000000e+00 : f32
    %127 = vector.broadcast %cst_68 : f32 to vector<200x4xf32>
    %128 = arith.maximumf %126, %127 : vector<200x4xf32>
    %c0_69 = arith.constant 0 : index
    %c0_70 = arith.constant 0 : index
    %129 = vector.load %arg17[%c0_69, %c0_70] : memref<200x1xf32, #tpu.memory_space<vmem>>, vector<200x1xf32>
    %130 = vector.broadcast %129 : vector<200x1xf32> to vector<200x4xf32>
    %131 = arith.mulf %130, %128 : vector<200x4xf32>
    %cst_71 = arith.constant dense<0.000000e+00> : vector<4xf32>
    %132 = vector.multi_reduction <add>, %131, %cst_71 [0] : vector<200x4xf32> to vector<4xf32>
    %133 = vector.shape_cast %132 : vector<4xf32> to vector<1x4xf32>
    %c0_72 = arith.constant 0 : index
    %c0_73 = arith.constant 0 : index
    %134 = vector.load %arg18[%c0_72, %c0_73] : memref<1x1xf32, #tpu.memory_space<vmem>>, vector<1x1xf32>
    %135 = vector.broadcast %134 : vector<1x1xf32> to vector<1x4xf32>
    %136 = arith.addf %133, %135 : vector<1x4xf32>
    %c0_74 = arith.constant 0 : index
    %c0_75 = arith.constant 0 : index
    %c0_76 = arith.constant 0 : index
    %137 = vector.load %arg19[%c0_74, %c0_75, %c0_76] : memref<1x1x4xf32, #tpu.memory_space<vmem>>, vector<1x1x4xf32>
    %138 = vector.shape_cast %137 : vector<1x1x4xf32> to vector<1x4xf32>
    %139 = vector.shape_cast %136 : vector<1x4xf32> to vector<1x1x4xf32>
    tpu.vector_store %arg19[%c0_74, %c0_75, %c0_76], %139 {strides = array<i32>} : memref<1x1x4xf32, #tpu.memory_space<vmem>>, vector<1x1x4xf32>,
    return
  }
  func.func @transform_0(%arg0: i32) -> (i32, i32, i32) {
    %c0_i32 = arith.constant 0 : i32
    %c0_i32_0 = arith.constant 0 : i32
    %c0_i32_1 = arith.constant 0 : i32
    return %arg0, %c0_i32, %c0_i32_0 : i32, i32, i32
  }
  func.func @transform_1(%arg0: i32) -> (i32, i32) {
    %c0_i32 = arith.constant 0 : i32
    %c0_i32_0 = arith.constant 0 : i32
    %c0_i32_1 = arith.constant 0 : i32
    return %c0_i32, %c0_i32_0 : i32, i32
  }
  func.func @transform_2(%arg0: i32) -> (i32, i32) {
    %c0_i32 = arith.constant 0 : i32
    %c0_i32_0 = arith.constant 0 : i32
    %c0_i32_1 = arith.constant 0 : i32
    return %c0_i32, %c0_i32_0 : i32, i32
  }
  func.func @transform_3(%arg0: i32) -> (i32, i32) {
    %c0_i32 = arith.constant 0 : i32
    %c0_i32_0 = arith.constant 0 : i32
    %c0_i32_1 = arith.constant 0 : i32
    return %c0_i32, %c0_i32_0 : i32, i32
  }
  func.func @transform_4(%arg0: i32) -> (i32, i32) {
    %c0_i32 = arith.constant 0 : i32
    %c0_i32_0 = arith.constant 0 : i32
    %c0_i32_1 = arith.constant 0 : i32
    return %c0_i32, %c0_i32_0 : i32, i32
  }
  func.func @transform_5(%arg0: i32) -> (i32, i32) {
    %c0_i32 = arith.constant 0 : i32
    %c0_i32_0 = arith.constant 0 : i32
    %c0_i32_1 = arith.constant 0 : i32
    return %c0_i32, %c0_i32_0 : i32, i32
  }
  func.func @transform_6(%arg0: i32) -> (i32, i32) {
    %c0_i32 = arith.constant 0 : i32
    %c0_i32_0 = arith.constant 0 : i32
    %c0_i32_1 = arith.constant 0 : i32
    return %c0_i32, %c0_i32_0 : i32, i32
  }
  func.func @transform_7(%arg0: i32) -> (i32, i32) {
    %c0_i32 = arith.constant 0 : i32
    %c0_i32_0 = arith.constant 0 : i32
    %c0_i32_1 = arith.constant 0 : i32
    return %c0_i32, %c0_i32_0 : i32, i32
  }
  func.func @transform_8(%arg0: i32) -> (i32, i32) {
    %c0_i32 = arith.constant 0 : i32
    %c0_i32_0 = arith.constant 0 : i32
    %c0_i32_1 = arith.constant 0 : i32
    return %c0_i32, %c0_i32_0 : i32, i32
  }
  func.func @transform_9(%arg0: i32) -> (i32, i32) {
    %c0_i32 = arith.constant 0 : i32
    %c0_i32_0 = arith.constant 0 : i32
    %c0_i32_1 = arith.constant 0 : i32
    return %c0_i32, %c0_i32_0 : i32, i32
  }
  func.func @transform_10(%arg0: i32) -> (i32, i32, i32) {
    %c0_i32 = arith.constant 0 : i32
    %c0_i32_0 = arith.constant 0 : i32
    %c0_i32_1 = arith.constant 0 : i32
    %c0_i32_2 = arith.constant 0 : i32
    return %c0_i32, %c0_i32_0, %c0_i32_1 : i32, i32, i32
  }
  func.func @transform_11(%arg0: i32) -> (i32, i32) {
    %c0_i32 = arith.constant 0 : i32
    %c0_i32_0 = arith.constant 0 : i32
    %c0_i32_1 = arith.constant 0 : i32
    return %c0_i32, %c0_i32_0 : i32, i32
  }
  func.func @transform_12(%arg0: i32) -> (i32, i32) {
    %c0_i32 = arith.constant 0 : i32
    %c0_i32_0 = arith.constant 0 : i32
    %c0_i32_1 = arith.constant 0 : i32
    return %c0_i32, %c0_i32_0 : i32, i32
  }
  func.func @transform_13(%arg0: i32) -> (i32, i32) {
    %c0_i32 = arith.constant 0 : i32
    %c0_i32_0 = arith.constant 0 : i32
    %c0_i32_1 = arith.constant 0 : i32
    return %c0_i32, %c0_i32_0 : i32, i32
  }
  func.func @transform_14(%arg0: i32) -> (i32, i32) {
    %c0_i32 = arith.constant 0 : i32
    %c0_i32_0 = arith.constant 0 : i32
    %c0_i32_1 = arith.constant 0 : i32
    return %c0_i32, %c0_i32_0 : i32, i32
  }
  func.func @transform_15(%arg0: i32) -> (i32, i32) {
    %c0_i32 = arith.constant 0 : i32
    %c0_i32_0 = arith.constant 0 : i32
    %c0_i32_1 = arith.constant 0 : i32
    return %c0_i32, %c0_i32_0 : i32, i32
  }
  func.func @transform_16(%arg0: i32) -> (i32, i32) {
    %c0_i32 = arith.constant 0 : i32
    %c0_i32_0 = arith.constant 0 : i32
    %c0_i32_1 = arith.constant 0 : i32
    return %c0_i32, %c0_i32_0 : i32, i32
  }
  func.func @transform_17(%arg0: i32) -> (i32, i32) {
    %c0_i32 = arith.constant 0 : i32
    %c0_i32_0 = arith.constant 0 : i32
    %c0_i32_1 = arith.constant 0 : i32
    return %c0_i32, %c0_i32_0 : i32, i32
  }
  func.func @transform_18(%arg0: i32) -> (i32, i32, i32) {
    %c0_i32 = arith.constant 0 : i32
    %c0_i32_0 = arith.constant 0 : i32
    %c0_i32_1 = arith.constant 0 : i32
    return %arg0, %c0_i32, %c0_i32_0 : i32, i32, i32
  }
}

</mosaic_0001>

<llo_original>
// kernel: tpu_custom_call.1
$region0: #{tpu_custom_call.1}
  #allocation0 [shape = 'u32[]', space=smem, size = 0x4, offset = 0x4, fixed_abs, tag = 'smem constant byte address 0x4 - core index']
  #allocation1 [shape = 'u32[144,128]{1,0:T(1,128)}', space=vmem, size = 0x12000, scoped, tag = 'internal scratch']
  #allocation2 [shape = 'f32[216,1024]{1,0:T(8,128)}', space=vmem, size = 0xd8000, scoped, tag = 'scratch operand']
  #allocation3 [shape = 'f32[1,1]{1,0:T(1,128)S(1)}', space=vmem, size = 0x200, scoped, tag = 'scoped memory for tpu_custom_call.1']
  %s0 = inlined_call_operand.vmem [shape: f32[2,1,1024], index: 0, kind: input, shape index: {}]
  %s1 = inlined_call_operand.vmem [shape: f32[9,1024], index: 1, kind: input, shape index: {}]
  %s2 = inlined_call_operand.vmem [shape: f32[24,9], index: 2, kind: input, shape index: {}]
  %s3 = inlined_call_operand.vmem [shape: f32[24,1], index: 3, kind: input, shape index: {}]
  %s4 = inlined_call_operand.vmem [shape: f32[24,1], index: 4, kind: input, shape index: {}]
  %s5 = inlined_call_operand.vmem [shape: f32[9,1024], index: 5, kind: input, shape index: {}]
  %s6 = inlined_call_operand.vmem [shape: f32[20,216], index: 6, kind: input, shape index: {}]
  %s7 = inlined_call_operand.vmem [shape: f32[20,1], index: 7, kind: input, shape index: {}]
  %s8 = inlined_call_operand.vmem [shape: f32[20,1], index: 8, kind: input, shape index: {}]
  %s9 = inlined_call_operand.vmem [shape: f32[1024,16], index: 9, kind: input, shape index: {}]
  %s10 = inlined_call_operand.vmem [shape: f32[4,400,20], index: 10, kind: input, shape index: {}]
  %s11 = inlined_call_operand.vmem [shape: f32[400,1], index: 11, kind: input, shape index: {}]
  %s12 = inlined_call_operand.vmem [shape: f32[200,400], index: 12, kind: input, shape index: {}]
  %s13 = inlined_call_operand.vmem [shape: f32[200,1], index: 13, kind: input, shape index: {}]
  %s14 = inlined_call_operand.vmem [shape: f32[200,200], index: 14, kind: input, shape index: {}]
  %s15 = inlined_call_operand.vmem [shape: f32[200,1], index: 15, kind: input, shape index: {}]
  %s16 = inlined_call_operand.vmem [shape: f32[200,1], index: 16, kind: input, shape index: {}]
  %s17 = inlined_call_operand.<no memory space> [shape: f32[1,1], index: 17, kind: input, shape index: {}]
  %s18 = inlined_call_operand.hbm [shape: f32[2,1,4], index: 18, kind: output, shape index: {}]
  %s19 = sld [smem:[#allocation0]]
  $region105: #{tpu_custom_call.1} parent=0
    _
  %s21 = ssub.s32 1, %s19
  %s22 = scalar_select 0, %s21, %s19
  %v23 = vstv %s17
  %24 = vst [vmem:[#allocation3] sm:$0x1] %v23
  $region1: #{tpu_custom_call.1} parent=0
    #allocation4 [shape = 'u8[1024]{0}', space=vmem, size = 0x400, scoped, tag = 'output window, operand 0']
    #allocation5 [shape = 's32[2]{0}', space=sflag, size = 0x8, scoped, tag = 'scoped memory for tpu_custom_call.1']
    %25 = vsyncpa [#allocation5], 0
    %s26 = scalar_lea.sflag [#allocation5], 1
    %27 = vsyncpa %s26, 0
    loop: start=0, step=1, limit=4
    $region2: #{tpu_custom_call.1} parent=1 // loop_pre_header
      _
    $region3: #{tpu_custom_call.1} parent=1 // loop_header
      %s29 = sphi 0, %s33
      %p30 = scmp.ge.s32.totalorder %s29, 4
      %s39 = sphi 0, %s41
      %s42 = sphi 0, %s39
      %s43 = sphi 0, %s42
      %s59 = sphi 0, %s43
      %s63 = sphi 0, %s63
      %s65 = sphi 0, %s63
      %s66 = sphi 0, %s65
      %s80 = sphi 0, %s66
      %s84 = sphi 0, %s84
      %s86 = sphi 0, %s84
      %s87 = sphi 0, %s86
      %s101 = sphi 0, %s87
      %s105 = sphi 0, %s105
      %s107 = sphi 0, %s105
      %s108 = sphi 0, %s107
      %s122 = sphi 0, %s108
      %s126 = sphi 0, %s126
      %s128 = sphi 0, %s126
      %s129 = sphi 0, %s128
      %s143 = sphi 0, %s129
      %s147 = sphi 0, %s147
      %s149 = sphi 0, %s147
      %s150 = sphi 0, %s149
      %s164 = sphi 0, %s150
      %s168 = sphi 0, %s168
      %s170 = sphi 0, %s168
      %s171 = sphi 0, %s170
      %s185 = sphi 0, %s171
      %s189 = sphi 0, %s189
      %s191 = sphi 0, %s189
      %s192 = sphi 0, %s191
      %s206 = sphi 0, %s192
      %s210 = sphi 0, %s210
      %s212 = sphi 0, %s210
      %s213 = sphi 0, %s212
      %s227 = sphi 0, %s213
      %s231 = sphi 0, %s231
      %s233 = sphi 0, %s231
      %s234 = sphi 0, %s233
      %s248 = sphi 0, %s234
      %s252 = sphi 0, %s252
      %s254 = sphi 0, %s252
      %s255 = sphi 0, %s254
      %s269 = sphi 0, %s255
      %s273 = sphi 0, %s273
      %s275 = sphi 0, %s273
      %s276 = sphi 0, %s275
      %s290 = sphi 0, %s276
      %s294 = sphi 0, %s294
      %s296 = sphi 0, %s294
      %s297 = sphi 0, %s296
      %s311 = sphi 0, %s297
      %s315 = sphi 0, %s315
      %s317 = sphi 0, %s315
      %s318 = sphi 0, %s317
      %s332 = sphi 0, %s318
      %s336 = sphi 0, %s336
      %s338 = sphi 0, %s336
      %s339 = sphi 0, %s338
      %s353 = sphi 0, %s339
      %s357 = sphi 0, %s357
      %s359 = sphi 0, %s357
      %s360 = sphi 0, %s359
      %s374 = sphi 0, %s360
      %s378 = sphi 0, %s378
      %s380 = sphi 0, %s378
      %s381 = sphi 0, %s380
      %s395 = sphi 0, %s381
      %s399 = sphi 0, %s399
      %s401 = sphi 0, %s399
      %s402 = sphi 0, %s401
      %s416 = sphi 0, %s402
      %s422 = sphi 0, %s424
      %s425 = sphi 0, %s422
      %s426 = sphi 0, %s425
      %s442 = sphi 0, %s426
    $region4: #{tpu_custom_call.1} parent=1 // loop_header_branch
      %32 = sbr.rel (%p30) target = $region8
    $region5: #{tpu_custom_call.1} parent=1 // loop_body
      %s34 = ssub.s32 %s29, 1
      %s35 = ssub.s32 %s29, 2
      %s36 = sadd.s32 %s29, 1
      %s37 = ssub.s32 %s29, %s36
      %p38 = scmp.eq.s32.totalorder %s37, 0
      %s40 = sadd.s32 %s39, 1
      %s41 = scalar_select %p38, %s39, %s40
      %p44 = pneg %p38
      %p45 = scmp.eq.s32.totalorder %s29, 1
      %p46 = por %p44, %p45
      %p47 = scmp.ne.s32.totalorder %s39, %s42
      %p48 = scmp.eq.s32.totalorder %s29, 0
      %p49 = por %p47, %p48
      %p50 = scmp.ne.s32.totalorder %s39, %s42
      %p51 = scmp.eq.s32.totalorder %s34, 1
      %p52 = por %p50, %p51
      %p53 = scmp.ne.s32.totalorder %s42, %s43
      %p54 = scmp.eq.s32.totalorder %s34, 0
      %p55 = por %p53, %p54
      %p56 = scmp.ne.s32.totalorder %s42, %s43
      %p57 = scmp.eq.s32.totalorder %s35, 1
      %p58 = por %p56, %p57
      %p60 = scmp.ne.s32.totalorder %s43, %s59
      %p61 = scmp.eq.s32.totalorder %s35, 0
      %p62 = por %p60, %p61
      %s64 = sadd.s32 %s63, 1
      %p67 = scmp.eq.s32.totalorder %s29, 1
      %p68 = scmp.ne.s32.totalorder %s63, %s65
      %p69 = scmp.eq.s32.totalorder %s29, 0
      %p70 = por %p68, %p69
      %p71 = scmp.ne.s32.totalorder %s63, %s65
      %p72 = scmp.eq.s32.totalorder %s34, 1
      %p73 = por %p71, %p72
      %p74 = scmp.ne.s32.totalorder %s65, %s66
      %p75 = scmp.eq.s32.totalorder %s34, 0
      %p76 = por %p74, %p75
      %p77 = scmp.ne.s32.totalorder %s65, %s66
      %p78 = scmp.eq.s32.totalorder %s35, 1
      %p79 = por %p77, %p78
      %p81 = scmp.ne.s32.totalorder %s66, %s80
      %p82 = scmp.eq.s32.totalorder %s35, 0
      %p83 = por %p81, %p82
      %s85 = sadd.s32 %s84, 1
      %p88 = scmp.eq.s32.totalorder %s29, 1
      %p89 = scmp.ne.s32.totalorder %s84, %s86
      %p90 = scmp.eq.s32.totalorder %s29, 0
      %p91 = por %p89, %p90
      %p92 = scmp.ne.s32.totalorder %s84, %s86
      %p93 = scmp.eq.s32.totalorder %s34, 1
      %p94 = por %p92, %p93
      %p95 = scmp.ne.s32.totalorder %s86, %s87
      %p96 = scmp.eq.s32.totalorder %s34, 0
      %p97 = por %p95, %p96
      %p98 = scmp.ne.s32.totalorder %s86, %s87
      %p99 = scmp.eq.s32.totalorder %s35, 1
      %p100 = por %p98, %p99
      %p102 = scmp.ne.s32.totalorder %s87, %s101
      %p103 = scmp.eq.s32.totalorder %s35, 0
      %p104 = por %p102, %p103
      %s106 = sadd.s32 %s105, 1
      %p109 = scmp.eq.s32.totalorder %s29, 1
      %p110 = scmp.ne.s32.totalorder %s105, %s107
      %p111 = scmp.eq.s32.totalorder %s29, 0
      %p112 = por %p110, %p111
      %p113 = scmp.ne.s32.totalorder %s105, %s107
      %p114 = scmp.eq.s32.totalorder %s34, 1
      %p115 = por %p113, %p114
      %p116 = scmp.ne.s32.totalorder %s107, %s108
      %p117 = scmp.eq.s32.totalorder %s34, 0
      %p118 = por %p116, %p117
      %p119 = scmp.ne.s32.totalorder %s107, %s108
      %p120 = scmp.eq.s32.totalorder %s35, 1
      %p121 = por %p119, %p120
      %p123 = scmp.ne.s32.totalorder %s108, %s122
      %p124 = scmp.eq.s32.totalorder %s35, 0
      %p125 = por %p123, %p124
      %s127 = sadd.s32 %s126, 1
      %p130 = scmp.eq.s32.totalorder %s29, 1
      %p131 = scmp.ne.s32.totalorder %s126, %s128
      %p132 = scmp.eq.s32.totalorder %s29, 0
      %p133 = por %p131, %p132
      %p134 = scmp.ne.s32.totalorder %s126, %s128
      %p135 = scmp.eq.s32.totalorder %s34, 1
      %p136 = por %p134, %p135
      %p137 = scmp.ne.s32.totalorder %s128, %s129
      %p138 = scmp.eq.s32.totalorder %s34, 0
      %p139 = por %p137, %p138
      %p140 = scmp.ne.s32.totalorder %s128, %s129
      %p141 = scmp.eq.s32.totalorder %s35, 1
      %p142 = por %p140, %p141
      %p144 = scmp.ne.s32.totalorder %s129, %s143
      %p145 = scmp.eq.s32.totalorder %s35, 0
      %p146 = por %p144, %p145
      %s148 = sadd.s32 %s147, 1
      %p151 = scmp.eq.s32.totalorder %s29, 1
      %p152 = scmp.ne.s32.totalorder %s147, %s149
      %p153 = scmp.eq.s32.totalorder %s29, 0
      %p154 = por %p152, %p153
      %p155 = scmp.ne.s32.totalorder %s147, %s149
      %p156 = scmp.eq.s32.totalorder %s34, 1
      %p157 = por %p155, %p156
      %p158 = scmp.ne.s32.totalorder %s149, %s150
      %p159 = scmp.eq.s32.totalorder %s34, 0
      %p160 = por %p158, %p159
      %p161 = scmp.ne.s32.totalorder %s149, %s150
      %p162 = scmp.eq.s32.totalorder %s35, 1
      %p163 = por %p161, %p162
      %p165 = scmp.ne.s32.totalorder %s150, %s164
      %p166 = scmp.eq.s32.totalorder %s35, 0
      %p167 = por %p165, %p166
      %s169 = sadd.s32 %s168, 1
      %p172 = scmp.eq.s32.totalorder %s29, 1
      %p173 = scmp.ne.s32.totalorder %s168, %s170
      %p174 = scmp.eq.s32.totalorder %s29, 0
      %p175 = por %p173, %p174
      %p176 = scmp.ne.s32.totalorder %s168, %s170
      %p177 = scmp.eq.s32.totalorder %s34, 1
      %p178 = por %p176, %p177
      %p179 = scmp.ne.s32.totalorder %s170, %s171
      %p180 = scmp.eq.s32.totalorder %s34, 0
      %p181 = por %p179, %p180
      %p182 = scmp.ne.s32.totalorder %s170, %s171
      %p183 = scmp.eq.s32.totalorder %s35, 1
      %p184 = por %p182, %p183
      %p186 = scmp.ne.s32.totalorder %s171, %s185
      %p187 = scmp.eq.s32.totalorder %s35, 0
      %p188 = por %p186, %p187
      %s190 = sadd.s32 %s189, 1
      %p193 = scmp.eq.s32.totalorder %s29, 1
      %p194 = scmp.ne.s32.totalorder %s189, %s191
      %p195 = scmp.eq.s32.totalorder %s29, 0
      %p196 = por %p194, %p195
      %p197 = scmp.ne.s32.totalorder %s189, %s191
      %p198 = scmp.eq.s32.totalorder %s34, 1
      %p199 = por %p197, %p198
      %p200 = scmp.ne.s32.totalorder %s191, %s192
      %p201 = scmp.eq.s32.totalorder %s34, 0
      %p202 = por %p200, %p201
      %p203 = scmp.ne.s32.totalorder %s191, %s192
      %p204 = scmp.eq.s32.totalorder %s35, 1
      %p205 = por %p203, %p204
      %p207 = scmp.ne.s32.totalorder %s192, %s206
      %p208 = scmp.eq.s32.totalorder %s35, 0
      %p209 = por %p207, %p208
      %s211 = sadd.s32 %s210, 1
      %p214 = scmp.eq.s32.totalorder %s29, 1
      %p215 = scmp.ne.s32.totalorder %s210, %s212
      %p216 = scmp.eq.s32.totalorder %s29, 0
      %p217 = por %p215, %p216
      %p218 = scmp.ne.s32.totalorder %s210, %s212
      %p219 = scmp.eq.s32.totalorder %s34, 1
      %p220 = por %p218, %p219
      %p221 = scmp.ne.s32.totalorder %s212, %s213
      %p222 = scmp.eq.s32.totalorder %s34, 0
      %p223 = por %p221, %p222
      %p224 = scmp.ne.s32.totalorder %s212, %s213
      %p225 = scmp.eq.s32.totalorder %s35, 1
      %p226 = por %p224, %p225
      %p228 = scmp.ne.s32.totalorder %s213, %s227
      %p229 = scmp.eq.s32.totalorder %s35, 0
      %p230 = por %p228, %p229
      %s232 = sadd.s32 %s231, 1
      %p235 = scmp.eq.s32.totalorder %s29, 1
      %p236 = scmp.ne.s32.totalorder %s231, %s233
      %p237 = scmp.eq.s32.totalorder %s29, 0
      %p238 = por %p236, %p237
      %p239 = scmp.ne.s32.totalorder %s231, %s233
      %p240 = scmp.eq.s32.totalorder %s34, 1
      %p241 = por %p239, %p240
      %p242 = scmp.ne.s32.totalorder %s233, %s234
      %p243 = scmp.eq.s32.totalorder %s34, 0
      %p244 = por %p242, %p243
      %p245 = scmp.ne.s32.totalorder %s233, %s234
      %p246 = scmp.eq.s32.totalorder %s35, 1
      %p247 = por %p245, %p246
      %p249 = scmp.ne.s32.totalorder %s234, %s248
      %p250 = scmp.eq.s32.totalorder %s35, 0
      %p251 = por %p249, %p250
      %s253 = sadd.s32 %s252, 1
      %p256 = scmp.eq.s32.totalorder %s29, 1
      %p257 = scmp.ne.s32.totalorder %s252, %s254
      %p258 = scmp.eq.s32.totalorder %s29, 0
      %p259 = por %p257, %p258
      %p260 = scmp.ne.s32.totalorder %s252, %s254
      %p261 = scmp.eq.s32.totalorder %s34, 1
      %p262 = por %p260, %p261
      %p263 = scmp.ne.s32.totalorder %s254, %s255
      %p264 = scmp.eq.s32.totalorder %s34, 0
      %p265 = por %p263, %p264
      %p266 = scmp.ne.s32.totalorder %s254, %s255
      %p267 = scmp.eq.s32.totalorder %s35, 1
      %p268 = por %p266, %p267
      %p270 = scmp.ne.s32.totalorder %s255, %s269
      %p271 = scmp.eq.s32.totalorder %s35, 0
      %p272 = por %p270, %p271
      %s274 = sadd.s32 %s273, 1
      %p277 = scmp.eq.s32.totalorder %s29, 1
      %p278 = scmp.ne.s32.totalorder %s273, %s275
      %p279 = scmp.eq.s32.totalorder %s29, 0
      %p280 = por %p278, %p279
      %p281 = scmp.ne.s32.totalorder %s273, %s275
      %p282 = scmp.eq.s32.totalorder %s34, 1
      %p283 = por %p281, %p282
      %p284 = scmp.ne.s32.totalorder %s275, %s276
      %p285 = scmp.eq.s32.totalorder %s34, 0
      %p286 = por %p284, %p285
      %p287 = scmp.ne.s32.totalorder %s275, %s276
      %p288 = scmp.eq.s32.totalorder %s35, 1
      %p289 = por %p287, %p288
      %p291 = scmp.ne.s32.totalorder %s276, %s290
      %p292 = scmp.eq.s32.totalorder %s35, 0
      %p293 = por %p291, %p292
      %s295 = sadd.s32 %s294, 1
      %p298 = scmp.eq.s32.totalorder %s29, 1
      %p299 = scmp.ne.s32.totalorder %s294, %s296
      %p300 = scmp.eq.s32.totalorder %s29, 0
      %p301 = por %p299, %p300
      %p302 = scmp.ne.s32.totalorder %s294, %s296
      %p303 = scmp.eq.s32.totalorder %s34, 1
      %p304 = por %p302, %p303
      %p305 = scmp.ne.s32.totalorder %s296, %s297
      %p306 = scmp.eq.s32.totalorder %s34, 0
      %p307 = por %p305, %p306
      %p308 = scmp.ne.s32.totalorder %s296, %s297
      %p309 = scmp.eq.s32.totalorder %s35, 1
      %p310 = por %p308, %p309
      %p312 = scmp.ne.s32.totalorder %s297, %s311
      %p313 = scmp.eq.s32.totalorder %s35, 0
      %p314 = por %p312, %p313
      %s316 = sadd.s32 %s315, 1
      %p319 = scmp.eq.s32.totalorder %s29, 1
      %p320 = scmp.ne.s32.totalorder %s315, %s317
      %p321 = scmp.eq.s32.totalorder %s29, 0
      %p322 = por %p320, %p321
      %p323 = scmp.ne.s32.totalorder %s315, %s317
      %p324 = scmp.eq.s32.totalorder %s34, 1
      %p325 = por %p323, %p324
      %p326 = scmp.ne.s32.totalorder %s317, %s318
      %p327 = scmp.eq.s32.totalorder %s34, 0
      %p328 = por %p326, %p327
      %p329 = scmp.ne.s32.totalorder %s317, %s318
      %p330 = scmp.eq.s32.totalorder %s35, 1
      %p331 = por %p329, %p330
      %p333 = scmp.ne.s32.totalorder %s318, %s332
      %p334 = scmp.eq.s32.totalorder %s35, 0
      %p335 = por %p333, %p334
      %s337 = sadd.s32 %s336, 1
      %p340 = scmp.eq.s32.totalorder %s29, 1
      %p341 = scmp.ne.s32.totalorder %s336, %s338
      %p342 = scmp.eq.s32.totalorder %s29, 0
      %p343 = por %p341, %p342
      %p344 = scmp.ne.s32.totalorder %s336, %s338
      %p345 = scmp.eq.s32.totalorder %s34, 1
      %p346 = por %p344, %p345
      %p347 = scmp.ne.s32.totalorder %s338, %s339
      %p348 = scmp.eq.s32.totalorder %s34, 0
      %p349 = por %p347, %p348
      %p350 = scmp.ne.s32.totalorder %s338, %s339
      %p351 = scmp.eq.s32.totalorder %s35, 1
      %p352 = por %p350, %p351
      %p354 = scmp.ne.s32.totalorder %s339, %s353
      %p355 = scmp.eq.s32.totalorder %s35, 0
      %p356 = por %p354, %p355
      %s358 = sadd.s32 %s357, 1
      %p361 = scmp.eq.s32.totalorder %s29, 1
      %p362 = scmp.ne.s32.totalorder %s357, %s359
      %p363 = scmp.eq.s32.totalorder %s29, 0
      %p364 = por %p362, %p363
      %p365 = scmp.ne.s32.totalorder %s357, %s359
      %p366 = scmp.eq.s32.totalorder %s34, 1
      %p367 = por %p365, %p366
      %p368 = scmp.ne.s32.totalorder %s359, %s360
      %p369 = scmp.eq.s32.totalorder %s34, 0
      %p370 = por %p368, %p369
      %p371 = scmp.ne.s32.totalorder %s359, %s360
      %p372 = scmp.eq.s32.totalorder %s35, 1
      %p373 = por %p371, %p372
      %p375 = scmp.ne.s32.totalorder %s360, %s374
      %p376 = scmp.eq.s32.totalorder %s35, 0
      %p377 = por %p375, %p376
      %s379 = sadd.s32 %s378, 1
      %p382 = scmp.eq.s32.totalorder %s29, 1
      %p383 = scmp.ne.s32.totalorder %s378, %s380
      %p384 = scmp.eq.s32.totalorder %s29, 0
      %p385 = por %p383, %p384
      %p386 = scmp.ne.s32.totalorder %s378, %s380
      %p387 = scmp.eq.s32.totalorder %s34, 1
      %p388 = por %p386, %p387
      %p389 = scmp.ne.s32.totalorder %s380, %s381
      %p390 = scmp.eq.s32.totalorder %s34, 0
      %p391 = por %p389, %p390
      %p392 = scmp.ne.s32.totalorder %s380, %s381
      %p393 = scmp.eq.s32.totalorder %s35, 1
      %p394 = por %p392, %p393
      %p396 = scmp.ne.s32.totalorder %s381, %s395
      %p397 = scmp.eq.s32.totalorder %s35, 0
      %p398 = por %p396, %p397
      %s400 = sadd.s32 %s399, 1
      %p403 = scmp.eq.s32.totalorder %s29, 1
      %p404 = scmp.ne.s32.totalorder %s399, %s401
      %p405 = scmp.eq.s32.totalorder %s29, 0
      %p406 = por %p404, %p405
      %p407 = scmp.ne.s32.totalorder %s399, %s401
      %p408 = scmp.eq.s32.totalorder %s34, 1
      %p409 = por %p407, %p408
      %p410 = scmp.ne.s32.totalorder %s401, %s402
      %p411 = scmp.eq.s32.totalorder %s34, 0
      %p412 = por %p410, %p411
      %p413 = scmp.ne.s32.totalorder %s401, %s402
      %p414 = scmp.eq.s32.totalorder %s35, 1
      %p415 = por %p413, %p414
      %p417 = scmp.ne.s32.totalorder %s402, %s416
      %p418 = scmp.eq.s32.totalorder %s35, 0
      %p419 = por %p417, %p418
      %s420 = ssub.s32 %s29, %s36
      %p421 = scmp.eq.s32.totalorder %s420, 0
      %s423 = sadd.s32 %s422, 1
      %s424 = scalar_select %p421, %s422, %s423
      %p427 = pneg %p421
      %p428 = scmp.eq.s32.totalorder %s29, 1
      %p429 = por %p427, %p428
      %p430 = scmp.ne.s32.totalorder %s422, %s425
      %p431 = scmp.eq.s32.totalorder %s29, 0
      %p432 = por %p430, %p431
      %p433 = scmp.ne.s32.totalorder %s422, %s425
      %p434 = scmp.eq.s32.totalorder %s34, 1
      %p435 = por %p433, %p434
      %p436 = scmp.ne.s32.totalorder %s425, %s426
      %p437 = scmp.eq.s32.totalorder %s34, 0
      %p438 = por %p436, %p437
      %p439 = scmp.ne.s32.totalorder %s425, %s426
      %p440 = scmp.eq.s32.totalorder %s35, 1
      %p441 = por %p439, %p440
      %p443 = scmp.ne.s32.totalorder %s426, %s442
      %p444 = scmp.eq.s32.totalorder %s35, 0
      %p445 = por %p443, %p444
      %p446 = scmp.le.s32.totalorder 1, %s29
      %p447 = scmp.lt.s32.totalorder %s29, 3
      %p448 = pnand %p446, %p447
      %p449 = pneg %p448
      // Predicated region
      $region9: #{tpu_custom_call.1} parent=5 // pred_check
        _
      $region10: #{tpu_custom_call.1} parent=5 // pred_check_branch
        %451 = sbr.rel (%p448) target = $region12
      $region11: #{tpu_custom_call.1} parent=5 // pred_region
        %s452 = ssub.s32 %s29, 1
        // Predicated region
        $region13: #{tpu_custom_call.1} parent=11 // pred_check
          %p453 = pneg %p76
        $region14: #{tpu_custom_call.1} parent=11 // pred_check_branch
          %455 = sbr.rel (%p453) target = $region16
        $region15: #{tpu_custom_call.1} parent=11 // pred_region
          _
        $region16: #{tpu_custom_call.1} parent=11 // pred_fallthru
          _
        // Predicated region
        $region17: #{tpu_custom_call.1} parent=11 // pred_check
          %p456 = pneg %p97
        $region18: #{tpu_custom_call.1} parent=11 // pred_check_branch
          %458 = sbr.rel (%p456) target = $region20
        $region19: #{tpu_custom_call.1} parent=11 // pred_region
          _
        $region20: #{tpu_custom_call.1} parent=11 // pred_fallthru
          _
        // Predicated region
        $region21: #{tpu_custom_call.1} parent=11 // pred_check
          %p459 = pneg %p118
        $region22: #{tpu_custom_call.1} parent=11 // pred_check_branch
          %461 = sbr.rel (%p459) target = $region24
        $region23: #{tpu_custom_call.1} parent=11 // pred_region
          _
        $region24: #{tpu_custom_call.1} parent=11 // pred_fallthru
          _
        // Predicated region
        $region25: #{tpu_custom_call.1} parent=11 // pred_check
          %p462 = pneg %p139
        $region26: #{tpu_custom_call.1} parent=11 // pred_check_branch
          %464 = sbr.rel (%p462) target = $region28
        $region27: #{tpu_custom_call.1} parent=11 // pred_region
          _
        $region28: #{tpu_custom_call.1} parent=11 // pred_fallthru
          _
        // Predicated region
        $region29: #{tpu_custom_call.1} parent=11 // pred_check
          %p465 = pneg %p160
        $region30: #{tpu_custom_call.1} parent=11 // pred_check_branch
          %467 = sbr.rel (%p465) target = $region32
        $region31: #{tpu_custom_call.1} parent=11 // pred_region
          _
        $region32: #{tpu_custom_call.1} parent=11 // pred_fallthru
          _
        // Predicated region
        $region33: #{tpu_custom_call.1} parent=11 // pred_check
          %p468 = pneg %p181
        $region34: #{tpu_custom_call.1} parent=11 // pred_check_branch
          %470 = sbr.rel (%p468) target = $region36
        $region35: #{tpu_custom_call.1} parent=11 // pred_region
          _
        $region36: #{tpu_custom_call.1} parent=11 // pred_fallthru
          _
        // Predicated region
        $region37: #{tpu_custom_call.1} parent=11 // pred_check
          %p471 = pneg %p202
        $region38: #{tpu_custom_call.1} parent=11 // pred_check_branch
          %473 = sbr.rel (%p471) target = $region40
        $region39: #{tpu_custom_call.1} parent=11 // pred_region
          _
        $region40: #{tpu_custom_call.1} parent=11 // pred_fallthru
          _
        // Predicated region
        $region41: #{tpu_custom_call.1} parent=11 // pred_check
          %p474 = pneg %p223
        $region42: #{tpu_custom_call.1} parent=11 // pred_check_branch
          %476 = sbr.rel (%p474) target = $region44
        $region43: #{tpu_custom_call.1} parent=11 // pred_region
          _
        $region44: #{tpu_custom_call.1} parent=11 // pred_fallthru
          _
        // Predicated region
        $region45: #{tpu_custom_call.1} parent=11 // pred_check
          %p477 = pneg %p244
        $region46: #{tpu_custom_call.1} parent=11 // pred_check_branch
          %479 = sbr.rel (%p477) target = $region48
        $region47: #{tpu_custom_call.1} parent=11 // pred_region
          _
        $region48: #{tpu_custom_call.1} parent=11 // pred_fallthru
          _
        // Predicated region
        $region49: #{tpu_custom_call.1} parent=11 // pred_check
          %p480 = pneg %p265
        $region50: #{tpu_custom_call.1} parent=11 // pred_check_branch
          %482 = sbr.rel (%p480) target = $region52
        $region51: #{tpu_custom_call.1} parent=11 // pred_region
          _
        $region52: #{tpu_custom_call.1} parent=11 // pred_fallthru
          _
        // Predicated region
        $region53: #{tpu_custom_call.1} parent=11 // pred_check
          %p483 = pneg %p286
        $region54: #{tpu_custom_call.1} parent=11 // pred_check_branch
          %485 = sbr.rel (%p483) target = $region56
        $region55: #{tpu_custom_call.1} parent=11 // pred_region
          _
        $region56: #{tpu_custom_call.1} parent=11 // pred_fallthru
          _
        // Predicated region
        $region57: #{tpu_custom_call.1} parent=11 // pred_check
          %p486 = pneg %p307
        $region58: #{tpu_custom_call.1} parent=11 // pred_check_branch
          %488 = sbr.rel (%p486) target = $region60
        $region59: #{tpu_custom_call.1} parent=11 // pred_region
          _
        $region60: #{tpu_custom_call.1} parent=11 // pred_fallthru
          _
        // Predicated region
        $region61: #{tpu_custom_call.1} parent=11 // pred_check
          %p489 = pneg %p328
        $region62: #{tpu_custom_call.1} parent=11 // pred_check_branch
          %491 = sbr.rel (%p489) target = $region64
        $region63: #{tpu_custom_call.1} parent=11 // pred_region
          _
        $region64: #{tpu_custom_call.1} parent=11 // pred_fallthru
          _
        // Predicated region
        $region65: #{tpu_custom_call.1} parent=11 // pred_check
          %p492 = pneg %p349
        $region66: #{tpu_custom_call.1} parent=11 // pred_check_branch
          %494 = sbr.rel (%p492) target = $region68
        $region67: #{tpu_custom_call.1} parent=11 // pred_region
          _
        $region68: #{tpu_custom_call.1} parent=11 // pred_fallthru
          _
        // Predicated region
        $region69: #{tpu_custom_call.1} parent=11 // pred_check
          %p495 = pneg %p370
        $region70: #{tpu_custom_call.1} parent=11 // pred_check_branch
          %497 = sbr.rel (%p495) target = $region72
        $region71: #{tpu_custom_call.1} parent=11 // pred_region
          _
        $region72: #{tpu_custom_call.1} parent=11 // pred_fallthru
          _
        // Predicated region
        $region73: #{tpu_custom_call.1} parent=11 // pred_check
          %p498 = pneg %p391
        $region74: #{tpu_custom_call.1} parent=11 // pred_check_branch
          %500 = sbr.rel (%p498) target = $region76
        $region75: #{tpu_custom_call.1} parent=11 // pred_region
          _
        $region76: #{tpu_custom_call.1} parent=11 // pred_fallthru
          _
        // Predicated region
        $region77: #{tpu_custom_call.1} parent=11 // pred_check
          %p501 = pneg %p412
        $region78: #{tpu_custom_call.1} parent=11 // pred_check_branch
          %503 = sbr.rel (%p501) target = $region80
        $region79: #{tpu_custom_call.1} parent=11 // pred_region
          _
        $region80: #{tpu_custom_call.1} parent=11 // pred_fallthru
          _
      $region12: #{tpu_custom_call.1} parent=5 // pred_fallthru
        _
      %p504 = scmp.lt.s32.totalorder %s29, 2
      // Predicated region
      $region81: #{tpu_custom_call.1} parent=5 // pred_check
        %p505 = pneg %p504
      $region82: #{tpu_custom_call.1} parent=5 // pred_check_branch
        %507 = sbr.rel (%p505) target = $region84
      $region83: #{tpu_custom_call.1} parent=5 // pred_region
        // Predicated region
        $region85: #{tpu_custom_call.1} parent=83 // pred_check
          %p508 = pneg %p49
        $region86: #{tpu_custom_call.1} parent=83 // pred_check_branch
          %510 = sbr.rel (%p508) target = $region88
        $region87: #{tpu_custom_call.1} parent=83 // pred_region
          %p511 = scmp.lt.s32.totalorder %s29, 1
          %s512 = scalar_select %p511, %s29, 1
          %s513 = smul.addr %s512, 8
          %s514 = scalar_lea.vmem %s0, %s513
        $region88: #{tpu_custom_call.1} parent=83 // pred_fallthru
          _
      $region84: #{tpu_custom_call.1} parent=5 // pred_fallthru
        _
      %p515 = scmp.le.s32.totalorder 1, %s29
      %p516 = scmp.lt.s32.totalorder %s29, 3
      %p517 = pnand %p515, %p516
      %p518 = pneg %p517
      // Predicated region
      $region89: #{tpu_custom_call.1} parent=5 // pred_check
        _
      $region90: #{tpu_custom_call.1} parent=5 // pred_check_branch
        %520 = sbr.rel (%p517) target = $region92
      $region91: #{tpu_custom_call.1} parent=5 // pred_region
        %s521 = ssub.s32 %s29, 1
        %p522 = scmp.lt.s32.totalorder %s34, 1
        %s523 = scalar_select %p522, %s34, 1
        %s524 = smul.addr %s523, 8
        %s525 = scalar_lea.vmem %s0, %s524
        %p526 = pneg %p55
        %p527 = pneg %p52
        %p528 = pneg %p76
        %p529 = pneg %p73
        %p530 = pneg %p97
        %p531 = pneg %p94
        %p532 = pneg %p118
        %p533 = pneg %p115
        %p534 = pneg %p139
        %p535 = pneg %p136
        %p536 = pneg %p160
        %p537 = pneg %p157
        %p538 = pneg %p181
        %p539 = pneg %p178
        %p540 = pneg %p202
        %p541 = pneg %p199
        %p542 = pneg %p223
        %p543 = pneg %p220
        %p544 = pneg %p244
        %p545 = pneg %p241
        %p546 = pneg %p265
        %p547 = pneg %p262
        %p548 = pneg %p286
        %p549 = pneg %p283
        %p550 = pneg %p307
        %p551 = pneg %p304
        %p552 = pneg %p328
        %p553 = pneg %p325
        %p554 = pneg %p349
        %p555 = pneg %p346
        %p556 = pneg %p370
        %p557 = pneg %p367
        %p558 = pneg %p391
        %p559 = pneg %p388
        %p560 = pneg %p412
        %p561 = pneg %p409
        %p562 = pneg %p438
        %p563 = pneg %p435
        %s564 = sand.u32 %s425, 1
        %s565 = scalar_lea.sflag [#allocation5], %s564
        %s566 = sand.u32 %s425, 1
        %s567 = scalar_lea.vmem [#allocation4], %s566
        %p568 = scmp.lt.s32.totalorder %s34, 1
        %s569 = scalar_select %p568, %s34, 1
        %s570 = smul.addr %s569, 8
        %s571 = scalar_lea.vmem %s0, %s570
        %v572 = vld [vmem:[%s571] sm:$0xff]
        %v574 = vlaneseq
        %v575 = vshrl.u32 %v574, 7
        %v576 = vsub.s32 0, %v575
        %v577 = vrot.slane %v572, %v576
        %v578 = vlaneseq
        %v579 = vshrl.u32 %v578, 7
        %v580 = vsub.s32 1, %v579
        %v581 = vrot.slane %v572, %v580
        %v582 = vlaneseq
        %v583 = vshrl.u32 %v582, 7
        %v584 = vsub.s32 2, %v583
        %v585 = vrot.slane %v572, %v584
        %v586 = vlaneseq
        %v587 = vshrl.u32 %v586, 7
        %v588 = vsub.s32 3, %v587
        %v589 = vrot.slane %v572, %v588
        %v590 = vlaneseq
        %v591 = vshrl.u32 %v590, 7
        %v592 = vsub.s32 4, %v591
        %v593 = vrot.slane %v572, %v592
        %v594 = vlaneseq
        %v595 = vshrl.u32 %v594, 7
        %v596 = vsub.s32 5, %v595
        %v597 = vrot.slane %v572, %v596
        %v598 = vlaneseq
        %v599 = vshrl.u32 %v598, 7
        %v600 = vsub.s32 6, %v599
        %v601 = vrot.slane %v572, %v600
        %v602 = vlaneseq
        %v603 = vshrl.u32 %v602, 7
        %v604 = vsub.s32 7, %v603
        %v605 = vrot.slane %v572, %v604
        %614 = vrot.lane.b32.xlu0 %v577, 17
        %v615 = vpop.permute.xlu0 %614
        %616 = vrot.lane.b32.xlu0 %v581, 17
        %v617 = vpop.permute.xlu0 %616
        %618 = vrot.lane.b32.xlu0 %v585, 17
        %v619 = vpop.permute.xlu0 %618
        %620 = vrot.lane.b32.xlu0 %v589, 17
        %v621 = vpop.permute.xlu0 %620
        %622 = vrot.lane.b32.xlu0 %v593, 17
        %v623 = vpop.permute.xlu0 %622
        %624 = vrot.lane.b32.xlu0 %v597, 17
        %v625 = vpop.permute.xlu0 %624
        %626 = vrot.lane.b32.xlu0 %v601, 17
        %v627 = vpop.permute.xlu0 %626
        %628 = vrot.lane.b32.xlu0 %v605, 17
        %v629 = vpop.permute.xlu0 %628
        %v630 = vlaneseq
        %v631 = vand.u32 %v630, 127
        %vm632 = vcmp.lt.s32.totalorder %v631, 17
        %v633 = vsel %vm632, %v627, %v629
        %v634 = vsel %vm632, %v625, %v627
        %v635 = vsel %vm632, %v623, %v625
        %v636 = vsel %vm632, %v621, %v623
        %v637 = vsel %vm632, %v619, %v621
        %v638 = vsel %vm632, %v617, %v619
        %v639 = vsel %vm632, %v615, %v617
        %v640 = vsel %vm632, %v629, %v615
        %641 = vrot.lane.b32.xlu0 %v577, 16
        %v642 = vpop.permute.xlu0 %641
        %643 = vrot.lane.b32.xlu0 %v581, 16
        %v644 = vpop.permute.xlu0 %643
        %645 = vrot.lane.b32.xlu0 %v585, 16
        %v646 = vpop.permute.xlu0 %645
        %647 = vrot.lane.b32.xlu0 %v589, 16
        %v648 = vpop.permute.xlu0 %647
        %649 = vrot.lane.b32.xlu0 %v593, 16
        %v650 = vpop.permute.xlu0 %649
        %651 = vrot.lane.b32.xlu0 %v597, 16
        %v652 = vpop.permute.xlu0 %651
        %653 = vrot.lane.b32.xlu0 %v601, 16
        %v654 = vpop.permute.xlu0 %653
        %655 = vrot.lane.b32.xlu0 %v605, 16
        %v656 = vpop.permute.xlu0 %655
        %vm657 = vcmp.lt.s32.totalorder %v631, 16
        %v658 = vsel %vm657, %v654, %v656
        %v659 = vsel %vm657, %v652, %v654
        %v660 = vsel %vm657, %v650, %v652
        %v661 = vsel %vm657, %v648, %v650
        %v662 = vsel %vm657, %v646, %v648
        %v663 = vsel %vm657, %v644, %v646
        %v664 = vsel %vm657, %v642, %v644
        %v665 = vsel %vm657, %v656, %v642
        %666 = vrot.lane.b32.xlu0 %v577, 15
        %v667 = vpop.permute.xlu0 %666
        %668 = vrot.lane.b32.xlu0 %v581, 15
        %v669 = vpop.permute.xlu0 %668
        %670 = vrot.lane.b32.xlu0 %v585, 15
        %v671 = vpop.permute.xlu0 %670
        %672 = vrot.lane.b32.xlu0 %v589, 15
        %v673 = vpop.permute.xlu0 %672
        %674 = vrot.lane.b32.xlu0 %v593, 15
        %v675 = vpop.permute.xlu0 %674
        %676 = vrot.lane.b32.xlu0 %v597, 15
        %v677 = vpop.permute.xlu0 %676
        %678 = vrot.lane.b32.xlu0 %v601, 15
        %v679 = vpop.permute.xlu0 %678
        %680 = vrot.lane.b32.xlu0 %v605, 15
        %v681 = vpop.permute.xlu0 %680
        %vm682 = vcmp.lt.s32.totalorder %v631, 15
        %v683 = vsel %vm682, %v679, %v681
        %v684 = vsel %vm682, %v677, %v679
        %v685 = vsel %vm682, %v675, %v677
        %v686 = vsel %vm682, %v673, %v675
        %v687 = vsel %vm682, %v671, %v673
        %v688 = vsel %vm682, %v669, %v671
        %v689 = vsel %vm682, %v667, %v669
        %v690 = vsel %vm682, %v681, %v667
        %691 = vrot.lane.b32.xlu0 %v577, 1
        %v692 = vpop.permute.xlu0 %691
        %693 = vrot.lane.b32.xlu0 %v581, 1
        %v694 = vpop.permute.xlu0 %693
        %695 = vrot.lane.b32.xlu0 %v585, 1
        %v696 = vpop.permute.xlu0 %695
        %697 = vrot.lane.b32.xlu0 %v589, 1
        %v698 = vpop.permute.xlu0 %697
        %699 = vrot.lane.b32.xlu0 %v593, 1
        %v700 = vpop.permute.xlu0 %699
        %701 = vrot.lane.b32.xlu0 %v597, 1
        %v702 = vpop.permute.xlu0 %701
        %703 = vrot.lane.b32.xlu0 %v601, 1
        %v704 = vpop.permute.xlu0 %703
        %705 = vrot.lane.b32.xlu0 %v605, 1
        %v706 = vpop.permute.xlu0 %705
        %vm707 = vcmp.lt.s32.totalorder %v631, 1
        %v708 = vsel %vm707, %v704, %v706
        %v709 = vsel %vm707, %v702, %v704
        %v710 = vsel %vm707, %v700, %v702
        %v711 = vsel %vm707, %v698, %v700
        %v712 = vsel %vm707, %v696, %v698
        %v713 = vsel %vm707, %v694, %v696
        %v714 = vsel %vm707, %v692, %v694
        %v715 = vsel %vm707, %v706, %v692
        %716 = vrot.lane.b32.xlu0 %v577, 127
        %v717 = vpop.permute.xlu0 %716
        %718 = vrot.lane.b32.xlu0 %v581, 127
        %v719 = vpop.permute.xlu0 %718
        %720 = vrot.lane.b32.xlu0 %v585, 127
        %v721 = vpop.permute.xlu0 %720
        %722 = vrot.lane.b32.xlu0 %v589, 127
        %v723 = vpop.permute.xlu0 %722
        %724 = vrot.lane.b32.xlu0 %v593, 127
        %v725 = vpop.permute.xlu0 %724
        %726 = vrot.lane.b32.xlu0 %v597, 127
        %v727 = vpop.permute.xlu0 %726
        %728 = vrot.lane.b32.xlu0 %v601, 127
        %v729 = vpop.permute.xlu0 %728
        %730 = vrot.lane.b32.xlu0 %v605, 127
        %v731 = vpop.permute.xlu0 %730
        %vm732 = vcmp.lt.s32.totalorder %v631, 127
        %v733 = vsel %vm732, %v729, %v731
        %v734 = vsel %vm732, %v727, %v729
        %v735 = vsel %vm732, %v725, %v727
        %v736 = vsel %vm732, %v723, %v725
        %v737 = vsel %vm732, %v721, %v723
        %v738 = vsel %vm732, %v719, %v721
        %v739 = vsel %vm732, %v717, %v719
        %v740 = vsel %vm732, %v731, %v717
        %741 = vrot.lane.b32.xlu0 %v577, 113
        %v742 = vpop.permute.xlu0 %741
        %743 = vrot.lane.b32.xlu0 %v581, 113
        %v744 = vpop.permute.xlu0 %743
        %745 = vrot.lane.b32.xlu0 %v585, 113
        %v746 = vpop.permute.xlu0 %745
        %747 = vrot.lane.b32.xlu0 %v589, 113
        %v748 = vpop.permute.xlu0 %747
        %749 = vrot.lane.b32.xlu0 %v593, 113
        %v750 = vpop.permute.xlu0 %749
        %751 = vrot.lane.b32.xlu0 %v597, 113
        %v752 = vpop.permute.xlu0 %751
        %753 = vrot.lane.b32.xlu0 %v601, 113
        %v754 = vpop.permute.xlu0 %753
        %755 = vrot.lane.b32.xlu0 %v605, 113
        %v756 = vpop.permute.xlu0 %755
        %vm757 = vcmp.lt.s32.totalorder %v631, 113
        %v758 = vsel %vm757, %v754, %v756
        %v759 = vsel %vm757, %v752, %v754
        %v760 = vsel %vm757, %v750, %v752
        %v761 = vsel %vm757, %v748, %v750
        %v762 = vsel %vm757, %v746, %v748
        %v763 = vsel %vm757, %v744, %v746
        %v764 = vsel %vm757, %v742, %v744
        %v765 = vsel %vm757, %v756, %v742
        %766 = vrot.lane.b32.xlu0 %v577, 112
        %v767 = vpop.permute.xlu0 %766
        %768 = vrot.lane.b32.xlu0 %v581, 112
        %v769 = vpop.permute.xlu0 %768
        %770 = vrot.lane.b32.xlu0 %v585, 112
        %v771 = vpop.permute.xlu0 %770
        %772 = vrot.lane.b32.xlu0 %v589, 112
        %v773 = vpop.permute.xlu0 %772
        %774 = vrot.lane.b32.xlu0 %v593, 112
        %v775 = vpop.permute.xlu0 %774
        %776 = vrot.lane.b32.xlu0 %v597, 112
        %v777 = vpop.permute.xlu0 %776
        %778 = vrot.lane.b32.xlu0 %v601, 112
        %v779 = vpop.permute.xlu0 %778
        %780 = vrot.lane.b32.xlu0 %v605, 112
        %v781 = vpop.permute.xlu0 %780
        %vm782 = vcmp.lt.s32.totalorder %v631, 112
        %v783 = vsel %vm782, %v779, %v781
        %v784 = vsel %vm782, %v777, %v779
        %v785 = vsel %vm782, %v775, %v777
        %v786 = vsel %vm782, %v773, %v775
        %v787 = vsel %vm782, %v771, %v773
        %v788 = vsel %vm782, %v769, %v771
        %v789 = vsel %vm782, %v767, %v769
        %v790 = vsel %vm782, %v781, %v767
        %791 = vrot.lane.b32.xlu0 %v577, 111
        %v792 = vpop.permute.xlu0 %791
        %793 = vrot.lane.b32.xlu0 %v581, 111
        %v794 = vpop.permute.xlu0 %793
        %795 = vrot.lane.b32.xlu0 %v585, 111
        %v796 = vpop.permute.xlu0 %795
        %797 = vrot.lane.b32.xlu0 %v589, 111
        %v798 = vpop.permute.xlu0 %797
        %799 = vrot.lane.b32.xlu0 %v593, 111
        %v800 = vpop.permute.xlu0 %799
        %801 = vrot.lane.b32.xlu0 %v597, 111
        %v802 = vpop.permute.xlu0 %801
        %803 = vrot.lane.b32.xlu0 %v601, 111
        %v804 = vpop.permute.xlu0 %803
        %805 = vrot.lane.b32.xlu0 %v605, 111
        %v806 = vpop.permute.xlu0 %805
        %vm807 = vcmp.lt.s32.totalorder %v631, 111
        %v808 = vsel %vm807, %v804, %v806
        %v809 = vsel %vm807, %v802, %v804
        %v810 = vsel %vm807, %v800, %v802
        %v811 = vsel %vm807, %v798, %v800
        %v812 = vsel %vm807, %v796, %v798
        %v813 = vsel %vm807, %v794, %v796
        %v814 = vsel %vm807, %v792, %v794
        %v815 = vsel %vm807, %v806, %v792
        %v824 = vrot.slane %v665, 7
        %v825 = vrot.slane %v664, 7
        %v826 = vrot.slane %v663, 7
        %v827 = vrot.slane %v662, 7
        %v828 = vrot.slane %v661, 7
        %v829 = vrot.slane %v660, 7
        %v830 = vrot.slane %v659, 7
        %v831 = vrot.slane %v658, 7
        %v848 = vrot.slane %v690, 6
        %v849 = vrot.slane %v689, 6
        %v850 = vrot.slane %v688, 6
        %v851 = vrot.slane %v687, 6
        %v852 = vrot.slane %v686, 6
        %v853 = vrot.slane %v685, 6
        %v854 = vrot.slane %v684, 6
        %v855 = vrot.slane %v683, 6
        %v872 = vrot.slane %v715, 5
        %v873 = vrot.slane %v714, 5
        %v874 = vrot.slane %v713, 5
        %v875 = vrot.slane %v712, 5
        %v876 = vrot.slane %v711, 5
        %v877 = vrot.slane %v710, 5
        %v878 = vrot.slane %v709, 5
        %v879 = vrot.slane %v708, 5
        %v896 = vrot.slane %v739, 3
        %v897 = vrot.slane %v738, 3
        %v898 = vrot.slane %v737, 3
        %v899 = vrot.slane %v736, 3
        %v900 = vrot.slane %v735, 3
        %v901 = vrot.slane %v734, 3
        %v902 = vrot.slane %v733, 3
        %v903 = vrot.slane %v740, 3
        %v920 = vrot.slane %v764, 2
        %v921 = vrot.slane %v763, 2
        %v922 = vrot.slane %v762, 2
        %v923 = vrot.slane %v761, 2
        %v924 = vrot.slane %v760, 2
        %v925 = vrot.slane %v759, 2
        %v926 = vrot.slane %v758, 2
        %v927 = vrot.slane %v765, 2
        %v944 = vrot.slane %v789, 1
        %v945 = vrot.slane %v788, 1
        %v946 = vrot.slane %v787, 1
        %v947 = vrot.slane %v786, 1
        %v948 = vrot.slane %v785, 1
        %v949 = vrot.slane %v784, 1
        %v950 = vrot.slane %v783, 1
        %v951 = vrot.slane %v790, 1
        %vm960 = vcmask 1040384
        %v961 = vsel %vm960, %v640, %v824
        %v962 = vsel %vm960, %v639, %v825
        %v963 = vsel %vm960, %v638, %v826
        %v964 = vsel %vm960, %v637, %v827
        %v965 = vsel %vm960, %v636, %v828
        %v966 = vsel %vm960, %v635, %v829
        %v967 = vsel %vm960, %v634, %v830
        %v968 = vsel %vm960, %v633, %v831
        %vm969 = vcmask 1041408
        %v970 = vsel %vm969, %v961, %v848
        %v971 = vsel %vm969, %v962, %v849
        %v972 = vsel %vm969, %v963, %v850
        %v973 = vsel %vm969, %v964, %v851
        %v974 = vsel %vm969, %v965, %v852
        %v975 = vsel %vm969, %v966, %v853
        %v976 = vsel %vm969, %v967, %v854
        %v977 = vsel %vm969, %v968, %v855
        %vm978 = vcmask 1042432
        %v979 = vsel %vm978, %v970, %v872
        %v980 = vsel %vm978, %v971, %v873
        %v981 = vsel %vm978, %v972, %v874
        %v982 = vsel %vm978, %v973, %v875
        %v983 = vsel %vm978, %v974, %v876
        %v984 = vsel %vm978, %v975, %v877
        %v985 = vsel %vm978, %v976, %v878
        %v986 = vsel %vm978, %v977, %v879
        %vm987 = vcmask 1043456
        %v988 = vsel %vm987, %v979, %v577
        %v989 = vsel %vm987, %v980, %v581
        %v990 = vsel %vm987, %v981, %v585
        %v991 = vsel %vm987, %v982, %v589
        %v992 = vsel %vm987, %v983, %v593
        %v993 = vsel %vm987, %v984, %v597
        %v994 = vsel %vm987, %v985, %v601
        %v995 = vsel %vm987, %v986, %v605
        %vm996 = vcmask 1044480
        %v997 = vsel %vm996, %v988, %v896
        %v998 = vsel %vm996, %v989, %v897
        %v999 = vsel %vm996, %v990, %v898
        %v1000 = vsel %vm996, %v991, %v899
        %v1001 = vsel %vm996, %v992, %v900
        %v1002 = vsel %vm996, %v993, %v901
        %v1003 = vsel %vm996, %v994, %v902
        %v1004 = vsel %vm996, %v995, %v903
        %vm1005 = vcmask 1045504
        %v1006 = vsel %vm1005, %v997, %v920
        %v1007 = vsel %vm1005, %v998, %v921
        %v1008 = vsel %vm1005, %v999, %v922
        %v1009 = vsel %vm1005, %v1000, %v923
        %v1010 = vsel %vm1005, %v1001, %v924
        %v1011 = vsel %vm1005, %v1002, %v925
        %v1012 = vsel %vm1005, %v1003, %v926
        %v1013 = vsel %vm1005, %v1004, %v927
        %vm1014 = vcmask 1046528
        %v1015 = vsel %vm1014, %v1006, %v944
        %v1016 = vsel %vm1014, %v1007, %v945
        %v1017 = vsel %vm1014, %v1008, %v946
        %v1018 = vsel %vm1014, %v1009, %v947
        %v1019 = vsel %vm1014, %v1010, %v948
        %v1020 = vsel %vm1014, %v1011, %v949
        %v1021 = vsel %vm1014, %v1012, %v950
        %v1022 = vsel %vm1014, %v1013, %v951
        %v1023 = vld [vmem:[%s1] sm:$0xff]
        %v1024 = vld [vmem:[%s1 + $0x8] sm:$0xff]
        %v1025 = vld [vmem:[%s1 + $0x10] sm:$0xff]
        %v1026 = vld [vmem:[%s1 + $0x18] sm:$0xff]
        %v1027 = vld [vmem:[%s1 + $0x20] sm:$0xff]
        %v1028 = vld [vmem:[%s1 + $0x28] sm:$0xff]
        %v1029 = vld [vmem:[%s1 + $0x30] sm:$0xff]
        %v1030 = vld [vmem:[%s1 + $0x38] sm:$0xff]
        %v1031 = vld [vmem:[%s1 + $0x40] sm:$0x1]
        %v1032 = vld [vmem:[%s1 + $0x48] sm:$0x1]
        %v1033 = vld [vmem:[%s1 + $0x50] sm:$0x1]
        %v1034 = vld [vmem:[%s1 + $0x58] sm:$0x1]
        %v1035 = vld [vmem:[%s1 + $0x60] sm:$0x1]
        %v1036 = vld [vmem:[%s1 + $0x68] sm:$0x1]
        %v1037 = vld [vmem:[%s1 + $0x70] sm:$0x1]
        %v1038 = vld [vmem:[%s1 + $0x78] sm:$0x1]
        %v1039 = vmul.f32 %v1015, %v1023
        %v1040 = vmul.f32 %v1016, %v1024
        %v1041 = vmul.f32 %v1017, %v1025
        %v1042 = vmul.f32 %v1018, %v1026
        %v1043 = vmul.f32 %v1019, %v1027
        %v1044 = vmul.f32 %v1020, %v1028
        %v1045 = vmul.f32 %v1021, %v1029
        %v1046 = vmul.f32 %v1022, %v1030
        %v1047 = vmul.f32 %v814, %v1031
        %v1048 = vmul.f32 %v813, %v1032
        %v1049 = vmul.f32 %v812, %v1033
        %v1050 = vmul.f32 %v811, %v1034
        %v1051 = vmul.f32 %v810, %v1035
        %v1052 = vmul.f32 %v809, %v1036
        %v1053 = vmul.f32 %v808, %v1037
        %v1054 = vmul.f32 %v815, %v1038
        %v1055 = vld [vmem:[%s2] sm:$0xff]
        %v1056 = vld [vmem:[%s2 + $0x8] sm:$0xff]
        %v1057 = vld [vmem:[%s2 + $0x10] sm:$0xff]
        %vm1058 = vcmask 72704
        %v1060 = vsel %vm1058, %v1055, 0
        %v1063 = vsel %vm1058, %v1056, 0
        %v1066 = vsel %vm1058, %v1057, 0
        %v1069 = vsel %vm960, %v1047, 0
        %v1072 = vsel %vm960, %v1048, 0
        %v1075 = vsel %vm960, %v1049, 0
        %v1078 = vsel %vm960, %v1050, 0
        %v1081 = vsel %vm960, %v1051, 0
        %v1084 = vsel %vm960, %v1052, 0
        %v1087 = vsel %vm960, %v1053, 0
        %v1090 = vsel %vm960, %v1054, 0
        %1092 = vmatprep.subr.mxu0 %v1040
        %1093 = vmatpush1.msra.mxu0 %v1039
        %1094 = vmatprep.subr.mxu0 %v1072
        %1095 = vmatpush1.msra.mxu0 %v1069
        %1096 = vmatprep.subr.mxu0 0.0
        %1097 = vmatpush1.msra.mxu0 0.0
        %1098 = vmatprep.subr.mxu0 0.0
        %1099 = vmatpush1.msra.mxu0 0.0
        %1100 = vmatprep.subr.mxu0 0.0
        %1101 = vmatpush1.msra.mxu0 0.0
        %1102 = vmatprep.subr.mxu0 0.0
        %1103 = vmatpush1.msra.mxu0 0.0
        %1104 = vmatprep.subr.mxu0 0.0
        %1105 = vmatpush1.msra.mxu0 0.0
        %1106 = vmatprep.subr.mxu0 0.0
        %1107 = vmatpush1.msra.mxu0 0.0
        %1108 = vmatprep.subr.mxu0 0.0
        %1109 = vmatpush1.msra.mxu0 0.0
        %1110 = vmatprep.subr.mxu0 0.0
        %1111 = vmatpush1.msra.mxu0 0.0
        %1112 = vmatprep.subr.mxu0 0.0
        %1113 = vmatpush1.msra.mxu0 0.0
        %1114 = vmatprep.subr.mxu0 0.0
        %1115 = vmatpush1.msra.mxu0 0.0
        %1116 = vmatprep.subr.mxu0 0.0
        %1117 = vmatpush1.msra.mxu0 0.0
        %1118 = vmatprep.subr.mxu0 0.0
        %1119 = vmatpush1.msra.mxu0 0.0
        %1120 = vmatprep.subr.mxu0 0.0
        %1121 = vmatpush1.msra.mxu0 0.0
        %1122 = vmatprep.subr.mxu0 0.0
        %1123 = vmatpush1.msra.mxu0 0.0
        %1124 = vmatprep.subr.mxu0 0.0
        %1125 = vmatpush1.msra.mxu0 0.0
        %1126 = vmatprep.subr.mxu0 0.0
        %1127 = vmatpush1.msra.mxu0 0.0
        %1128 = vmatprep.subr.mxu0 0.0
        %1129 = vmatpush1.msra.mxu0 0.0
        %1130 = vmatprep.subr.mxu0 0.0
        %1131 = vmatpush1.msra.mxu0 0.0
        %1132 = vmatprep.subr.mxu0 0.0
        %1133 = vmatpush1.msra.mxu0 0.0
        %1134 = vmatprep.subr.mxu0 0.0
        %1135 = vmatpush1.msra.mxu0 0.0
        %1136 = vmatprep.subr.mxu0 0.0
        %1137 = vmatpush1.msra.mxu0 0.0
        %1138 = vmatprep.subr.mxu0 0.0
        %1139 = vmatpush1.msra.mxu0 0.0
        %1140 = vmatprep.subr.mxu0 0.0
        %1141 = vmatpush1.msra.mxu0 0.0
        %1142 = vmatprep.subr.mxu0 0.0
        %1143 = vmatpush1.msra.mxu0 0.0
        %1144 = vmatprep.subr.mxu0 0.0
        %1145 = vmatpush1.msra.mxu0 0.0
        %1146 = vmatprep.subr.mxu0 0.0
        %1147 = vmatpush1.msra.mxu0 0.0
        %1148 = vmatprep.subr.mxu0 0.0
        %1149 = vmatpush1.msra.mxu0 0.0
        %1150 = vmatprep.subr.mxu0 0.0
        %1151 = vmatpush1.msra.mxu0 0.0
        %1152 = vmatprep.subr.mxu0 0.0
        %1153 = vmatpush1.msra.mxu0 0.0
        %1154 = vmatprep.subr.mxu0 0.0
        %1155 = vmatpush1.msra.mxu0 0.0
        %1156 = vmatprep.mubr.f32.mxu0 0.0
        %1157 = vmatmul.mubr.f32.gmra.mrb[0].mxu0 %v1060
        %v1158 = vpop.f32.mrb[0].mxu0
        %v1159 = vadd.f32 0.0, %v1158
        %v1160 = vpop.f32.mrb[0].mxu0
        %v1161 = vadd.f32 0.0, %v1160
        %1162 = vmatprep.mubr.f32.mxu0 0.0
        %1163 = vmatmul.mubr.f32.gmra.mrb[0].mxu0 %v1063
        %v1164 = vpop.f32.mrb[0].mxu0
        %v1165 = vadd.f32 0.0, %v1164
        %v1166 = vpop.f32.mrb[0].mxu0
        %v1167 = vadd.f32 0.0, %v1166
        %1168 = vmatprep.mubr.f32.mxu0 0.0
        %1169 = vmatmul.mubr.f32.gmra.mrb[0].mxu0 %v1066
        %v1170 = vpop.f32.mrb[0].mxu0
        %v1171 = vadd.f32 0.0, %v1170
        %v1172 = vpop.f32.mrb[0].mxu0
        %v1173 = vadd.f32 0.0, %v1172
        %1174 = vdwg.mxu0
        %1175 = vmatprep.subr.mxu0 %v1042
        %1176 = vmatpush1.msra.mxu0 %v1041
        %1177 = vmatprep.subr.mxu0 %v1078
        %1178 = vmatpush1.msra.mxu0 %v1075
        %1179 = vmatprep.subr.mxu0 0.0
        %1180 = vmatpush1.msra.mxu0 0.0
        %1181 = vmatprep.subr.mxu0 0.0
        %1182 = vmatpush1.msra.mxu0 0.0
        %1183 = vmatprep.subr.mxu0 0.0
        %1184 = vmatpush1.msra.mxu0 0.0
        %1185 = vmatprep.subr.mxu0 0.0
        %1186 = vmatpush1.msra.mxu0 0.0
        %1187 = vmatprep.subr.mxu0 0.0
        %1188 = vmatpush1.msra.mxu0 0.0
        %1189 = vmatprep.subr.mxu0 0.0
        %1190 = vmatpush1.msra.mxu0 0.0
        %1191 = vmatprep.subr.mxu0 0.0
        %1192 = vmatpush1.msra.mxu0 0.0
        %1193 = vmatprep.subr.mxu0 0.0
        %1194 = vmatpush1.msra.mxu0 0.0
        %1195 = vmatprep.subr.mxu0 0.0
        %1196 = vmatpush1.msra.mxu0 0.0
        %1197 = vmatprep.subr.mxu0 0.0
        %1198 = vmatpush1.msra.mxu0 0.0
        %1199 = vmatprep.subr.mxu0 0.0
        %1200 = vmatpush1.msra.mxu0 0.0
        %1201 = vmatprep.subr.mxu0 0.0
        %1202 = vmatpush1.msra.mxu0 0.0
        %1203 = vmatprep.subr.mxu0 0.0
        %1204 = vmatpush1.msra.mxu0 0.0
        %1205 = vmatprep.subr.mxu0 0.0
        %1206 = vmatpush1.msra.mxu0 0.0
        %1207 = vmatprep.subr.mxu0 0.0
        %1208 = vmatpush1.msra.mxu0 0.0
        %1209 = vmatprep.subr.mxu0 0.0
        %1210 = vmatpush1.msra.mxu0 0.0
        %1211 = vmatprep.subr.mxu0 0.0
        %1212 = vmatpush1.msra.mxu0 0.0
        %1213 = vmatprep.subr.mxu0 0.0
        %1214 = vmatpush1.msra.mxu0 0.0
        %1215 = vmatprep.subr.mxu0 0.0
        %1216 = vmatpush1.msra.mxu0 0.0
        %1217 = vmatprep.subr.mxu0 0.0
        %1218 = vmatpush1.msra.mxu0 0.0
        %1219 = vmatprep.subr.mxu0 0.0
        %1220 = vmatpush1.msra.mxu0 0.0
        %1221 = vmatprep.subr.mxu0 0.0
        %1222 = vmatpush1.msra.mxu0 0.0
        %1223 = vmatprep.subr.mxu0 0.0
        %1224 = vmatpush1.msra.mxu0 0.0
        %1225 = vmatprep.subr.mxu0 0.0
        %1226 = vmatpush1.msra.mxu0 0.0
        %1227 = vmatprep.subr.mxu0 0.0
        %1228 = vmatpush1.msra.mxu0 0.0
        %1229 = vmatprep.subr.mxu0 0.0
        %1230 = vmatpush1.msra.mxu0 0.0
        %1231 = vmatprep.subr.mxu0 0.0
        %1232 = vmatpush1.msra.mxu0 0.0
        %1233 = vmatprep.subr.mxu0 0.0
        %1234 = vmatpush1.msra.mxu0 0.0
        %1235 = vmatprep.subr.mxu0 0.0
        %1236 = vmatpush1.msra.mxu0 0.0
        %1237 = vmatprep.subr.mxu0 0.0
        %1238 = vmatpush1.msra.mxu0 0.0
        %1239 = vmatprep.mubr.f32.mxu0 0.0
        %1240 = vmatmul.mubr.f32.gmra.mrb[0].mxu0 %v1060
        %v1241 = vpop.f32.mrb[0].mxu0
        %v1242 = vadd.f32 0.0, %v1241
        %v1243 = vpop.f32.mrb[0].mxu0
        %v1244 = vadd.f32 0.0, %v1243
        %1245 = vmatprep.mubr.f32.mxu0 0.0
        %1246 = vmatmul.mubr.f32.gmra.mrb[0].mxu0 %v1063
        %v1247 = vpop.f32.mrb[0].mxu0
        %v1248 = vadd.f32 0.0, %v1247
        %v1249 = vpop.f32.mrb[0].mxu0
        %v1250 = vadd.f32 0.0, %v1249
        %1251 = vmatprep.mubr.f32.mxu0 0.0
        %1252 = vmatmul.mubr.f32.gmra.mrb[0].mxu0 %v1066
        %v1253 = vpop.f32.mrb[0].mxu0
        %v1254 = vadd.f32 0.0, %v1253
        %v1255 = vpop.f32.mrb[0].mxu0
        %v1256 = vadd.f32 0.0, %v1255
        %1257 = vdwg.mxu0
        %1258 = vmatprep.subr.mxu0 %v1044
        %1259 = vmatpush1.msra.mxu0 %v1043
        %1260 = vmatprep.subr.mxu0 %v1084
        %1261 = vmatpush1.msra.mxu0 %v1081
        %1262 = vmatprep.subr.mxu0 0.0
        %1263 = vmatpush1.msra.mxu0 0.0
        %1264 = vmatprep.subr.mxu0 0.0
        %1265 = vmatpush1.msra.mxu0 0.0
        %1266 = vmatprep.subr.mxu0 0.0
        %1267 = vmatpush1.msra.mxu0 0.0
        %1268 = vmatprep.subr.mxu0 0.0
        %1269 = vmatpush1.msra.mxu0 0.0
        %1270 = vmatprep.subr.mxu0 0.0
        %1271 = vmatpush1.msra.mxu0 0.0
        %1272 = vmatprep.subr.mxu0 0.0
        %1273 = vmatpush1.msra.mxu0 0.0
        %1274 = vmatprep.subr.mxu0 0.0
        %1275 = vmatpush1.msra.mxu0 0.0
        %1276 = vmatprep.subr.mxu0 0.0
        %1277 = vmatpush1.msra.mxu0 0.0
        %1278 = vmatprep.subr.mxu0 0.0
        %1279 = vmatpush1.msra.mxu0 0.0
        %1280 = vmatprep.subr.mxu0 0.0
        %1281 = vmatpush1.msra.mxu0 0.0
        %1282 = vmatprep.subr.mxu0 0.0
        %1283 = vmatpush1.msra.mxu0 0.0
        %1284 = vmatprep.subr.mxu0 0.0
        %1285 = vmatpush1.msra.mxu0 0.0
        %1286 = vmatprep.subr.mxu0 0.0
        %1287 = vmatpush1.msra.mxu0 0.0
        %1288 = vmatprep.subr.mxu0 0.0
        %1289 = vmatpush1.msra.mxu0 0.0
        %1290 = vmatprep.subr.mxu0 0.0
        %1291 = vmatpush1.msra.mxu0 0.0
        %1292 = vmatprep.subr.mxu0 0.0
        %1293 = vmatpush1.msra.mxu0 0.0
        %1294 = vmatprep.subr.mxu0 0.0
        %1295 = vmatpush1.msra.mxu0 0.0
        %1296 = vmatprep.subr.mxu0 0.0
        %1297 = vmatpush1.msra.mxu0 0.0
        %1298 = vmatprep.subr.mxu0 0.0
        %1299 = vmatpush1.msra.mxu0 0.0
        %1300 = vmatprep.subr.mxu0 0.0
        %1301 = vmatpush1.msra.mxu0 0.0
        %1302 = vmatprep.subr.mxu0 0.0
        %1303 = vmatpush1.msra.mxu0 0.0
        %1304 = vmatprep.subr.mxu0 0.0
        %1305 = vmatpush1.msra.mxu0 0.0
        %1306 = vmatprep.subr.mxu0 0.0
        %1307 = vmatpush1.msra.mxu0 0.0
        %1308 = vmatprep.subr.mxu0 0.0
        %1309 = vmatpush1.msra.mxu0 0.0
        %1310 = vmatprep.subr.mxu0 0.0
        %1311 = vmatpush1.msra.mxu0 0.0
        %1312 = vmatprep.subr.mxu0 0.0
        %1313 = vmatpush1.msra.mxu0 0.0
        %1314 = vmatprep.subr.mxu0 0.0
        %1315 = vmatpush1.msra.mxu0 0.0
        %1316 = vmatprep.subr.mxu0 0.0
        %1317 = vmatpush1.msra.mxu0 0.0
        %1318 = vmatprep.subr.mxu0 0.0
        %1319 = vmatpush1.msra.mxu0 0.0
        %1320 = vmatprep.subr.mxu0 0.0
        %1321 = vmatpush1.msra.mxu0 0.0
        %1322 = vmatprep.mubr.f32.mxu0 0.0
        %1323 = vmatmul.mubr.f32.gmra.mrb[0].mxu0 %v1060
        %v1324 = vpop.f32.mrb[0].mxu0
        %v1325 = vadd.f32 0.0, %v1324
        %v1326 = vpop.f32.mrb[0].mxu0
        %v1327 = vadd.f32 0.0, %v1326
        %1328 = vmatprep.mubr.f32.mxu0 0.0
        %1329 = vmatmul.mubr.f32.gmra.mrb[0].mxu0 %v1063
        %v1330 = vpop.f32.mrb[0].mxu0
        %v1331 = vadd.f32 0.0, %v1330
        %v1332 = vpop.f32.mrb[0].mxu0
        %v1333 = vadd.f32 0.0, %v1332
        %1334 = vmatprep.mubr.f32.mxu0 0.0
        %1335 = vmatmul.mubr.f32.gmra.mrb[0].mxu0 %v1066
        %v1336 = vpop.f32.mrb[0].mxu0
        %v1337 = vadd.f32 0.0, %v1336
        %v1338 = vpop.f32.mrb[0].mxu0
        %v1339 = vadd.f32 0.0, %v1338
        %1340 = vdwg.mxu0
        %1341 = vmatprep.subr.mxu0 %v1046
        %1342 = vmatpush1.msra.mxu0 %v1045
        %1343 = vmatprep.subr.mxu0 %v1090
        %1344 = vmatpush1.msra.mxu0 %v1087
        %1345 = vmatprep.subr.mxu0 0.0
        %1346 = vmatpush1.msra.mxu0 0.0
        %1347 = vmatprep.subr.mxu0 0.0
        %1348 = vmatpush1.msra.mxu0 0.0
        %1349 = vmatprep.subr.mxu0 0.0
        %1350 = vmatpush1.msra.mxu0 0.0
        %1351 = vmatprep.subr.mxu0 0.0
        %1352 = vmatpush1.msra.mxu0 0.0
        %1353 = vmatprep.subr.mxu0 0.0
        %1354 = vmatpush1.msra.mxu0 0.0
        %1355 = vmatprep.subr.mxu0 0.0
        %1356 = vmatpush1.msra.mxu0 0.0
        %1357 = vmatprep.subr.mxu0 0.0
        %1358 = vmatpush1.msra.mxu0 0.0
        %1359 = vmatprep.subr.mxu0 0.0
        %1360 = vmatpush1.msra.mxu0 0.0
        %1361 = vmatprep.subr.mxu0 0.0
        %1362 = vmatpush1.msra.mxu0 0.0
        %1363 = vmatprep.subr.mxu0 0.0
        %1364 = vmatpush1.msra.mxu0 0.0
        %1365 = vmatprep.subr.mxu0 0.0
        %1366 = vmatpush1.msra.mxu0 0.0
        %1367 = vmatprep.subr.mxu0 0.0
        %1368 = vmatpush1.msra.mxu0 0.0
        %1369 = vmatprep.subr.mxu0 0.0
        %1370 = vmatpush1.msra.mxu0 0.0
        %1371 = vmatprep.subr.mxu0 0.0
        %1372 = vmatpush1.msra.mxu0 0.0
        %1373 = vmatprep.subr.mxu0 0.0
        %1374 = vmatpush1.msra.mxu0 0.0
        %1375 = vmatprep.subr.mxu0 0.0
        %1376 = vmatpush1.msra.mxu0 0.0
        %1377 = vmatprep.subr.mxu0 0.0
        %1378 = vmatpush1.msra.mxu0 0.0
        %1379 = vmatprep.subr.mxu0 0.0
        %1380 = vmatpush1.msra.mxu0 0.0
        %1381 = vmatprep.subr.mxu0 0.0
        %1382 = vmatpush1.msra.mxu0 0.0
        %1383 = vmatprep.subr.mxu0 0.0
        %1384 = vmatpush1.msra.mxu0 0.0
        %1385 = vmatprep.subr.mxu0 0.0
        %1386 = vmatpush1.msra.mxu0 0.0
        %1387 = vmatprep.subr.mxu0 0.0
        %1388 = vmatpush1.msra.mxu0 0.0
        %1389 = vmatprep.subr.mxu0 0.0
        %1390 = vmatpush1.msra.mxu0 0.0
        %1391 = vmatprep.subr.mxu0 0.0
        %1392 = vmatpush1.msra.mxu0 0.0
        %1393 = vmatprep.subr.mxu0 0.0
        %1394 = vmatpush1.msra.mxu0 0.0
        %1395 = vmatprep.subr.mxu0 0.0
        %1396 = vmatpush1.msra.mxu0 0.0
        %1397 = vmatprep.subr.mxu0 0.0
        %1398 = vmatpush1.msra.mxu0 0.0
        %1399 = vmatprep.subr.mxu0 0.0
        %1400 = vmatpush1.msra.mxu0 0.0
        %1401 = vmatprep.subr.mxu0 0.0
        %1402 = vmatpush1.msra.mxu0 0.0
        %1403 = vmatprep.subr.mxu0 0.0
        %1404 = vmatpush1.msra.mxu0 0.0
        %1405 = vmatprep.mubr.f32.mxu0 0.0
        %1406 = vmatmul.mubr.f32.gmra.mrb[0].mxu0 %v1060
        %v1407 = vpop.f32.mrb[0].mxu0
        %v1408 = vadd.f32 0.0, %v1407
        %v1409 = vpop.f32.mrb[0].mxu0
        %v1410 = vadd.f32 0.0, %v1409
        %1411 = vmatprep.mubr.f32.mxu0 0.0
        %1412 = vmatmul.mubr.f32.gmra.mrb[0].mxu0 %v1063
        %v1413 = vpop.f32.mrb[0].mxu0
        %v1414 = vadd.f32 0.0, %v1413
        %v1415 = vpop.f32.mrb[0].mxu0
        %v1416 = vadd.f32 0.0, %v1415
        %1417 = vmatprep.mubr.f32.mxu0 0.0
        %1418 = vmatmul.mubr.f32.gmra.mrb[0].mxu0 %v1066
        %v1419 = vpop.f32.mrb[0].mxu0
        %v1420 = vadd.f32 0.0, %v1419
        %v1421 = vpop.f32.mrb[0].mxu0
        %v1422 = vadd.f32 0.0, %v1421
        %1423 = vdwg.mxu0
        %v1424 = vld [vmem:[%s3] sm:$0xff]
        %v1425 = vld [vmem:[%s3 + $0x8] sm:$0xff]
        %v1426 = vld [vmem:[%s3 + $0x10] sm:$0xff]
        %1428 = vset.pattern.permute.xlu0 0
        %1429 = vperm.xlu0 %1428, %v1424
        %v1430 = vpop.permute.xlu0 %1429
        %1433 = vset.pattern.permute.xlu0 0
        %1434 = vperm.xlu0 %1433, %v1425
        %v1435 = vpop.permute.xlu0 %1434
        %1438 = vset.pattern.permute.xlu0 0
        %1439 = vperm.xlu0 %1438, %v1426
        %v1440 = vpop.permute.xlu0 %1439
        %v1442 = vmul.f32 %v1159, %v1430
        %v1443 = vmul.f32 %v1161, %v1430
        %v1444 = vmul.f32 %v1242, %v1430
        %v1445 = vmul.f32 %v1244, %v1430
        %v1446 = vmul.f32 %v1325, %v1430
        %v1447 = vmul.f32 %v1327, %v1430
        %v1448 = vmul.f32 %v1408, %v1430
        %v1449 = vmul.f32 %v1410, %v1430
        %v1450 = vmul.f32 %v1165, %v1435
        %v1451 = vmul.f32 %v1167, %v1435
        %v1452 = vmul.f32 %v1248, %v1435
        %v1453 = vmul.f32 %v1250, %v1435
        %v1454 = vmul.f32 %v1331, %v1435
        %v1455 = vmul.f32 %v1333, %v1435
        %v1456 = vmul.f32 %v1414, %v1435
        %v1457 = vmul.f32 %v1416, %v1435
        %v1458 = vmul.f32 %v1171, %v1440
        %v1459 = vmul.f32 %v1173, %v1440
        %v1460 = vmul.f32 %v1254, %v1440
        %v1461 = vmul.f32 %v1256, %v1440
        %v1462 = vmul.f32 %v1337, %v1440
        %v1463 = vmul.f32 %v1339, %v1440
        %v1464 = vmul.f32 %v1420, %v1440
        %v1465 = vmul.f32 %v1422, %v1440
        %v1466 = vld [vmem:[%s4] sm:$0xff]
        %v1467 = vld [vmem:[%s4 + $0x8] sm:$0xff]
        %v1468 = vld [vmem:[%s4 + $0x10] sm:$0xff]
        %1470 = vset.pattern.permute.xlu0 0
        %1471 = vperm.xlu0 %1470, %v1466
        %v1472 = vpop.permute.xlu0 %1471
        %1475 = vset.pattern.permute.xlu0 0
        %1476 = vperm.xlu0 %1475, %v1467
        %v1477 = vpop.permute.xlu0 %1476
        %1480 = vset.pattern.permute.xlu0 0
        %1481 = vperm.xlu0 %1480, %v1468
        %v1482 = vpop.permute.xlu0 %1481
        %v1484 = vadd.f32 %v1442, %v1472
        %v1485 = vadd.f32 %v1443, %v1472
        %v1486 = vadd.f32 %v1444, %v1472
        %v1487 = vadd.f32 %v1445, %v1472
        %v1488 = vadd.f32 %v1446, %v1472
        %v1489 = vadd.f32 %v1447, %v1472
        %v1490 = vadd.f32 %v1448, %v1472
        %v1491 = vadd.f32 %v1449, %v1472
        %v1492 = vadd.f32 %v1450, %v1477
        %v1493 = vadd.f32 %v1451, %v1477
        %v1494 = vadd.f32 %v1452, %v1477
        %v1495 = vadd.f32 %v1453, %v1477
        %v1496 = vadd.f32 %v1454, %v1477
        %v1497 = vadd.f32 %v1455, %v1477
        %v1498 = vadd.f32 %v1456, %v1477
        %v1499 = vadd.f32 %v1457, %v1477
        %v1500 = vadd.f32 %v1458, %v1482
        %v1501 = vadd.f32 %v1459, %v1482
        %v1502 = vadd.f32 %v1460, %v1482
        %v1503 = vadd.f32 %v1461, %v1482
        %v1504 = vadd.f32 %v1462, %v1482
        %v1505 = vadd.f32 %v1463, %v1482
        %v1506 = vadd.f32 %v1464, %v1482
        %v1507 = vadd.f32 %v1465, %v1482
        %v1508 = vmax.f32 %v1484, 0.0
        %v1509 = vmax.f32 %v1485, 0.0
        %v1510 = vmax.f32 %v1486, 0.0
        %v1511 = vmax.f32 %v1487, 0.0
        %v1512 = vmax.f32 %v1488, 0.0
        %v1513 = vmax.f32 %v1489, 0.0
        %v1514 = vmax.f32 %v1490, 0.0
        %v1515 = vmax.f32 %v1491, 0.0
        %v1516 = vmax.f32 %v1492, 0.0
        %v1517 = vmax.f32 %v1493, 0.0
        %v1518 = vmax.f32 %v1494, 0.0
        %v1519 = vmax.f32 %v1495, 0.0
        %v1520 = vmax.f32 %v1496, 0.0
        %v1521 = vmax.f32 %v1497, 0.0
        %v1522 = vmax.f32 %v1498, 0.0
        %v1523 = vmax.f32 %v1499, 0.0
        %v1524 = vmax.f32 %v1500, 0.0
        %v1525 = vmax.f32 %v1501, 0.0
        %v1526 = vmax.f32 %v1502, 0.0
        %v1527 = vmax.f32 %v1503, 0.0
        %v1528 = vmax.f32 %v1504, 0.0
        %v1529 = vmax.f32 %v1505, 0.0
        %v1530 = vmax.f32 %v1506, 0.0
        %v1531 = vmax.f32 %v1507, 0.0
        %1532 = vrot.lane.b32.xlu0 %v1508, 127
        %v1533 = vpop.permute.xlu0 %1532
        %1534 = vrot.lane.b32.xlu0 %v1516, 127
        %v1535 = vpop.permute.xlu0 %1534
        %1536 = vrot.lane.b32.xlu0 %v1524, 127
        %v1537 = vpop.permute.xlu0 %1536
        %1538 = vrot.lane.b32.xlu0 %v1509, 127
        %v1539 = vpop.permute.xlu0 %1538
        %1540 = vrot.lane.b32.xlu0 %v1517, 127
        %v1541 = vpop.permute.xlu0 %1540
        %1542 = vrot.lane.b32.xlu0 %v1525, 127
        %v1543 = vpop.permute.xlu0 %1542
        %1544 = vrot.lane.b32.xlu0 %v1510, 127
        %v1545 = vpop.permute.xlu0 %1544
        %1546 = vrot.lane.b32.xlu0 %v1518, 127
        %v1547 = vpop.permute.xlu0 %1546
        %1548 = vrot.lane.b32.xlu0 %v1526, 127
        %v1549 = vpop.permute.xlu0 %1548
        %1550 = vrot.lane.b32.xlu0 %v1511, 127
        %v1551 = vpop.permute.xlu0 %1550
        %1552 = vrot.lane.b32.xlu0 %v1519, 127
        %v1553 = vpop.permute.xlu0 %1552
        %1554 = vrot.lane.b32.xlu0 %v1527, 127
        %v1555 = vpop.permute.xlu0 %1554
        %1556 = vrot.lane.b32.xlu0 %v1512, 127
        %v1557 = vpop.permute.xlu0 %1556
        %1558 = vrot.lane.b32.xlu0 %v1520, 127
        %v1559 = vpop.permute.xlu0 %1558
        %1560 = vrot.lane.b32.xlu0 %v1528, 127
        %v1561 = vpop.permute.xlu0 %1560
        %1562 = vrot.lane.b32.xlu0 %v1513, 127
        %v1563 = vpop.permute.xlu0 %1562
        %1564 = vrot.lane.b32.xlu0 %v1521, 127
        %v1565 = vpop.permute.xlu0 %1564
        %1566 = vrot.lane.b32.xlu0 %v1529, 127
        %v1567 = vpop.permute.xlu0 %1566
        %1568 = vrot.lane.b32.xlu0 %v1514, 127
        %v1569 = vpop.permute.xlu0 %1568
        %1570 = vrot.lane.b32.xlu0 %v1522, 127
        %v1571 = vpop.permute.xlu0 %1570
        %1572 = vrot.lane.b32.xlu0 %v1530, 127
        %v1573 = vpop.permute.xlu0 %1572
        %1574 = vrot.lane.b32.xlu0 %v1515, 127
        %v1575 = vpop.permute.xlu0 %1574
        %1576 = vrot.lane.b32.xlu0 %v1523, 127
        %v1577 = vpop.permute.xlu0 %1576
        %1578 = vrot.lane.b32.xlu0 %v1531, 127
        %v1579 = vpop.permute.xlu0 %1578
        %v1580 = vsel %vm732, %v1569, %v1575
        %v1581 = vsel %vm732, %v1571, %v1577
        %v1582 = vsel %vm732, %v1573, %v1579
        %v1583 = vsel %vm732, %v1563, %v1569
        %v1584 = vsel %vm732, %v1565, %v1571
        %v1585 = vsel %vm732, %v1567, %v1573
        %v1586 = vsel %vm732, %v1557, %v1563
        %v1587 = vsel %vm732, %v1559, %v1565
        %v1588 = vsel %vm732, %v1561, %v1567
        %v1589 = vsel %vm732, %v1551, %v1557
        %v1590 = vsel %vm732, %v1553, %v1559
        %v1591 = vsel %vm732, %v1555, %v1561
        %v1592 = vsel %vm732, %v1545, %v1551
        %v1593 = vsel %vm732, %v1547, %v1553
        %v1594 = vsel %vm732, %v1549, %v1555
        %v1595 = vsel %vm732, %v1539, %v1545
        %v1596 = vsel %vm732, %v1541, %v1547
        %v1597 = vsel %vm732, %v1543, %v1549
        %v1598 = vsel %vm732, %v1533, %v1539
        %v1599 = vsel %vm732, %v1535, %v1541
        %v1600 = vsel %vm732, %v1537, %v1543
        %v1601 = vsel %vm732, %v1575, %v1533
        %v1602 = vsel %vm732, %v1577, %v1535
        %v1603 = vsel %vm732, %v1579, %v1537
        %v1604 = vmax.f32 %v1508, %v1598
        %v1605 = vmax.f32 %v1509, %v1595
        %v1606 = vmax.f32 %v1510, %v1592
        %v1607 = vmax.f32 %v1511, %v1589
        %v1608 = vmax.f32 %v1512, %v1586
        %v1609 = vmax.f32 %v1513, %v1583
        %v1610 = vmax.f32 %v1514, %v1580
        %v1611 = vmax.f32 %v1515, %v1601
        %v1612 = vmax.f32 %v1516, %v1599
        %v1613 = vmax.f32 %v1517, %v1596
        %v1614 = vmax.f32 %v1518, %v1593
        %v1615 = vmax.f32 %v1519, %v1590
        %v1616 = vmax.f32 %v1520, %v1587
        %v1617 = vmax.f32 %v1521, %v1584
        %v1618 = vmax.f32 %v1522, %v1581
        %v1619 = vmax.f32 %v1523, %v1602
        %v1620 = vmax.f32 %v1524, %v1600
        %v1621 = vmax.f32 %v1525, %v1597
        %v1622 = vmax.f32 %v1526, %v1594
        %v1623 = vmax.f32 %v1527, %v1591
        %v1624 = vmax.f32 %v1528, %v1588
        %v1625 = vmax.f32 %v1529, %v1585
        %v1626 = vmax.f32 %v1530, %v1582
        %v1627 = vmax.f32 %v1531, %v1603
        %1628 = vrot.lane.b32.xlu0 %v1604, 112
        %v1629 = vpop.permute.xlu0 %1628
        %1630 = vrot.lane.b32.xlu0 %v1612, 112
        %v1631 = vpop.permute.xlu0 %1630
        %1632 = vrot.lane.b32.xlu0 %v1620, 112
        %v1633 = vpop.permute.xlu0 %1632
        %1634 = vrot.lane.b32.xlu0 %v1605, 112
        %v1635 = vpop.permute.xlu0 %1634
        %1636 = vrot.lane.b32.xlu0 %v1613, 112
        %v1637 = vpop.permute.xlu0 %1636
        %1638 = vrot.lane.b32.xlu0 %v1621, 112
        %v1639 = vpop.permute.xlu0 %1638
        %1640 = vrot.lane.b32.xlu0 %v1606, 112
        %v1641 = vpop.permute.xlu0 %1640
        %1642 = vrot.lane.b32.xlu0 %v1614, 112
        %v1643 = vpop.permute.xlu0 %1642
        %1644 = vrot.lane.b32.xlu0 %v1622, 112
        %v1645 = vpop.permute.xlu0 %1644
        %1646 = vrot.lane.b32.xlu0 %v1607, 112
        %v1647 = vpop.permute.xlu0 %1646
        %1648 = vrot.lane.b32.xlu0 %v1615, 112
        %v1649 = vpop.permute.xlu0 %1648
        %1650 = vrot.lane.b32.xlu0 %v1623, 112
        %v1651 = vpop.permute.xlu0 %1650
        %1652 = vrot.lane.b32.xlu0 %v1608, 112
        %v1653 = vpop.permute.xlu0 %1652
        %1654 = vrot.lane.b32.xlu0 %v1616, 112
        %v1655 = vpop.permute.xlu0 %1654
        %1656 = vrot.lane.b32.xlu0 %v1624, 112
        %v1657 = vpop.permute.xlu0 %1656
        %1658 = vrot.lane.b32.xlu0 %v1609, 112
        %v1659 = vpop.permute.xlu0 %1658
        %1660 = vrot.lane.b32.xlu0 %v1617, 112
        %v1661 = vpop.permute.xlu0 %1660
        %1662 = vrot.lane.b32.xlu0 %v1625, 112
        %v1663 = vpop.permute.xlu0 %1662
        %1664 = vrot.lane.b32.xlu0 %v1610, 112
        %v1665 = vpop.permute.xlu0 %1664
        %1666 = vrot.lane.b32.xlu0 %v1618, 112
        %v1667 = vpop.permute.xlu0 %1666
        %1668 = vrot.lane.b32.xlu0 %v1626, 112
        %v1669 = vpop.permute.xlu0 %1668
        %1670 = vrot.lane.b32.xlu0 %v1611, 112
        %v1671 = vpop.permute.xlu0 %1670
        %1672 = vrot.lane.b32.xlu0 %v1619, 112
        %v1673 = vpop.permute.xlu0 %1672
        %1674 = vrot.lane.b32.xlu0 %v1627, 112
        %v1675 = vpop.permute.xlu0 %1674
        %v1676 = vsel %vm782, %v1665, %v1671
        %v1677 = vsel %vm782, %v1667, %v1673
        %v1678 = vsel %vm782, %v1669, %v1675
        %v1679 = vsel %vm782, %v1659, %v1665
        %v1680 = vsel %vm782, %v1661, %v1667
        %v1681 = vsel %vm782, %v1663, %v1669
        %v1682 = vsel %vm782, %v1653, %v1659
        %v1683 = vsel %vm782, %v1655, %v1661
        %v1684 = vsel %vm782, %v1657, %v1663
        %v1685 = vsel %vm782, %v1647, %v1653
        %v1686 = vsel %vm782, %v1649, %v1655
        %v1687 = vsel %vm782, %v1651, %v1657
        %v1688 = vsel %vm782, %v1641, %v1647
        %v1689 = vsel %vm782, %v1643, %v1649
        %v1690 = vsel %vm782, %v1645, %v1651
        %v1691 = vsel %vm782, %v1635, %v1641
        %v1692 = vsel %vm782, %v1637, %v1643
        %v1693 = vsel %vm782, %v1639, %v1645
        %v1694 = vsel %vm782, %v1629, %v1635
        %v1695 = vsel %vm782, %v1631, %v1637
        %v1696 = vsel %vm782, %v1633, %v1639
        %v1697 = vsel %vm782, %v1671, %v1629
        %v1698 = vsel %vm782, %v1673, %v1631
        %v1699 = vsel %vm782, %v1675, %v1633
        %v1700 = vmax.f32 %v1604, %v1694
        %v1701 = vmax.f32 %v1605, %v1691
        %v1702 = vmax.f32 %v1606, %v1688
        %v1703 = vmax.f32 %v1607, %v1685
        %v1704 = vmax.f32 %v1608, %v1682
        %v1705 = vmax.f32 %v1609, %v1679
        %v1706 = vmax.f32 %v1610, %v1676
        %v1707 = vmax.f32 %v1611, %v1697
        %v1708 = vmax.f32 %v1612, %v1695
        %v1709 = vmax.f32 %v1613, %v1692
        %v1710 = vmax.f32 %v1614, %v1689
        %v1711 = vmax.f32 %v1615, %v1686
        %v1712 = vmax.f32 %v1616, %v1683
        %v1713 = vmax.f32 %v1617, %v1680
        %v1714 = vmax.f32 %v1618, %v1677
        %v1715 = vmax.f32 %v1619, %v1698
        %v1716 = vmax.f32 %v1620, %v1696
        %v1717 = vmax.f32 %v1621, %v1693
        %v1718 = vmax.f32 %v1622, %v1690
        %v1719 = vmax.f32 %v1623, %v1687
        %v1720 = vmax.f32 %v1624, %v1684
        %v1721 = vmax.f32 %v1625, %v1681
        %v1722 = vmax.f32 %v1626, %v1678
        %v1723 = vmax.f32 %v1627, %v1699
        %v1724 = vld [vmem:[%s5] sm:$0xff]
        %v1725 = vld [vmem:[%s5 + $0x8] sm:$0xff]
        %v1726 = vld [vmem:[%s5 + $0x10] sm:$0xff]
        %v1727 = vld [vmem:[%s5 + $0x18] sm:$0xff]
        %v1728 = vld [vmem:[%s5 + $0x20] sm:$0xff]
        %v1729 = vld [vmem:[%s5 + $0x28] sm:$0xff]
        %v1730 = vld [vmem:[%s5 + $0x30] sm:$0xff]
        %v1731 = vld [vmem:[%s5 + $0x38] sm:$0xff]
        %v1732 = vld [vmem:[%s5 + $0x40] sm:$0x1]
        %v1733 = vld [vmem:[%s5 + $0x48] sm:$0x1]
        %v1734 = vld [vmem:[%s5 + $0x50] sm:$0x1]
        %v1735 = vld [vmem:[%s5 + $0x58] sm:$0x1]
        %v1736 = vld [vmem:[%s5 + $0x60] sm:$0x1]
        %v1737 = vld [vmem:[%s5 + $0x68] sm:$0x1]
        %v1738 = vld [vmem:[%s5 + $0x70] sm:$0x1]
        %v1739 = vld [vmem:[%s5 + $0x78] sm:$0x1]
        %1740 = vrot.lane.b32.xlu0 %v1700, 34
        %v1741 = vpop.permute.xlu0 %1740
        %1742 = vrot.lane.b32.xlu0 %v1708, 34
        %v1743 = vpop.permute.xlu0 %1742
        %1744 = vrot.lane.b32.xlu0 %v1716, 34
        %v1745 = vpop.permute.xlu0 %1744
        %1746 = vrot.lane.b32.xlu0 %v1701, 34
        %v1747 = vpop.permute.xlu0 %1746
        %1748 = vrot.lane.b32.xlu0 %v1709, 34
        %v1749 = vpop.permute.xlu0 %1748
        %1750 = vrot.lane.b32.xlu0 %v1717, 34
        %v1751 = vpop.permute.xlu0 %1750
        %1752 = vrot.lane.b32.xlu0 %v1702, 34
        %v1753 = vpop.permute.xlu0 %1752
        %1754 = vrot.lane.b32.xlu0 %v1710, 34
        %v1755 = vpop.permute.xlu0 %1754
        %1756 = vrot.lane.b32.xlu0 %v1718, 34
        %v1757 = vpop.permute.xlu0 %1756
        %1758 = vrot.lane.b32.xlu0 %v1703, 34
        %v1759 = vpop.permute.xlu0 %1758
        %1760 = vrot.lane.b32.xlu0 %v1711, 34
        %v1761 = vpop.permute.xlu0 %1760
        %1762 = vrot.lane.b32.xlu0 %v1719, 34
        %v1763 = vpop.permute.xlu0 %1762
        %1764 = vrot.lane.b32.xlu0 %v1704, 34
        %v1765 = vpop.permute.xlu0 %1764
        %1766 = vrot.lane.b32.xlu0 %v1712, 34
        %v1767 = vpop.permute.xlu0 %1766
        %1768 = vrot.lane.b32.xlu0 %v1720, 34
        %v1769 = vpop.permute.xlu0 %1768
        %1770 = vrot.lane.b32.xlu0 %v1705, 34
        %v1771 = vpop.permute.xlu0 %1770
        %1772 = vrot.lane.b32.xlu0 %v1713, 34
        %v1773 = vpop.permute.xlu0 %1772
        %1774 = vrot.lane.b32.xlu0 %v1721, 34
        %v1775 = vpop.permute.xlu0 %1774
        %1776 = vrot.lane.b32.xlu0 %v1706, 34
        %v1777 = vpop.permute.xlu0 %1776
        %1778 = vrot.lane.b32.xlu0 %v1714, 34
        %v1779 = vpop.permute.xlu0 %1778
        %1780 = vrot.lane.b32.xlu0 %v1722, 34
        %v1781 = vpop.permute.xlu0 %1780
        %1782 = vrot.lane.b32.xlu0 %v1707, 34
        %v1783 = vpop.permute.xlu0 %1782
        %1784 = vrot.lane.b32.xlu0 %v1715, 34
        %v1785 = vpop.permute.xlu0 %1784
        %1786 = vrot.lane.b32.xlu0 %v1723, 34
        %v1787 = vpop.permute.xlu0 %1786
        %vm1788 = vcmp.lt.s32.totalorder %v631, 34
        %v1789 = vsel %vm1788, %v1777, %v1783
        %v1790 = vsel %vm1788, %v1779, %v1785
        %v1791 = vsel %vm1788, %v1781, %v1787
        %v1792 = vsel %vm1788, %v1771, %v1777
        %v1793 = vsel %vm1788, %v1773, %v1779
        %v1794 = vsel %vm1788, %v1775, %v1781
        %v1795 = vsel %vm1788, %v1765, %v1771
        %v1796 = vsel %vm1788, %v1767, %v1773
        %v1797 = vsel %vm1788, %v1769, %v1775
        %v1798 = vsel %vm1788, %v1759, %v1765
        %v1799 = vsel %vm1788, %v1761, %v1767
        %v1800 = vsel %vm1788, %v1763, %v1769
        %v1801 = vsel %vm1788, %v1753, %v1759
        %v1802 = vsel %vm1788, %v1755, %v1761
        %v1803 = vsel %vm1788, %v1757, %v1763
        %v1804 = vsel %vm1788, %v1747, %v1753
        %v1805 = vsel %vm1788, %v1749, %v1755
        %v1806 = vsel %vm1788, %v1751, %v1757
        %v1807 = vsel %vm1788, %v1741, %v1747
        %v1808 = vsel %vm1788, %v1743, %v1749
        %v1809 = vsel %vm1788, %v1745, %v1751
        %v1810 = vsel %vm1788, %v1783, %v1741
        %v1811 = vsel %vm1788, %v1785, %v1743
        %v1812 = vsel %vm1788, %v1787, %v1745
        %v1813 = vlaneseq
        %v1814 = vshrl.u32 %v1813, 7
        %v1815 = vsub.s32 0, %v1814
        %v1816 = vrot.slane %v1724, %v1815
        %v1817 = vlaneseq
        %v1818 = vshrl.u32 %v1817, 7
        %v1819 = vsub.s32 0, %v1818
        %v1820 = vrot.slane %v1725, %v1819
        %v1821 = vlaneseq
        %v1822 = vshrl.u32 %v1821, 7
        %v1823 = vsub.s32 0, %v1822
        %v1824 = vrot.slane %v1726, %v1823
        %v1825 = vlaneseq
        %v1826 = vshrl.u32 %v1825, 7
        %v1827 = vsub.s32 0, %v1826
        %v1828 = vrot.slane %v1727, %v1827
        %v1829 = vlaneseq
        %v1830 = vshrl.u32 %v1829, 7
        %v1831 = vsub.s32 0, %v1830
        %v1832 = vrot.slane %v1728, %v1831
        %v1833 = vlaneseq
        %v1834 = vshrl.u32 %v1833, 7
        %v1835 = vsub.s32 0, %v1834
        %v1836 = vrot.slane %v1729, %v1835
        %v1837 = vlaneseq
        %v1838 = vshrl.u32 %v1837, 7
        %v1839 = vsub.s32 0, %v1838
        %v1840 = vrot.slane %v1730, %v1839
        %v1841 = vlaneseq
        %v1842 = vshrl.u32 %v1841, 7
        %v1843 = vsub.s32 0, %v1842
        %v1844 = vrot.slane %v1731, %v1843
        %v1845 = vmul.f32 %v1816, %v1810
        %v1846 = vmul.f32 %v1820, %v1807
        %v1847 = vmul.f32 %v1824, %v1804
        %v1848 = vmul.f32 %v1828, %v1801
        %v1849 = vmul.f32 %v1832, %v1798
        %v1850 = vmul.f32 %v1836, %v1795
        %v1851 = vmul.f32 %v1840, %v1792
        %v1852 = vmul.f32 %v1844, %v1789
        %v1853 = vmul.f32 %v1816, %v1811
        %v1854 = vmul.f32 %v1820, %v1808
        %v1855 = vmul.f32 %v1824, %v1805
        %v1856 = vmul.f32 %v1828, %v1802
        %v1857 = vmul.f32 %v1832, %v1799
        %v1858 = vmul.f32 %v1836, %v1796
        %v1859 = vmul.f32 %v1840, %v1793
        %v1860 = vmul.f32 %v1844, %v1790
        %v1861 = vmul.f32 %v1816, %v1812
        %v1862 = vmul.f32 %v1820, %v1809
        %v1863 = vmul.f32 %v1824, %v1806
        %v1864 = vmul.f32 %v1828, %v1803
        %v1865 = vmul.f32 %v1832, %v1800
        %v1866 = vmul.f32 %v1836, %v1797
        %v1867 = vmul.f32 %v1840, %v1794
        %v1868 = vmul.f32 %v1844, %v1791
        %1869 = vst [vmem:[#allocation2] sm:$0xff] %v1845
        %1870 = vst [vmem:[#allocation2 + $0x8] sm:$0xff] %v1846
        %1871 = vst [vmem:[#allocation2 + $0x10] sm:$0xff] %v1847
        %1872 = vst [vmem:[#allocation2 + $0x18] sm:$0xff] %v1848
        %1873 = vst [vmem:[#allocation2 + $0x20] sm:$0xff] %v1849
        %1874 = vst [vmem:[#allocation2 + $0x28] sm:$0xff] %v1850
        %1875 = vst [vmem:[#allocation2 + $0x30] sm:$0xff] %v1851
        %1876 = vst [vmem:[#allocation2 + $0x38] sm:$0xff] %v1852
        %1877 = vst [vmem:[#allocation2 + $0x40] sm:$0xff] %v1853
        %1878 = vst [vmem:[#allocation2 + $0x48] sm:$0xff] %v1854
        %1879 = vst [vmem:[#allocation2 + $0x50] sm:$0xff] %v1855
        %1880 = vst [vmem:[#allocation2 + $0x58] sm:$0xff] %v1856
        %1881 = vst [vmem:[#allocation2 + $0x60] sm:$0xff] %v1857
        %1882 = vst [vmem:[#allocation2 + $0x68] sm:$0xff] %v1858
        %1883 = vst [vmem:[#allocation2 + $0x70] sm:$0xff] %v1859
        %1884 = vst [vmem:[#allocation2 + $0x78] sm:$0xff] %v1860
        %1885 = vst [vmem:[#allocation2 + $0x80] sm:$0xff] %v1861
        %1886 = vst [vmem:[#allocation2 + $0x88] sm:$0xff] %v1862
        %1887 = vst [vmem:[#allocation2 + $0x90] sm:$0xff] %v1863
        %1888 = vst [vmem:[#allocation2 + $0x98] sm:$0xff] %v1864
        %1889 = vst [vmem:[#allocation2 + $0xa0] sm:$0xff] %v1865
        %1890 = vst [vmem:[#allocation2 + $0xa8] sm:$0xff] %v1866
        %1891 = vst [vmem:[#allocation2 + $0xb0] sm:$0xff] %v1867
        %1892 = vst [vmem:[#allocation2 + $0xb8] sm:$0xff] %v1868
        %1893 = vrot.lane.b32.xlu0 %v1700, 32
        %v1894 = vpop.permute.xlu0 %1893
        %1895 = vrot.lane.b32.xlu0 %v1708, 32
        %v1896 = vpop.permute.xlu0 %1895
        %1897 = vrot.lane.b32.xlu0 %v1716, 32
        %v1898 = vpop.permute.xlu0 %1897
        %1899 = vrot.lane.b32.xlu0 %v1701, 32
        %v1900 = vpop.permute.xlu0 %1899
        %1901 = vrot.lane.b32.xlu0 %v1709, 32
        %v1902 = vpop.permute.xlu0 %1901
        %1903 = vrot.lane.b32.xlu0 %v1717, 32
        %v1904 = vpop.permute.xlu0 %1903
        %1905 = vrot.lane.b32.xlu0 %v1702, 32
        %v1906 = vpop.permute.xlu0 %1905
        %1907 = vrot.lane.b32.xlu0 %v1710, 32
        %v1908 = vpop.permute.xlu0 %1907
        %1909 = vrot.lane.b32.xlu0 %v1718, 32
        %v1910 = vpop.permute.xlu0 %1909
        %1911 = vrot.lane.b32.xlu0 %v1703, 32
        %v1912 = vpop.permute.xlu0 %1911
        %1913 = vrot.lane.b32.xlu0 %v1711, 32
        %v1914 = vpop.permute.xlu0 %1913
        %1915 = vrot.lane.b32.xlu0 %v1719, 32
        %v1916 = vpop.permute.xlu0 %1915
        %1917 = vrot.lane.b32.xlu0 %v1704, 32
        %v1918 = vpop.permute.xlu0 %1917
        %1919 = vrot.lane.b32.xlu0 %v1712, 32
        %v1920 = vpop.permute.xlu0 %1919
        %1921 = vrot.lane.b32.xlu0 %v1720, 32
        %v1922 = vpop.permute.xlu0 %1921
        %1923 = vrot.lane.b32.xlu0 %v1705, 32
        %v1924 = vpop.permute.xlu0 %1923
        %1925 = vrot.lane.b32.xlu0 %v1713, 32
        %v1926 = vpop.permute.xlu0 %1925
        %1927 = vrot.lane.b32.xlu0 %v1721, 32
        %v1928 = vpop.permute.xlu0 %1927
        %1929 = vrot.lane.b32.xlu0 %v1706, 32
        %v1930 = vpop.permute.xlu0 %1929
        %1931 = vrot.lane.b32.xlu0 %v1714, 32
        %v1932 = vpop.permute.xlu0 %1931
        %1933 = vrot.lane.b32.xlu0 %v1722, 32
        %v1934 = vpop.permute.xlu0 %1933
        %1935 = vrot.lane.b32.xlu0 %v1707, 32
        %v1936 = vpop.permute.xlu0 %1935
        %1937 = vrot.lane.b32.xlu0 %v1715, 32
        %v1938 = vpop.permute.xlu0 %1937
        %1939 = vrot.lane.b32.xlu0 %v1723, 32
        %v1940 = vpop.permute.xlu0 %1939
        %vm1941 = vcmp.lt.s32.totalorder %v631, 32
        %v1942 = vsel %vm1941, %v1930, %v1936
        %v1943 = vsel %vm1941, %v1932, %v1938
        %v1944 = vsel %vm1941, %v1934, %v1940
        %v1945 = vsel %vm1941, %v1924, %v1930
        %v1946 = vsel %vm1941, %v1926, %v1932
        %v1947 = vsel %vm1941, %v1928, %v1934
        %v1948 = vsel %vm1941, %v1918, %v1924
        %v1949 = vsel %vm1941, %v1920, %v1926
        %v1950 = vsel %vm1941, %v1922, %v1928
        %v1951 = vsel %vm1941, %v1912, %v1918
        %v1952 = vsel %vm1941, %v1914, %v1920
        %v1953 = vsel %vm1941, %v1916, %v1922
        %v1954 = vsel %vm1941, %v1906, %v1912
        %v1955 = vsel %vm1941, %v1908, %v1914
        %v1956 = vsel %vm1941, %v1910, %v1916
        %v1957 = vsel %vm1941, %v1900, %v1906
        %v1958 = vsel %vm1941, %v1902, %v1908
        %v1959 = vsel %vm1941, %v1904, %v1910
        %v1960 = vsel %vm1941, %v1894, %v1900
        %v1961 = vsel %vm1941, %v1896, %v1902
        %v1962 = vsel %vm1941, %v1898, %v1904
        %v1963 = vsel %vm1941, %v1936, %v1894
        %v1964 = vsel %vm1941, %v1938, %v1896
        %v1965 = vsel %vm1941, %v1940, %v1898
        %v1966 = vlaneseq
        %v1967 = vshrl.u32 %v1966, 7
        %v1968 = vsub.s32 1, %v1967
        %v1969 = vrot.slane %v1724, %v1968
        %v1970 = vlaneseq
        %v1971 = vshrl.u32 %v1970, 7
        %v1972 = vsub.s32 1, %v1971
        %v1973 = vrot.slane %v1725, %v1972
        %v1974 = vlaneseq
        %v1975 = vshrl.u32 %v1974, 7
        %v1976 = vsub.s32 1, %v1975
        %v1977 = vrot.slane %v1726, %v1976
        %v1978 = vlaneseq
        %v1979 = vshrl.u32 %v1978, 7
        %v1980 = vsub.s32 1, %v1979
        %v1981 = vrot.slane %v1727, %v1980
        %v1982 = vlaneseq
        %v1983 = vshrl.u32 %v1982, 7
        %v1984 = vsub.s32 1, %v1983
        %v1985 = vrot.slane %v1728, %v1984
        %v1986 = vlaneseq
        %v1987 = vshrl.u32 %v1986, 7
        %v1988 = vsub.s32 1, %v1987
        %v1989 = vrot.slane %v1729, %v1988
        %v1990 = vlaneseq
        %v1991 = vshrl.u32 %v1990, 7
        %v1992 = vsub.s32 1, %v1991
        %v1993 = vrot.slane %v1730, %v1992
        %v1994 = vlaneseq
        %v1995 = vshrl.u32 %v1994, 7
        %v1996 = vsub.s32 1, %v1995
        %v1997 = vrot.slane %v1731, %v1996
        %v1998 = vmul.f32 %v1969, %v1963
        %v1999 = vmul.f32 %v1973, %v1960
        %v2000 = vmul.f32 %v1977, %v1957
        %v2001 = vmul.f32 %v1981, %v1954
        %v2002 = vmul.f32 %v1985, %v1951
        %v2003 = vmul.f32 %v1989, %v1948
        %v2004 = vmul.f32 %v1993, %v1945
        %v2005 = vmul.f32 %v1997, %v1942
        %v2006 = vmul.f32 %v1969, %v1964
        %v2007 = vmul.f32 %v1973, %v1961
        %v2008 = vmul.f32 %v1977, %v1958
        %v2009 = vmul.f32 %v1981, %v1955
        %v2010 = vmul.f32 %v1985, %v1952
        %v2011 = vmul.f32 %v1989, %v1949
        %v2012 = vmul.f32 %v1993, %v1946
        %v2013 = vmul.f32 %v1997, %v1943
        %v2014 = vmul.f32 %v1969, %v1965
        %v2015 = vmul.f32 %v1973, %v1962
        %v2016 = vmul.f32 %v1977, %v1959
        %v2017 = vmul.f32 %v1981, %v1956
        %v2018 = vmul.f32 %v1985, %v1953
        %v2019 = vmul.f32 %v1989, %v1950
        %v2020 = vmul.f32 %v1993, %v1947
        %v2021 = vmul.f32 %v1997, %v1944
        %2022 = vst [vmem:[#allocation2 + $0xc0] sm:$0xff] %v1998
        %2023 = vst [vmem:[#allocation2 + $0xc8] sm:$0xff] %v1999
        %2024 = vst [vmem:[#allocation2 + $0xd0] sm:$0xff] %v2000
        %2025 = vst [vmem:[#allocation2 + $0xd8] sm:$0xff] %v2001
        %2026 = vst [vmem:[#allocation2 + $0xe0] sm:$0xff] %v2002
        %2027 = vst [vmem:[#allocation2 + $0xe8] sm:$0xff] %v2003
        %2028 = vst [vmem:[#allocation2 + $0xf0] sm:$0xff] %v2004
        %2029 = vst [vmem:[#allocation2 + $0xf8] sm:$0xff] %v2005
        %2030 = vst [vmem:[#allocation2 + $0x100] sm:$0xff] %v2006
        %2031 = vst [vmem:[#allocation2 + $0x108] sm:$0xff] %v2007
        %2032 = vst [vmem:[#allocation2 + $0x110] sm:$0xff] %v2008
        %2033 = vst [vmem:[#allocation2 + $0x118] sm:$0xff] %v2009
        %2034 = vst [vmem:[#allocation2 + $0x120] sm:$0xff] %v2010
        %2035 = vst [vmem:[#allocation2 + $0x128] sm:$0xff] %v2011
        %2036 = vst [vmem:[#allocation2 + $0x130] sm:$0xff] %v2012
        %2037 = vst [vmem:[#allocation2 + $0x138] sm:$0xff] %v2013
        %2038 = vst [vmem:[#allocation2 + $0x140] sm:$0xff] %v2014
        %2039 = vst [vmem:[#allocation2 + $0x148] sm:$0xff] %v2015
        %2040 = vst [vmem:[#allocation2 + $0x150] sm:$0xff] %v2016
        %2041 = vst [vmem:[#allocation2 + $0x158] sm:$0xff] %v2017
        %2042 = vst [vmem:[#allocation2 + $0x160] sm:$0xff] %v2018
        %2043 = vst [vmem:[#allocation2 + $0x168] sm:$0xff] %v2019
        %2044 = vst [vmem:[#allocation2 + $0x170] sm:$0xff] %v2020
        %2045 = vst [vmem:[#allocation2 + $0x178] sm:$0xff] %v2021
        %2046 = vrot.lane.b32.xlu0 %v1700, 30
        %v2047 = vpop.permute.xlu0 %2046
        %2048 = vrot.lane.b32.xlu0 %v1708, 30
        %v2049 = vpop.permute.xlu0 %2048
        %2050 = vrot.lane.b32.xlu0 %v1716, 30
        %v2051 = vpop.permute.xlu0 %2050
        %2052 = vrot.lane.b32.xlu0 %v1701, 30
        %v2053 = vpop.permute.xlu0 %2052
        %2054 = vrot.lane.b32.xlu0 %v1709, 30
        %v2055 = vpop.permute.xlu0 %2054
        %2056 = vrot.lane.b32.xlu0 %v1717, 30
        %v2057 = vpop.permute.xlu0 %2056
        %2058 = vrot.lane.b32.xlu0 %v1702, 30
        %v2059 = vpop.permute.xlu0 %2058
        %2060 = vrot.lane.b32.xlu0 %v1710, 30
        %v2061 = vpop.permute.xlu0 %2060
        %2062 = vrot.lane.b32.xlu0 %v1718, 30
        %v2063 = vpop.permute.xlu0 %2062
        %2064 = vrot.lane.b32.xlu0 %v1703, 30
        %v2065 = vpop.permute.xlu0 %2064
        %2066 = vrot.lane.b32.xlu0 %v1711, 30
        %v2067 = vpop.permute.xlu0 %2066
        %2068 = vrot.lane.b32.xlu0 %v1719, 30
        %v2069 = vpop.permute.xlu0 %2068
        %2070 = vrot.lane.b32.xlu0 %v1704, 30
        %v2071 = vpop.permute.xlu0 %2070
        %2072 = vrot.lane.b32.xlu0 %v1712, 30
        %v2073 = vpop.permute.xlu0 %2072
        %2074 = vrot.lane.b32.xlu0 %v1720, 30
        %v2075 = vpop.permute.xlu0 %2074
        %2076 = vrot.lane.b32.xlu0 %v1705, 30
        %v2077 = vpop.permute.xlu0 %2076
        %2078 = vrot.lane.b32.xlu0 %v1713, 30
        %v2079 = vpop.permute.xlu0 %2078
        %2080 = vrot.lane.b32.xlu0 %v1721, 30
        %v2081 = vpop.permute.xlu0 %2080
        %2082 = vrot.lane.b32.xlu0 %v1706, 30
        %v2083 = vpop.permute.xlu0 %2082
        %2084 = vrot.lane.b32.xlu0 %v1714, 30
        %v2085 = vpop.permute.xlu0 %2084
        %2086 = vrot.lane.b32.xlu0 %v1722, 30
        %v2087 = vpop.permute.xlu0 %2086
        %2088 = vrot.lane.b32.xlu0 %v1707, 30
        %v2089 = vpop.permute.xlu0 %2088
        %2090 = vrot.lane.b32.xlu0 %v1715, 30
        %v2091 = vpop.permute.xlu0 %2090
        %2092 = vrot.lane.b32.xlu0 %v1723, 30
        %v2093 = vpop.permute.xlu0 %2092
        %vm2094 = vcmp.lt.s32.totalorder %v631, 30
        %v2095 = vsel %vm2094, %v2083, %v2089
        %v2096 = vsel %vm2094, %v2085, %v2091
        %v2097 = vsel %vm2094, %v2087, %v2093
        %v2098 = vsel %vm2094, %v2077, %v2083
        %v2099 = vsel %vm2094, %v2079, %v2085
        %v2100 = vsel %vm2094, %v2081, %v2087
        %v2101 = vsel %vm2094, %v2071, %v2077
        %v2102 = vsel %vm2094, %v2073, %v2079
        %v2103 = vsel %vm2094, %v2075, %v2081
        %v2104 = vsel %vm2094, %v2065, %v2071
        %v2105 = vsel %vm2094, %v2067, %v2073
        %v2106 = vsel %vm2094, %v2069, %v2075
        %v2107 = vsel %vm2094, %v2059, %v2065
        %v2108 = vsel %vm2094, %v2061, %v2067
        %v2109 = vsel %vm2094, %v2063, %v2069
        %v2110 = vsel %vm2094, %v2053, %v2059
        %v2111 = vsel %vm2094, %v2055, %v2061
        %v2112 = vsel %vm2094, %v2057, %v2063
        %v2113 = vsel %vm2094, %v2047, %v2053
        %v2114 = vsel %vm2094, %v2049, %v2055
        %v2115 = vsel %vm2094, %v2051, %v2057
        %v2116 = vsel %vm2094, %v2089, %v2047
        %v2117 = vsel %vm2094, %v2091, %v2049
        %v2118 = vsel %vm2094, %v2093, %v2051
        %v2119 = vlaneseq
        %v2120 = vshrl.u32 %v2119, 7
        %v2121 = vsub.s32 2, %v2120
        %v2122 = vrot.slane %v1724, %v2121
        %v2123 = vlaneseq
        %v2124 = vshrl.u32 %v2123, 7
        %v2125 = vsub.s32 2, %v2124
        %v2126 = vrot.slane %v1725, %v2125
        %v2127 = vlaneseq
        %v2128 = vshrl.u32 %v2127, 7
        %v2129 = vsub.s32 2, %v2128
        %v2130 = vrot.slane %v1726, %v2129
        %v2131 = vlaneseq
        %v2132 = vshrl.u32 %v2131, 7
        %v2133 = vsub.s32 2, %v2132
        %v2134 = vrot.slane %v1727, %v2133
        %v2135 = vlaneseq
        %v2136 = vshrl.u32 %v2135, 7
        %v2137 = vsub.s32 2, %v2136
        %v2138 = vrot.slane %v1728, %v2137
        %v2139 = vlaneseq
        %v2140 = vshrl.u32 %v2139, 7
        %v2141 = vsub.s32 2, %v2140
        %v2142 = vrot.slane %v1729, %v2141
        %v2143 = vlaneseq
        %v2144 = vshrl.u32 %v2143, 7
        %v2145 = vsub.s32 2, %v2144
        %v2146 = vrot.slane %v1730, %v2145
        %v2147 = vlaneseq
        %v2148 = vshrl.u32 %v2147, 7
        %v2149 = vsub.s32 2, %v2148
        %v2150 = vrot.slane %v1731, %v2149
        %v2151 = vmul.f32 %v2122, %v2116
        %v2152 = vmul.f32 %v2126, %v2113
        %v2153 = vmul.f32 %v2130, %v2110
        %v2154 = vmul.f32 %v2134, %v2107
        %v2155 = vmul.f32 %v2138, %v2104
        %v2156 = vmul.f32 %v2142, %v2101
        %v2157 = vmul.f32 %v2146, %v2098
        %v2158 = vmul.f32 %v2150, %v2095
        %v2159 = vmul.f32 %v2122, %v2117
        %v2160 = vmul.f32 %v2126, %v2114
        %v2161 = vmul.f32 %v2130, %v2111
        %v2162 = vmul.f32 %v2134, %v2108
        %v2163 = vmul.f32 %v2138, %v2105
        %v2164 = vmul.f32 %v2142, %v2102
        %v2165 = vmul.f32 %v2146, %v2099
        %v2166 = vmul.f32 %v2150, %v2096
        %v2167 = vmul.f32 %v2122, %v2118
        %v2168 = vmul.f32 %v2126, %v2115
        %v2169 = vmul.f32 %v2130, %v2112
        %v2170 = vmul.f32 %v2134, %v2109
        %v2171 = vmul.f32 %v2138, %v2106
        %v2172 = vmul.f32 %v2142, %v2103
        %v2173 = vmul.f32 %v2146, %v2100
        %v2174 = vmul.f32 %v2150, %v2097
        %2175 = vst [vmem:[#allocation2 + $0x180] sm:$0xff] %v2151
        %2176 = vst [vmem:[#allocation2 + $0x188] sm:$0xff] %v2152
        %2177 = vst [vmem:[#allocation2 + $0x190] sm:$0xff] %v2153
        %2178 = vst [vmem:[#allocation2 + $0x198] sm:$0xff] %v2154
        %2179 = vst [vmem:[#allocation2 + $0x1a0] sm:$0xff] %v2155
        %2180 = vst [vmem:[#allocation2 + $0x1a8] sm:$0xff] %v2156
        %2181 = vst [vmem:[#allocation2 + $0x1b0] sm:$0xff] %v2157
        %2182 = vst [vmem:[#allocation2 + $0x1b8] sm:$0xff] %v2158
        %2183 = vst [vmem:[#allocation2 + $0x1c0] sm:$0xff] %v2159
        %2184 = vst [vmem:[#allocation2 + $0x1c8] sm:$0xff] %v2160
        %2185 = vst [vmem:[#allocation2 + $0x1d0] sm:$0xff] %v2161
        %2186 = vst [vmem:[#allocation2 + $0x1d8] sm:$0xff] %v2162
        %2187 = vst [vmem:[#allocation2 + $0x1e0] sm:$0xff] %v2163
        %2188 = vst [vmem:[#allocation2 + $0x1e8] sm:$0xff] %v2164
        %2189 = vst [vmem:[#allocation2 + $0x1f0] sm:$0xff] %v2165
        %2190 = vst [vmem:[#allocation2 + $0x1f8] sm:$0xff] %v2166
        %2191 = vst [vmem:[#allocation2 + $0x200] sm:$0xff] %v2167
        %2192 = vst [vmem:[#allocation2 + $0x208] sm:$0xff] %v2168
        %2193 = vst [vmem:[#allocation2 + $0x210] sm:$0xff] %v2169
        %2194 = vst [vmem:[#allocation2 + $0x218] sm:$0xff] %v2170
        %2195 = vst [vmem:[#allocation2 + $0x220] sm:$0xff] %v2171
        %2196 = vst [vmem:[#allocation2 + $0x228] sm:$0xff] %v2172
        %2197 = vst [vmem:[#allocation2 + $0x230] sm:$0xff] %v2173
        %2198 = vst [vmem:[#allocation2 + $0x238] sm:$0xff] %v2174
        %2199 = vrot.lane.b32.xlu0 %v1700, 2
        %v2200 = vpop.permute.xlu0 %2199
        %2201 = vrot.lane.b32.xlu0 %v1708, 2
        %v2202 = vpop.permute.xlu0 %2201
        %2203 = vrot.lane.b32.xlu0 %v1716, 2
        %v2204 = vpop.permute.xlu0 %2203
        %2205 = vrot.lane.b32.xlu0 %v1701, 2
        %v2206 = vpop.permute.xlu0 %2205
        %2207 = vrot.lane.b32.xlu0 %v1709, 2
        %v2208 = vpop.permute.xlu0 %2207
        %2209 = vrot.lane.b32.xlu0 %v1717, 2
        %v2210 = vpop.permute.xlu0 %2209
        %2211 = vrot.lane.b32.xlu0 %v1702, 2
        %v2212 = vpop.permute.xlu0 %2211
        %2213 = vrot.lane.b32.xlu0 %v1710, 2
        %v2214 = vpop.permute.xlu0 %2213
        %2215 = vrot.lane.b32.xlu0 %v1718, 2
        %v2216 = vpop.permute.xlu0 %2215
        %2217 = vrot.lane.b32.xlu0 %v1703, 2
        %v2218 = vpop.permute.xlu0 %2217
        %2219 = vrot.lane.b32.xlu0 %v1711, 2
        %v2220 = vpop.permute.xlu0 %2219
        %2221 = vrot.lane.b32.xlu0 %v1719, 2
        %v2222 = vpop.permute.xlu0 %2221
        %2223 = vrot.lane.b32.xlu0 %v1704, 2
        %v2224 = vpop.permute.xlu0 %2223
        %2225 = vrot.lane.b32.xlu0 %v1712, 2
        %v2226 = vpop.permute.xlu0 %2225
        %2227 = vrot.lane.b32.xlu0 %v1720, 2
        %v2228 = vpop.permute.xlu0 %2227
        %2229 = vrot.lane.b32.xlu0 %v1705, 2
        %v2230 = vpop.permute.xlu0 %2229
        %2231 = vrot.lane.b32.xlu0 %v1713, 2
        %v2232 = vpop.permute.xlu0 %2231
        %2233 = vrot.lane.b32.xlu0 %v1721, 2
        %v2234 = vpop.permute.xlu0 %2233
        %2235 = vrot.lane.b32.xlu0 %v1706, 2
        %v2236 = vpop.permute.xlu0 %2235
        %2237 = vrot.lane.b32.xlu0 %v1714, 2
        %v2238 = vpop.permute.xlu0 %2237
        %2239 = vrot.lane.b32.xlu0 %v1722, 2
        %v2240 = vpop.permute.xlu0 %2239
        %2241 = vrot.lane.b32.xlu0 %v1707, 2
        %v2242 = vpop.permute.xlu0 %2241
        %2243 = vrot.lane.b32.xlu0 %v1715, 2
        %v2244 = vpop.permute.xlu0 %2243
        %2245 = vrot.lane.b32.xlu0 %v1723, 2
        %v2246 = vpop.permute.xlu0 %2245
        %vm2247 = vcmp.lt.s32.totalorder %v631, 2
        %v2248 = vsel %vm2247, %v2236, %v2242
        %v2249 = vsel %vm2247, %v2238, %v2244
        %v2250 = vsel %vm2247, %v2240, %v2246
        %v2251 = vsel %vm2247, %v2230, %v2236
        %v2252 = vsel %vm2247, %v2232, %v2238
        %v2253 = vsel %vm2247, %v2234, %v2240
        %v2254 = vsel %vm2247, %v2224, %v2230
        %v2255 = vsel %vm2247, %v2226, %v2232
        %v2256 = vsel %vm2247, %v2228, %v2234
        %v2257 = vsel %vm2247, %v2218, %v2224
        %v2258 = vsel %vm2247, %v2220, %v2226
        %v2259 = vsel %vm2247, %v2222, %v2228
        %v2260 = vsel %vm2247, %v2212, %v2218
        %v2261 = vsel %vm2247, %v2214, %v2220
        %v2262 = vsel %vm2247, %v2216, %v2222
        %v2263 = vsel %vm2247, %v2206, %v2212
        %v2264 = vsel %vm2247, %v2208, %v2214
        %v2265 = vsel %vm2247, %v2210, %v2216
        %v2266 = vsel %vm2247, %v2200, %v2206
        %v2267 = vsel %vm2247, %v2202, %v2208
        %v2268 = vsel %vm2247, %v2204, %v2210
        %v2269 = vsel %vm2247, %v2242, %v2200
        %v2270 = vsel %vm2247, %v2244, %v2202
        %v2271 = vsel %vm2247, %v2246, %v2204
        %v2272 = vlaneseq
        %v2273 = vshrl.u32 %v2272, 7
        %v2274 = vsub.s32 3, %v2273
        %v2275 = vrot.slane %v1724, %v2274
        %v2276 = vlaneseq
        %v2277 = vshrl.u32 %v2276, 7
        %v2278 = vsub.s32 3, %v2277
        %v2279 = vrot.slane %v1725, %v2278
        %v2280 = vlaneseq
        %v2281 = vshrl.u32 %v2280, 7
        %v2282 = vsub.s32 3, %v2281
        %v2283 = vrot.slane %v1726, %v2282
        %v2284 = vlaneseq
        %v2285 = vshrl.u32 %v2284, 7
        %v2286 = vsub.s32 3, %v2285
        %v2287 = vrot.slane %v1727, %v2286
        %v2288 = vlaneseq
        %v2289 = vshrl.u32 %v2288, 7
        %v2290 = vsub.s32 3, %v2289
        %v2291 = vrot.slane %v1728, %v2290
        %v2292 = vlaneseq
        %v2293 = vshrl.u32 %v2292, 7
        %v2294 = vsub.s32 3, %v2293
        %v2295 = vrot.slane %v1729, %v2294
        %v2296 = vlaneseq
        %v2297 = vshrl.u32 %v2296, 7
        %v2298 = vsub.s32 3, %v2297
        %v2299 = vrot.slane %v1730, %v2298
        %v2300 = vlaneseq
        %v2301 = vshrl.u32 %v2300, 7
        %v2302 = vsub.s32 3, %v2301
        %v2303 = vrot.slane %v1731, %v2302
        %v2304 = vmul.f32 %v2275, %v2269
        %v2305 = vmul.f32 %v2279, %v2266
        %v2306 = vmul.f32 %v2283, %v2263
        %v2307 = vmul.f32 %v2287, %v2260
        %v2308 = vmul.f32 %v2291, %v2257
        %v2309 = vmul.f32 %v2295, %v2254
        %v2310 = vmul.f32 %v2299, %v2251
        %v2311 = vmul.f32 %v2303, %v2248
        %v2312 = vmul.f32 %v2275, %v2270
        %v2313 = vmul.f32 %v2279, %v2267
        %v2314 = vmul.f32 %v2283, %v2264
        %v2315 = vmul.f32 %v2287, %v2261
        %v2316 = vmul.f32 %v2291, %v2258
        %v2317 = vmul.f32 %v2295, %v2255
        %v2318 = vmul.f32 %v2299, %v2252
        %v2319 = vmul.f32 %v2303, %v2249
        %v2320 = vmul.f32 %v2275, %v2271
        %v2321 = vmul.f32 %v2279, %v2268
        %v2322 = vmul.f32 %v2283, %v2265
        %v2323 = vmul.f32 %v2287, %v2262
        %v2324 = vmul.f32 %v2291, %v2259
        %v2325 = vmul.f32 %v2295, %v2256
        %v2326 = vmul.f32 %v2299, %v2253
        %v2327 = vmul.f32 %v2303, %v2250
        %2328 = vst [vmem:[#allocation2 + $0x240] sm:$0xff] %v2304
        %2329 = vst [vmem:[#allocation2 + $0x248] sm:$0xff] %v2305
        %2330 = vst [vmem:[#allocation2 + $0x250] sm:$0xff] %v2306
        %2331 = vst [vmem:[#allocation2 + $0x258] sm:$0xff] %v2307
        %2332 = vst [vmem:[#allocation2 + $0x260] sm:$0xff] %v2308
        %2333 = vst [vmem:[#allocation2 + $0x268] sm:$0xff] %v2309
        %2334 = vst [vmem:[#allocation2 + $0x270] sm:$0xff] %v2310
        %2335 = vst [vmem:[#allocation2 + $0x278] sm:$0xff] %v2311
        %2336 = vst [vmem:[#allocation2 + $0x280] sm:$0xff] %v2312
        %2337 = vst [vmem:[#allocation2 + $0x288] sm:$0xff] %v2313
        %2338 = vst [vmem:[#allocation2 + $0x290] sm:$0xff] %v2314
        %2339 = vst [vmem:[#allocation2 + $0x298] sm:$0xff] %v2315
        %2340 = vst [vmem:[#allocation2 + $0x2a0] sm:$0xff] %v2316
        %2341 = vst [vmem:[#allocation2 + $0x2a8] sm:$0xff] %v2317
        %2342 = vst [vmem:[#allocation2 + $0x2b0] sm:$0xff] %v2318
        %2343 = vst [vmem:[#allocation2 + $0x2b8] sm:$0xff] %v2319
        %2344 = vst [vmem:[#allocation2 + $0x2c0] sm:$0xff] %v2320
        %2345 = vst [vmem:[#allocation2 + $0x2c8] sm:$0xff] %v2321
        %2346 = vst [vmem:[#allocation2 + $0x2d0] sm:$0xff] %v2322
        %2347 = vst [vmem:[#allocation2 + $0x2d8] sm:$0xff] %v2323
        %2348 = vst [vmem:[#allocation2 + $0x2e0] sm:$0xff] %v2324
        %2349 = vst [vmem:[#allocation2 + $0x2e8] sm:$0xff] %v2325
        %2350 = vst [vmem:[#allocation2 + $0x2f0] sm:$0xff] %v2326
        %2351 = vst [vmem:[#allocation2 + $0x2f8] sm:$0xff] %v2327
        %v2352 = vlaneseq
        %v2353 = vshrl.u32 %v2352, 7
        %v2354 = vsub.s32 4, %v2353
        %v2355 = vrot.slane %v1724, %v2354
        %v2356 = vlaneseq
        %v2357 = vshrl.u32 %v2356, 7
        %v2358 = vsub.s32 4, %v2357
        %v2359 = vrot.slane %v1725, %v2358
        %v2360 = vlaneseq
        %v2361 = vshrl.u32 %v2360, 7
        %v2362 = vsub.s32 4, %v2361
        %v2363 = vrot.slane %v1726, %v2362
        %v2364 = vlaneseq
        %v2365 = vshrl.u32 %v2364, 7
        %v2366 = vsub.s32 4, %v2365
        %v2367 = vrot.slane %v1727, %v2366
        %v2368 = vlaneseq
        %v2369 = vshrl.u32 %v2368, 7
        %v2370 = vsub.s32 4, %v2369
        %v2371 = vrot.slane %v1728, %v2370
        %v2372 = vlaneseq
        %v2373 = vshrl.u32 %v2372, 7
        %v2374 = vsub.s32 4, %v2373
        %v2375 = vrot.slane %v1729, %v2374
        %v2376 = vlaneseq
        %v2377 = vshrl.u32 %v2376, 7
        %v2378 = vsub.s32 4, %v2377
        %v2379 = vrot.slane %v1730, %v2378
        %v2380 = vlaneseq
        %v2381 = vshrl.u32 %v2380, 7
        %v2382 = vsub.s32 4, %v2381
        %v2383 = vrot.slane %v1731, %v2382
        %v2384 = vmul.f32 %v2355, %v1700
        %v2385 = vmul.f32 %v2359, %v1701
        %v2386 = vmul.f32 %v2363, %v1702
        %v2387 = vmul.f32 %v2367, %v1703
        %v2388 = vmul.f32 %v2371, %v1704
        %v2389 = vmul.f32 %v2375, %v1705
        %v2390 = vmul.f32 %v2379, %v1706
        %v2391 = vmul.f32 %v2383, %v1707
        %v2392 = vmul.f32 %v2355, %v1708
        %v2393 = vmul.f32 %v2359, %v1709
        %v2394 = vmul.f32 %v2363, %v1710
        %v2395 = vmul.f32 %v2367, %v1711
        %v2396 = vmul.f32 %v2371, %v1712
        %v2397 = vmul.f32 %v2375, %v1713
        %v2398 = vmul.f32 %v2379, %v1714
        %v2399 = vmul.f32 %v2383, %v1715
        %v2400 = vmul.f32 %v2355, %v1716
        %v2401 = vmul.f32 %v2359, %v1717
        %v2402 = vmul.f32 %v2363, %v1718
        %v2403 = vmul.f32 %v2367, %v1719
        %v2404 = vmul.f32 %v2371, %v1720
        %v2405 = vmul.f32 %v2375, %v1721
        %v2406 = vmul.f32 %v2379, %v1722
        %v2407 = vmul.f32 %v2383, %v1723
        %2408 = vst [vmem:[#allocation2 + $0x300] sm:$0xff] %v2384
        %2409 = vst [vmem:[#allocation2 + $0x308] sm:$0xff] %v2385
        %2410 = vst [vmem:[#allocation2 + $0x310] sm:$0xff] %v2386
        %2411 = vst [vmem:[#allocation2 + $0x318] sm:$0xff] %v2387
        %2412 = vst [vmem:[#allocation2 + $0x320] sm:$0xff] %v2388
        %2413 = vst [vmem:[#allocation2 + $0x328] sm:$0xff] %v2389
        %2414 = vst [vmem:[#allocation2 + $0x330] sm:$0xff] %v2390
        %2415 = vst [vmem:[#allocation2 + $0x338] sm:$0xff] %v2391
        %2416 = vst [vmem:[#allocation2 + $0x340] sm:$0xff] %v2392
        %2417 = vst [vmem:[#allocation2 + $0x348] sm:$0xff] %v2393
        %2418 = vst [vmem:[#allocation2 + $0x350] sm:$0xff] %v2394
        %2419 = vst [vmem:[#allocation2 + $0x358] sm:$0xff] %v2395
        %2420 = vst [vmem:[#allocation2 + $0x360] sm:$0xff] %v2396
        %2421 = vst [vmem:[#allocation2 + $0x368] sm:$0xff] %v2397
        %2422 = vst [vmem:[#allocation2 + $0x370] sm:$0xff] %v2398
        %2423 = vst [vmem:[#allocation2 + $0x378] sm:$0xff] %v2399
        %2424 = vst [vmem:[#allocation2 + $0x380] sm:$0xff] %v2400
        %2425 = vst [vmem:[#allocation2 + $0x388] sm:$0xff] %v2401
        %2426 = vst [vmem:[#allocation2 + $0x390] sm:$0xff] %v2402
        %2427 = vst [vmem:[#allocation2 + $0x398] sm:$0xff] %v2403
        %2428 = vst [vmem:[#allocation2 + $0x3a0] sm:$0xff] %v2404
        %2429 = vst [vmem:[#allocation2 + $0x3a8] sm:$0xff] %v2405
        %2430 = vst [vmem:[#allocation2 + $0x3b0] sm:$0xff] %v2406
        %2431 = vst [vmem:[#allocation2 + $0x3b8] sm:$0xff] %v2407
        %2432 = vrot.lane.b32.xlu0 %v1700, 126
        %v2433 = vpop.permute.xlu0 %2432
        %2434 = vrot.lane.b32.xlu0 %v1708, 126
        %v2435 = vpop.permute.xlu0 %2434
        %2436 = vrot.lane.b32.xlu0 %v1716, 126
        %v2437 = vpop.permute.xlu0 %2436
        %2438 = vrot.lane.b32.xlu0 %v1701, 126
        %v2439 = vpop.permute.xlu0 %2438
        %2440 = vrot.lane.b32.xlu0 %v1709, 126
        %v2441 = vpop.permute.xlu0 %2440
        %2442 = vrot.lane.b32.xlu0 %v1717, 126
        %v2443 = vpop.permute.xlu0 %2442
        %2444 = vrot.lane.b32.xlu0 %v1702, 126
        %v2445 = vpop.permute.xlu0 %2444
        %2446 = vrot.lane.b32.xlu0 %v1710, 126
        %v2447 = vpop.permute.xlu0 %2446
        %2448 = vrot.lane.b32.xlu0 %v1718, 126
        %v2449 = vpop.permute.xlu0 %2448
        %2450 = vrot.lane.b32.xlu0 %v1703, 126
        %v2451 = vpop.permute.xlu0 %2450
        %2452 = vrot.lane.b32.xlu0 %v1711, 126
        %v2453 = vpop.permute.xlu0 %2452
        %2454 = vrot.lane.b32.xlu0 %v1719, 126
        %v2455 = vpop.permute.xlu0 %2454
        %2456 = vrot.lane.b32.xlu0 %v1704, 126
        %v2457 = vpop.permute.xlu0 %2456
        %2458 = vrot.lane.b32.xlu0 %v1712, 126
        %v2459 = vpop.permute.xlu0 %2458
        %2460 = vrot.lane.b32.xlu0 %v1720, 126
        %v2461 = vpop.permute.xlu0 %2460
        %2462 = vrot.lane.b32.xlu0 %v1705, 126
        %v2463 = vpop.permute.xlu0 %2462
        %2464 = vrot.lane.b32.xlu0 %v1713, 126
        %v2465 = vpop.permute.xlu0 %2464
        %2466 = vrot.lane.b32.xlu0 %v1721, 126
        %v2467 = vpop.permute.xlu0 %2466
        %2468 = vrot.lane.b32.xlu0 %v1706, 126
        %v2469 = vpop.permute.xlu0 %2468
        %2470 = vrot.lane.b32.xlu0 %v1714, 126
        %v2471 = vpop.permute.xlu0 %2470
        %2472 = vrot.lane.b32.xlu0 %v1722, 126
        %v2473 = vpop.permute.xlu0 %2472
        %2474 = vrot.lane.b32.xlu0 %v1707, 126
        %v2475 = vpop.permute.xlu0 %2474
        %2476 = vrot.lane.b32.xlu0 %v1715, 126
        %v2477 = vpop.permute.xlu0 %2476
        %2478 = vrot.lane.b32.xlu0 %v1723, 126
        %v2479 = vpop.permute.xlu0 %2478
        %vm2480 = vcmp.lt.s32.totalorder %v631, 126
        %v2481 = vsel %vm2480, %v2469, %v2475
        %v2482 = vsel %vm2480, %v2471, %v2477
        %v2483 = vsel %vm2480, %v2473, %v2479
        %v2484 = vsel %vm2480, %v2463, %v2469
        %v2485 = vsel %vm2480, %v2465, %v2471
        %v2486 = vsel %vm2480, %v2467, %v2473
        %v2487 = vsel %vm2480, %v2457, %v2463
        %v2488 = vsel %vm2480, %v2459, %v2465
        %v2489 = vsel %vm2480, %v2461, %v2467
        %v2490 = vsel %vm2480, %v2451, %v2457
        %v2491 = vsel %vm2480, %v2453, %v2459
        %v2492 = vsel %vm2480, %v2455, %v2461
        %v2493 = vsel %vm2480, %v2445, %v2451
        %v2494 = vsel %vm2480, %v2447, %v2453
        %v2495 = vsel %vm2480, %v2449, %v2455
        %v2496 = vsel %vm2480, %v2439, %v2445
        %v2497 = vsel %vm2480, %v2441, %v2447
        %v2498 = vsel %vm2480, %v2443, %v2449
        %v2499 = vsel %vm2480, %v2433, %v2439
        %v2500 = vsel %vm2480, %v2435, %v2441
        %v2501 = vsel %vm2480, %v2437, %v2443
        %v2502 = vsel %vm2480, %v2475, %v2433
        %v2503 = vsel %vm2480, %v2477, %v2435
        %v2504 = vsel %vm2480, %v2479, %v2437
        %v2505 = vlaneseq
        %v2506 = vshrl.u32 %v2505, 7
        %v2507 = vsub.s32 5, %v2506
        %v2508 = vrot.slane %v1724, %v2507
        %v2509 = vlaneseq
        %v2510 = vshrl.u32 %v2509, 7
        %v2511 = vsub.s32 5, %v2510
        %v2512 = vrot.slane %v1725, %v2511
        %v2513 = vlaneseq
        %v2514 = vshrl.u32 %v2513, 7
        %v2515 = vsub.s32 5, %v2514
        %v2516 = vrot.slane %v1726, %v2515
        %v2517 = vlaneseq
        %v2518 = vshrl.u32 %v2517, 7
        %v2519 = vsub.s32 5, %v2518
        %v2520 = vrot.slane %v1727, %v2519
        %v2521 = vlaneseq
        %v2522 = vshrl.u32 %v2521, 7
        %v2523 = vsub.s32 5, %v2522
        %v2524 = vrot.slane %v1728, %v2523
        %v2525 = vlaneseq
        %v2526 = vshrl.u32 %v2525, 7
        %v2527 = vsub.s32 5, %v2526
        %v2528 = vrot.slane %v1729, %v2527
        %v2529 = vlaneseq
        %v2530 = vshrl.u32 %v2529, 7
        %v2531 = vsub.s32 5, %v2530
        %v2532 = vrot.slane %v1730, %v2531
        %v2533 = vlaneseq
        %v2534 = vshrl.u32 %v2533, 7
        %v2535 = vsub.s32 5, %v2534
        %v2536 = vrot.slane %v1731, %v2535
        %v2537 = vmul.f32 %v2508, %v2499
        %v2538 = vmul.f32 %v2512, %v2496
        %v2539 = vmul.f32 %v2516, %v2493
        %v2540 = vmul.f32 %v2520, %v2490
        %v2541 = vmul.f32 %v2524, %v2487
        %v2542 = vmul.f32 %v2528, %v2484
        %v2543 = vmul.f32 %v2532, %v2481
        %v2544 = vmul.f32 %v2536, %v2502
        %v2545 = vmul.f32 %v2508, %v2500
        %v2546 = vmul.f32 %v2512, %v2497
        %v2547 = vmul.f32 %v2516, %v2494
        %v2548 = vmul.f32 %v2520, %v2491
        %v2549 = vmul.f32 %v2524, %v2488
        %v2550 = vmul.f32 %v2528, %v2485
        %v2551 = vmul.f32 %v2532, %v2482
        %v2552 = vmul.f32 %v2536, %v2503
        %v2553 = vmul.f32 %v2508, %v2501
        %v2554 = vmul.f32 %v2512, %v2498
        %v2555 = vmul.f32 %v2516, %v2495
        %v2556 = vmul.f32 %v2520, %v2492
        %v2557 = vmul.f32 %v2524, %v2489
        %v2558 = vmul.f32 %v2528, %v2486
        %v2559 = vmul.f32 %v2532, %v2483
        %v2560 = vmul.f32 %v2536, %v2504
        %2561 = vst [vmem:[#allocation2 + $0x3c0] sm:$0xff] %v2537
        %2562 = vst [vmem:[#allocation2 + $0x3c8] sm:$0xff] %v2538
        %2563 = vst [vmem:[#allocation2 + $0x3d0] sm:$0xff] %v2539
        %2564 = vst [vmem:[#allocation2 + $0x3d8] sm:$0xff] %v2540
        %2565 = vst [vmem:[#allocation2 + $0x3e0] sm:$0xff] %v2541
        %2566 = vst [vmem:[#allocation2 + $0x3e8] sm:$0xff] %v2542
        %2567 = vst [vmem:[#allocation2 + $0x3f0] sm:$0xff] %v2543
        %2568 = vst [vmem:[#allocation2 + $0x3f8] sm:$0xff] %v2544
        %2569 = vst [vmem:[#allocation2 + $0x400] sm:$0xff] %v2545
        %2570 = vst [vmem:[#allocation2 + $0x408] sm:$0xff] %v2546
        %2571 = vst [vmem:[#allocation2 + $0x410] sm:$0xff] %v2547
        %2572 = vst [vmem:[#allocation2 + $0x418] sm:$0xff] %v2548
        %2573 = vst [vmem:[#allocation2 + $0x420] sm:$0xff] %v2549
        %2574 = vst [vmem:[#allocation2 + $0x428] sm:$0xff] %v2550
        %2575 = vst [vmem:[#allocation2 + $0x430] sm:$0xff] %v2551
        %2576 = vst [vmem:[#allocation2 + $0x438] sm:$0xff] %v2552
        %2577 = vst [vmem:[#allocation2 + $0x440] sm:$0xff] %v2553
        %2578 = vst [vmem:[#allocation2 + $0x448] sm:$0xff] %v2554
        %2579 = vst [vmem:[#allocation2 + $0x450] sm:$0xff] %v2555
        %2580 = vst [vmem:[#allocation2 + $0x458] sm:$0xff] %v2556
        %2581 = vst [vmem:[#allocation2 + $0x460] sm:$0xff] %v2557
        %2582 = vst [vmem:[#allocation2 + $0x468] sm:$0xff] %v2558
        %2583 = vst [vmem:[#allocation2 + $0x470] sm:$0xff] %v2559
        %2584 = vst [vmem:[#allocation2 + $0x478] sm:$0xff] %v2560
        %2585 = vrot.lane.b32.xlu0 %v1700, 98
        %v2586 = vpop.permute.xlu0 %2585
        %2587 = vrot.lane.b32.xlu0 %v1708, 98
        %v2588 = vpop.permute.xlu0 %2587
        %2589 = vrot.lane.b32.xlu0 %v1716, 98
        %v2590 = vpop.permute.xlu0 %2589
        %2591 = vrot.lane.b32.xlu0 %v1701, 98
        %v2592 = vpop.permute.xlu0 %2591
        %2593 = vrot.lane.b32.xlu0 %v1709, 98
        %v2594 = vpop.permute.xlu0 %2593
        %2595 = vrot.lane.b32.xlu0 %v1717, 98
        %v2596 = vpop.permute.xlu0 %2595
        %2597 = vrot.lane.b32.xlu0 %v1702, 98
        %v2598 = vpop.permute.xlu0 %2597
        %2599 = vrot.lane.b32.xlu0 %v1710, 98
        %v2600 = vpop.permute.xlu0 %2599
        %2601 = vrot.lane.b32.xlu0 %v1718, 98
        %v2602 = vpop.permute.xlu0 %2601
        %2603 = vrot.lane.b32.xlu0 %v1703, 98
        %v2604 = vpop.permute.xlu0 %2603
        %2605 = vrot.lane.b32.xlu0 %v1711, 98
        %v2606 = vpop.permute.xlu0 %2605
        %2607 = vrot.lane.b32.xlu0 %v1719, 98
        %v2608 = vpop.permute.xlu0 %2607
        %2609 = vrot.lane.b32.xlu0 %v1704, 98
        %v2610 = vpop.permute.xlu0 %2609
        %2611 = vrot.lane.b32.xlu0 %v1712, 98
        %v2612 = vpop.permute.xlu0 %2611
        %2613 = vrot.lane.b32.xlu0 %v1720, 98
        %v2614 = vpop.permute.xlu0 %2613
        %2615 = vrot.lane.b32.xlu0 %v1705, 98
        %v2616 = vpop.permute.xlu0 %2615
        %2617 = vrot.lane.b32.xlu0 %v1713, 98
        %v2618 = vpop.permute.xlu0 %2617
        %2619 = vrot.lane.b32.xlu0 %v1721, 98
        %v2620 = vpop.permute.xlu0 %2619
        %2621 = vrot.lane.b32.xlu0 %v1706, 98
        %v2622 = vpop.permute.xlu0 %2621
        %2623 = vrot.lane.b32.xlu0 %v1714, 98
        %v2624 = vpop.permute.xlu0 %2623
        %2625 = vrot.lane.b32.xlu0 %v1722, 98
        %v2626 = vpop.permute.xlu0 %2625
        %2627 = vrot.lane.b32.xlu0 %v1707, 98
        %v2628 = vpop.permute.xlu0 %2627
        %2629 = vrot.lane.b32.xlu0 %v1715, 98
        %v2630 = vpop.permute.xlu0 %2629
        %2631 = vrot.lane.b32.xlu0 %v1723, 98
        %v2632 = vpop.permute.xlu0 %2631
        %vm2633 = vcmp.lt.s32.totalorder %v631, 98
        %v2634 = vsel %vm2633, %v2622, %v2628
        %v2635 = vsel %vm2633, %v2624, %v2630
        %v2636 = vsel %vm2633, %v2626, %v2632
        %v2637 = vsel %vm2633, %v2616, %v2622
        %v2638 = vsel %vm2633, %v2618, %v2624
        %v2639 = vsel %vm2633, %v2620, %v2626
        %v2640 = vsel %vm2633, %v2610, %v2616
        %v2641 = vsel %vm2633, %v2612, %v2618
        %v2642 = vsel %vm2633, %v2614, %v2620
        %v2643 = vsel %vm2633, %v2604, %v2610
        %v2644 = vsel %vm2633, %v2606, %v2612
        %v2645 = vsel %vm2633, %v2608, %v2614
        %v2646 = vsel %vm2633, %v2598, %v2604
        %v2647 = vsel %vm2633, %v2600, %v2606
        %v2648 = vsel %vm2633, %v2602, %v2608
        %v2649 = vsel %vm2633, %v2592, %v2598
        %v2650 = vsel %vm2633, %v2594, %v2600
        %v2651 = vsel %vm2633, %v2596, %v2602
        %v2652 = vsel %vm2633, %v2586, %v2592
        %v2653 = vsel %vm2633, %v2588, %v2594
        %v2654 = vsel %vm2633, %v2590, %v2596
        %v2655 = vsel %vm2633, %v2628, %v2586
        %v2656 = vsel %vm2633, %v2630, %v2588
        %v2657 = vsel %vm2633, %v2632, %v2590
        %v2658 = vlaneseq
        %v2659 = vshrl.u32 %v2658, 7
        %v2660 = vsub.s32 6, %v2659
        %v2661 = vrot.slane %v1724, %v2660
        %v2662 = vlaneseq
        %v2663 = vshrl.u32 %v2662, 7
        %v2664 = vsub.s32 6, %v2663
        %v2665 = vrot.slane %v1725, %v2664
        %v2666 = vlaneseq
        %v2667 = vshrl.u32 %v2666, 7
        %v2668 = vsub.s32 6, %v2667
        %v2669 = vrot.slane %v1726, %v2668
        %v2670 = vlaneseq
        %v2671 = vshrl.u32 %v2670, 7
        %v2672 = vsub.s32 6, %v2671
        %v2673 = vrot.slane %v1727, %v2672
        %v2674 = vlaneseq
        %v2675 = vshrl.u32 %v2674, 7
        %v2676 = vsub.s32 6, %v2675
        %v2677 = vrot.slane %v1728, %v2676
        %v2678 = vlaneseq
        %v2679 = vshrl.u32 %v2678, 7
        %v2680 = vsub.s32 6, %v2679
        %v2681 = vrot.slane %v1729, %v2680
        %v2682 = vlaneseq
        %v2683 = vshrl.u32 %v2682, 7
        %v2684 = vsub.s32 6, %v2683
        %v2685 = vrot.slane %v1730, %v2684
        %v2686 = vlaneseq
        %v2687 = vshrl.u32 %v2686, 7
        %v2688 = vsub.s32 6, %v2687
        %v2689 = vrot.slane %v1731, %v2688
        %v2690 = vmul.f32 %v2661, %v2652
        %v2691 = vmul.f32 %v2665, %v2649
        %v2692 = vmul.f32 %v2669, %v2646
        %v2693 = vmul.f32 %v2673, %v2643
        %v2694 = vmul.f32 %v2677, %v2640
        %v2695 = vmul.f32 %v2681, %v2637
        %v2696 = vmul.f32 %v2685, %v2634
        %v2697 = vmul.f32 %v2689, %v2655
        %v2698 = vmul.f32 %v2661, %v2653
        %v2699 = vmul.f32 %v2665, %v2650
        %v2700 = vmul.f32 %v2669, %v2647
        %v2701 = vmul.f32 %v2673, %v2644
        %v2702 = vmul.f32 %v2677, %v2641
        %v2703 = vmul.f32 %v2681, %v2638
        %v2704 = vmul.f32 %v2685, %v2635
        %v2705 = vmul.f32 %v2689, %v2656
        %v2706 = vmul.f32 %v2661, %v2654
        %v2707 = vmul.f32 %v2665, %v2651
        %v2708 = vmul.f32 %v2669, %v2648
        %v2709 = vmul.f32 %v2673, %v2645
        %v2710 = vmul.f32 %v2677, %v2642
        %v2711 = vmul.f32 %v2681, %v2639
        %v2712 = vmul.f32 %v2685, %v2636
        %v2713 = vmul.f32 %v2689, %v2657
        %2714 = vst [vmem:[#allocation2 + $0x480] sm:$0xff] %v2690
        %2715 = vst [vmem:[#allocation2 + $0x488] sm:$0xff] %v2691
        %2716 = vst [vmem:[#allocation2 + $0x490] sm:$0xff] %v2692
        %2717 = vst [vmem:[#allocation2 + $0x498] sm:$0xff] %v2693
        %2718 = vst [vmem:[#allocation2 + $0x4a0] sm:$0xff] %v2694
        %2719 = vst [vmem:[#allocation2 + $0x4a8] sm:$0xff] %v2695
        %2720 = vst [vmem:[#allocation2 + $0x4b0] sm:$0xff] %v2696
        %2721 = vst [vmem:[#allocation2 + $0x4b8] sm:$0xff] %v2697
        %2722 = vst [vmem:[#allocation2 + $0x4c0] sm:$0xff] %v2698
        %2723 = vst [vmem:[#allocation2 + $0x4c8] sm:$0xff] %v2699
        %2724 = vst [vmem:[#allocation2 + $0x4d0] sm:$0xff] %v2700
        %2725 = vst [vmem:[#allocation2 + $0x4d8] sm:$0xff] %v2701
        %2726 = vst [vmem:[#allocation2 + $0x4e0] sm:$0xff] %v2702
        %2727 = vst [vmem:[#allocation2 + $0x4e8] sm:$0xff] %v2703
        %2728 = vst [vmem:[#allocation2 + $0x4f0] sm:$0xff] %v2704
        %2729 = vst [vmem:[#allocation2 + $0x4f8] sm:$0xff] %v2705
        %2730 = vst [vmem:[#allocation2 + $0x500] sm:$0xff] %v2706
        %2731 = vst [vmem:[#allocation2 + $0x508] sm:$0xff] %v2707
        %2732 = vst [vmem:[#allocation2 + $0x510] sm:$0xff] %v2708
        %2733 = vst [vmem:[#allocation2 + $0x518] sm:$0xff] %v2709
        %2734 = vst [vmem:[#allocation2 + $0x520] sm:$0xff] %v2710
        %2735 = vst [vmem:[#allocation2 + $0x528] sm:$0xff] %v2711
        %2736 = vst [vmem:[#allocation2 + $0x530] sm:$0xff] %v2712
        %2737 = vst [vmem:[#allocation2 + $0x538] sm:$0xff] %v2713
        %2738 = vrot.lane.b32.xlu0 %v1700, 96
        %v2739 = vpop.permute.xlu0 %2738
        %2740 = vrot.lane.b32.xlu0 %v1708, 96
        %v2741 = vpop.permute.xlu0 %2740
        %2742 = vrot.lane.b32.xlu0 %v1716, 96
        %v2743 = vpop.permute.xlu0 %2742
        %2744 = vrot.lane.b32.xlu0 %v1701, 96
        %v2745 = vpop.permute.xlu0 %2744
        %2746 = vrot.lane.b32.xlu0 %v1709, 96
        %v2747 = vpop.permute.xlu0 %2746
        %2748 = vrot.lane.b32.xlu0 %v1717, 96
        %v2749 = vpop.permute.xlu0 %2748
        %2750 = vrot.lane.b32.xlu0 %v1702, 96
        %v2751 = vpop.permute.xlu0 %2750
        %2752 = vrot.lane.b32.xlu0 %v1710, 96
        %v2753 = vpop.permute.xlu0 %2752
        %2754 = vrot.lane.b32.xlu0 %v1718, 96
        %v2755 = vpop.permute.xlu0 %2754
        %2756 = vrot.lane.b32.xlu0 %v1703, 96
        %v2757 = vpop.permute.xlu0 %2756
        %2758 = vrot.lane.b32.xlu0 %v1711, 96
        %v2759 = vpop.permute.xlu0 %2758
        %2760 = vrot.lane.b32.xlu0 %v1719, 96
        %v2761 = vpop.permute.xlu0 %2760
        %2762 = vrot.lane.b32.xlu0 %v1704, 96
        %v2763 = vpop.permute.xlu0 %2762
        %2764 = vrot.lane.b32.xlu0 %v1712, 96
        %v2765 = vpop.permute.xlu0 %2764
        %2766 = vrot.lane.b32.xlu0 %v1720, 96
        %v2767 = vpop.permute.xlu0 %2766
        %2768 = vrot.lane.b32.xlu0 %v1705, 96
        %v2769 = vpop.permute.xlu0 %2768
        %2770 = vrot.lane.b32.xlu0 %v1713, 96
        %v2771 = vpop.permute.xlu0 %2770
        %2772 = vrot.lane.b32.xlu0 %v1721, 96
        %v2773 = vpop.permute.xlu0 %2772
        %2774 = vrot.lane.b32.xlu0 %v1706, 96
        %v2775 = vpop.permute.xlu0 %2774
        %2776 = vrot.lane.b32.xlu0 %v1714, 96
        %v2777 = vpop.permute.xlu0 %2776
        %2778 = vrot.lane.b32.xlu0 %v1722, 96
        %v2779 = vpop.permute.xlu0 %2778
        %2780 = vrot.lane.b32.xlu0 %v1707, 96
        %v2781 = vpop.permute.xlu0 %2780
        %2782 = vrot.lane.b32.xlu0 %v1715, 96
        %v2783 = vpop.permute.xlu0 %2782
        %2784 = vrot.lane.b32.xlu0 %v1723, 96
        %v2785 = vpop.permute.xlu0 %2784
        %vm2786 = vcmp.lt.s32.totalorder %v631, 96
        %v2787 = vsel %vm2786, %v2775, %v2781
        %v2788 = vsel %vm2786, %v2777, %v2783
        %v2789 = vsel %vm2786, %v2779, %v2785
        %v2790 = vsel %vm2786, %v2769, %v2775
        %v2791 = vsel %vm2786, %v2771, %v2777
        %v2792 = vsel %vm2786, %v2773, %v2779
        %v2793 = vsel %vm2786, %v2763, %v2769
        %v2794 = vsel %vm2786, %v2765, %v2771
        %v2795 = vsel %vm2786, %v2767, %v2773
        %v2796 = vsel %vm2786, %v2757, %v2763
        %v2797 = vsel %vm2786, %v2759, %v2765
        %v2798 = vsel %vm2786, %v2761, %v2767
        %v2799 = vsel %vm2786, %v2751, %v2757
        %v2800 = vsel %vm2786, %v2753, %v2759
        %v2801 = vsel %vm2786, %v2755, %v2761
        %v2802 = vsel %vm2786, %v2745, %v2751
        %v2803 = vsel %vm2786, %v2747, %v2753
        %v2804 = vsel %vm2786, %v2749, %v2755
        %v2805 = vsel %vm2786, %v2739, %v2745
        %v2806 = vsel %vm2786, %v2741, %v2747
        %v2807 = vsel %vm2786, %v2743, %v2749
        %v2808 = vsel %vm2786, %v2781, %v2739
        %v2809 = vsel %vm2786, %v2783, %v2741
        %v2810 = vsel %vm2786, %v2785, %v2743
        %v2811 = vlaneseq
        %v2812 = vshrl.u32 %v2811, 7
        %v2813 = vsub.s32 7, %v2812
        %v2814 = vrot.slane %v1724, %v2813
        %v2815 = vlaneseq
        %v2816 = vshrl.u32 %v2815, 7
        %v2817 = vsub.s32 7, %v2816
        %v2818 = vrot.slane %v1725, %v2817
        %v2819 = vlaneseq
        %v2820 = vshrl.u32 %v2819, 7
        %v2821 = vsub.s32 7, %v2820
        %v2822 = vrot.slane %v1726, %v2821
        %v2823 = vlaneseq
        %v2824 = vshrl.u32 %v2823, 7
        %v2825 = vsub.s32 7, %v2824
        %v2826 = vrot.slane %v1727, %v2825
        %v2827 = vlaneseq
        %v2828 = vshrl.u32 %v2827, 7
        %v2829 = vsub.s32 7, %v2828
        %v2830 = vrot.slane %v1728, %v2829
        %v2831 = vlaneseq
        %v2832 = vshrl.u32 %v2831, 7
        %v2833 = vsub.s32 7, %v2832
        %v2834 = vrot.slane %v1729, %v2833
        %v2835 = vlaneseq
        %v2836 = vshrl.u32 %v2835, 7
        %v2837 = vsub.s32 7, %v2836
        %v2838 = vrot.slane %v1730, %v2837
        %v2839 = vlaneseq
        %v2840 = vshrl.u32 %v2839, 7
        %v2841 = vsub.s32 7, %v2840
        %v2842 = vrot.slane %v1731, %v2841
        %v2843 = vmul.f32 %v2814, %v2805
        %v2844 = vmul.f32 %v2818, %v2802
        %v2845 = vmul.f32 %v2822, %v2799
        %v2846 = vmul.f32 %v2826, %v2796
        %v2847 = vmul.f32 %v2830, %v2793
        %v2848 = vmul.f32 %v2834, %v2790
        %v2849 = vmul.f32 %v2838, %v2787
        %v2850 = vmul.f32 %v2842, %v2808
        %v2851 = vmul.f32 %v2814, %v2806
        %v2852 = vmul.f32 %v2818, %v2803
        %v2853 = vmul.f32 %v2822, %v2800
        %v2854 = vmul.f32 %v2826, %v2797
        %v2855 = vmul.f32 %v2830, %v2794
        %v2856 = vmul.f32 %v2834, %v2791
        %v2857 = vmul.f32 %v2838, %v2788
        %v2858 = vmul.f32 %v2842, %v2809
        %v2859 = vmul.f32 %v2814, %v2807
        %v2860 = vmul.f32 %v2818, %v2804
        %v2861 = vmul.f32 %v2822, %v2801
        %v2862 = vmul.f32 %v2826, %v2798
        %v2863 = vmul.f32 %v2830, %v2795
        %v2864 = vmul.f32 %v2834, %v2792
        %v2865 = vmul.f32 %v2838, %v2789
        %v2866 = vmul.f32 %v2842, %v2810
        %2867 = vst [vmem:[#allocation2 + $0x540] sm:$0xff] %v2843
        %2868 = vst [vmem:[#allocation2 + $0x548] sm:$0xff] %v2844
        %2869 = vst [vmem:[#allocation2 + $0x550] sm:$0xff] %v2845
        %2870 = vst [vmem:[#allocation2 + $0x558] sm:$0xff] %v2846
        %2871 = vst [vmem:[#allocation2 + $0x560] sm:$0xff] %v2847
        %2872 = vst [vmem:[#allocation2 + $0x568] sm:$0xff] %v2848
        %2873 = vst [vmem:[#allocation2 + $0x570] sm:$0xff] %v2849
        %2874 = vst [vmem:[#allocation2 + $0x578] sm:$0xff] %v2850
        %2875 = vst [vmem:[#allocation2 + $0x580] sm:$0xff] %v2851
        %2876 = vst [vmem:[#allocation2 + $0x588] sm:$0xff] %v2852
        %2877 = vst [vmem:[#allocation2 + $0x590] sm:$0xff] %v2853
        %2878 = vst [vmem:[#allocation2 + $0x598] sm:$0xff] %v2854
        %2879 = vst [vmem:[#allocation2 + $0x5a0] sm:$0xff] %v2855
        %2880 = vst [vmem:[#allocation2 + $0x5a8] sm:$0xff] %v2856
        %2881 = vst [vmem:[#allocation2 + $0x5b0] sm:$0xff] %v2857
        %2882 = vst [vmem:[#allocation2 + $0x5b8] sm:$0xff] %v2858
        %2883 = vst [vmem:[#allocation2 + $0x5c0] sm:$0xff] %v2859
        %2884 = vst [vmem:[#allocation2 + $0x5c8] sm:$0xff] %v2860
        %2885 = vst [vmem:[#allocation2 + $0x5d0] sm:$0xff] %v2861
        %2886 = vst [vmem:[#allocation2 + $0x5d8] sm:$0xff] %v2862
        %2887 = vst [vmem:[#allocation2 + $0x5e0] sm:$0xff] %v2863
        %2888 = vst [vmem:[#allocation2 + $0x5e8] sm:$0xff] %v2864
        %2889 = vst [vmem:[#allocation2 + $0x5f0] sm:$0xff] %v2865
        %2890 = vst [vmem:[#allocation2 + $0x5f8] sm:$0xff] %v2866
        %2891 = vrot.lane.b32.xlu0 %v1700, 94
        %v2892 = vpop.permute.xlu0 %2891
        %2893 = vrot.lane.b32.xlu0 %v1708, 94
        %v2894 = vpop.permute.xlu0 %2893
        %2895 = vrot.lane.b32.xlu0 %v1716, 94
        %v2896 = vpop.permute.xlu0 %2895
        %2897 = vrot.lane.b32.xlu0 %v1701, 94
        %v2898 = vpop.permute.xlu0 %2897
        %2899 = vrot.lane.b32.xlu0 %v1709, 94
        %v2900 = vpop.permute.xlu0 %2899
        %2901 = vrot.lane.b32.xlu0 %v1717, 94
        %v2902 = vpop.permute.xlu0 %2901
        %2903 = vrot.lane.b32.xlu0 %v1702, 94
        %v2904 = vpop.permute.xlu0 %2903
        %2905 = vrot.lane.b32.xlu0 %v1710, 94
        %v2906 = vpop.permute.xlu0 %2905
        %2907 = vrot.lane.b32.xlu0 %v1718, 94
        %v2908 = vpop.permute.xlu0 %2907
        %2909 = vrot.lane.b32.xlu0 %v1703, 94
        %v2910 = vpop.permute.xlu0 %2909
        %2911 = vrot.lane.b32.xlu0 %v1711, 94
        %v2912 = vpop.permute.xlu0 %2911
        %2913 = vrot.lane.b32.xlu0 %v1719, 94
        %v2914 = vpop.permute.xlu0 %2913
        %2915 = vrot.lane.b32.xlu0 %v1704, 94
        %v2916 = vpop.permute.xlu0 %2915
        %2917 = vrot.lane.b32.xlu0 %v1712, 94
        %v2918 = vpop.permute.xlu0 %2917
        %2919 = vrot.lane.b32.xlu0 %v1720, 94
        %v2920 = vpop.permute.xlu0 %2919
        %2921 = vrot.lane.b32.xlu0 %v1705, 94
        %v2922 = vpop.permute.xlu0 %2921
        %2923 = vrot.lane.b32.xlu0 %v1713, 94
        %v2924 = vpop.permute.xlu0 %2923
        %2925 = vrot.lane.b32.xlu0 %v1721, 94
        %v2926 = vpop.permute.xlu0 %2925
        %2927 = vrot.lane.b32.xlu0 %v1706, 94
        %v2928 = vpop.permute.xlu0 %2927
        %2929 = vrot.lane.b32.xlu0 %v1714, 94
        %v2930 = vpop.permute.xlu0 %2929
        %2931 = vrot.lane.b32.xlu0 %v1722, 94
        %v2932 = vpop.permute.xlu0 %2931
        %2933 = vrot.lane.b32.xlu0 %v1707, 94
        %v2934 = vpop.permute.xlu0 %2933
        %2935 = vrot.lane.b32.xlu0 %v1715, 94
        %v2936 = vpop.permute.xlu0 %2935
        %2937 = vrot.lane.b32.xlu0 %v1723, 94
        %v2938 = vpop.permute.xlu0 %2937
        %vm2939 = vcmp.lt.s32.totalorder %v631, 94
        %v2940 = vsel %vm2939, %v2928, %v2934
        %v2941 = vsel %vm2939, %v2930, %v2936
        %v2942 = vsel %vm2939, %v2932, %v2938
        %v2943 = vsel %vm2939, %v2922, %v2928
        %v2944 = vsel %vm2939, %v2924, %v2930
        %v2945 = vsel %vm2939, %v2926, %v2932
        %v2946 = vsel %vm2939, %v2916, %v2922
        %v2947 = vsel %vm2939, %v2918, %v2924
        %v2948 = vsel %vm2939, %v2920, %v2926
        %v2949 = vsel %vm2939, %v2910, %v2916
        %v2950 = vsel %vm2939, %v2912, %v2918
        %v2951 = vsel %vm2939, %v2914, %v2920
        %v2952 = vsel %vm2939, %v2904, %v2910
        %v2953 = vsel %vm2939, %v2906, %v2912
        %v2954 = vsel %vm2939, %v2908, %v2914
        %v2955 = vsel %vm2939, %v2898, %v2904
        %v2956 = vsel %vm2939, %v2900, %v2906
        %v2957 = vsel %vm2939, %v2902, %v2908
        %v2958 = vsel %vm2939, %v2892, %v2898
        %v2959 = vsel %vm2939, %v2894, %v2900
        %v2960 = vsel %vm2939, %v2896, %v2902
        %v2961 = vsel %vm2939, %v2934, %v2892
        %v2962 = vsel %vm2939, %v2936, %v2894
        %v2963 = vsel %vm2939, %v2938, %v2896
        %v2964 = vlaneseq
        %v2965 = vshrl.u32 %v2964, 7
        %v2966 = vsub.s32 0, %v2965
        %v2967 = vrot.slane %v1732, %v2966
        %v2968 = vlaneseq
        %v2969 = vshrl.u32 %v2968, 7
        %v2970 = vsub.s32 0, %v2969
        %v2971 = vrot.slane %v1733, %v2970
        %v2972 = vlaneseq
        %v2973 = vshrl.u32 %v2972, 7
        %v2974 = vsub.s32 0, %v2973
        %v2975 = vrot.slane %v1734, %v2974
        %v2976 = vlaneseq
        %v2977 = vshrl.u32 %v2976, 7
        %v2978 = vsub.s32 0, %v2977
        %v2979 = vrot.slane %v1735, %v2978
        %v2980 = vlaneseq
        %v2981 = vshrl.u32 %v2980, 7
        %v2982 = vsub.s32 0, %v2981
        %v2983 = vrot.slane %v1736, %v2982
        %v2984 = vlaneseq
        %v2985 = vshrl.u32 %v2984, 7
        %v2986 = vsub.s32 0, %v2985
        %v2987 = vrot.slane %v1737, %v2986
        %v2988 = vlaneseq
        %v2989 = vshrl.u32 %v2988, 7
        %v2990 = vsub.s32 0, %v2989
        %v2991 = vrot.slane %v1738, %v2990
        %v2992 = vlaneseq
        %v2993 = vshrl.u32 %v2992, 7
        %v2994 = vsub.s32 0, %v2993
        %v2995 = vrot.slane %v1739, %v2994
        %v2996 = vmul.f32 %v2967, %v2958
        %v2997 = vmul.f32 %v2971, %v2955
        %v2998 = vmul.f32 %v2975, %v2952
        %v2999 = vmul.f32 %v2979, %v2949
        %v3000 = vmul.f32 %v2983, %v2946
        %v3001 = vmul.f32 %v2987, %v2943
        %v3002 = vmul.f32 %v2991, %v2940
        %v3003 = vmul.f32 %v2995, %v2961
        %v3004 = vmul.f32 %v2967, %v2959
        %v3005 = vmul.f32 %v2971, %v2956
        %v3006 = vmul.f32 %v2975, %v2953
        %v3007 = vmul.f32 %v2979, %v2950
        %v3008 = vmul.f32 %v2983, %v2947
        %v3009 = vmul.f32 %v2987, %v2944
        %v3010 = vmul.f32 %v2991, %v2941
        %v3011 = vmul.f32 %v2995, %v2962
        %v3012 = vmul.f32 %v2967, %v2960
        %v3013 = vmul.f32 %v2971, %v2957
        %v3014 = vmul.f32 %v2975, %v2954
        %v3015 = vmul.f32 %v2979, %v2951
        %v3016 = vmul.f32 %v2983, %v2948
        %v3017 = vmul.f32 %v2987, %v2945
        %v3018 = vmul.f32 %v2991, %v2942
        %v3019 = vmul.f32 %v2995, %v2963
        %3020 = vst [vmem:[#allocation2 + $0x600] sm:$0xff] %v2996
        %3021 = vst [vmem:[#allocation2 + $0x608] sm:$0xff] %v2997
        %3022 = vst [vmem:[#allocation2 + $0x610] sm:$0xff] %v2998
        %3023 = vst [vmem:[#allocation2 + $0x618] sm:$0xff] %v2999
        %3024 = vst [vmem:[#allocation2 + $0x620] sm:$0xff] %v3000
        %3025 = vst [vmem:[#allocation2 + $0x628] sm:$0xff] %v3001
        %3026 = vst [vmem:[#allocation2 + $0x630] sm:$0xff] %v3002
        %3027 = vst [vmem:[#allocation2 + $0x638] sm:$0xff] %v3003
        %3028 = vst [vmem:[#allocation2 + $0x640] sm:$0xff] %v3004
        %3029 = vst [vmem:[#allocation2 + $0x648] sm:$0xff] %v3005
        %3030 = vst [vmem:[#allocation2 + $0x650] sm:$0xff] %v3006
        %3031 = vst [vmem:[#allocation2 + $0x658] sm:$0xff] %v3007
        %3032 = vst [vmem:[#allocation2 + $0x660] sm:$0xff] %v3008
        %3033 = vst [vmem:[#allocation2 + $0x668] sm:$0xff] %v3009
        %3034 = vst [vmem:[#allocation2 + $0x670] sm:$0xff] %v3010
        %3035 = vst [vmem:[#allocation2 + $0x678] sm:$0xff] %v3011
        %3036 = vst [vmem:[#allocation2 + $0x680] sm:$0xff] %v3012
        %3037 = vst [vmem:[#allocation2 + $0x688] sm:$0xff] %v3013
        %3038 = vst [vmem:[#allocation2 + $0x690] sm:$0xff] %v3014
        %3039 = vst [vmem:[#allocation2 + $0x698] sm:$0xff] %v3015
        %3040 = vst [vmem:[#allocation2 + $0x6a0] sm:$0xff] %v3016
        %3041 = vst [vmem:[#allocation2 + $0x6a8] sm:$0xff] %v3017
        %3042 = vst [vmem:[#allocation2 + $0x6b0] sm:$0xff] %v3018
        %3043 = vst [vmem:[#allocation2 + $0x6b8] sm:$0xff] %v3019
        %v3044 = vld [vmem:[%s6] sm:$0xff]
        %v3045 = vld [vmem:[%s6 + $0x8] sm:$0xff]
        %v3046 = vld [vmem:[%s6 + $0x10] sm:$0xff]
        %v3047 = vld [vmem:[%s6 + $0x18] sm:$0xff]
        %v3048 = vld [vmem:[%s6 + $0x20] sm:$0xf]
        %v3049 = vld [vmem:[%s6 + $0x28] sm:$0xf]
        %v3050 = vld [vmem:[#allocation2] sm:$0xff]
        %v3051 = vld [vmem:[#allocation2 + $0x8] sm:$0xff]
        %v3052 = vld [vmem:[#allocation2 + $0x10] sm:$0xff]
        %v3053 = vld [vmem:[#allocation2 + $0x18] sm:$0xff]
        %v3054 = vld [vmem:[#allocation2 + $0x20] sm:$0xff]
        %v3055 = vld [vmem:[#allocation2 + $0x28] sm:$0xff]
        %v3056 = vld [vmem:[#allocation2 + $0x30] sm:$0xff]
        %v3057 = vld [vmem:[#allocation2 + $0x38] sm:$0xff]
        %v3058 = vld [vmem:[#allocation2 + $0x40] sm:$0xff]
        %v3059 = vld [vmem:[#allocation2 + $0x48] sm:$0xff]
        %v3060 = vld [vmem:[#allocation2 + $0x50] sm:$0xff]
        %v3061 = vld [vmem:[#allocation2 + $0x58] sm:$0xff]
        %v3062 = vld [vmem:[#allocation2 + $0x60] sm:$0xff]
        %v3063 = vld [vmem:[#allocation2 + $0x68] sm:$0xff]
        %v3064 = vld [vmem:[#allocation2 + $0x70] sm:$0xff]
        %v3065 = vld [vmem:[#allocation2 + $0x78] sm:$0xff]
        %v3066 = vld [vmem:[#allocation2 + $0x80] sm:$0xff]
        %v3067 = vld [vmem:[#allocation2 + $0x88] sm:$0xff]
        %v3068 = vld [vmem:[#allocation2 + $0x90] sm:$0xff]
        %v3069 = vld [vmem:[#allocation2 + $0x98] sm:$0xff]
        %v3070 = vld [vmem:[#allocation2 + $0xa0] sm:$0xff]
        %v3071 = vld [vmem:[#allocation2 + $0xa8] sm:$0xff]
        %v3072 = vld [vmem:[#allocation2 + $0xb0] sm:$0xff]
        %v3073 = vld [vmem:[#allocation2 + $0xb8] sm:$0xff]
        %v3074 = vld [vmem:[#allocation2 + $0xc0] sm:$0xff]
        %v3075 = vld [vmem:[#allocation2 + $0xc8] sm:$0xff]
        %v3076 = vld [vmem:[#allocation2 + $0xd0] sm:$0xff]
        %v3077 = vld [vmem:[#allocation2 + $0xd8] sm:$0xff]
        %v3078 = vld [vmem:[#allocation2 + $0xe0] sm:$0xff]
        %v3079 = vld [vmem:[#allocation2 + $0xe8] sm:$0xff]
        %v3080 = vld [vmem:[#allocation2 + $0xf0] sm:$0xff]
        %v3081 = vld [vmem:[#allocation2 + $0xf8] sm:$0xff]
        %v3082 = vld [vmem:[#allocation2 + $0x100] sm:$0xff]
        %v3083 = vld [vmem:[#allocation2 + $0x108] sm:$0xff]
        %v3084 = vld [vmem:[#allocation2 + $0x110] sm:$0xff]
        %v3085 = vld [vmem:[#allocation2 + $0x118] sm:$0xff]
        %v3086 = vld [vmem:[#allocation2 + $0x120] sm:$0xff]
        %v3087 = vld [vmem:[#allocation2 + $0x128] sm:$0xff]
        %v3088 = vld [vmem:[#allocation2 + $0x130] sm:$0xff]
        %v3089 = vld [vmem:[#allocation2 + $0x138] sm:$0xff]
        %v3090 = vld [vmem:[#allocation2 + $0x140] sm:$0xff]
        %v3091 = vld [vmem:[#allocation2 + $0x148] sm:$0xff]
        %v3092 = vld [vmem:[#allocation2 + $0x150] sm:$0xff]
        %v3093 = vld [vmem:[#allocation2 + $0x158] sm:$0xff]
        %v3094 = vld [vmem:[#allocation2 + $0x160] sm:$0xff]
        %v3095 = vld [vmem:[#allocation2 + $0x168] sm:$0xff]
        %v3096 = vld [vmem:[#allocation2 + $0x170] sm:$0xff]
        %v3097 = vld [vmem:[#allocation2 + $0x178] sm:$0xff]
        %v3098 = vld [vmem:[#allocation2 + $0x180] sm:$0xff]
        %v3099 = vld [vmem:[#allocation2 + $0x188] sm:$0xff]
        %v3100 = vld [vmem:[#allocation2 + $0x190] sm:$0xff]
        %v3101 = vld [vmem:[#allocation2 + $0x198] sm:$0xff]
        %v3102 = vld [vmem:[#allocation2 + $0x1a0] sm:$0xff]
        %v3103 = vld [vmem:[#allocation2 + $0x1a8] sm:$0xff]
        %v3104 = vld [vmem:[#allocation2 + $0x1b0] sm:$0xff]
        %v3105 = vld [vmem:[#allocation2 + $0x1b8] sm:$0xff]
        %v3106 = vld [vmem:[#allocation2 + $0x1c0] sm:$0xff]
        %v3107 = vld [vmem:[#allocation2 + $0x1c8] sm:$0xff]
        %v3108 = vld [vmem:[#allocation2 + $0x1d0] sm:$0xff]
        %v3109 = vld [vmem:[#allocation2 + $0x1d8] sm:$0xff]
        %v3110 = vld [vmem:[#allocation2 + $0x1e0] sm:$0xff]
        %v3111 = vld [vmem:[#allocation2 + $0x1e8] sm:$0xff]
        %v3112 = vld [vmem:[#allocation2 + $0x1f0] sm:$0xff]
        %v3113 = vld [vmem:[#allocation2 + $0x1f8] sm:$0xff]
        %v3114 = vld [vmem:[#allocation2 + $0x200] sm:$0xff]
        %v3115 = vld [vmem:[#allocation2 + $0x208] sm:$0xff]
        %v3116 = vld [vmem:[#allocation2 + $0x210] sm:$0xff]
        %v3117 = vld [vmem:[#allocation2 + $0x218] sm:$0xff]
        %v3118 = vld [vmem:[#allocation2 + $0x220] sm:$0xff]
        %v3119 = vld [vmem:[#allocation2 + $0x228] sm:$0xff]
        %v3120 = vld [vmem:[#allocation2 + $0x230] sm:$0xff]
        %v3121 = vld [vmem:[#allocation2 + $0x238] sm:$0xff]
        %v3122 = vld [vmem:[#allocation2 + $0x240] sm:$0xff]
        %v3123 = vld [vmem:[#allocation2 + $0x248] sm:$0xff]
        %v3124 = vld [vmem:[#allocation2 + $0x250] sm:$0xff]
        %v3125 = vld [vmem:[#allocation2 + $0x258] sm:$0xff]
        %v3126 = vld [vmem:[#allocation2 + $0x260] sm:$0xff]
        %v3127 = vld [vmem:[#allocation2 + $0x268] sm:$0xff]
        %v3128 = vld [vmem:[#allocation2 + $0x270] sm:$0xff]
        %v3129 = vld [vmem:[#allocation2 + $0x278] sm:$0xff]
        %v3130 = vld [vmem:[#allocation2 + $0x280] sm:$0xff]
        %v3131 = vld [vmem:[#allocation2 + $0x288] sm:$0xff]
        %v3132 = vld [vmem:[#allocation2 + $0x290] sm:$0xff]
        %v3133 = vld [vmem:[#allocation2 + $0x298] sm:$0xff]
        %v3134 = vld [vmem:[#allocation2 + $0x2a0] sm:$0xff]
        %v3135 = vld [vmem:[#allocation2 + $0x2a8] sm:$0xff]
        %v3136 = vld [vmem:[#allocation2 + $0x2b0] sm:$0xff]
        %v3137 = vld [vmem:[#allocation2 + $0x2b8] sm:$0xff]
        %v3138 = vld [vmem:[#allocation2 + $0x2c0] sm:$0xff]
        %v3139 = vld [vmem:[#allocation2 + $0x2c8] sm:$0xff]
        %v3140 = vld [vmem:[#allocation2 + $0x2d0] sm:$0xff]
        %v3141 = vld [vmem:[#allocation2 + $0x2d8] sm:$0xff]
        %v3142 = vld [vmem:[#allocation2 + $0x2e0] sm:$0xff]
        %v3143 = vld [vmem:[#allocation2 + $0x2e8] sm:$0xff]
        %v3144 = vld [vmem:[#allocation2 + $0x2f0] sm:$0xff]
        %v3145 = vld [vmem:[#allocation2 + $0x2f8] sm:$0xff]
        %v3146 = vld [vmem:[#allocation2 + $0x300] sm:$0xff]
        %v3147 = vld [vmem:[#allocation2 + $0x308] sm:$0xff]
        %v3148 = vld [vmem:[#allocation2 + $0x310] sm:$0xff]
        %v3149 = vld [vmem:[#allocation2 + $0x318] sm:$0xff]
        %v3150 = vld [vmem:[#allocation2 + $0x320] sm:$0xff]
        %v3151 = vld [vmem:[#allocation2 + $0x328] sm:$0xff]
        %v3152 = vld [vmem:[#allocation2 + $0x330] sm:$0xff]
        %v3153 = vld [vmem:[#allocation2 + $0x338] sm:$0xff]
        %v3154 = vld [vmem:[#allocation2 + $0x340] sm:$0xff]
        %v3155 = vld [vmem:[#allocation2 + $0x348] sm:$0xff]
        %v3156 = vld [vmem:[#allocation2 + $0x350] sm:$0xff]
        %v3157 = vld [vmem:[#allocation2 + $0x358] sm:$0xff]
        %v3158 = vld [vmem:[#allocation2 + $0x360] sm:$0xff]
        %v3159 = vld [vmem:[#allocation2 + $0x368] sm:$0xff]
        %v3160 = vld [vmem:[#allocation2 + $0x370] sm:$0xff]
        %v3161 = vld [vmem:[#allocation2 + $0x378] sm:$0xff]
        %v3162 = vld [vmem:[#allocation2 + $0x380] sm:$0xff]
        %v3163 = vld [vmem:[#allocation2 + $0x388] sm:$0xff]
        %v3164 = vld [vmem:[#allocation2 + $0x390] sm:$0xff]
        %v3165 = vld [vmem:[#allocation2 + $0x398] sm:$0xff]
        %v3166 = vld [vmem:[#allocation2 + $0x3a0] sm:$0xff]
        %v3167 = vld [vmem:[#allocation2 + $0x3a8] sm:$0xff]
        %v3168 = vld [vmem:[#allocation2 + $0x3b0] sm:$0xff]
        %v3169 = vld [vmem:[#allocation2 + $0x3b8] sm:$0xff]
        %v3170 = vld [vmem:[#allocation2 + $0x3c0] sm:$0xff]
        %v3171 = vld [vmem:[#allocation2 + $0x3c8] sm:$0xff]
        %v3172 = vld [vmem:[#allocation2 + $0x3d0] sm:$0xff]
        %v3173 = vld [vmem:[#allocation2 + $0x3d8] sm:$0xff]
        %v3174 = vld [vmem:[#allocation2 + $0x3e0] sm:$0xff]
        %v3175 = vld [vmem:[#allocation2 + $0x3e8] sm:$0xff]
        %v3176 = vld [vmem:[#allocation2 + $0x3f0] sm:$0xff]
        %v3177 = vld [vmem:[#allocation2 + $0x3f8] sm:$0xff]
        %v3178 = vld [vmem:[#allocation2 + $0x400] sm:$0xff]
        %v3179 = vld [vmem:[#allocation2 + $0x408] sm:$0xff]
        %v3180 = vld [vmem:[#allocation2 + $0x410] sm:$0xff]
        %v3181 = vld [vmem:[#allocation2 + $0x418] sm:$0xff]
        %v3182 = vld [vmem:[#allocation2 + $0x420] sm:$0xff]
        %v3183 = vld [vmem:[#allocation2 + $0x428] sm:$0xff]
        %v3184 = vld [vmem:[#allocation2 + $0x430] sm:$0xff]
        %v3185 = vld [vmem:[#allocation2 + $0x438] sm:$0xff]
        %v3186 = vld [vmem:[#allocation2 + $0x440] sm:$0xff]
        %v3187 = vld [vmem:[#allocation2 + $0x448] sm:$0xff]
        %v3188 = vld [vmem:[#allocation2 + $0x450] sm:$0xff]
        %v3189 = vld [vmem:[#allocation2 + $0x458] sm:$0xff]
        %v3190 = vld [vmem:[#allocation2 + $0x460] sm:$0xff]
        %v3191 = vld [vmem:[#allocation2 + $0x468] sm:$0xff]
        %v3192 = vld [vmem:[#allocation2 + $0x470] sm:$0xff]
        %v3193 = vld [vmem:[#allocation2 + $0x478] sm:$0xff]
        %v3194 = vld [vmem:[#allocation2 + $0x480] sm:$0xff]
        %v3195 = vld [vmem:[#allocation2 + $0x488] sm:$0xff]
        %v3196 = vld [vmem:[#allocation2 + $0x490] sm:$0xff]
        %v3197 = vld [vmem:[#allocation2 + $0x498] sm:$0xff]
        %v3198 = vld [vmem:[#allocation2 + $0x4a0] sm:$0xff]
        %v3199 = vld [vmem:[#allocation2 + $0x4a8] sm:$0xff]
        %v3200 = vld [vmem:[#allocation2 + $0x4b0] sm:$0xff]
        %v3201 = vld [vmem:[#allocation2 + $0x4b8] sm:$0xff]
        %v3202 = vld [vmem:[#allocation2 + $0x4c0] sm:$0xff]
        %v3203 = vld [vmem:[#allocation2 + $0x4c8] sm:$0xff]
        %v3204 = vld [vmem:[#allocation2 + $0x4d0] sm:$0xff]
        %v3205 = vld [vmem:[#allocation2 + $0x4d8] sm:$0xff]
        %v3206 = vld [vmem:[#allocation2 + $0x4e0] sm:$0xff]
        %v3207 = vld [vmem:[#allocation2 + $0x4e8] sm:$0xff]
        %v3208 = vld [vmem:[#allocation2 + $0x4f0] sm:$0xff]
        %v3209 = vld [vmem:[#allocation2 + $0x4f8] sm:$0xff]
        %v3210 = vld [vmem:[#allocation2 + $0x500] sm:$0xff]
        %v3211 = vld [vmem:[#allocation2 + $0x508] sm:$0xff]
        %v3212 = vld [vmem:[#allocation2 + $0x510] sm:$0xff]
        %v3213 = vld [vmem:[#allocation2 + $0x518] sm:$0xff]
        %v3214 = vld [vmem:[#allocation2 + $0x520] sm:$0xff]
        %v3215 = vld [vmem:[#allocation2 + $0x528] sm:$0xff]
        %v3216 = vld [vmem:[#allocation2 + $0x530] sm:$0xff]
        %v3217 = vld [vmem:[#allocation2 + $0x538] sm:$0xff]
        %v3218 = vld [vmem:[#allocation2 + $0x540] sm:$0xff]
        %v3219 = vld [vmem:[#allocation2 + $0x548] sm:$0xff]
        %v3220 = vld [vmem:[#allocation2 + $0x550] sm:$0xff]
        %v3221 = vld [vmem:[#allocation2 + $0x558] sm:$0xff]
        %v3222 = vld [vmem:[#allocation2 + $0x560] sm:$0xff]
        %v3223 = vld [vmem:[#allocation2 + $0x568] sm:$0xff]
        %v3224 = vld [vmem:[#allocation2 + $0x570] sm:$0xff]
        %v3225 = vld [vmem:[#allocation2 + $0x578] sm:$0xff]
        %v3226 = vld [vmem:[#allocation2 + $0x580] sm:$0xff]
        %v3227 = vld [vmem:[#allocation2 + $0x588] sm:$0xff]
        %v3228 = vld [vmem:[#allocation2 + $0x590] sm:$0xff]
        %v3229 = vld [vmem:[#allocation2 + $0x598] sm:$0xff]
        %v3230 = vld [vmem:[#allocation2 + $0x5a0] sm:$0xff]
        %v3231 = vld [vmem:[#allocation2 + $0x5a8] sm:$0xff]
        %v3232 = vld [vmem:[#allocation2 + $0x5b0] sm:$0xff]
        %v3233 = vld [vmem:[#allocation2 + $0x5b8] sm:$0xff]
        %v3234 = vld [vmem:[#allocation2 + $0x5c0] sm:$0xff]
        %v3235 = vld [vmem:[#allocation2 + $0x5c8] sm:$0xff]
        %v3236 = vld [vmem:[#allocation2 + $0x5d0] sm:$0xff]
        %v3237 = vld [vmem:[#allocation2 + $0x5d8] sm:$0xff]
        %v3238 = vld [vmem:[#allocation2 + $0x5e0] sm:$0xff]
        %v3239 = vld [vmem:[#allocation2 + $0x5e8] sm:$0xff]
        %v3240 = vld [vmem:[#allocation2 + $0x5f0] sm:$0xff]
        %v3241 = vld [vmem:[#allocation2 + $0x5f8] sm:$0xff]
        %v3242 = vld [vmem:[#allocation2 + $0x600] sm:$0xff]
        %v3243 = vld [vmem:[#allocation2 + $0x608] sm:$0xff]
        %v3244 = vld [vmem:[#allocation2 + $0x610] sm:$0xff]
        %v3245 = vld [vmem:[#allocation2 + $0x618] sm:$0xff]
        %v3246 = vld [vmem:[#allocation2 + $0x620] sm:$0xff]
        %v3247 = vld [vmem:[#allocation2 + $0x628] sm:$0xff]
        %v3248 = vld [vmem:[#allocation2 + $0x630] sm:$0xff]
        %v3249 = vld [vmem:[#allocation2 + $0x638] sm:$0xff]
        %v3250 = vld [vmem:[#allocation2 + $0x640] sm:$0xff]
        %v3251 = vld [vmem:[#allocation2 + $0x648] sm:$0xff]
        %v3252 = vld [vmem:[#allocation2 + $0x650] sm:$0xff]
        %v3253 = vld [vmem:[#allocation2 + $0x658] sm:$0xff]
        %v3254 = vld [vmem:[#allocation2 + $0x660] sm:$0xff]
        %v3255 = vld [vmem:[#allocation2 + $0x668] sm:$0xff]
        %v3256 = vld [vmem:[#allocation2 + $0x670] sm:$0xff]
        %v3257 = vld [vmem:[#allocation2 + $0x678] sm:$0xff]
        %v3258 = vld [vmem:[#allocation2 + $0x680] sm:$0xff]
        %v3259 = vld [vmem:[#allocation2 + $0x688] sm:$0xff]
        %v3260 = vld [vmem:[#allocation2 + $0x690] sm:$0xff]
        %v3261 = vld [vmem:[#allocation2 + $0x698] sm:$0xff]
        %v3262 = vld [vmem:[#allocation2 + $0x6a0] sm:$0xff]
        %v3263 = vld [vmem:[#allocation2 + $0x6a8] sm:$0xff]
        %v3264 = vld [vmem:[#allocation2 + $0x6b0] sm:$0xff]
        %v3265 = vld [vmem:[#allocation2 + $0x6b8] sm:$0xff]
        %vm3266 = vcmask 719872
        %v3268 = vsel %vm3266, %v3045, 0
        %v3271 = vsel %vm3266, %v3047, 0
        %v3274 = vsel %vm3266, %v3049, 0
        %3276 = vmatprep.subr.mxu0 %v3051
        %3277 = vmatpush1.msra.mxu0 %v3050
        %3278 = vmatprep.subr.mxu0 %v3059
        %3279 = vmatpush1.msra.mxu0 %v3058
        %3280 = vmatprep.subr.mxu0 %v3067
        %3281 = vmatpush1.msra.mxu0 %v3066
        %3282 = vmatprep.subr.mxu0 %v3075
        %3283 = vmatpush1.msra.mxu0 %v3074
        %3284 = vmatprep.subr.mxu0 %v3083
        %3285 = vmatpush1.msra.mxu0 %v3082
        %3286 = vmatprep.subr.mxu0 %v3091
        %3287 = vmatpush1.msra.mxu0 %v3090
        %3288 = vmatprep.subr.mxu0 %v3099
        %3289 = vmatpush1.msra.mxu0 %v3098
        %3290 = vmatprep.subr.mxu0 %v3107
        %3291 = vmatpush1.msra.mxu0 %v3106
        %3292 = vmatprep.subr.mxu0 %v3115
        %3293 = vmatpush1.msra.mxu0 %v3114
        %3294 = vmatprep.subr.mxu0 %v3123
        %3295 = vmatpush1.msra.mxu0 %v3122
        %3296 = vmatprep.subr.mxu0 %v3131
        %3297 = vmatpush1.msra.mxu0 %v3130
        %3298 = vmatprep.subr.mxu0 %v3139
        %3299 = vmatpush1.msra.mxu0 %v3138
        %3300 = vmatprep.subr.mxu0 %v3147
        %3301 = vmatpush1.msra.mxu0 %v3146
        %3302 = vmatprep.subr.mxu0 %v3155
        %3303 = vmatpush1.msra.mxu0 %v3154
        %3304 = vmatprep.subr.mxu0 %v3163
        %3305 = vmatpush1.msra.mxu0 %v3162
        %3306 = vmatprep.subr.mxu0 %v3171
        %3307 = vmatpush1.msra.mxu0 %v3170
        %3308 = vmatprep.subr.mxu0 %v3179
        %3309 = vmatpush1.msra.mxu0 %v3178
        %3310 = vmatprep.subr.mxu0 %v3187
        %3311 = vmatpush1.msra.mxu0 %v3186
        %3312 = vmatprep.subr.mxu0 %v3195
        %3313 = vmatpush1.msra.mxu0 %v3194
        %3314 = vmatprep.subr.mxu0 %v3203
        %3315 = vmatpush1.msra.mxu0 %v3202
        %3316 = vmatprep.subr.mxu0 %v3211
        %3317 = vmatpush1.msra.mxu0 %v3210
        %3318 = vmatprep.subr.mxu0 %v3219
        %3319 = vmatpush1.msra.mxu0 %v3218
        %3320 = vmatprep.subr.mxu0 %v3227
        %3321 = vmatpush1.msra.mxu0 %v3226
        %3322 = vmatprep.subr.mxu0 %v3235
        %3323 = vmatpush1.msra.mxu0 %v3234
        %3324 = vmatprep.subr.mxu0 %v3243
        %3325 = vmatpush1.msra.mxu0 %v3242
        %3326 = vmatprep.subr.mxu0 %v3251
        %3327 = vmatpush1.msra.mxu0 %v3250
        %3328 = vmatprep.subr.mxu0 %v3259
        %3329 = vmatpush1.msra.mxu0 %v3258
        %3330 = vmatprep.subr.mxu0 0.0
        %3331 = vmatpush1.msra.mxu0 0.0
        %3332 = vmatprep.subr.mxu0 0.0
        %3333 = vmatpush1.msra.mxu0 0.0
        %3334 = vmatprep.subr.mxu0 0.0
        %3335 = vmatpush1.msra.mxu0 0.0
        %3336 = vmatprep.subr.mxu0 0.0
        %3337 = vmatpush1.msra.mxu0 0.0
        %3338 = vmatprep.subr.mxu0 0.0
        %3339 = vmatpush1.msra.mxu0 0.0
        %3340 = vmatprep.mubr.f32.mxu0 %v3268
        %3341 = vmatmul.mubr.f32.gmra.mrb[0].mxu0 %v3044
        %v3342 = vpop.f32.mrb[0].mxu0
        %v3343 = vadd.f32 0.0, %v3342
        %v3344 = vpop.f32.mrb[0].mxu0
        %v3345 = vadd.f32 0.0, %v3344
        %3346 = vmatprep.mubr.f32.mxu0 %v3271
        %3347 = vmatmul.mubr.f32.gmra.mrb[0].mxu0 %v3046
        %v3348 = vpop.f32.mrb[0].mxu0
        %v3349 = vadd.f32 0.0, %v3348
        %v3350 = vpop.f32.mrb[0].mxu0
        %v3351 = vadd.f32 0.0, %v3350
        %3352 = vmatprep.mubr.f32.mxu0 %v3274
        %3353 = vmatmul.mubr.f32.gmra.mrb[0].mxu0 %v3048
        %v3354 = vpop.f32.mrb[0].mxu0
        %v3355 = vadd.f32 0.0, %v3354
        %v3356 = vpop.f32.mrb[0].mxu0
        %v3357 = vadd.f32 0.0, %v3356
        %3358 = vdwg.mxu0
        %3359 = vmatprep.subr.mxu0 %v3053
        %3360 = vmatpush1.msra.mxu0 %v3052
        %3361 = vmatprep.subr.mxu0 %v3061
        %3362 = vmatpush1.msra.mxu0 %v3060
        %3363 = vmatprep.subr.mxu0 %v3069
        %3364 = vmatpush1.msra.mxu0 %v3068
        %3365 = vmatprep.subr.mxu0 %v3077
        %3366 = vmatpush1.msra.mxu0 %v3076
        %3367 = vmatprep.subr.mxu0 %v3085
        %3368 = vmatpush1.msra.mxu0 %v3084
        %3369 = vmatprep.subr.mxu0 %v3093
        %3370 = vmatpush1.msra.mxu0 %v3092
        %3371 = vmatprep.subr.mxu0 %v3101
        %3372 = vmatpush1.msra.mxu0 %v3100
        %3373 = vmatprep.subr.mxu0 %v3109
        %3374 = vmatpush1.msra.mxu0 %v3108
        %3375 = vmatprep.subr.mxu0 %v3117
        %3376 = vmatpush1.msra.mxu0 %v3116
        %3377 = vmatprep.subr.mxu0 %v3125
        %3378 = vmatpush1.msra.mxu0 %v3124
        %3379 = vmatprep.subr.mxu0 %v3133
        %3380 = vmatpush1.msra.mxu0 %v3132
        %3381 = vmatprep.subr.mxu0 %v3141
        %3382 = vmatpush1.msra.mxu0 %v3140
        %3383 = vmatprep.subr.mxu0 %v3149
        %3384 = vmatpush1.msra.mxu0 %v3148
        %3385 = vmatprep.subr.mxu0 %v3157
        %3386 = vmatpush1.msra.mxu0 %v3156
        %3387 = vmatprep.subr.mxu0 %v3165
        %3388 = vmatpush1.msra.mxu0 %v3164
        %3389 = vmatprep.subr.mxu0 %v3173
        %3390 = vmatpush1.msra.mxu0 %v3172
        %3391 = vmatprep.subr.mxu0 %v3181
        %3392 = vmatpush1.msra.mxu0 %v3180
        %3393 = vmatprep.subr.mxu0 %v3189
        %3394 = vmatpush1.msra.mxu0 %v3188
        %3395 = vmatprep.subr.mxu0 %v3197
        %3396 = vmatpush1.msra.mxu0 %v3196
        %3397 = vmatprep.subr.mxu0 %v3205
        %3398 = vmatpush1.msra.mxu0 %v3204
        %3399 = vmatprep.subr.mxu0 %v3213
        %3400 = vmatpush1.msra.mxu0 %v3212
        %3401 = vmatprep.subr.mxu0 %v3221
        %3402 = vmatpush1.msra.mxu0 %v3220
        %3403 = vmatprep.subr.mxu0 %v3229
        %3404 = vmatpush1.msra.mxu0 %v3228
        %3405 = vmatprep.subr.mxu0 %v3237
        %3406 = vmatpush1.msra.mxu0 %v3236
        %3407 = vmatprep.subr.mxu0 %v3245
        %3408 = vmatpush1.msra.mxu0 %v3244
        %3409 = vmatprep.subr.mxu0 %v3253
        %3410 = vmatpush1.msra.mxu0 %v3252
        %3411 = vmatprep.subr.mxu0 %v3261
        %3412 = vmatpush1.msra.mxu0 %v3260
        %3413 = vmatprep.subr.mxu0 0.0
        %3414 = vmatpush1.msra.mxu0 0.0
        %3415 = vmatprep.subr.mxu0 0.0
        %3416 = vmatpush1.msra.mxu0 0.0
        %3417 = vmatprep.subr.mxu0 0.0
        %3418 = vmatpush1.msra.mxu0 0.0
        %3419 = vmatprep.subr.mxu0 0.0
        %3420 = vmatpush1.msra.mxu0 0.0
        %3421 = vmatprep.subr.mxu0 0.0
        %3422 = vmatpush1.msra.mxu0 0.0
        %3423 = vmatprep.mubr.f32.mxu0 %v3268
        %3424 = vmatmul.mubr.f32.gmra.mrb[0].mxu0 %v3044
        %v3425 = vpop.f32.mrb[0].mxu0
        %v3426 = vadd.f32 0.0, %v3425
        %v3427 = vpop.f32.mrb[0].mxu0
        %v3428 = vadd.f32 0.0, %v3427
        %3429 = vmatprep.mubr.f32.mxu0 %v3271
        %3430 = vmatmul.mubr.f32.gmra.mrb[0].mxu0 %v3046
        %v3431 = vpop.f32.mrb[0].mxu0
        %v3432 = vadd.f32 0.0, %v3431
        %v3433 = vpop.f32.mrb[0].mxu0
        %v3434 = vadd.f32 0.0, %v3433
        %3435 = vmatprep.mubr.f32.mxu0 %v3274
        %3436 = vmatmul.mubr.f32.gmra.mrb[0].mxu0 %v3048
        %v3437 = vpop.f32.mrb[0].mxu0
        %v3438 = vadd.f32 0.0, %v3437
        %v3439 = vpop.f32.mrb[0].mxu0
        %v3440 = vadd.f32 0.0, %v3439
        %3441 = vdwg.mxu0
        %3442 = vmatprep.subr.mxu0 %v3055
        %3443 = vmatpush1.msra.mxu0 %v3054
        %3444 = vmatprep.subr.mxu0 %v3063
        %3445 = vmatpush1.msra.mxu0 %v3062
        %3446 = vmatprep.subr.mxu0 %v3071
        %3447 = vmatpush1.msra.mxu0 %v3070
        %3448 = vmatprep.subr.mxu0 %v3079
        %3449 = vmatpush1.msra.mxu0 %v3078
        %3450 = vmatprep.subr.mxu0 %v3087
        %3451 = vmatpush1.msra.mxu0 %v3086
        %3452 = vmatprep.subr.mxu0 %v3095
        %3453 = vmatpush1.msra.mxu0 %v3094
        %3454 = vmatprep.subr.mxu0 %v3103
        %3455 = vmatpush1.msra.mxu0 %v3102
        %3456 = vmatprep.subr.mxu0 %v3111
        %3457 = vmatpush1.msra.mxu0 %v3110
        %3458 = vmatprep.subr.mxu0 %v3119
        %3459 = vmatpush1.msra.mxu0 %v3118
        %3460 = vmatprep.subr.mxu0 %v3127
        %3461 = vmatpush1.msra.mxu0 %v3126
        %3462 = vmatprep.subr.mxu0 %v3135
        %3463 = vmatpush1.msra.mxu0 %v3134
        %3464 = vmatprep.subr.mxu0 %v3143
        %3465 = vmatpush1.msra.mxu0 %v3142
        %3466 = vmatprep.subr.mxu0 %v3151
        %3467 = vmatpush1.msra.mxu0 %v3150
        %3468 = vmatprep.subr.mxu0 %v3159
        %3469 = vmatpush1.msra.mxu0 %v3158
        %3470 = vmatprep.subr.mxu0 %v3167
        %3471 = vmatpush1.msra.mxu0 %v3166
        %3472 = vmatprep.subr.mxu0 %v3175
        %3473 = vmatpush1.msra.mxu0 %v3174
        %3474 = vmatprep.subr.mxu0 %v3183
        %3475 = vmatpush1.msra.mxu0 %v3182
        %3476 = vmatprep.subr.mxu0 %v3191
        %3477 = vmatpush1.msra.mxu0 %v3190
        %3478 = vmatprep.subr.mxu0 %v3199
        %3479 = vmatpush1.msra.mxu0 %v3198
        %3480 = vmatprep.subr.mxu0 %v3207
        %3481 = vmatpush1.msra.mxu0 %v3206
        %3482 = vmatprep.subr.mxu0 %v3215
        %3483 = vmatpush1.msra.mxu0 %v3214
        %3484 = vmatprep.subr.mxu0 %v3223
        %3485 = vmatpush1.msra.mxu0 %v3222
        %3486 = vmatprep.subr.mxu0 %v3231
        %3487 = vmatpush1.msra.mxu0 %v3230
        %3488 = vmatprep.subr.mxu0 %v3239
        %3489 = vmatpush1.msra.mxu0 %v3238
        %3490 = vmatprep.subr.mxu0 %v3247
        %3491 = vmatpush1.msra.mxu0 %v3246
        %3492 = vmatprep.subr.mxu0 %v3255
        %3493 = vmatpush1.msra.mxu0 %v3254
        %3494 = vmatprep.subr.mxu0 %v3263
        %3495 = vmatpush1.msra.mxu0 %v3262
        %3496 = vmatprep.subr.mxu0 0.0
        %3497 = vmatpush1.msra.mxu0 0.0
        %3498 = vmatprep.subr.mxu0 0.0
        %3499 = vmatpush1.msra.mxu0 0.0
        %3500 = vmatprep.subr.mxu0 0.0
        %3501 = vmatpush1.msra.mxu0 0.0
        %3502 = vmatprep.subr.mxu0 0.0
        %3503 = vmatpush1.msra.mxu0 0.0
        %3504 = vmatprep.subr.mxu0 0.0
        %3505 = vmatpush1.msra.mxu0 0.0
        %3506 = vmatprep.mubr.f32.mxu0 %v3268
        %3507 = vmatmul.mubr.f32.gmra.mrb[0].mxu0 %v3044
        %v3508 = vpop.f32.mrb[0].mxu0
        %v3509 = vadd.f32 0.0, %v3508
        %v3510 = vpop.f32.mrb[0].mxu0
        %v3511 = vadd.f32 0.0, %v3510
        %3512 = vmatprep.mubr.f32.mxu0 %v3271
        %3513 = vmatmul.mubr.f32.gmra.mrb[0].mxu0 %v3046
        %v3514 = vpop.f32.mrb[0].mxu0
        %v3515 = vadd.f32 0.0, %v3514
        %v3516 = vpop.f32.mrb[0].mxu0
        %v3517 = vadd.f32 0.0, %v3516
        %3518 = vmatprep.mubr.f32.mxu0 %v3274
        %3519 = vmatmul.mubr.f32.gmra.mrb[0].mxu0 %v3048
        %v3520 = vpop.f32.mrb[0].mxu0
        %v3521 = vadd.f32 0.0, %v3520
        %v3522 = vpop.f32.mrb[0].mxu0
        %v3523 = vadd.f32 0.0, %v3522
        %3524 = vdwg.mxu0
        %3525 = vmatprep.subr.mxu0 %v3057
        %3526 = vmatpush1.msra.mxu0 %v3056
        %3527 = vmatprep.subr.mxu0 %v3065
        %3528 = vmatpush1.msra.mxu0 %v3064
        %3529 = vmatprep.subr.mxu0 %v3073
        %3530 = vmatpush1.msra.mxu0 %v3072
        %3531 = vmatprep.subr.mxu0 %v3081
        %3532 = vmatpush1.msra.mxu0 %v3080
        %3533 = vmatprep.subr.mxu0 %v3089
        %3534 = vmatpush1.msra.mxu0 %v3088
        %3535 = vmatprep.subr.mxu0 %v3097
        %3536 = vmatpush1.msra.mxu0 %v3096
        %3537 = vmatprep.subr.mxu0 %v3105
        %3538 = vmatpush1.msra.mxu0 %v3104
        %3539 = vmatprep.subr.mxu0 %v3113
        %3540 = vmatpush1.msra.mxu0 %v3112
        %3541 = vmatprep.subr.mxu0 %v3121
        %3542 = vmatpush1.msra.mxu0 %v3120
        %3543 = vmatprep.subr.mxu0 %v3129
        %3544 = vmatpush1.msra.mxu0 %v3128
        %3545 = vmatprep.subr.mxu0 %v3137
        %3546 = vmatpush1.msra.mxu0 %v3136
        %3547 = vmatprep.subr.mxu0 %v3145
        %3548 = vmatpush1.msra.mxu0 %v3144
        %3549 = vmatprep.subr.mxu0 %v3153
        %3550 = vmatpush1.msra.mxu0 %v3152
        %3551 = vmatprep.subr.mxu0 %v3161
        %3552 = vmatpush1.msra.mxu0 %v3160
        %3553 = vmatprep.subr.mxu0 %v3169
        %3554 = vmatpush1.msra.mxu0 %v3168
        %3555 = vmatprep.subr.mxu0 %v3177
        %3556 = vmatpush1.msra.mxu0 %v3176
        %3557 = vmatprep.subr.mxu0 %v3185
        %3558 = vmatpush1.msra.mxu0 %v3184
        %3559 = vmatprep.subr.mxu0 %v3193
        %3560 = vmatpush1.msra.mxu0 %v3192
        %3561 = vmatprep.subr.mxu0 %v3201
        %3562 = vmatpush1.msra.mxu0 %v3200
        %3563 = vmatprep.subr.mxu0 %v3209
        %3564 = vmatpush1.msra.mxu0 %v3208
        %3565 = vmatprep.subr.mxu0 %v3217
        %3566 = vmatpush1.msra.mxu0 %v3216
        %3567 = vmatprep.subr.mxu0 %v3225
        %3568 = vmatpush1.msra.mxu0 %v3224
        %3569 = vmatprep.subr.mxu0 %v3233
        %3570 = vmatpush1.msra.mxu0 %v3232
        %3571 = vmatprep.subr.mxu0 %v3241
        %3572 = vmatpush1.msra.mxu0 %v3240
        %3573 = vmatprep.subr.mxu0 %v3249
        %3574 = vmatpush1.msra.mxu0 %v3248
        %3575 = vmatprep.subr.mxu0 %v3257
        %3576 = vmatpush1.msra.mxu0 %v3256
        %3577 = vmatprep.subr.mxu0 %v3265
        %3578 = vmatpush1.msra.mxu0 %v3264
        %3579 = vmatprep.subr.mxu0 0.0
        %3580 = vmatpush1.msra.mxu0 0.0
        %3581 = vmatprep.subr.mxu0 0.0
        %3582 = vmatpush1.msra.mxu0 0.0
        %3583 = vmatprep.subr.mxu0 0.0
        %3584 = vmatpush1.msra.mxu0 0.0
        %3585 = vmatprep.subr.mxu0 0.0
        %3586 = vmatpush1.msra.mxu0 0.0
        %3587 = vmatprep.subr.mxu0 0.0
        %3588 = vmatpush1.msra.mxu0 0.0
        %3589 = vmatprep.mubr.f32.mxu0 %v3268
        %3590 = vmatmul.mubr.f32.gmra.mrb[0].mxu0 %v3044
        %v3591 = vpop.f32.mrb[0].mxu0
        %v3592 = vadd.f32 0.0, %v3591
        %v3593 = vpop.f32.mrb[0].mxu0
        %v3594 = vadd.f32 0.0, %v3593
        %3595 = vmatprep.mubr.f32.mxu0 %v3271
        %3596 = vmatmul.mubr.f32.gmra.mrb[0].mxu0 %v3046
        %v3597 = vpop.f32.mrb[0].mxu0
        %v3598 = vadd.f32 0.0, %v3597
        %v3599 = vpop.f32.mrb[0].mxu0
        %v3600 = vadd.f32 0.0, %v3599
        %3601 = vmatprep.mubr.f32.mxu0 %v3274
        %3602 = vmatmul.mubr.f32.gmra.mrb[0].mxu0 %v3048
        %v3603 = vpop.f32.mrb[0].mxu0
        %v3604 = vadd.f32 0.0, %v3603
        %v3605 = vpop.f32.mrb[0].mxu0
        %v3606 = vadd.f32 0.0, %v3605
        %3607 = vdwg.mxu0
        %v3608 = vld [vmem:[%s7] sm:$0xff]
        %v3609 = vld [vmem:[%s7 + $0x8] sm:$0xff]
        %v3610 = vld [vmem:[%s7 + $0x10] sm:$0xf]
        %3612 = vset.pattern.permute.xlu0 0
        %3613 = vperm.xlu0 %3612, %v3608
        %v3614 = vpop.permute.xlu0 %3613
        %3617 = vset.pattern.permute.xlu0 0
        %3618 = vperm.xlu0 %3617, %v3609
        %v3619 = vpop.permute.xlu0 %3618
        %3622 = vset.pattern.permute.xlu0 0
        %3623 = vperm.xlu0 %3622, %v3610
        %v3624 = vpop.permute.xlu0 %3623
        %v3626 = vmul.f32 %v3343, %v3614
        %v3627 = vmul.f32 %v3345, %v3614
        %v3628 = vmul.f32 %v3426, %v3614
        %v3629 = vmul.f32 %v3428, %v3614
        %v3630 = vmul.f32 %v3509, %v3614
        %v3631 = vmul.f32 %v3511, %v3614
        %v3632 = vmul.f32 %v3592, %v3614
        %v3633 = vmul.f32 %v3594, %v3614
        %v3634 = vmul.f32 %v3349, %v3619
        %v3635 = vmul.f32 %v3351, %v3619
        %v3636 = vmul.f32 %v3432, %v3619
        %v3637 = vmul.f32 %v3434, %v3619
        %v3638 = vmul.f32 %v3515, %v3619
        %v3639 = vmul.f32 %v3517, %v3619
        %v3640 = vmul.f32 %v3598, %v3619
        %v3641 = vmul.f32 %v3600, %v3619
        %v3642 = vmul.f32 %v3355, %v3624
        %v3643 = vmul.f32 %v3357, %v3624
        %v3644 = vmul.f32 %v3438, %v3624
        %v3645 = vmul.f32 %v3440, %v3624
        %v3646 = vmul.f32 %v3521, %v3624
        %v3647 = vmul.f32 %v3523, %v3624
        %v3648 = vmul.f32 %v3604, %v3624
        %v3649 = vmul.f32 %v3606, %v3624
        %v3650 = vld [vmem:[%s8] sm:$0xff]
        %v3651 = vld [vmem:[%s8 + $0x8] sm:$0xff]
        %v3652 = vld [vmem:[%s8 + $0x10] sm:$0xf]
        %3654 = vset.pattern.permute.xlu0 0
        %3655 = vperm.xlu0 %3654, %v3650
        %v3656 = vpop.permute.xlu0 %3655
        %3659 = vset.pattern.permute.xlu0 0
        %3660 = vperm.xlu0 %3659, %v3651
        %v3661 = vpop.permute.xlu0 %3660
        %3664 = vset.pattern.permute.xlu0 0
        %3665 = vperm.xlu0 %3664, %v3652
        %v3666 = vpop.permute.xlu0 %3665
        %v3668 = vadd.f32 %v3626, %v3656
        %v3669 = vadd.f32 %v3627, %v3656
        %v3670 = vadd.f32 %v3628, %v3656
        %v3671 = vadd.f32 %v3629, %v3656
        %v3672 = vadd.f32 %v3630, %v3656
        %v3673 = vadd.f32 %v3631, %v3656
        %v3674 = vadd.f32 %v3632, %v3656
        %v3675 = vadd.f32 %v3633, %v3656
        %v3676 = vadd.f32 %v3634, %v3661
        %v3677 = vadd.f32 %v3635, %v3661
        %v3678 = vadd.f32 %v3636, %v3661
        %v3679 = vadd.f32 %v3637, %v3661
        %v3680 = vadd.f32 %v3638, %v3661
        %v3681 = vadd.f32 %v3639, %v3661
        %v3682 = vadd.f32 %v3640, %v3661
        %v3683 = vadd.f32 %v3641, %v3661
        %v3684 = vadd.f32 %v3642, %v3666
        %v3685 = vadd.f32 %v3643, %v3666
        %v3686 = vadd.f32 %v3644, %v3666
        %v3687 = vadd.f32 %v3645, %v3666
        %v3688 = vadd.f32 %v3646, %v3666
        %v3689 = vadd.f32 %v3647, %v3666
        %v3690 = vadd.f32 %v3648, %v3666
        %v3691 = vadd.f32 %v3649, %v3666
        %v3692 = vmax.f32 %v3668, 0.0
        %v3693 = vmax.f32 %v3669, 0.0
        %v3694 = vmax.f32 %v3670, 0.0
        %v3695 = vmax.f32 %v3671, 0.0
        %v3696 = vmax.f32 %v3672, 0.0
        %v3697 = vmax.f32 %v3673, 0.0
        %v3698 = vmax.f32 %v3674, 0.0
        %v3699 = vmax.f32 %v3675, 0.0
        %v3700 = vmax.f32 %v3676, 0.0
        %v3701 = vmax.f32 %v3677, 0.0
        %v3702 = vmax.f32 %v3678, 0.0
        %v3703 = vmax.f32 %v3679, 0.0
        %v3704 = vmax.f32 %v3680, 0.0
        %v3705 = vmax.f32 %v3681, 0.0
        %v3706 = vmax.f32 %v3682, 0.0
        %v3707 = vmax.f32 %v3683, 0.0
        %v3708 = vmax.f32 %v3684, 0.0
        %v3709 = vmax.f32 %v3685, 0.0
        %v3710 = vmax.f32 %v3686, 0.0
        %v3711 = vmax.f32 %v3687, 0.0
        %v3712 = vmax.f32 %v3688, 0.0
        %v3713 = vmax.f32 %v3689, 0.0
        %v3714 = vmax.f32 %v3690, 0.0
        %v3715 = vmax.f32 %v3691, 0.0
        %3716 = vrot.lane.b32.xlu0 %v3692, 126
        %v3717 = vpop.permute.xlu0 %3716
        %3718 = vrot.lane.b32.xlu0 %v3700, 126
        %v3719 = vpop.permute.xlu0 %3718
        %3720 = vrot.lane.b32.xlu0 %v3708, 126
        %v3721 = vpop.permute.xlu0 %3720
        %3722 = vrot.lane.b32.xlu0 %v3693, 126
        %v3723 = vpop.permute.xlu0 %3722
        %3724 = vrot.lane.b32.xlu0 %v3701, 126
        %v3725 = vpop.permute.xlu0 %3724
        %3726 = vrot.lane.b32.xlu0 %v3709, 126
        %v3727 = vpop.permute.xlu0 %3726
        %3728 = vrot.lane.b32.xlu0 %v3694, 126
        %v3729 = vpop.permute.xlu0 %3728
        %3730 = vrot.lane.b32.xlu0 %v3702, 126
        %v3731 = vpop.permute.xlu0 %3730
        %3732 = vrot.lane.b32.xlu0 %v3710, 126
        %v3733 = vpop.permute.xlu0 %3732
        %3734 = vrot.lane.b32.xlu0 %v3695, 126
        %v3735 = vpop.permute.xlu0 %3734
        %3736 = vrot.lane.b32.xlu0 %v3703, 126
        %v3737 = vpop.permute.xlu0 %3736
        %3738 = vrot.lane.b32.xlu0 %v3711, 126
        %v3739 = vpop.permute.xlu0 %3738
        %3740 = vrot.lane.b32.xlu0 %v3696, 126
        %v3741 = vpop.permute.xlu0 %3740
        %3742 = vrot.lane.b32.xlu0 %v3704, 126
        %v3743 = vpop.permute.xlu0 %3742
        %3744 = vrot.lane.b32.xlu0 %v3712, 126
        %v3745 = vpop.permute.xlu0 %3744
        %3746 = vrot.lane.b32.xlu0 %v3697, 126
        %v3747 = vpop.permute.xlu0 %3746
        %3748 = vrot.lane.b32.xlu0 %v3705, 126
        %v3749 = vpop.permute.xlu0 %3748
        %3750 = vrot.lane.b32.xlu0 %v3713, 126
        %v3751 = vpop.permute.xlu0 %3750
        %3752 = vrot.lane.b32.xlu0 %v3698, 126
        %v3753 = vpop.permute.xlu0 %3752
        %3754 = vrot.lane.b32.xlu0 %v3706, 126
        %v3755 = vpop.permute.xlu0 %3754
        %3756 = vrot.lane.b32.xlu0 %v3714, 126
        %v3757 = vpop.permute.xlu0 %3756
        %3758 = vrot.lane.b32.xlu0 %v3699, 126
        %v3759 = vpop.permute.xlu0 %3758
        %3760 = vrot.lane.b32.xlu0 %v3707, 126
        %v3761 = vpop.permute.xlu0 %3760
        %3762 = vrot.lane.b32.xlu0 %v3715, 126
        %v3763 = vpop.permute.xlu0 %3762
        %v3764 = vsel %vm2480, %v3753, %v3759
        %v3765 = vsel %vm2480, %v3755, %v3761
        %v3766 = vsel %vm2480, %v3757, %v3763
        %v3767 = vsel %vm2480, %v3747, %v3753
        %v3768 = vsel %vm2480, %v3749, %v3755
        %v3769 = vsel %vm2480, %v3751, %v3757
        %v3770 = vsel %vm2480, %v3741, %v3747
        %v3771 = vsel %vm2480, %v3743, %v3749
        %v3772 = vsel %vm2480, %v3745, %v3751
        %v3773 = vsel %vm2480, %v3735, %v3741
        %v3774 = vsel %vm2480, %v3737, %v3743
        %v3775 = vsel %vm2480, %v3739, %v3745
        %v3776 = vsel %vm2480, %v3729, %v3735
        %v3777 = vsel %vm2480, %v3731, %v3737
        %v3778 = vsel %vm2480, %v3733, %v3739
        %v3779 = vsel %vm2480, %v3723, %v3729
        %v3780 = vsel %vm2480, %v3725, %v3731
        %v3781 = vsel %vm2480, %v3727, %v3733
        %v3782 = vsel %vm2480, %v3717, %v3723
        %v3783 = vsel %vm2480, %v3719, %v3725
        %v3784 = vsel %vm2480, %v3721, %v3727
        %v3785 = vsel %vm2480, %v3759, %v3717
        %v3786 = vsel %vm2480, %v3761, %v3719
        %v3787 = vsel %vm2480, %v3763, %v3721
        %v3788 = vmax.f32 %v3692, %v3782
        %v3789 = vmax.f32 %v3693, %v3779
        %v3790 = vmax.f32 %v3694, %v3776
        %v3791 = vmax.f32 %v3695, %v3773
        %v3792 = vmax.f32 %v3696, %v3770
        %v3793 = vmax.f32 %v3697, %v3767
        %v3794 = vmax.f32 %v3698, %v3764
        %v3795 = vmax.f32 %v3699, %v3785
        %v3796 = vmax.f32 %v3700, %v3783
        %v3797 = vmax.f32 %v3701, %v3780
        %v3798 = vmax.f32 %v3702, %v3777
        %v3799 = vmax.f32 %v3703, %v3774
        %v3800 = vmax.f32 %v3704, %v3771
        %v3801 = vmax.f32 %v3705, %v3768
        %v3802 = vmax.f32 %v3706, %v3765
        %v3803 = vmax.f32 %v3707, %v3786
        %v3804 = vmax.f32 %v3708, %v3784
        %v3805 = vmax.f32 %v3709, %v3781
        %v3806 = vmax.f32 %v3710, %v3778
        %v3807 = vmax.f32 %v3711, %v3775
        %v3808 = vmax.f32 %v3712, %v3772
        %v3809 = vmax.f32 %v3713, %v3769
        %v3810 = vmax.f32 %v3714, %v3766
        %v3811 = vmax.f32 %v3715, %v3787
        %3812 = vrot.lane.b32.xlu0 %v3788, 96
        %v3813 = vpop.permute.xlu0 %3812
        %3814 = vrot.lane.b32.xlu0 %v3796, 96
        %v3815 = vpop.permute.xlu0 %3814
        %3816 = vrot.lane.b32.xlu0 %v3804, 96
        %v3817 = vpop.permute.xlu0 %3816
        %3818 = vrot.lane.b32.xlu0 %v3789, 96
        %v3819 = vpop.permute.xlu0 %3818
        %3820 = vrot.lane.b32.xlu0 %v3797, 96
        %v3821 = vpop.permute.xlu0 %3820
        %3822 = vrot.lane.b32.xlu0 %v3805, 96
        %v3823 = vpop.permute.xlu0 %3822
        %3824 = vrot.lane.b32.xlu0 %v3790, 96
        %v3825 = vpop.permute.xlu0 %3824
        %3826 = vrot.lane.b32.xlu0 %v3798, 96
        %v3827 = vpop.permute.xlu0 %3826
        %3828 = vrot.lane.b32.xlu0 %v3806, 96
        %v3829 = vpop.permute.xlu0 %3828
        %3830 = vrot.lane.b32.xlu0 %v3791, 96
        %v3831 = vpop.permute.xlu0 %3830
        %3832 = vrot.lane.b32.xlu0 %v3799, 96
        %v3833 = vpop.permute.xlu0 %3832
        %3834 = vrot.lane.b32.xlu0 %v3807, 96
        %v3835 = vpop.permute.xlu0 %3834
        %3836 = vrot.lane.b32.xlu0 %v3792, 96
        %v3837 = vpop.permute.xlu0 %3836
        %3838 = vrot.lane.b32.xlu0 %v3800, 96
        %v3839 = vpop.permute.xlu0 %3838
        %3840 = vrot.lane.b32.xlu0 %v3808, 96
        %v3841 = vpop.permute.xlu0 %3840
        %3842 = vrot.lane.b32.xlu0 %v3793, 96
        %v3843 = vpop.permute.xlu0 %3842
        %3844 = vrot.lane.b32.xlu0 %v3801, 96
        %v3845 = vpop.permute.xlu0 %3844
        %3846 = vrot.lane.b32.xlu0 %v3809, 96
        %v3847 = vpop.permute.xlu0 %3846
        %3848 = vrot.lane.b32.xlu0 %v3794, 96
        %v3849 = vpop.permute.xlu0 %3848
        %3850 = vrot.lane.b32.xlu0 %v3802, 96
        %v3851 = vpop.permute.xlu0 %3850
        %3852 = vrot.lane.b32.xlu0 %v3810, 96
        %v3853 = vpop.permute.xlu0 %3852
        %3854 = vrot.lane.b32.xlu0 %v3795, 96
        %v3855 = vpop.permute.xlu0 %3854
        %3856 = vrot.lane.b32.xlu0 %v3803, 96
        %v3857 = vpop.permute.xlu0 %3856
        %3858 = vrot.lane.b32.xlu0 %v3811, 96
        %v3859 = vpop.permute.xlu0 %3858
        %v3860 = vsel %vm2786, %v3849, %v3855
        %v3861 = vsel %vm2786, %v3851, %v3857
        %v3862 = vsel %vm2786, %v3853, %v3859
        %v3863 = vsel %vm2786, %v3843, %v3849
        %v3864 = vsel %vm2786, %v3845, %v3851
        %v3865 = vsel %vm2786, %v3847, %v3853
        %v3866 = vsel %vm2786, %v3837, %v3843
        %v3867 = vsel %vm2786, %v3839, %v3845
        %v3868 = vsel %vm2786, %v3841, %v3847
        %v3869 = vsel %vm2786, %v3831, %v3837
        %v3870 = vsel %vm2786, %v3833, %v3839
        %v3871 = vsel %vm2786, %v3835, %v3841
        %v3872 = vsel %vm2786, %v3825, %v3831
        %v3873 = vsel %vm2786, %v3827, %v3833
        %v3874 = vsel %vm2786, %v3829, %v3835
        %v3875 = vsel %vm2786, %v3819, %v3825
        %v3876 = vsel %vm2786, %v3821, %v3827
        %v3877 = vsel %vm2786, %v3823, %v3829
        %v3878 = vsel %vm2786, %v3813, %v3819
        %v3879 = vsel %vm2786, %v3815, %v3821
        %v3880 = vsel %vm2786, %v3817, %v3823
        %v3881 = vsel %vm2786, %v3855, %v3813
        %v3882 = vsel %vm2786, %v3857, %v3815
        %v3883 = vsel %vm2786, %v3859, %v3817
        %v3884 = vmax.f32 %v3788, %v3878
        %v3885 = vmax.f32 %v3789, %v3875
        %v3886 = vmax.f32 %v3790, %v3872
        %v3887 = vmax.f32 %v3791, %v3869
        %v3888 = vmax.f32 %v3792, %v3866
        %v3889 = vmax.f32 %v3793, %v3863
        %v3890 = vmax.f32 %v3794, %v3860
        %v3891 = vmax.f32 %v3795, %v3881
        %v3892 = vmax.f32 %v3796, %v3879
        %v3893 = vmax.f32 %v3797, %v3876
        %v3894 = vmax.f32 %v3798, %v3873
        %v3895 = vmax.f32 %v3799, %v3870
        %v3896 = vmax.f32 %v3800, %v3867
        %v3897 = vmax.f32 %v3801, %v3864
        %v3898 = vmax.f32 %v3802, %v3861
        %v3899 = vmax.f32 %v3803, %v3882
        %v3900 = vmax.f32 %v3804, %v3880
        %v3901 = vmax.f32 %v3805, %v3877
        %v3902 = vmax.f32 %v3806, %v3874
        %v3903 = vmax.f32 %v3807, %v3871
        %v3904 = vmax.f32 %v3808, %v3868
        %v3905 = vmax.f32 %v3809, %v3865
        %v3906 = vmax.f32 %v3810, %v3862
        %v3907 = vmax.f32 %v3811, %v3883
        %v3908 = vld [vmem:[%s9] sm:$0xff]
        %v3909 = vld [vmem:[%s9 + $0x8] sm:$0xff]
        %v3910 = vld [vmem:[%s9 + $0x10] sm:$0xff]
        %v3911 = vld [vmem:[%s9 + $0x18] sm:$0xff]
        %v3912 = vld [vmem:[%s9 + $0x20] sm:$0xff]
        %v3913 = vld [vmem:[%s9 + $0x28] sm:$0xff]
        %v3914 = vld [vmem:[%s9 + $0x30] sm:$0xff]
        %v3915 = vld [vmem:[%s9 + $0x38] sm:$0xff]
        %v3916 = vld [vmem:[%s9 + $0x40] sm:$0xff]
        %v3917 = vld [vmem:[%s9 + $0x48] sm:$0xff]
        %v3918 = vld [vmem:[%s9 + $0x50] sm:$0xff]
        %v3919 = vld [vmem:[%s9 + $0x58] sm:$0xff]
        %v3920 = vld [vmem:[%s9 + $0x60] sm:$0xff]
        %v3921 = vld [vmem:[%s9 + $0x68] sm:$0xff]
        %v3922 = vld [vmem:[%s9 + $0x70] sm:$0xff]
        %v3923 = vld [vmem:[%s9 + $0x78] sm:$0xff]
        %v3924 = vld [vmem:[%s9 + $0x80] sm:$0xff]
        %v3925 = vld [vmem:[%s9 + $0x88] sm:$0xff]
        %v3926 = vld [vmem:[%s9 + $0x90] sm:$0xff]
        %v3927 = vld [vmem:[%s9 + $0x98] sm:$0xff]
        %v3928 = vld [vmem:[%s9 + $0xa0] sm:$0xff]
        %v3929 = vld [vmem:[%s9 + $0xa8] sm:$0xff]
        %v3930 = vld [vmem:[%s9 + $0xb0] sm:$0xff]
        %v3931 = vld [vmem:[%s9 + $0xb8] sm:$0xff]
        %v3932 = vld [vmem:[%s9 + $0xc0] sm:$0xff]
        %v3933 = vld [vmem:[%s9 + $0xc8] sm:$0xff]
        %v3934 = vld [vmem:[%s9 + $0xd0] sm:$0xff]
        %v3935 = vld [vmem:[%s9 + $0xd8] sm:$0xff]
        %v3936 = vld [vmem:[%s9 + $0xe0] sm:$0xff]
        %v3937 = vld [vmem:[%s9 + $0xe8] sm:$0xff]
        %v3938 = vld [vmem:[%s9 + $0xf0] sm:$0xff]
        %v3939 = vld [vmem:[%s9 + $0xf8] sm:$0xff]
        %v3940 = vld [vmem:[%s9 + $0x100] sm:$0xff]
        %v3941 = vld [vmem:[%s9 + $0x108] sm:$0xff]
        %v3942 = vld [vmem:[%s9 + $0x110] sm:$0xff]
        %v3943 = vld [vmem:[%s9 + $0x118] sm:$0xff]
        %v3944 = vld [vmem:[%s9 + $0x120] sm:$0xff]
        %v3945 = vld [vmem:[%s9 + $0x128] sm:$0xff]
        %v3946 = vld [vmem:[%s9 + $0x130] sm:$0xff]
        %v3947 = vld [vmem:[%s9 + $0x138] sm:$0xff]
        %v3948 = vld [vmem:[%s9 + $0x140] sm:$0xff]
        %v3949 = vld [vmem:[%s9 + $0x148] sm:$0xff]
        %v3950 = vld [vmem:[%s9 + $0x150] sm:$0xff]
        %v3951 = vld [vmem:[%s9 + $0x158] sm:$0xff]
        %v3952 = vld [vmem:[%s9 + $0x160] sm:$0xff]
        %v3953 = vld [vmem:[%s9 + $0x168] sm:$0xff]
        %v3954 = vld [vmem:[%s9 + $0x170] sm:$0xff]
        %v3955 = vld [vmem:[%s9 + $0x178] sm:$0xff]
        %v3956 = vld [vmem:[%s9 + $0x180] sm:$0xff]
        %v3957 = vld [vmem:[%s9 + $0x188] sm:$0xff]
        %v3958 = vld [vmem:[%s9 + $0x190] sm:$0xff]
        %v3959 = vld [vmem:[%s9 + $0x198] sm:$0xff]
        %v3960 = vld [vmem:[%s9 + $0x1a0] sm:$0xff]
        %v3961 = vld [vmem:[%s9 + $0x1a8] sm:$0xff]
        %v3962 = vld [vmem:[%s9 + $0x1b0] sm:$0xff]
        %v3963 = vld [vmem:[%s9 + $0x1b8] sm:$0xff]
        %v3964 = vld [vmem:[%s9 + $0x1c0] sm:$0xff]
        %v3965 = vld [vmem:[%s9 + $0x1c8] sm:$0xff]
        %v3966 = vld [vmem:[%s9 + $0x1d0] sm:$0xff]
        %v3967 = vld [vmem:[%s9 + $0x1d8] sm:$0xff]
        %v3968 = vld [vmem:[%s9 + $0x1e0] sm:$0xff]
        %v3969 = vld [vmem:[%s9 + $0x1e8] sm:$0xff]
        %v3970 = vld [vmem:[%s9 + $0x1f0] sm:$0xff]
        %v3971 = vld [vmem:[%s9 + $0x1f8] sm:$0xff]
        %v3972 = vld [vmem:[%s9 + $0x200] sm:$0xff]
        %v3973 = vld [vmem:[%s9 + $0x208] sm:$0xff]
        %v3974 = vld [vmem:[%s9 + $0x210] sm:$0xff]
        %v3975 = vld [vmem:[%s9 + $0x218] sm:$0xff]
        %v3976 = vld [vmem:[%s9 + $0x220] sm:$0xff]
        %v3977 = vld [vmem:[%s9 + $0x228] sm:$0xff]
        %v3978 = vld [vmem:[%s9 + $0x230] sm:$0xff]
        %v3979 = vld [vmem:[%s9 + $0x238] sm:$0xff]
        %v3980 = vld [vmem:[%s9 + $0x240] sm:$0xff]
        %v3981 = vld [vmem:[%s9 + $0x248] sm:$0xff]
        %v3982 = vld [vmem:[%s9 + $0x250] sm:$0xff]
        %v3983 = vld [vmem:[%s9 + $0x258] sm:$0xff]
        %v3984 = vld [vmem:[%s9 + $0x260] sm:$0xff]
        %v3985 = vld [vmem:[%s9 + $0x268] sm:$0xff]
        %v3986 = vld [vmem:[%s9 + $0x270] sm:$0xff]
        %v3987 = vld [vmem:[%s9 + $0x278] sm:$0xff]
        %v3988 = vld [vmem:[%s9 + $0x280] sm:$0xff]
        %v3989 = vld [vmem:[%s9 + $0x288] sm:$0xff]
        %v3990 = vld [vmem:[%s9 + $0x290] sm:$0xff]
        %v3991 = vld [vmem:[%s9 + $0x298] sm:$0xff]
        %v3992 = vld [vmem:[%s9 + $0x2a0] sm:$0xff]
        %v3993 = vld [vmem:[%s9 + $0x2a8] sm:$0xff]
        %v3994 = vld [vmem:[%s9 + $0x2b0] sm:$0xff]
        %v3995 = vld [vmem:[%s9 + $0x2b8] sm:$0xff]
        %v3996 = vld [vmem:[%s9 + $0x2c0] sm:$0xff]
        %v3997 = vld [vmem:[%s9 + $0x2c8] sm:$0xff]
        %v3998 = vld [vmem:[%s9 + $0x2d0] sm:$0xff]
        %v3999 = vld [vmem:[%s9 + $0x2d8] sm:$0xff]
        %v4000 = vld [vmem:[%s9 + $0x2e0] sm:$0xff]
        %v4001 = vld [vmem:[%s9 + $0x2e8] sm:$0xff]
        %v4002 = vld [vmem:[%s9 + $0x2f0] sm:$0xff]
        %v4003 = vld [vmem:[%s9 + $0x2f8] sm:$0xff]
        %v4004 = vld [vmem:[%s9 + $0x300] sm:$0xff]
        %v4005 = vld [vmem:[%s9 + $0x308] sm:$0xff]
        %v4006 = vld [vmem:[%s9 + $0x310] sm:$0xff]
        %v4007 = vld [vmem:[%s9 + $0x318] sm:$0xff]
        %v4008 = vld [vmem:[%s9 + $0x320] sm:$0xff]
        %v4009 = vld [vmem:[%s9 + $0x328] sm:$0xff]
        %v4010 = vld [vmem:[%s9 + $0x330] sm:$0xff]
        %v4011 = vld [vmem:[%s9 + $0x338] sm:$0xff]
        %v4012 = vld [vmem:[%s9 + $0x340] sm:$0xff]
        %v4013 = vld [vmem:[%s9 + $0x348] sm:$0xff]
        %v4014 = vld [vmem:[%s9 + $0x350] sm:$0xff]
        %v4015 = vld [vmem:[%s9 + $0x358] sm:$0xff]
        %v4016 = vld [vmem:[%s9 + $0x360] sm:$0xff]
        %v4017 = vld [vmem:[%s9 + $0x368] sm:$0xff]
        %v4018 = vld [vmem:[%s9 + $0x370] sm:$0xff]
        %v4019 = vld [vmem:[%s9 + $0x378] sm:$0xff]
        %v4020 = vld [vmem:[%s9 + $0x380] sm:$0xff]
        %v4021 = vld [vmem:[%s9 + $0x388] sm:$0xff]
        %v4022 = vld [vmem:[%s9 + $0x390] sm:$0xff]
        %v4023 = vld [vmem:[%s9 + $0x398] sm:$0xff]
        %v4024 = vld [vmem:[%s9 + $0x3a0] sm:$0xff]
        %v4025 = vld [vmem:[%s9 + $0x3a8] sm:$0xff]
        %v4026 = vld [vmem:[%s9 + $0x3b0] sm:$0xff]
        %v4027 = vld [vmem:[%s9 + $0x3b8] sm:$0xff]
        %v4028 = vld [vmem:[%s9 + $0x3c0] sm:$0xff]
        %v4029 = vld [vmem:[%s9 + $0x3c8] sm:$0xff]
        %v4030 = vld [vmem:[%s9 + $0x3d0] sm:$0xff]
        %v4031 = vld [vmem:[%s9 + $0x3d8] sm:$0xff]
        %v4032 = vld [vmem:[%s9 + $0x3e0] sm:$0xff]
        %v4033 = vld [vmem:[%s9 + $0x3e8] sm:$0xff]
        %v4034 = vld [vmem:[%s9 + $0x3f0] sm:$0xff]
        %v4035 = vld [vmem:[%s9 + $0x3f8] sm:$0xff]
        %4036 = vmatprep.subr.mxu0 0.0
        %4037 = vmatpush1.msra.mxu0 %v3908
        %4038 = vmatprep.subr.mxu0 0.0
        %4039 = vmatpush1.msra.mxu0 %v3909
        %4040 = vmatprep.subr.mxu0 0.0
        %4041 = vmatpush1.msra.mxu0 %v3910
        %4042 = vmatprep.subr.mxu0 0.0
        %4043 = vmatpush1.msra.mxu0 %v3911
        %4044 = vmatprep.subr.mxu0 0.0
        %4045 = vmatpush1.msra.mxu0 %v3912
        %4046 = vmatprep.subr.mxu0 0.0
        %4047 = vmatpush1.msra.mxu0 %v3913
        %4048 = vmatprep.subr.mxu0 0.0
        %4049 = vmatpush1.msra.mxu0 %v3914
        %4050 = vmatprep.subr.mxu0 0.0
        %4051 = vmatpush1.msra.mxu0 %v3915
        %4052 = vmatprep.subr.mxu0 0.0
        %4053 = vmatpush1.msra.mxu0 %v3916
        %4054 = vmatprep.subr.mxu0 0.0
        %4055 = vmatpush1.msra.mxu0 %v3917
        %4056 = vmatprep.subr.mxu0 0.0
        %4057 = vmatpush1.msra.mxu0 %v3918
        %4058 = vmatprep.subr.mxu0 0.0
        %4059 = vmatpush1.msra.mxu0 %v3919
        %4060 = vmatprep.subr.mxu0 0.0
        %4061 = vmatpush1.msra.mxu0 %v3920
        %4062 = vmatprep.subr.mxu0 0.0
        %4063 = vmatpush1.msra.mxu0 %v3921
        %4064 = vmatprep.subr.mxu0 0.0
        %4065 = vmatpush1.msra.mxu0 %v3922
        %4066 = vmatprep.subr.mxu0 0.0
        %4067 = vmatpush1.msra.mxu0 %v3923
        %4068 = vmatprep.subr.mxu0 0.0
        %4069 = vmatpush1.msra.mxu0 %v3924
        %4070 = vmatprep.subr.mxu0 0.0
        %4071 = vmatpush1.msra.mxu0 %v3925
        %4072 = vmatprep.subr.mxu0 0.0
        %4073 = vmatpush1.msra.mxu0 %v3926
        %4074 = vmatprep.subr.mxu0 0.0
        %4075 = vmatpush1.msra.mxu0 %v3927
        %4076 = vmatprep.subr.mxu0 0.0
        %4077 = vmatpush1.msra.mxu0 %v3928
        %4078 = vmatprep.subr.mxu0 0.0
        %4079 = vmatpush1.msra.mxu0 %v3929
        %4080 = vmatprep.subr.mxu0 0.0
        %4081 = vmatpush1.msra.mxu0 %v3930
        %4082 = vmatprep.subr.mxu0 0.0
        %4083 = vmatpush1.msra.mxu0 %v3931
        %4084 = vmatprep.subr.mxu0 0.0
        %4085 = vmatpush1.msra.mxu0 %v3932
        %4086 = vmatprep.subr.mxu0 0.0
        %4087 = vmatpush1.msra.mxu0 %v3933
        %4088 = vmatprep.subr.mxu0 0.0
        %4089 = vmatpush1.msra.mxu0 %v3934
        %4090 = vmatprep.subr.mxu0 0.0
        %4091 = vmatpush1.msra.mxu0 %v3935
        %4092 = vmatprep.subr.mxu0 0.0
        %4093 = vmatpush1.msra.mxu0 %v3936
        %4094 = vmatprep.subr.mxu0 0.0
        %4095 = vmatpush1.msra.mxu0 %v3937
        %4096 = vmatprep.subr.mxu0 0.0
        %4097 = vmatpush1.msra.mxu0 %v3938
        %4098 = vmatprep.subr.mxu0 0.0
        %4099 = vmatpush1.msra.mxu0 %v3939
        %4100 = vmatprep.mubr.f32.mxu0 %v3885
        %4101 = vmatmul.mubr.f32.gmra.mrb[0].mxu0 %v3884
        %v4102 = vpop.f32.mrb[0].mxu0
        %v4103 = vadd.f32 0.0, %v4102
        %v4104 = vpop.f32.mrb[0].mxu0
        %4105 = vmatprep.mubr.f32.mxu0 %v3893
        %4106 = vmatmul.mubr.f32.gmra.mrb[0].mxu0 %v3892
        %v4107 = vpop.f32.mrb[0].mxu0
        %v4108 = vadd.f32 0.0, %v4107
        %v4109 = vpop.f32.mrb[0].mxu0
        %4110 = vmatprep.mubr.f32.mxu0 %v3901
        %4111 = vmatmul.mubr.f32.gmra.mrb[0].mxu0 %v3900
        %v4112 = vpop.f32.mrb[0].mxu0
        %v4113 = vadd.f32 0.0, %v4112
        %v4114 = vpop.f32.mrb[0].mxu0
        %4115 = vdwg.mxu0
        %4116 = vmatprep.subr.mxu0 0.0
        %4117 = vmatpush1.msra.mxu0 %v3940
        %4118 = vmatprep.subr.mxu0 0.0
        %4119 = vmatpush1.msra.mxu0 %v3941
        %4120 = vmatprep.subr.mxu0 0.0
        %4121 = vmatpush1.msra.mxu0 %v3942
        %4122 = vmatprep.subr.mxu0 0.0
        %4123 = vmatpush1.msra.mxu0 %v3943
        %4124 = vmatprep.subr.mxu0 0.0
        %4125 = vmatpush1.msra.mxu0 %v3944
        %4126 = vmatprep.subr.mxu0 0.0
        %4127 = vmatpush1.msra.mxu0 %v3945
        %4128 = vmatprep.subr.mxu0 0.0
        %4129 = vmatpush1.msra.mxu0 %v3946
        %4130 = vmatprep.subr.mxu0 0.0
        %4131 = vmatpush1.msra.mxu0 %v3947
        %4132 = vmatprep.subr.mxu0 0.0
        %4133 = vmatpush1.msra.mxu0 %v3948
        %4134 = vmatprep.subr.mxu0 0.0
        %4135 = vmatpush1.msra.mxu0 %v3949
        %4136 = vmatprep.subr.mxu0 0.0
        %4137 = vmatpush1.msra.mxu0 %v3950
        %4138 = vmatprep.subr.mxu0 0.0
        %4139 = vmatpush1.msra.mxu0 %v3951
        %4140 = vmatprep.subr.mxu0 0.0
        %4141 = vmatpush1.msra.mxu0 %v3952
        %4142 = vmatprep.subr.mxu0 0.0
        %4143 = vmatpush1.msra.mxu0 %v3953
        %4144 = vmatprep.subr.mxu0 0.0
        %4145 = vmatpush1.msra.mxu0 %v3954
        %4146 = vmatprep.subr.mxu0 0.0
        %4147 = vmatpush1.msra.mxu0 %v3955
        %4148 = vmatprep.subr.mxu0 0.0
        %4149 = vmatpush1.msra.mxu0 %v3956
        %4150 = vmatprep.subr.mxu0 0.0
        %4151 = vmatpush1.msra.mxu0 %v3957
        %4152 = vmatprep.subr.mxu0 0.0
        %4153 = vmatpush1.msra.mxu0 %v3958
        %4154 = vmatprep.subr.mxu0 0.0
        %4155 = vmatpush1.msra.mxu0 %v3959
        %4156 = vmatprep.subr.mxu0 0.0
        %4157 = vmatpush1.msra.mxu0 %v3960
        %4158 = vmatprep.subr.mxu0 0.0
        %4159 = vmatpush1.msra.mxu0 %v3961
        %4160 = vmatprep.subr.mxu0 0.0
        %4161 = vmatpush1.msra.mxu0 %v3962
        %4162 = vmatprep.subr.mxu0 0.0
        %4163 = vmatpush1.msra.mxu0 %v3963
        %4164 = vmatprep.subr.mxu0 0.0
        %4165 = vmatpush1.msra.mxu0 %v3964
        %4166 = vmatprep.subr.mxu0 0.0
        %4167 = vmatpush1.msra.mxu0 %v3965
        %4168 = vmatprep.subr.mxu0 0.0
        %4169 = vmatpush1.msra.mxu0 %v3966
        %4170 = vmatprep.subr.mxu0 0.0
        %4171 = vmatpush1.msra.mxu0 %v3967
        %4172 = vmatprep.subr.mxu0 0.0
        %4173 = vmatpush1.msra.mxu0 %v3968
        %4174 = vmatprep.subr.mxu0 0.0
        %4175 = vmatpush1.msra.mxu0 %v3969
        %4176 = vmatprep.subr.mxu0 0.0
        %4177 = vmatpush1.msra.mxu0 %v3970
        %4178 = vmatprep.subr.mxu0 0.0
        %4179 = vmatpush1.msra.mxu0 %v3971
        %4180 = vmatprep.mubr.f32.mxu0 %v3887
        %4181 = vmatmul.mubr.f32.gmra.mrb[0].mxu0 %v3886
        %v4182 = vpop.f32.mrb[0].mxu0
        %v4183 = vadd.f32 %v4103, %v4182
        %v4184 = vpop.f32.mrb[0].mxu0
        %4185 = vmatprep.mubr.f32.mxu0 %v3895
        %4186 = vmatmul.mubr.f32.gmra.mrb[0].mxu0 %v3894
        %v4187 = vpop.f32.mrb[0].mxu0
        %v4188 = vadd.f32 %v4108, %v4187
        %v4189 = vpop.f32.mrb[0].mxu0
        %4190 = vmatprep.mubr.f32.mxu0 %v3903
        %4191 = vmatmul.mubr.f32.gmra.mrb[0].mxu0 %v3902
        %v4192 = vpop.f32.mrb[0].mxu0
        %v4193 = vadd.f32 %v4113, %v4192
        %v4194 = vpop.f32.mrb[0].mxu0
        %4195 = vdwg.mxu0
        %4196 = vmatprep.subr.mxu0 0.0
        %4197 = vmatpush1.msra.mxu0 %v3972
        %4198 = vmatprep.subr.mxu0 0.0
        %4199 = vmatpush1.msra.mxu0 %v3973
        %4200 = vmatprep.subr.mxu0 0.0
        %4201 = vmatpush1.msra.mxu0 %v3974
        %4202 = vmatprep.subr.mxu0 0.0
        %4203 = vmatpush1.msra.mxu0 %v3975
        %4204 = vmatprep.subr.mxu0 0.0
        %4205 = vmatpush1.msra.mxu0 %v3976
        %4206 = vmatprep.subr.mxu0 0.0
        %4207 = vmatpush1.msra.mxu0 %v3977
        %4208 = vmatprep.subr.mxu0 0.0
        %4209 = vmatpush1.msra.mxu0 %v3978
        %4210 = vmatprep.subr.mxu0 0.0
        %4211 = vmatpush1.msra.mxu0 %v3979
        %4212 = vmatprep.subr.mxu0 0.0
        %4213 = vmatpush1.msra.mxu0 %v3980
        %4214 = vmatprep.subr.mxu0 0.0
        %4215 = vmatpush1.msra.mxu0 %v3981
        %4216 = vmatprep.subr.mxu0 0.0
        %4217 = vmatpush1.msra.mxu0 %v3982
        %4218 = vmatprep.subr.mxu0 0.0
        %4219 = vmatpush1.msra.mxu0 %v3983
        %4220 = vmatprep.subr.mxu0 0.0
        %4221 = vmatpush1.msra.mxu0 %v3984
        %4222 = vmatprep.subr.mxu0 0.0
        %4223 = vmatpush1.msra.mxu0 %v3985
        %4224 = vmatprep.subr.mxu0 0.0
        %4225 = vmatpush1.msra.mxu0 %v3986
        %4226 = vmatprep.subr.mxu0 0.0
        %4227 = vmatpush1.msra.mxu0 %v3987
        %4228 = vmatprep.subr.mxu0 0.0
        %4229 = vmatpush1.msra.mxu0 %v3988
        %4230 = vmatprep.subr.mxu0 0.0
        %4231 = vmatpush1.msra.mxu0 %v3989
        %4232 = vmatprep.subr.mxu0 0.0
        %4233 = vmatpush1.msra.mxu0 %v3990
        %4234 = vmatprep.subr.mxu0 0.0
        %4235 = vmatpush1.msra.mxu0 %v3991
        %4236 = vmatprep.subr.mxu0 0.0
        %4237 = vmatpush1.msra.mxu0 %v3992
        %4238 = vmatprep.subr.mxu0 0.0
        %4239 = vmatpush1.msra.mxu0 %v3993
        %4240 = vmatprep.subr.mxu0 0.0
        %4241 = vmatpush1.msra.mxu0 %v3994
        %4242 = vmatprep.subr.mxu0 0.0
        %4243 = vmatpush1.msra.mxu0 %v3995
        %4244 = vmatprep.subr.mxu0 0.0
        %4245 = vmatpush1.msra.mxu0 %v3996
        %4246 = vmatprep.subr.mxu0 0.0
        %4247 = vmatpush1.msra.mxu0 %v3997
        %4248 = vmatprep.subr.mxu0 0.0
        %4249 = vmatpush1.msra.mxu0 %v3998
        %4250 = vmatprep.subr.mxu0 0.0
        %4251 = vmatpush1.msra.mxu0 %v3999
        %4252 = vmatprep.subr.mxu0 0.0
        %4253 = vmatpush1.msra.mxu0 %v4000
        %4254 = vmatprep.subr.mxu0 0.0
        %4255 = vmatpush1.msra.mxu0 %v4001
        %4256 = vmatprep.subr.mxu0 0.0
        %4257 = vmatpush1.msra.mxu0 %v4002
        %4258 = vmatprep.subr.mxu0 0.0
        %4259 = vmatpush1.msra.mxu0 %v4003
        %4260 = vmatprep.mubr.f32.mxu0 %v3889
        %4261 = vmatmul.mubr.f32.gmra.mrb[0].mxu0 %v3888
        %v4262 = vpop.f32.mrb[0].mxu0
        %v4263 = vadd.f32 %v4183, %v4262
        %v4264 = vpop.f32.mrb[0].mxu0
        %4265 = vmatprep.mubr.f32.mxu0 %v3897
        %4266 = vmatmul.mubr.f32.gmra.mrb[0].mxu0 %v3896
        %v4267 = vpop.f32.mrb[0].mxu0
        %v4268 = vadd.f32 %v4188, %v4267
        %v4269 = vpop.f32.mrb[0].mxu0
        %4270 = vmatprep.mubr.f32.mxu0 %v3905
        %4271 = vmatmul.mubr.f32.gmra.mrb[0].mxu0 %v3904
        %v4272 = vpop.f32.mrb[0].mxu0
        %v4273 = vadd.f32 %v4193, %v4272
        %v4274 = vpop.f32.mrb[0].mxu0
        %4275 = vdwg.mxu0
        %4276 = vmatprep.subr.mxu0 0.0
        %4277 = vmatpush1.msra.mxu0 %v4004
        %4278 = vmatprep.subr.mxu0 0.0
        %4279 = vmatpush1.msra.mxu0 %v4005
        %4280 = vmatprep.subr.mxu0 0.0
        %4281 = vmatpush1.msra.mxu0 %v4006
        %4282 = vmatprep.subr.mxu0 0.0
        %4283 = vmatpush1.msra.mxu0 %v4007
        %4284 = vmatprep.subr.mxu0 0.0
        %4285 = vmatpush1.msra.mxu0 %v4008
        %4286 = vmatprep.subr.mxu0 0.0
        %4287 = vmatpush1.msra.mxu0 %v4009
        %4288 = vmatprep.subr.mxu0 0.0
        %4289 = vmatpush1.msra.mxu0 %v4010
        %4290 = vmatprep.subr.mxu0 0.0
        %4291 = vmatpush1.msra.mxu0 %v4011
        %4292 = vmatprep.subr.mxu0 0.0
        %4293 = vmatpush1.msra.mxu0 %v4012
        %4294 = vmatprep.subr.mxu0 0.0
        %4295 = vmatpush1.msra.mxu0 %v4013
        %4296 = vmatprep.subr.mxu0 0.0
        %4297 = vmatpush1.msra.mxu0 %v4014
        %4298 = vmatprep.subr.mxu0 0.0
        %4299 = vmatpush1.msra.mxu0 %v4015
        %4300 = vmatprep.subr.mxu0 0.0
        %4301 = vmatpush1.msra.mxu0 %v4016
        %4302 = vmatprep.subr.mxu0 0.0
        %4303 = vmatpush1.msra.mxu0 %v4017
        %4304 = vmatprep.subr.mxu0 0.0
        %4305 = vmatpush1.msra.mxu0 %v4018
        %4306 = vmatprep.subr.mxu0 0.0
        %4307 = vmatpush1.msra.mxu0 %v4019
        %4308 = vmatprep.subr.mxu0 0.0
        %4309 = vmatpush1.msra.mxu0 %v4020
        %4310 = vmatprep.subr.mxu0 0.0
        %4311 = vmatpush1.msra.mxu0 %v4021
        %4312 = vmatprep.subr.mxu0 0.0
        %4313 = vmatpush1.msra.mxu0 %v4022
        %4314 = vmatprep.subr.mxu0 0.0
        %4315 = vmatpush1.msra.mxu0 %v4023
        %4316 = vmatprep.subr.mxu0 0.0
        %4317 = vmatpush1.msra.mxu0 %v4024
        %4318 = vmatprep.subr.mxu0 0.0
        %4319 = vmatpush1.msra.mxu0 %v4025
        %4320 = vmatprep.subr.mxu0 0.0
        %4321 = vmatpush1.msra.mxu0 %v4026
        %4322 = vmatprep.subr.mxu0 0.0
        %4323 = vmatpush1.msra.mxu0 %v4027
        %4324 = vmatprep.subr.mxu0 0.0
        %4325 = vmatpush1.msra.mxu0 %v4028
        %4326 = vmatprep.subr.mxu0 0.0
        %4327 = vmatpush1.msra.mxu0 %v4029
        %4328 = vmatprep.subr.mxu0 0.0
        %4329 = vmatpush1.msra.mxu0 %v4030
        %4330 = vmatprep.subr.mxu0 0.0
        %4331 = vmatpush1.msra.mxu0 %v4031
        %4332 = vmatprep.subr.mxu0 0.0
        %4333 = vmatpush1.msra.mxu0 %v4032
        %4334 = vmatprep.subr.mxu0 0.0
        %4335 = vmatpush1.msra.mxu0 %v4033
        %4336 = vmatprep.subr.mxu0 0.0
        %4337 = vmatpush1.msra.mxu0 %v4034
        %4338 = vmatprep.subr.mxu0 0.0
        %4339 = vmatpush1.msra.mxu0 %v4035
        %4340 = vmatprep.mubr.f32.mxu0 %v3891
        %4341 = vmatmul.mubr.f32.gmra.mrb[0].mxu0 %v3890
        %v4342 = vpop.f32.mrb[0].mxu0
        %v4343 = vadd.f32 %v4263, %v4342
        %v4344 = vpop.f32.mrb[0].mxu0
        %4345 = vmatprep.mubr.f32.mxu0 %v3899
        %4346 = vmatmul.mubr.f32.gmra.mrb[0].mxu0 %v3898
        %v4347 = vpop.f32.mrb[0].mxu0
        %v4348 = vadd.f32 %v4268, %v4347
        %v4349 = vpop.f32.mrb[0].mxu0
        %4350 = vmatprep.mubr.f32.mxu0 %v3907
        %4351 = vmatmul.mubr.f32.gmra.mrb[0].mxu0 %v3906
        %v4352 = vpop.f32.mrb[0].mxu0
        %v4353 = vadd.f32 %v4273, %v4352
        %v4354 = vpop.f32.mrb[0].mxu0
        %4355 = vdwg.mxu0
        %v4356 = vld [vmem:[%s10] sm:$0xff]
        %v4357 = vld [vmem:[%s10 + $0x8] sm:$0xff]
        %v4358 = vld [vmem:[%s10 + $0x10] sm:$0xff]
        %v4359 = vld [vmem:[%s10 + $0x18] sm:$0xff]
        %v4360 = vld [vmem:[%s10 + $0x20] sm:$0xff]
        %v4361 = vld [vmem:[%s10 + $0x28] sm:$0xff]
        %v4362 = vld [vmem:[%s10 + $0x30] sm:$0xff]
        %v4363 = vld [vmem:[%s10 + $0x38] sm:$0xff]
        %v4364 = vld [vmem:[%s10 + $0x40] sm:$0xff]
        %v4365 = vld [vmem:[%s10 + $0x48] sm:$0xff]
        %v4366 = vld [vmem:[%s10 + $0x50] sm:$0xff]
        %v4367 = vld [vmem:[%s10 + $0x58] sm:$0xff]
        %v4368 = vld [vmem:[%s10 + $0x60] sm:$0xff]
        %v4369 = vld [vmem:[%s10 + $0x68] sm:$0xff]
        %v4370 = vld [vmem:[%s10 + $0x70] sm:$0xff]
        %v4371 = vld [vmem:[%s10 + $0x78] sm:$0xff]
        %v4372 = vld [vmem:[%s10 + $0x80] sm:$0xff]
        %v4373 = vld [vmem:[%s10 + $0x88] sm:$0xff]
        %v4374 = vld [vmem:[%s10 + $0x90] sm:$0xff]
        %v4375 = vld [vmem:[%s10 + $0x98] sm:$0xff]
        %v4376 = vld [vmem:[%s10 + $0xa0] sm:$0xff]
        %v4377 = vld [vmem:[%s10 + $0xa8] sm:$0xff]
        %v4378 = vld [vmem:[%s10 + $0xb0] sm:$0xff]
        %v4379 = vld [vmem:[%s10 + $0xb8] sm:$0xff]
        %v4380 = vld [vmem:[%s10 + $0xc0] sm:$0xff]
        %v4381 = vld [vmem:[%s10 + $0xc8] sm:$0xff]
        %v4382 = vld [vmem:[%s10 + $0xd0] sm:$0xff]
        %v4383 = vld [vmem:[%s10 + $0xd8] sm:$0xff]
        %v4384 = vld [vmem:[%s10 + $0xe0] sm:$0xff]
        %v4385 = vld [vmem:[%s10 + $0xe8] sm:$0xff]
        %v4386 = vld [vmem:[%s10 + $0xf0] sm:$0xff]
        %v4387 = vld [vmem:[%s10 + $0xf8] sm:$0xff]
        %v4388 = vld [vmem:[%s10 + $0x100] sm:$0xff]
        %v4389 = vld [vmem:[%s10 + $0x108] sm:$0xff]
        %v4390 = vld [vmem:[%s10 + $0x110] sm:$0xff]
        %v4391 = vld [vmem:[%s10 + $0x118] sm:$0xff]
        %v4392 = vld [vmem:[%s10 + $0x120] sm:$0xff]
        %v4393 = vld [vmem:[%s10 + $0x128] sm:$0xff]
        %v4394 = vld [vmem:[%s10 + $0x130] sm:$0xff]
        %v4395 = vld [vmem:[%s10 + $0x138] sm:$0xff]
        %v4396 = vld [vmem:[%s10 + $0x140] sm:$0xff]
        %v4397 = vld [vmem:[%s10 + $0x148] sm:$0xff]
        %v4398 = vld [vmem:[%s10 + $0x150] sm:$0xff]
        %v4399 = vld [vmem:[%s10 + $0x158] sm:$0xff]
        %v4400 = vld [vmem:[%s10 + $0x160] sm:$0xff]
        %v4401 = vld [vmem:[%s10 + $0x168] sm:$0xff]
        %v4402 = vld [vmem:[%s10 + $0x170] sm:$0xff]
        %v4403 = vld [vmem:[%s10 + $0x178] sm:$0xff]
        %v4404 = vld [vmem:[%s10 + $0x180] sm:$0xff]
        %v4405 = vld [vmem:[%s10 + $0x188] sm:$0xff]
        %s4406 = scalar_lea.vmem %s10, 400
        %v4407 = vld [vmem:[%s4406] sm:$0xff]
        %v4408 = vld [vmem:[%s4406 + $0x8] sm:$0xff]
        %v4409 = vld [vmem:[%s4406 + $0x10] sm:$0xff]
        %v4410 = vld [vmem:[%s4406 + $0x18] sm:$0xff]
        %v4411 = vld [vmem:[%s4406 + $0x20] sm:$0xff]
        %v4412 = vld [vmem:[%s4406 + $0x28] sm:$0xff]
        %v4413 = vld [vmem:[%s4406 + $0x30] sm:$0xff]
        %v4414 = vld [vmem:[%s4406 + $0x38] sm:$0xff]
        %v4415 = vld [vmem:[%s4406 + $0x40] sm:$0xff]
        %v4416 = vld [vmem:[%s4406 + $0x48] sm:$0xff]
        %v4417 = vld [vmem:[%s4406 + $0x50] sm:$0xff]
        %v4418 = vld [vmem:[%s4406 + $0x58] sm:$0xff]
        %v4419 = vld [vmem:[%s4406 + $0x60] sm:$0xff]
        %v4420 = vld [vmem:[%s4406 + $0x68] sm:$0xff]
        %v4421 = vld [vmem:[%s4406 + $0x70] sm:$0xff]
        %v4422 = vld [vmem:[%s4406 + $0x78] sm:$0xff]
        %v4423 = vld [vmem:[%s4406 + $0x80] sm:$0xff]
        %v4424 = vld [vmem:[%s4406 + $0x88] sm:$0xff]
        %v4425 = vld [vmem:[%s4406 + $0x90] sm:$0xff]
        %v4426 = vld [vmem:[%s4406 + $0x98] sm:$0xff]
        %v4427 = vld [vmem:[%s4406 + $0xa0] sm:$0xff]
        %v4428 = vld [vmem:[%s4406 + $0xa8] sm:$0xff]
        %v4429 = vld [vmem:[%s4406 + $0xb0] sm:$0xff]
        %v4430 = vld [vmem:[%s4406 + $0xb8] sm:$0xff]
        %v4431 = vld [vmem:[%s4406 + $0xc0] sm:$0xff]
        %v4432 = vld [vmem:[%s4406 + $0xc8] sm:$0xff]
        %v4433 = vld [vmem:[%s4406 + $0xd0] sm:$0xff]
        %v4434 = vld [vmem:[%s4406 + $0xd8] sm:$0xff]
        %v4435 = vld [vmem:[%s4406 + $0xe0] sm:$0xff]
        %v4436 = vld [vmem:[%s4406 + $0xe8] sm:$0xff]
        %v4437 = vld [vmem:[%s4406 + $0xf0] sm:$0xff]
        %v4438 = vld [vmem:[%s4406 + $0xf8] sm:$0xff]
        %v4439 = vld [vmem:[%s4406 + $0x100] sm:$0xff]
        %v4440 = vld [vmem:[%s4406 + $0x108] sm:$0xff]
        %v4441 = vld [vmem:[%s4406 + $0x110] sm:$0xff]
        %v4442 = vld [vmem:[%s4406 + $0x118] sm:$0xff]
        %v4443 = vld [vmem:[%s4406 + $0x120] sm:$0xff]
        %v4444 = vld [vmem:[%s4406 + $0x128] sm:$0xff]
        %v4445 = vld [vmem:[%s4406 + $0x130] sm:$0xff]
        %v4446 = vld [vmem:[%s4406 + $0x138] sm:$0xff]
        %v4447 = vld [vmem:[%s4406 + $0x140] sm:$0xff]
        %v4448 = vld [vmem:[%s4406 + $0x148] sm:$0xff]
        %v4449 = vld [vmem:[%s4406 + $0x150] sm:$0xff]
        %v4450 = vld [vmem:[%s4406 + $0x158] sm:$0xff]
        %v4451 = vld [vmem:[%s4406 + $0x160] sm:$0xff]
        %v4452 = vld [vmem:[%s4406 + $0x168] sm:$0xff]
        %v4453 = vld [vmem:[%s4406 + $0x170] sm:$0xff]
        %v4454 = vld [vmem:[%s4406 + $0x178] sm:$0xff]
        %v4455 = vld [vmem:[%s4406 + $0x180] sm:$0xff]
        %v4456 = vld [vmem:[%s4406 + $0x188] sm:$0xff]
        %4460 = vrot.lane.b32.xlu0 %v4343, 124
        %v4461 = vpop.permute.xlu0 %4460
        %4462 = vrot.lane.b32.xlu0 %v4348, 124
        %v4463 = vpop.permute.xlu0 %4462
        %4464 = vrot.lane.b32.xlu0 %v4353, 124
        %v4465 = vpop.permute.xlu0 %4464
        %vm4468 = vcmask 162816
        %v4470 = vsel %vm4468, %v4407, 0
        %v4473 = vsel %vm4468, %v4408, 0
        %v4476 = vsel %vm4468, %v4409, 0
        %v4479 = vsel %vm4468, %v4410, 0
        %v4482 = vsel %vm4468, %v4411, 0
        %v4485 = vsel %vm4468, %v4412, 0
        %v4488 = vsel %vm4468, %v4413, 0
        %v4491 = vsel %vm4468, %v4414, 0
        %v4494 = vsel %vm4468, %v4415, 0
        %v4497 = vsel %vm4468, %v4416, 0
        %v4500 = vsel %vm4468, %v4417, 0
        %v4503 = vsel %vm4468, %v4418, 0
        %v4506 = vsel %vm4468, %v4419, 0
        %v4509 = vsel %vm4468, %v4420, 0
        %v4512 = vsel %vm4468, %v4421, 0
        %v4515 = vsel %vm4468, %v4422, 0
        %v4518 = vsel %vm4468, %v4423, 0
        %v4521 = vsel %vm4468, %v4424, 0
        %v4524 = vsel %vm4468, %v4425, 0
        %v4527 = vsel %vm4468, %v4426, 0
        %v4530 = vsel %vm4468, %v4427, 0
        %v4533 = vsel %vm4468, %v4428, 0
        %v4536 = vsel %vm4468, %v4429, 0
        %v4539 = vsel %vm4468, %v4430, 0
        %v4542 = vsel %vm4468, %v4431, 0
        %v4545 = vsel %vm4468, %v4432, 0
        %v4548 = vsel %vm4468, %v4433, 0
        %v4551 = vsel %vm4468, %v4434, 0
        %v4554 = vsel %vm4468, %v4435, 0
        %v4557 = vsel %vm4468, %v4436, 0
        %v4560 = vsel %vm4468, %v4437, 0
        %v4563 = vsel %vm4468, %v4438, 0
        %v4566 = vsel %vm4468, %v4439, 0
        %v4569 = vsel %vm4468, %v4440, 0
        %v4572 = vsel %vm4468, %v4441, 0
        %v4575 = vsel %vm4468, %v4442, 0
        %v4578 = vsel %vm4468, %v4443, 0
        %v4581 = vsel %vm4468, %v4444, 0
        %v4584 = vsel %vm4468, %v4445, 0
        %v4587 = vsel %vm4468, %v4446, 0
        %v4590 = vsel %vm4468, %v4447, 0
        %v4593 = vsel %vm4468, %v4448, 0
        %v4596 = vsel %vm4468, %v4449, 0
        %v4599 = vsel %vm4468, %v4450, 0
        %v4602 = vsel %vm4468, %v4451, 0
        %v4605 = vsel %vm4468, %v4452, 0
        %v4608 = vsel %vm4468, %v4453, 0
        %v4611 = vsel %vm4468, %v4454, 0
        %v4614 = vsel %vm4468, %v4455, 0
        %v4617 = vsel %vm4468, %v4456, 0
        %v4619 = vsel %vm987, %v4465, 0
        %4621 = vmatprep.subr.mxu0 0.0
        %4622 = vmatpush1.msra.mxu0 %v4461
        %4623 = vmatprep.subr.mxu0 0.0
        %4624 = vmatpush1.msra.mxu0 %v4463
        %4625 = vmatprep.subr.mxu0 0.0
        %4626 = vmatpush1.msra.mxu0 %v4619
        %4627 = vmatprep.subr.mxu0 0.0
        %4628 = vmatpush1.msra.mxu0 0.0
        %4629 = vmatprep.subr.mxu0 0.0
        %4630 = vmatpush1.msra.mxu0 0.0
        %4631 = vmatprep.subr.mxu0 0.0
        %4632 = vmatpush1.msra.mxu0 0.0
        %4633 = vmatprep.subr.mxu0 0.0
        %4634 = vmatpush1.msra.mxu0 0.0
        %4635 = vmatprep.subr.mxu0 0.0
        %4636 = vmatpush1.msra.mxu0 0.0
        %4637 = vmatprep.subr.mxu0 0.0
        %4638 = vmatpush1.msra.mxu0 0.0
        %4639 = vmatprep.subr.mxu0 0.0
        %4640 = vmatpush1.msra.mxu0 0.0
        %4641 = vmatprep.subr.mxu0 0.0
        %4642 = vmatpush1.msra.mxu0 0.0
        %4643 = vmatprep.subr.mxu0 0.0
        %4644 = vmatpush1.msra.mxu0 0.0
        %4645 = vmatprep.subr.mxu0 0.0
        %4646 = vmatpush1.msra.mxu0 0.0
        %4647 = vmatprep.subr.mxu0 0.0
        %4648 = vmatpush1.msra.mxu0 0.0
        %4649 = vmatprep.subr.mxu0 0.0
        %4650 = vmatpush1.msra.mxu0 0.0
        %4651 = vmatprep.subr.mxu0 0.0
        %4652 = vmatpush1.msra.mxu0 0.0
        %4653 = vmatprep.subr.mxu0 0.0
        %4654 = vmatpush1.msra.mxu0 0.0
        %4655 = vmatprep.subr.mxu0 0.0
        %4656 = vmatpush1.msra.mxu0 0.0
        %4657 = vmatprep.subr.mxu0 0.0
        %4658 = vmatpush1.msra.mxu0 0.0
        %4659 = vmatprep.subr.mxu0 0.0
        %4660 = vmatpush1.msra.mxu0 0.0
        %4661 = vmatprep.subr.mxu0 0.0
        %4662 = vmatpush1.msra.mxu0 0.0
        %4663 = vmatprep.subr.mxu0 0.0
        %4664 = vmatpush1.msra.mxu0 0.0
        %4665 = vmatprep.subr.mxu0 0.0
        %4666 = vmatpush1.msra.mxu0 0.0
        %4667 = vmatprep.subr.mxu0 0.0
        %4668 = vmatpush1.msra.mxu0 0.0
        %4669 = vmatprep.subr.mxu0 0.0
        %4670 = vmatpush1.msra.mxu0 0.0
        %4671 = vmatprep.subr.mxu0 0.0
        %4672 = vmatpush1.msra.mxu0 0.0
        %4673 = vmatprep.subr.mxu0 0.0
        %4674 = vmatpush1.msra.mxu0 0.0
        %4675 = vmatprep.subr.mxu0 0.0
        %4676 = vmatpush1.msra.mxu0 0.0
        %4677 = vmatprep.subr.mxu0 0.0
        %4678 = vmatpush1.msra.mxu0 0.0
        %4679 = vmatprep.subr.mxu0 0.0
        %4680 = vmatpush1.msra.mxu0 0.0
        %4681 = vmatprep.subr.mxu0 0.0
        %4682 = vmatpush1.msra.mxu0 0.0
        %4683 = vmatprep.subr.mxu0 0.0
        %4684 = vmatpush1.msra.mxu0 0.0
        %4685 = vmatprep.mubr.f32.mxu0 0.0
        %4686 = vmatmul.mubr.f32.gmra.mrb[0].mxu0 %v4470
        %v4687 = vpop.f32.mrb[0].mxu0
        %v4688 = vadd.f32 0.0, %v4687
        %v4689 = vpop.f32.mrb[0].mxu0
        %4690 = vmatprep.mubr.f32.mxu0 0.0
        %4691 = vmatmul.mubr.f32.gmra.mrb[0].mxu0 %v4473
        %v4692 = vpop.f32.mrb[0].mxu0
        %v4693 = vadd.f32 0.0, %v4692
        %v4694 = vpop.f32.mrb[0].mxu0
        %4695 = vmatprep.mubr.f32.mxu0 0.0
        %4696 = vmatmul.mubr.f32.gmra.mrb[0].mxu0 %v4476
        %v4697 = vpop.f32.mrb[0].mxu0
        %v4698 = vadd.f32 0.0, %v4697
        %v4699 = vpop.f32.mrb[0].mxu0
        %4700 = vmatprep.mubr.f32.mxu0 0.0
        %4701 = vmatmul.mubr.f32.gmra.mrb[0].mxu0 %v4479
        %v4702 = vpop.f32.mrb[0].mxu0
        %v4703 = vadd.f32 0.0, %v4702
        %v4704 = vpop.f32.mrb[0].mxu0
        %4705 = vmatprep.mubr.f32.mxu0 0.0
        %4706 = vmatmul.mubr.f32.gmra.mrb[0].mxu0 %v4482
        %v4707 = vpop.f32.mrb[0].mxu0
        %v4708 = vadd.f32 0.0, %v4707
        %v4709 = vpop.f32.mrb[0].mxu0
        %4710 = vmatprep.mubr.f32.mxu0 0.0
        %4711 = vmatmul.mubr.f32.gmra.mrb[0].mxu0 %v4485
        %v4712 = vpop.f32.mrb[0].mxu0
        %v4713 = vadd.f32 0.0, %v4712
        %v4714 = vpop.f32.mrb[0].mxu0
        %4715 = vmatprep.mubr.f32.mxu0 0.0
        %4716 = vmatmul.mubr.f32.gmra.mrb[0].mxu0 %v4488
        %v4717 = vpop.f32.mrb[0].mxu0
        %v4718 = vadd.f32 0.0, %v4717
        %v4719 = vpop.f32.mrb[0].mxu0
        %4720 = vmatprep.mubr.f32.mxu0 0.0
        %4721 = vmatmul.mubr.f32.gmra.mrb[0].mxu0 %v4491
        %v4722 = vpop.f32.mrb[0].mxu0
        %v4723 = vadd.f32 0.0, %v4722
        %v4724 = vpop.f32.mrb[0].mxu0
        %4725 = vmatprep.mubr.f32.mxu0 0.0
        %4726 = vmatmul.mubr.f32.gmra.mrb[0].mxu0 %v4494
        %v4727 = vpop.f32.mrb[0].mxu0
        %v4728 = vadd.f32 0.0, %v4727
        %v4729 = vpop.f32.mrb[0].mxu0
        %4730 = vmatprep.mubr.f32.mxu0 0.0
        %4731 = vmatmul.mubr.f32.gmra.mrb[0].mxu0 %v4497
        %v4732 = vpop.f32.mrb[0].mxu0
        %v4733 = vadd.f32 0.0, %v4732
        %v4734 = vpop.f32.mrb[0].mxu0
        %4735 = vmatprep.mubr.f32.mxu0 0.0
        %4736 = vmatmul.mubr.f32.gmra.mrb[0].mxu0 %v4500
        %v4737 = vpop.f32.mrb[0].mxu0
        %v4738 = vadd.f32 0.0, %v4737
        %v4739 = vpop.f32.mrb[0].mxu0
        %4740 = vmatprep.mubr.f32.mxu0 0.0
        %4741 = vmatmul.mubr.f32.gmra.mrb[0].mxu0 %v4503
        %v4742 = vpop.f32.mrb[0].mxu0
        %v4743 = vadd.f32 0.0, %v4742
        %v4744 = vpop.f32.mrb[0].mxu0
        %4745 = vmatprep.mubr.f32.mxu0 0.0
        %4746 = vmatmul.mubr.f32.gmra.mrb[0].mxu0 %v4506
        %v4747 = vpop.f32.mrb[0].mxu0
        %v4748 = vadd.f32 0.0, %v4747
        %v4749 = vpop.f32.mrb[0].mxu0
        %4750 = vmatprep.mubr.f32.mxu0 0.0
        %4751 = vmatmul.mubr.f32.gmra.mrb[0].mxu0 %v4509
        %v4752 = vpop.f32.mrb[0].mxu0
        %v4753 = vadd.f32 0.0, %v4752
        %v4754 = vpop.f32.mrb[0].mxu0
        %4755 = vmatprep.mubr.f32.mxu0 0.0
        %4756 = vmatmul.mubr.f32.gmra.mrb[0].mxu0 %v4512
        %v4757 = vpop.f32.mrb[0].mxu0
        %v4758 = vadd.f32 0.0, %v4757
        %v4759 = vpop.f32.mrb[0].mxu0
        %4760 = vmatprep.mubr.f32.mxu0 0.0
        %4761 = vmatmul.mubr.f32.gmra.mrb[0].mxu0 %v4515
        %v4762 = vpop.f32.mrb[0].mxu0
        %v4763 = vadd.f32 0.0, %v4762
        %v4764 = vpop.f32.mrb[0].mxu0
        %4765 = vmatprep.mubr.f32.mxu0 0.0
        %4766 = vmatmul.mubr.f32.gmra.mrb[0].mxu0 %v4518
        %v4767 = vpop.f32.mrb[0].mxu0
        %v4768 = vadd.f32 0.0, %v4767
        %v4769 = vpop.f32.mrb[0].mxu0
        %4770 = vmatprep.mubr.f32.mxu0 0.0
        %4771 = vmatmul.mubr.f32.gmra.mrb[0].mxu0 %v4521
        %v4772 = vpop.f32.mrb[0].mxu0
        %v4773 = vadd.f32 0.0, %v4772
        %v4774 = vpop.f32.mrb[0].mxu0
        %4775 = vmatprep.mubr.f32.mxu0 0.0
        %4776 = vmatmul.mubr.f32.gmra.mrb[0].mxu0 %v4524
        %v4777 = vpop.f32.mrb[0].mxu0
        %v4778 = vadd.f32 0.0, %v4777
        %v4779 = vpop.f32.mrb[0].mxu0
        %4780 = vmatprep.mubr.f32.mxu0 0.0
        %4781 = vmatmul.mubr.f32.gmra.mrb[0].mxu0 %v4527
        %v4782 = vpop.f32.mrb[0].mxu0
        %v4783 = vadd.f32 0.0, %v4782
        %v4784 = vpop.f32.mrb[0].mxu0
        %4785 = vmatprep.mubr.f32.mxu0 0.0
        %4786 = vmatmul.mubr.f32.gmra.mrb[0].mxu0 %v4530
        %v4787 = vpop.f32.mrb[0].mxu0
        %v4788 = vadd.f32 0.0, %v4787
        %v4789 = vpop.f32.mrb[0].mxu0
        %4790 = vmatprep.mubr.f32.mxu0 0.0
        %4791 = vmatmul.mubr.f32.gmra.mrb[0].mxu0 %v4533
        %v4792 = vpop.f32.mrb[0].mxu0
        %v4793 = vadd.f32 0.0, %v4792
        %v4794 = vpop.f32.mrb[0].mxu0
        %4795 = vmatprep.mubr.f32.mxu0 0.0
        %4796 = vmatmul.mubr.f32.gmra.mrb[0].mxu0 %v4536
        %v4797 = vpop.f32.mrb[0].mxu0
        %v4798 = vadd.f32 0.0, %v4797
        %v4799 = vpop.f32.mrb[0].mxu0
        %4800 = vmatprep.mubr.f32.mxu0 0.0
        %4801 = vmatmul.mubr.f32.gmra.mrb[0].mxu0 %v4539
        %v4802 = vpop.f32.mrb[0].mxu0
        %v4803 = vadd.f32 0.0, %v4802
        %v4804 = vpop.f32.mrb[0].mxu0
        %4805 = vmatprep.mubr.f32.mxu0 0.0
        %4806 = vmatmul.mubr.f32.gmra.mrb[0].mxu0 %v4542
        %v4807 = vpop.f32.mrb[0].mxu0
        %v4808 = vadd.f32 0.0, %v4807
        %v4809 = vpop.f32.mrb[0].mxu0
        %4810 = vmatprep.mubr.f32.mxu0 0.0
        %4811 = vmatmul.mubr.f32.gmra.mrb[0].mxu0 %v4545
        %v4812 = vpop.f32.mrb[0].mxu0
        %v4813 = vadd.f32 0.0, %v4812
        %v4814 = vpop.f32.mrb[0].mxu0
        %4815 = vmatprep.mubr.f32.mxu0 0.0
        %4816 = vmatmul.mubr.f32.gmra.mrb[0].mxu0 %v4548
        %v4817 = vpop.f32.mrb[0].mxu0
        %v4818 = vadd.f32 0.0, %v4817
        %v4819 = vpop.f32.mrb[0].mxu0
        %4820 = vmatprep.mubr.f32.mxu0 0.0
        %4821 = vmatmul.mubr.f32.gmra.mrb[0].mxu0 %v4551
        %v4822 = vpop.f32.mrb[0].mxu0
        %v4823 = vadd.f32 0.0, %v4822
        %v4824 = vpop.f32.mrb[0].mxu0
        %4825 = vmatprep.mubr.f32.mxu0 0.0
        %4826 = vmatmul.mubr.f32.gmra.mrb[0].mxu0 %v4554
        %v4827 = vpop.f32.mrb[0].mxu0
        %v4828 = vadd.f32 0.0, %v4827
        %v4829 = vpop.f32.mrb[0].mxu0
        %4830 = vmatprep.mubr.f32.mxu0 0.0
        %4831 = vmatmul.mubr.f32.gmra.mrb[0].mxu0 %v4557
        %v4832 = vpop.f32.mrb[0].mxu0
        %v4833 = vadd.f32 0.0, %v4832
        %v4834 = vpop.f32.mrb[0].mxu0
        %4835 = vmatprep.mubr.f32.mxu0 0.0
        %4836 = vmatmul.mubr.f32.gmra.mrb[0].mxu0 %v4560
        %v4837 = vpop.f32.mrb[0].mxu0
        %v4838 = vadd.f32 0.0, %v4837
        %v4839 = vpop.f32.mrb[0].mxu0
        %4840 = vmatprep.mubr.f32.mxu0 0.0
        %4841 = vmatmul.mubr.f32.gmra.mrb[0].mxu0 %v4563
        %v4842 = vpop.f32.mrb[0].mxu0
        %v4843 = vadd.f32 0.0, %v4842
        %v4844 = vpop.f32.mrb[0].mxu0
        %4845 = vmatprep.mubr.f32.mxu0 0.0
        %4846 = vmatmul.mubr.f32.gmra.mrb[0].mxu0 %v4566
        %v4847 = vpop.f32.mrb[0].mxu0
        %v4848 = vadd.f32 0.0, %v4847
        %v4849 = vpop.f32.mrb[0].mxu0
        %4850 = vmatprep.mubr.f32.mxu0 0.0
        %4851 = vmatmul.mubr.f32.gmra.mrb[0].mxu0 %v4569
        %v4852 = vpop.f32.mrb[0].mxu0
        %v4853 = vadd.f32 0.0, %v4852
        %v4854 = vpop.f32.mrb[0].mxu0
        %4855 = vmatprep.mubr.f32.mxu0 0.0
        %4856 = vmatmul.mubr.f32.gmra.mrb[0].mxu0 %v4572
        %v4857 = vpop.f32.mrb[0].mxu0
        %v4858 = vadd.f32 0.0, %v4857
        %v4859 = vpop.f32.mrb[0].mxu0
        %4860 = vmatprep.mubr.f32.mxu0 0.0
        %4861 = vmatmul.mubr.f32.gmra.mrb[0].mxu0 %v4575
        %v4862 = vpop.f32.mrb[0].mxu0
        %v4863 = vadd.f32 0.0, %v4862
        %v4864 = vpop.f32.mrb[0].mxu0
        %4865 = vmatprep.mubr.f32.mxu0 0.0
        %4866 = vmatmul.mubr.f32.gmra.mrb[0].mxu0 %v4578
        %v4867 = vpop.f32.mrb[0].mxu0
        %v4868 = vadd.f32 0.0, %v4867
        %v4869 = vpop.f32.mrb[0].mxu0
        %4870 = vmatprep.mubr.f32.mxu0 0.0
        %4871 = vmatmul.mubr.f32.gmra.mrb[0].mxu0 %v4581
        %v4872 = vpop.f32.mrb[0].mxu0
        %v4873 = vadd.f32 0.0, %v4872
        %v4874 = vpop.f32.mrb[0].mxu0
        %4875 = vmatprep.mubr.f32.mxu0 0.0
        %4876 = vmatmul.mubr.f32.gmra.mrb[0].mxu0 %v4584
        %v4877 = vpop.f32.mrb[0].mxu0
        %v4878 = vadd.f32 0.0, %v4877
        %v4879 = vpop.f32.mrb[0].mxu0
        %4880 = vmatprep.mubr.f32.mxu0 0.0
        %4881 = vmatmul.mubr.f32.gmra.mrb[0].mxu0 %v4587
        %v4882 = vpop.f32.mrb[0].mxu0
        %v4883 = vadd.f32 0.0, %v4882
        %v4884 = vpop.f32.mrb[0].mxu0
        %4885 = vmatprep.mubr.f32.mxu0 0.0
        %4886 = vmatmul.mubr.f32.gmra.mrb[0].mxu0 %v4590
        %v4887 = vpop.f32.mrb[0].mxu0
        %v4888 = vadd.f32 0.0, %v4887
        %v4889 = vpop.f32.mrb[0].mxu0
        %4890 = vmatprep.mubr.f32.mxu0 0.0
        %4891 = vmatmul.mubr.f32.gmra.mrb[0].mxu0 %v4593
        %v4892 = vpop.f32.mrb[0].mxu0
        %v4893 = vadd.f32 0.0, %v4892
        %v4894 = vpop.f32.mrb[0].mxu0
        %4895 = vmatprep.mubr.f32.mxu0 0.0
        %4896 = vmatmul.mubr.f32.gmra.mrb[0].mxu0 %v4596
        %v4897 = vpop.f32.mrb[0].mxu0
        %v4898 = vadd.f32 0.0, %v4897
        %v4899 = vpop.f32.mrb[0].mxu0
        %4900 = vmatprep.mubr.f32.mxu0 0.0
        %4901 = vmatmul.mubr.f32.gmra.mrb[0].mxu0 %v4599
        %v4902 = vpop.f32.mrb[0].mxu0
        %v4903 = vadd.f32 0.0, %v4902
        %v4904 = vpop.f32.mrb[0].mxu0
        %4905 = vmatprep.mubr.f32.mxu0 0.0
        %4906 = vmatmul.mubr.f32.gmra.mrb[0].mxu0 %v4602
        %v4907 = vpop.f32.mrb[0].mxu0
        %v4908 = vadd.f32 0.0, %v4907
        %v4909 = vpop.f32.mrb[0].mxu0
        %4910 = vmatprep.mubr.f32.mxu0 0.0
        %4911 = vmatmul.mubr.f32.gmra.mrb[0].mxu0 %v4605
        %v4912 = vpop.f32.mrb[0].mxu0
        %v4913 = vadd.f32 0.0, %v4912
        %v4914 = vpop.f32.mrb[0].mxu0
        %4915 = vmatprep.mubr.f32.mxu0 0.0
        %4916 = vmatmul.mubr.f32.gmra.mrb[0].mxu0 %v4608
        %v4917 = vpop.f32.mrb[0].mxu0
        %v4918 = vadd.f32 0.0, %v4917
        %v4919 = vpop.f32.mrb[0].mxu0
        %4920 = vmatprep.mubr.f32.mxu0 0.0
        %4921 = vmatmul.mubr.f32.gmra.mrb[0].mxu0 %v4611
        %v4922 = vpop.f32.mrb[0].mxu0
        %v4923 = vadd.f32 0.0, %v4922
        %v4924 = vpop.f32.mrb[0].mxu0
        %4925 = vmatprep.mubr.f32.mxu0 0.0
        %4926 = vmatmul.mubr.f32.gmra.mrb[0].mxu0 %v4614
        %v4927 = vpop.f32.mrb[0].mxu0
        %v4928 = vadd.f32 0.0, %v4927
        %v4929 = vpop.f32.mrb[0].mxu0
        %4930 = vmatprep.mubr.f32.mxu0 0.0
        %4931 = vmatmul.mubr.f32.gmra.mrb[0].mxu0 %v4617
        %v4932 = vpop.f32.mrb[0].mxu0
        %v4933 = vadd.f32 0.0, %v4932
        %v4934 = vpop.f32.mrb[0].mxu0
        %4935 = vdwg.mxu0
        %v4937 = vsel %vm4468, %v4356, 0
        %v4940 = vsel %vm4468, %v4357, 0
        %v4943 = vsel %vm4468, %v4358, 0
        %v4946 = vsel %vm4468, %v4359, 0
        %v4949 = vsel %vm4468, %v4360, 0
        %v4952 = vsel %vm4468, %v4361, 0
        %v4955 = vsel %vm4468, %v4362, 0
        %v4958 = vsel %vm4468, %v4363, 0
        %v4961 = vsel %vm4468, %v4364, 0
        %v4964 = vsel %vm4468, %v4365, 0
        %v4967 = vsel %vm4468, %v4366, 0
        %v4970 = vsel %vm4468, %v4367, 0
        %v4973 = vsel %vm4468, %v4368, 0
        %v4976 = vsel %vm4468, %v4369, 0
        %v4979 = vsel %vm4468, %v4370, 0
        %v4982 = vsel %vm4468, %v4371, 0
        %v4985 = vsel %vm4468, %v4372, 0
        %v4988 = vsel %vm4468, %v4373, 0
        %v4991 = vsel %vm4468, %v4374, 0
        %v4994 = vsel %vm4468, %v4375, 0
        %v4997 = vsel %vm4468, %v4376, 0
        %v5000 = vsel %vm4468, %v4377, 0
        %v5003 = vsel %vm4468, %v4378, 0
        %v5006 = vsel %vm4468, %v4379, 0
        %v5009 = vsel %vm4468, %v4380, 0
        %v5012 = vsel %vm4468, %v4381, 0
        %v5015 = vsel %vm4468, %v4382, 0
        %v5018 = vsel %vm4468, %v4383, 0
        %v5021 = vsel %vm4468, %v4384, 0
        %v5024 = vsel %vm4468, %v4385, 0
        %v5027 = vsel %vm4468, %v4386, 0
        %v5030 = vsel %vm4468, %v4387, 0
        %v5033 = vsel %vm4468, %v4388, 0
        %v5036 = vsel %vm4468, %v4389, 0
        %v5039 = vsel %vm4468, %v4390, 0
        %v5042 = vsel %vm4468, %v4391, 0
        %v5045 = vsel %vm4468, %v4392, 0
        %v5048 = vsel %vm4468, %v4393, 0
        %v5051 = vsel %vm4468, %v4394, 0
        %v5054 = vsel %vm4468, %v4395, 0
        %v5057 = vsel %vm4468, %v4396, 0
        %v5060 = vsel %vm4468, %v4397, 0
        %v5063 = vsel %vm4468, %v4398, 0
        %v5066 = vsel %vm4468, %v4399, 0
        %v5069 = vsel %vm4468, %v4400, 0
        %v5072 = vsel %vm4468, %v4401, 0
        %v5075 = vsel %vm4468, %v4402, 0
        %v5078 = vsel %vm4468, %v4403, 0
        %v5081 = vsel %vm4468, %v4404, 0
        %v5084 = vsel %vm4468, %v4405, 0
        %v5086 = vsel %vm987, %v4353, 0
        %5088 = vmatprep.subr.mxu0 0.0
        %5089 = vmatpush1.msra.mxu0 %v4343
        %5090 = vmatprep.subr.mxu0 0.0
        %5091 = vmatpush1.msra.mxu0 %v4348
        %5092 = vmatprep.subr.mxu0 0.0
        %5093 = vmatpush1.msra.mxu0 %v5086
        %5094 = vmatprep.subr.mxu0 0.0
        %5095 = vmatpush1.msra.mxu0 0.0
        %5096 = vmatprep.subr.mxu0 0.0
        %5097 = vmatpush1.msra.mxu0 0.0
        %5098 = vmatprep.subr.mxu0 0.0
        %5099 = vmatpush1.msra.mxu0 0.0
        %5100 = vmatprep.subr.mxu0 0.0
        %5101 = vmatpush1.msra.mxu0 0.0
        %5102 = vmatprep.subr.mxu0 0.0
        %5103 = vmatpush1.msra.mxu0 0.0
        %5104 = vmatprep.subr.mxu0 0.0
        %5105 = vmatpush1.msra.mxu0 0.0
        %5106 = vmatprep.subr.mxu0 0.0
        %5107 = vmatpush1.msra.mxu0 0.0
        %5108 = vmatprep.subr.mxu0 0.0
        %5109 = vmatpush1.msra.mxu0 0.0
        %5110 = vmatprep.subr.mxu0 0.0
        %5111 = vmatpush1.msra.mxu0 0.0
        %5112 = vmatprep.subr.mxu0 0.0
        %5113 = vmatpush1.msra.mxu0 0.0
        %5114 = vmatprep.subr.mxu0 0.0
        %5115 = vmatpush1.msra.mxu0 0.0
        %5116 = vmatprep.subr.mxu0 0.0
        %5117 = vmatpush1.msra.mxu0 0.0
        %5118 = vmatprep.subr.mxu0 0.0
        %5119 = vmatpush1.msra.mxu0 0.0
        %5120 = vmatprep.subr.mxu0 0.0
        %5121 = vmatpush1.msra.mxu0 0.0
        %5122 = vmatprep.subr.mxu0 0.0
        %5123 = vmatpush1.msra.mxu0 0.0
        %5124 = vmatprep.subr.mxu0 0.0
        %5125 = vmatpush1.msra.mxu0 0.0
        %5126 = vmatprep.subr.mxu0 0.0
        %5127 = vmatpush1.msra.mxu0 0.0
        %5128 = vmatprep.subr.mxu0 0.0
        %5129 = vmatpush1.msra.mxu0 0.0
        %5130 = vmatprep.subr.mxu0 0.0
        %5131 = vmatpush1.msra.mxu0 0.0
        %5132 = vmatprep.subr.mxu0 0.0
        %5133 = vmatpush1.msra.mxu0 0.0
        %5134 = vmatprep.subr.mxu0 0.0
        %5135 = vmatpush1.msra.mxu0 0.0
        %5136 = vmatprep.subr.mxu0 0.0
        %5137 = vmatpush1.msra.mxu0 0.0
        %5138 = vmatprep.subr.mxu0 0.0
        %5139 = vmatpush1.msra.mxu0 0.0
        %5140 = vmatprep.subr.mxu0 0.0
        %5141 = vmatpush1.msra.mxu0 0.0
        %5142 = vmatprep.subr.mxu0 0.0
        %5143 = vmatpush1.msra.mxu0 0.0
        %5144 = vmatprep.subr.mxu0 0.0
        %5145 = vmatpush1.msra.mxu0 0.0
        %5146 = vmatprep.subr.mxu0 0.0
        %5147 = vmatpush1.msra.mxu0 0.0
        %5148 = vmatprep.subr.mxu0 0.0
        %5149 = vmatpush1.msra.mxu0 0.0
        %5150 = vmatprep.subr.mxu0 0.0
        %5151 = vmatpush1.msra.mxu0 0.0
        %5152 = vmatprep.mubr.f32.mxu0 0.0
        %5153 = vmatmul.mubr.f32.gmra.mrb[0].mxu0 %v4937
        %v5154 = vpop.f32.mrb[0].mxu0
        %v5155 = vadd.f32 %v4688, %v5154
        %v5156 = vpop.f32.mrb[0].mxu0
        %5157 = vmatprep.mubr.f32.mxu0 0.0
        %5158 = vmatmul.mubr.f32.gmra.mrb[0].mxu0 %v4940
        %v5159 = vpop.f32.mrb[0].mxu0
        %v5160 = vadd.f32 %v4693, %v5159
        %v5161 = vpop.f32.mrb[0].mxu0
        %5162 = vmatprep.mubr.f32.mxu0 0.0
        %5163 = vmatmul.mubr.f32.gmra.mrb[0].mxu0 %v4943
        %v5164 = vpop.f32.mrb[0].mxu0
        %v5165 = vadd.f32 %v4698, %v5164
        %v5166 = vpop.f32.mrb[0].mxu0
        %5167 = vmatprep.mubr.f32.mxu0 0.0
        %5168 = vmatmul.mubr.f32.gmra.mrb[0].mxu0 %v4946
        %v5169 = vpop.f32.mrb[0].mxu0
        %v5170 = vadd.f32 %v4703, %v5169
        %v5171 = vpop.f32.mrb[0].mxu0
        %5172 = vmatprep.mubr.f32.mxu0 0.0
        %5173 = vmatmul.mubr.f32.gmra.mrb[0].mxu0 %v4949
        %v5174 = vpop.f32.mrb[0].mxu0
        %v5175 = vadd.f32 %v4708, %v5174
        %v5176 = vpop.f32.mrb[0].mxu0
        %5177 = vmatprep.mubr.f32.mxu0 0.0
        %5178 = vmatmul.mubr.f32.gmra.mrb[0].mxu0 %v4952
        %v5179 = vpop.f32.mrb[0].mxu0
        %v5180 = vadd.f32 %v4713, %v5179
        %v5181 = vpop.f32.mrb[0].mxu0
        %5182 = vmatprep.mubr.f32.mxu0 0.0
        %5183 = vmatmul.mubr.f32.gmra.mrb[0].mxu0 %v4955
        %v5184 = vpop.f32.mrb[0].mxu0
        %v5185 = vadd.f32 %v4718, %v5184
        %v5186 = vpop.f32.mrb[0].mxu0
        %5187 = vmatprep.mubr.f32.mxu0 0.0
        %5188 = vmatmul.mubr.f32.gmra.mrb[0].mxu0 %v4958
        %v5189 = vpop.f32.mrb[0].mxu0
        %v5190 = vadd.f32 %v4723, %v5189
        %v5191 = vpop.f32.mrb[0].mxu0
        %5192 = vmatprep.mubr.f32.mxu0 0.0
        %5193 = vmatmul.mubr.f32.gmra.mrb[0].mxu0 %v4961
        %v5194 = vpop.f32.mrb[0].mxu0
        %v5195 = vadd.f32 %v4728, %v5194
        %v5196 = vpop.f32.mrb[0].mxu0
        %5197 = vmatprep.mubr.f32.mxu0 0.0
        %5198 = vmatmul.mubr.f32.gmra.mrb[0].mxu0 %v4964
        %v5199 = vpop.f32.mrb[0].mxu0
        %v5200 = vadd.f32 %v4733, %v5199
        %v5201 = vpop.f32.mrb[0].mxu0
        %5202 = vmatprep.mubr.f32.mxu0 0.0
        %5203 = vmatmul.mubr.f32.gmra.mrb[0].mxu0 %v4967
        %v5204 = vpop.f32.mrb[0].mxu0
        %v5205 = vadd.f32 %v4738, %v5204
        %v5206 = vpop.f32.mrb[0].mxu0
        %5207 = vmatprep.mubr.f32.mxu0 0.0
        %5208 = vmatmul.mubr.f32.gmra.mrb[0].mxu0 %v4970
        %v5209 = vpop.f32.mrb[0].mxu0
        %v5210 = vadd.f32 %v4743, %v5209
        %v5211 = vpop.f32.mrb[0].mxu0
        %5212 = vmatprep.mubr.f32.mxu0 0.0
        %5213 = vmatmul.mubr.f32.gmra.mrb[0].mxu0 %v4973
        %v5214 = vpop.f32.mrb[0].mxu0
        %v5215 = vadd.f32 %v4748, %v5214
        %v5216 = vpop.f32.mrb[0].mxu0
        %5217 = vmatprep.mubr.f32.mxu0 0.0
        %5218 = vmatmul.mubr.f32.gmra.mrb[0].mxu0 %v4976
        %v5219 = vpop.f32.mrb[0].mxu0
        %v5220 = vadd.f32 %v4753, %v5219
        %v5221 = vpop.f32.mrb[0].mxu0
        %5222 = vmatprep.mubr.f32.mxu0 0.0
        %5223 = vmatmul.mubr.f32.gmra.mrb[0].mxu0 %v4979
        %v5224 = vpop.f32.mrb[0].mxu0
        %v5225 = vadd.f32 %v4758, %v5224
        %v5226 = vpop.f32.mrb[0].mxu0
        %5227 = vmatprep.mubr.f32.mxu0 0.0
        %5228 = vmatmul.mubr.f32.gmra.mrb[0].mxu0 %v4982
        %v5229 = vpop.f32.mrb[0].mxu0
        %v5230 = vadd.f32 %v4763, %v5229
        %v5231 = vpop.f32.mrb[0].mxu0
        %5232 = vmatprep.mubr.f32.mxu0 0.0
        %5233 = vmatmul.mubr.f32.gmra.mrb[0].mxu0 %v4985
        %v5234 = vpop.f32.mrb[0].mxu0
        %v5235 = vadd.f32 %v4768, %v5234
        %v5236 = vpop.f32.mrb[0].mxu0
        %5237 = vmatprep.mubr.f32.mxu0 0.0
        %5238 = vmatmul.mubr.f32.gmra.mrb[0].mxu0 %v4988
        %v5239 = vpop.f32.mrb[0].mxu0
        %v5240 = vadd.f32 %v4773, %v5239
        %v5241 = vpop.f32.mrb[0].mxu0
        %5242 = vmatprep.mubr.f32.mxu0 0.0
        %5243 = vmatmul.mubr.f32.gmra.mrb[0].mxu0 %v4991
        %v5244 = vpop.f32.mrb[0].mxu0
        %v5245 = vadd.f32 %v4778, %v5244
        %v5246 = vpop.f32.mrb[0].mxu0
        %5247 = vmatprep.mubr.f32.mxu0 0.0
        %5248 = vmatmul.mubr.f32.gmra.mrb[0].mxu0 %v4994
        %v5249 = vpop.f32.mrb[0].mxu0
        %v5250 = vadd.f32 %v4783, %v5249
        %v5251 = vpop.f32.mrb[0].mxu0
        %5252 = vmatprep.mubr.f32.mxu0 0.0
        %5253 = vmatmul.mubr.f32.gmra.mrb[0].mxu0 %v4997
        %v5254 = vpop.f32.mrb[0].mxu0
        %v5255 = vadd.f32 %v4788, %v5254
        %v5256 = vpop.f32.mrb[0].mxu0
        %5257 = vmatprep.mubr.f32.mxu0 0.0
        %5258 = vmatmul.mubr.f32.gmra.mrb[0].mxu0 %v5000
        %v5259 = vpop.f32.mrb[0].mxu0
        %v5260 = vadd.f32 %v4793, %v5259
        %v5261 = vpop.f32.mrb[0].mxu0
        %5262 = vmatprep.mubr.f32.mxu0 0.0
        %5263 = vmatmul.mubr.f32.gmra.mrb[0].mxu0 %v5003
        %v5264 = vpop.f32.mrb[0].mxu0
        %v5265 = vadd.f32 %v4798, %v5264
        %v5266 = vpop.f32.mrb[0].mxu0
        %5267 = vmatprep.mubr.f32.mxu0 0.0
        %5268 = vmatmul.mubr.f32.gmra.mrb[0].mxu0 %v5006
        %v5269 = vpop.f32.mrb[0].mxu0
        %v5270 = vadd.f32 %v4803, %v5269
        %v5271 = vpop.f32.mrb[0].mxu0
        %5272 = vmatprep.mubr.f32.mxu0 0.0
        %5273 = vmatmul.mubr.f32.gmra.mrb[0].mxu0 %v5009
        %v5274 = vpop.f32.mrb[0].mxu0
        %v5275 = vadd.f32 %v4808, %v5274
        %v5276 = vpop.f32.mrb[0].mxu0
        %5277 = vmatprep.mubr.f32.mxu0 0.0
        %5278 = vmatmul.mubr.f32.gmra.mrb[0].mxu0 %v5012
        %v5279 = vpop.f32.mrb[0].mxu0
        %v5280 = vadd.f32 %v4813, %v5279
        %v5281 = vpop.f32.mrb[0].mxu0
        %5282 = vmatprep.mubr.f32.mxu0 0.0
        %5283 = vmatmul.mubr.f32.gmra.mrb[0].mxu0 %v5015
        %v5284 = vpop.f32.mrb[0].mxu0
        %v5285 = vadd.f32 %v4818, %v5284
        %v5286 = vpop.f32.mrb[0].mxu0
        %5287 = vmatprep.mubr.f32.mxu0 0.0
        %5288 = vmatmul.mubr.f32.gmra.mrb[0].mxu0 %v5018
        %v5289 = vpop.f32.mrb[0].mxu0
        %v5290 = vadd.f32 %v4823, %v5289
        %v5291 = vpop.f32.mrb[0].mxu0
        %5292 = vmatprep.mubr.f32.mxu0 0.0
        %5293 = vmatmul.mubr.f32.gmra.mrb[0].mxu0 %v5021
        %v5294 = vpop.f32.mrb[0].mxu0
        %v5295 = vadd.f32 %v4828, %v5294
        %v5296 = vpop.f32.mrb[0].mxu0
        %5297 = vmatprep.mubr.f32.mxu0 0.0
        %5298 = vmatmul.mubr.f32.gmra.mrb[0].mxu0 %v5024
        %v5299 = vpop.f32.mrb[0].mxu0
        %v5300 = vadd.f32 %v4833, %v5299
        %v5301 = vpop.f32.mrb[0].mxu0
        %5302 = vmatprep.mubr.f32.mxu0 0.0
        %5303 = vmatmul.mubr.f32.gmra.mrb[0].mxu0 %v5027
        %v5304 = vpop.f32.mrb[0].mxu0
        %v5305 = vadd.f32 %v4838, %v5304
        %v5306 = vpop.f32.mrb[0].mxu0
        %5307 = vmatprep.mubr.f32.mxu0 0.0
        %5308 = vmatmul.mubr.f32.gmra.mrb[0].mxu0 %v5030
        %v5309 = vpop.f32.mrb[0].mxu0
        %v5310 = vadd.f32 %v4843, %v5309
        %v5311 = vpop.f32.mrb[0].mxu0
        %5312 = vmatprep.mubr.f32.mxu0 0.0
        %5313 = vmatmul.mubr.f32.gmra.mrb[0].mxu0 %v5033
        %v5314 = vpop.f32.mrb[0].mxu0
        %v5315 = vadd.f32 %v4848, %v5314
        %v5316 = vpop.f32.mrb[0].mxu0
        %5317 = vmatprep.mubr.f32.mxu0 0.0
        %5318 = vmatmul.mubr.f32.gmra.mrb[0].mxu0 %v5036
        %v5319 = vpop.f32.mrb[0].mxu0
        %v5320 = vadd.f32 %v4853, %v5319
        %v5321 = vpop.f32.mrb[0].mxu0
        %5322 = vmatprep.mubr.f32.mxu0 0.0
        %5323 = vmatmul.mubr.f32.gmra.mrb[0].mxu0 %v5039
        %v5324 = vpop.f32.mrb[0].mxu0
        %v5325 = vadd.f32 %v4858, %v5324
        %v5326 = vpop.f32.mrb[0].mxu0
        %5327 = vmatprep.mubr.f32.mxu0 0.0
        %5328 = vmatmul.mubr.f32.gmra.mrb[0].mxu0 %v5042
        %v5329 = vpop.f32.mrb[0].mxu0
        %v5330 = vadd.f32 %v4863, %v5329
        %v5331 = vpop.f32.mrb[0].mxu0
        %5332 = vmatprep.mubr.f32.mxu0 0.0
        %5333 = vmatmul.mubr.f32.gmra.mrb[0].mxu0 %v5045
        %v5334 = vpop.f32.mrb[0].mxu0
        %v5335 = vadd.f32 %v4868, %v5334
        %v5336 = vpop.f32.mrb[0].mxu0
        %5337 = vmatprep.mubr.f32.mxu0 0.0
        %5338 = vmatmul.mubr.f32.gmra.mrb[0].mxu0 %v5048
        %v5339 = vpop.f32.mrb[0].mxu0
        %v5340 = vadd.f32 %v4873, %v5339
        %v5341 = vpop.f32.mrb[0].mxu0
        %5342 = vmatprep.mubr.f32.mxu0 0.0
        %5343 = vmatmul.mubr.f32.gmra.mrb[0].mxu0 %v5051
        %v5344 = vpop.f32.mrb[0].mxu0
        %v5345 = vadd.f32 %v4878, %v5344
        %v5346 = vpop.f32.mrb[0].mxu0
        %5347 = vmatprep.mubr.f32.mxu0 0.0
        %5348 = vmatmul.mubr.f32.gmra.mrb[0].mxu0 %v5054
        %v5349 = vpop.f32.mrb[0].mxu0
        %v5350 = vadd.f32 %v4883, %v5349
        %v5351 = vpop.f32.mrb[0].mxu0
        %5352 = vmatprep.mubr.f32.mxu0 0.0
        %5353 = vmatmul.mubr.f32.gmra.mrb[0].mxu0 %v5057
        %v5354 = vpop.f32.mrb[0].mxu0
        %v5355 = vadd.f32 %v4888, %v5354
        %v5356 = vpop.f32.mrb[0].mxu0
        %5357 = vmatprep.mubr.f32.mxu0 0.0
        %5358 = vmatmul.mubr.f32.gmra.mrb[0].mxu0 %v5060
        %v5359 = vpop.f32.mrb[0].mxu0
        %v5360 = vadd.f32 %v4893, %v5359
        %v5361 = vpop.f32.mrb[0].mxu0
        %5362 = vmatprep.mubr.f32.mxu0 0.0
        %5363 = vmatmul.mubr.f32.gmra.mrb[0].mxu0 %v5063
        %v5364 = vpop.f32.mrb[0].mxu0
        %v5365 = vadd.f32 %v4898, %v5364
        %v5366 = vpop.f32.mrb[0].mxu0
        %5367 = vmatprep.mubr.f32.mxu0 0.0
        %5368 = vmatmul.mubr.f32.gmra.mrb[0].mxu0 %v5066
        %v5369 = vpop.f32.mrb[0].mxu0
        %v5370 = vadd.f32 %v4903, %v5369
        %v5371 = vpop.f32.mrb[0].mxu0
        %5372 = vmatprep.mubr.f32.mxu0 0.0
        %5373 = vmatmul.mubr.f32.gmra.mrb[0].mxu0 %v5069
        %v5374 = vpop.f32.mrb[0].mxu0
        %v5375 = vadd.f32 %v4908, %v5374
        %v5376 = vpop.f32.mrb[0].mxu0
        %5377 = vmatprep.mubr.f32.mxu0 0.0
        %5378 = vmatmul.mubr.f32.gmra.mrb[0].mxu0 %v5072
        %v5379 = vpop.f32.mrb[0].mxu0
        %v5380 = vadd.f32 %v4913, %v5379
        %v5381 = vpop.f32.mrb[0].mxu0
        %5382 = vmatprep.mubr.f32.mxu0 0.0
        %5383 = vmatmul.mubr.f32.gmra.mrb[0].mxu0 %v5075
        %v5384 = vpop.f32.mrb[0].mxu0
        %v5385 = vadd.f32 %v4918, %v5384
        %v5386 = vpop.f32.mrb[0].mxu0
        %5387 = vmatprep.mubr.f32.mxu0 0.0
        %5388 = vmatmul.mubr.f32.gmra.mrb[0].mxu0 %v5078
        %v5389 = vpop.f32.mrb[0].mxu0
        %v5390 = vadd.f32 %v4923, %v5389
        %v5391 = vpop.f32.mrb[0].mxu0
        %5392 = vmatprep.mubr.f32.mxu0 0.0
        %5393 = vmatmul.mubr.f32.gmra.mrb[0].mxu0 %v5081
        %v5394 = vpop.f32.mrb[0].mxu0
        %v5395 = vadd.f32 %v4928, %v5394
        %v5396 = vpop.f32.mrb[0].mxu0
        %5397 = vmatprep.mubr.f32.mxu0 0.0
        %5398 = vmatmul.mubr.f32.gmra.mrb[0].mxu0 %v5084
        %v5399 = vpop.f32.mrb[0].mxu0
        %v5400 = vadd.f32 %v4933, %v5399
        %v5401 = vpop.f32.mrb[0].mxu0
        %5402 = vdwg.mxu0
        %s5403 = scalar_lea.vmem %s10, 800
        %v5404 = vld [vmem:[%s5403] sm:$0xff]
        %v5405 = vld [vmem:[%s5403 + $0x8] sm:$0xff]
        %v5406 = vld [vmem:[%s5403 + $0x10] sm:$0xff]
        %v5407 = vld [vmem:[%s5403 + $0x18] sm:$0xff]
        %v5408 = vld [vmem:[%s5403 + $0x20] sm:$0xff]
        %v5409 = vld [vmem:[%s5403 + $0x28] sm:$0xff]
        %v5410 = vld [vmem:[%s5403 + $0x30] sm:$0xff]
        %v5411 = vld [vmem:[%s5403 + $0x38] sm:$0xff]
        %v5412 = vld [vmem:[%s5403 + $0x40] sm:$0xff]
        %v5413 = vld [vmem:[%s5403 + $0x48] sm:$0xff]
        %v5414 = vld [vmem:[%s5403 + $0x50] sm:$0xff]
        %v5415 = vld [vmem:[%s5403 + $0x58] sm:$0xff]
        %v5416 = vld [vmem:[%s5403 + $0x60] sm:$0xff]
        %v5417 = vld [vmem:[%s5403 + $0x68] sm:$0xff]
        %v5418 = vld [vmem:[%s5403 + $0x70] sm:$0xff]
        %v5419 = vld [vmem:[%s5403 + $0x78] sm:$0xff]
        %v5420 = vld [vmem:[%s5403 + $0x80] sm:$0xff]
        %v5421 = vld [vmem:[%s5403 + $0x88] sm:$0xff]
        %v5422 = vld [vmem:[%s5403 + $0x90] sm:$0xff]
        %v5423 = vld [vmem:[%s5403 + $0x98] sm:$0xff]
        %v5424 = vld [vmem:[%s5403 + $0xa0] sm:$0xff]
        %v5425 = vld [vmem:[%s5403 + $0xa8] sm:$0xff]
        %v5426 = vld [vmem:[%s5403 + $0xb0] sm:$0xff]
        %v5427 = vld [vmem:[%s5403 + $0xb8] sm:$0xff]
        %v5428 = vld [vmem:[%s5403 + $0xc0] sm:$0xff]
        %v5429 = vld [vmem:[%s5403 + $0xc8] sm:$0xff]
        %v5430 = vld [vmem:[%s5403 + $0xd0] sm:$0xff]
        %v5431 = vld [vmem:[%s5403 + $0xd8] sm:$0xff]
        %v5432 = vld [vmem:[%s5403 + $0xe0] sm:$0xff]
        %v5433 = vld [vmem:[%s5403 + $0xe8] sm:$0xff]
        %v5434 = vld [vmem:[%s5403 + $0xf0] sm:$0xff]
        %v5435 = vld [vmem:[%s5403 + $0xf8] sm:$0xff]
        %v5436 = vld [vmem:[%s5403 + $0x100] sm:$0xff]
        %v5437 = vld [vmem:[%s5403 + $0x108] sm:$0xff]
        %v5438 = vld [vmem:[%s5403 + $0x110] sm:$0xff]
        %v5439 = vld [vmem:[%s5403 + $0x118] sm:$0xff]
        %v5440 = vld [vmem:[%s5403 + $0x120] sm:$0xff]
        %v5441 = vld [vmem:[%s5403 + $0x128] sm:$0xff]
        %v5442 = vld [vmem:[%s5403 + $0x130] sm:$0xff]
        %v5443 = vld [vmem:[%s5403 + $0x138] sm:$0xff]
        %v5444 = vld [vmem:[%s5403 + $0x140] sm:$0xff]
        %v5445 = vld [vmem:[%s5403 + $0x148] sm:$0xff]
        %v5446 = vld [vmem:[%s5403 + $0x150] sm:$0xff]
        %v5447 = vld [vmem:[%s5403 + $0x158] sm:$0xff]
        %v5448 = vld [vmem:[%s5403 + $0x160] sm:$0xff]
        %v5449 = vld [vmem:[%s5403 + $0x168] sm:$0xff]
        %v5450 = vld [vmem:[%s5403 + $0x170] sm:$0xff]
        %v5451 = vld [vmem:[%s5403 + $0x178] sm:$0xff]
        %v5452 = vld [vmem:[%s5403 + $0x180] sm:$0xff]
        %v5453 = vld [vmem:[%s5403 + $0x188] sm:$0xff]
        %5454 = vrot.lane.b32.xlu0 %v4343, 120
        %v5455 = vpop.permute.xlu0 %5454
        %5456 = vrot.lane.b32.xlu0 %v4348, 120
        %v5457 = vpop.permute.xlu0 %5456
        %5458 = vrot.lane.b32.xlu0 %v4353, 120
        %v5459 = vpop.permute.xlu0 %5458
        %v5463 = vsel %vm4468, %v5404, 0
        %v5466 = vsel %vm4468, %v5405, 0
        %v5469 = vsel %vm4468, %v5406, 0
        %v5472 = vsel %vm4468, %v5407, 0
        %v5475 = vsel %vm4468, %v5408, 0
        %v5478 = vsel %vm4468, %v5409, 0
        %v5481 = vsel %vm4468, %v5410, 0
        %v5484 = vsel %vm4468, %v5411, 0
        %v5487 = vsel %vm4468, %v5412, 0
        %v5490 = vsel %vm4468, %v5413, 0
        %v5493 = vsel %vm4468, %v5414, 0
        %v5496 = vsel %vm4468, %v5415, 0
        %v5499 = vsel %vm4468, %v5416, 0
        %v5502 = vsel %vm4468, %v5417, 0
        %v5505 = vsel %vm4468, %v5418, 0
        %v5508 = vsel %vm4468, %v5419, 0
        %v5511 = vsel %vm4468, %v5420, 0
        %v5514 = vsel %vm4468, %v5421, 0
        %v5517 = vsel %vm4468, %v5422, 0
        %v5520 = vsel %vm4468, %v5423, 0
        %v5523 = vsel %vm4468, %v5424, 0
        %v5526 = vsel %vm4468, %v5425, 0
        %v5529 = vsel %vm4468, %v5426, 0
        %v5532 = vsel %vm4468, %v5427, 0
        %v5535 = vsel %vm4468, %v5428, 0
        %v5538 = vsel %vm4468, %v5429, 0
        %v5541 = vsel %vm4468, %v5430, 0
        %v5544 = vsel %vm4468, %v5431, 0
        %v5547 = vsel %vm4468, %v5432, 0
        %v5550 = vsel %vm4468, %v5433, 0
        %v5553 = vsel %vm4468, %v5434, 0
        %v5556 = vsel %vm4468, %v5435, 0
        %v5559 = vsel %vm4468, %v5436, 0
        %v5562 = vsel %vm4468, %v5437, 0
        %v5565 = vsel %vm4468, %v5438, 0
        %v5568 = vsel %vm4468, %v5439, 0
        %v5571 = vsel %vm4468, %v5440, 0
        %v5574 = vsel %vm4468, %v5441, 0
        %v5577 = vsel %vm4468, %v5442, 0
        %v5580 = vsel %vm4468, %v5443, 0
        %v5583 = vsel %vm4468, %v5444, 0
        %v5586 = vsel %vm4468, %v5445, 0
        %v5589 = vsel %vm4468, %v5446, 0
        %v5592 = vsel %vm4468, %v5447, 0
        %v5595 = vsel %vm4468, %v5448, 0
        %v5598 = vsel %vm4468, %v5449, 0
        %v5601 = vsel %vm4468, %v5450, 0
        %v5604 = vsel %vm4468, %v5451, 0
        %v5607 = vsel %vm4468, %v5452, 0
        %v5610 = vsel %vm4468, %v5453, 0
        %v5612 = vsel %vm987, %v5459, 0
        %5614 = vmatprep.subr.mxu0 0.0
        %5615 = vmatpush1.msra.mxu0 %v5455
        %5616 = vmatprep.subr.mxu0 0.0
        %5617 = vmatpush1.msra.mxu0 %v5457
        %5618 = vmatprep.subr.mxu0 0.0
        %5619 = vmatpush1.msra.mxu0 %v5612
        %5620 = vmatprep.subr.mxu0 0.0
        %5621 = vmatpush1.msra.mxu0 0.0
        %5622 = vmatprep.subr.mxu0 0.0
        %5623 = vmatpush1.msra.mxu0 0.0
        %5624 = vmatprep.subr.mxu0 0.0
        %5625 = vmatpush1.msra.mxu0 0.0
        %5626 = vmatprep.subr.mxu0 0.0
        %5627 = vmatpush1.msra.mxu0 0.0
        %5628 = vmatprep.subr.mxu0 0.0
        %5629 = vmatpush1.msra.mxu0 0.0
        %5630 = vmatprep.subr.mxu0 0.0
        %5631 = vmatpush1.msra.mxu0 0.0
        %5632 = vmatprep.subr.mxu0 0.0
        %5633 = vmatpush1.msra.mxu0 0.0
        %5634 = vmatprep.subr.mxu0 0.0
        %5635 = vmatpush1.msra.mxu0 0.0
        %5636 = vmatprep.subr.mxu0 0.0
        %5637 = vmatpush1.msra.mxu0 0.0
        %5638 = vmatprep.subr.mxu0 0.0
        %5639 = vmatpush1.msra.mxu0 0.0
        %5640 = vmatprep.subr.mxu0 0.0
        %5641 = vmatpush1.msra.mxu0 0.0
        %5642 = vmatprep.subr.mxu0 0.0
        %5643 = vmatpush1.msra.mxu0 0.0
        %5644 = vmatprep.subr.mxu0 0.0
        %5645 = vmatpush1.msra.mxu0 0.0
        %5646 = vmatprep.subr.mxu0 0.0
        %5647 = vmatpush1.msra.mxu0 0.0
        %5648 = vmatprep.subr.mxu0 0.0
        %5649 = vmatpush1.msra.mxu0 0.0
        %5650 = vmatprep.subr.mxu0 0.0
        %5651 = vmatpush1.msra.mxu0 0.0
        %5652 = vmatprep.subr.mxu0 0.0
        %5653 = vmatpush1.msra.mxu0 0.0
        %5654 = vmatprep.subr.mxu0 0.0
        %5655 = vmatpush1.msra.mxu0 0.0
        %5656 = vmatprep.subr.mxu0 0.0
        %5657 = vmatpush1.msra.mxu0 0.0
        %5658 = vmatprep.subr.mxu0 0.0
        %5659 = vmatpush1.msra.mxu0 0.0
        %5660 = vmatprep.subr.mxu0 0.0
        %5661 = vmatpush1.msra.mxu0 0.0
        %5662 = vmatprep.subr.mxu0 0.0
        %5663 = vmatpush1.msra.mxu0 0.0
        %5664 = vmatprep.subr.mxu0 0.0
        %5665 = vmatpush1.msra.mxu0 0.0
        %5666 = vmatprep.subr.mxu0 0.0
        %5667 = vmatpush1.msra.mxu0 0.0
        %5668 = vmatprep.subr.mxu0 0.0
        %5669 = vmatpush1.msra.mxu0 0.0
        %5670 = vmatprep.subr.mxu0 0.0
        %5671 = vmatpush1.msra.mxu0 0.0
        %5672 = vmatprep.subr.mxu0 0.0
        %5673 = vmatpush1.msra.mxu0 0.0
        %5674 = vmatprep.subr.mxu0 0.0
        %5675 = vmatpush1.msra.mxu0 0.0
        %5676 = vmatprep.subr.mxu0 0.0
        %5677 = vmatpush1.msra.mxu0 0.0
        %5678 = vmatprep.mubr.f32.mxu0 0.0
        %5679 = vmatmul.mubr.f32.gmra.mrb[0].mxu0 %v5463
        %v5680 = vpop.f32.mrb[0].mxu0
        %v5681 = vadd.f32 0.0, %v5680
        %v5682 = vpop.f32.mrb[0].mxu0
        %5683 = vmatprep.mubr.f32.mxu0 0.0
        %5684 = vmatmul.mubr.f32.gmra.mrb[0].mxu0 %v5466
        %v5685 = vpop.f32.mrb[0].mxu0
        %v5686 = vadd.f32 0.0, %v5685
        %v5687 = vpop.f32.mrb[0].mxu0
        %5688 = vmatprep.mubr.f32.mxu0 0.0
        %5689 = vmatmul.mubr.f32.gmra.mrb[0].mxu0 %v5469
        %v5690 = vpop.f32.mrb[0].mxu0
        %v5691 = vadd.f32 0.0, %v5690
        %v5692 = vpop.f32.mrb[0].mxu0
        %5693 = vmatprep.mubr.f32.mxu0 0.0
        %5694 = vmatmul.mubr.f32.gmra.mrb[0].mxu0 %v5472
        %v5695 = vpop.f32.mrb[0].mxu0
        %v5696 = vadd.f32 0.0, %v5695
        %v5697 = vpop.f32.mrb[0].mxu0
        %5698 = vmatprep.mubr.f32.mxu0 0.0
        %5699 = vmatmul.mubr.f32.gmra.mrb[0].mxu0 %v5475
        %v5700 = vpop.f32.mrb[0].mxu0
        %v5701 = vadd.f32 0.0, %v5700
        %v5702 = vpop.f32.mrb[0].mxu0
        %5703 = vmatprep.mubr.f32.mxu0 0.0
        %5704 = vmatmul.mubr.f32.gmra.mrb[0].mxu0 %v5478
        %v5705 = vpop.f32.mrb[0].mxu0
        %v5706 = vadd.f32 0.0, %v5705
        %v5707 = vpop.f32.mrb[0].mxu0
        %5708 = vmatprep.mubr.f32.mxu0 0.0
        %5709 = vmatmul.mubr.f32.gmra.mrb[0].mxu0 %v5481
        %v5710 = vpop.f32.mrb[0].mxu0
        %v5711 = vadd.f32 0.0, %v5710
        %v5712 = vpop.f32.mrb[0].mxu0
        %5713 = vmatprep.mubr.f32.mxu0 0.0
        %5714 = vmatmul.mubr.f32.gmra.mrb[0].mxu0 %v5484
        %v5715 = vpop.f32.mrb[0].mxu0
        %v5716 = vadd.f32 0.0, %v5715
        %v5717 = vpop.f32.mrb[0].mxu0
        %5718 = vmatprep.mubr.f32.mxu0 0.0
        %5719 = vmatmul.mubr.f32.gmra.mrb[0].mxu0 %v5487
        %v5720 = vpop.f32.mrb[0].mxu0
        %v5721 = vadd.f32 0.0, %v5720
        %v5722 = vpop.f32.mrb[0].mxu0
        %5723 = vmatprep.mubr.f32.mxu0 0.0
        %5724 = vmatmul.mubr.f32.gmra.mrb[0].mxu0 %v5490
        %v5725 = vpop.f32.mrb[0].mxu0
        %v5726 = vadd.f32 0.0, %v5725
        %v5727 = vpop.f32.mrb[0].mxu0
        %5728 = vmatprep.mubr.f32.mxu0 0.0
        %5729 = vmatmul.mubr.f32.gmra.mrb[0].mxu0 %v5493
        %v5730 = vpop.f32.mrb[0].mxu0
        %v5731 = vadd.f32 0.0, %v5730
        %v5732 = vpop.f32.mrb[0].mxu0
        %5733 = vmatprep.mubr.f32.mxu0 0.0
        %5734 = vmatmul.mubr.f32.gmra.mrb[0].mxu0 %v5496
        %v5735 = vpop.f32.mrb[0].mxu0
        %v5736 = vadd.f32 0.0, %v5735
        %v5737 = vpop.f32.mrb[0].mxu0
        %5738 = vmatprep.mubr.f32.mxu0 0.0
        %5739 = vmatmul.mubr.f32.gmra.mrb[0].mxu0 %v5499
        %v5740 = vpop.f32.mrb[0].mxu0
        %v5741 = vadd.f32 0.0, %v5740
        %v5742 = vpop.f32.mrb[0].mxu0
        %5743 = vmatprep.mubr.f32.mxu0 0.0
        %5744 = vmatmul.mubr.f32.gmra.mrb[0].mxu0 %v5502
        %v5745 = vpop.f32.mrb[0].mxu0
        %v5746 = vadd.f32 0.0, %v5745
        %v5747 = vpop.f32.mrb[0].mxu0
        %5748 = vmatprep.mubr.f32.mxu0 0.0
        %5749 = vmatmul.mubr.f32.gmra.mrb[0].mxu0 %v5505
        %v5750 = vpop.f32.mrb[0].mxu0
        %v5751 = vadd.f32 0.0, %v5750
        %v5752 = vpop.f32.mrb[0].mxu0
        %5753 = vmatprep.mubr.f32.mxu0 0.0
        %5754 = vmatmul.mubr.f32.gmra.mrb[0].mxu0 %v5508
        %v5755 = vpop.f32.mrb[0].mxu0
        %v5756 = vadd.f32 0.0, %v5755
        %v5757 = vpop.f32.mrb[0].mxu0
        %5758 = vmatprep.mubr.f32.mxu0 0.0
        %5759 = vmatmul.mubr.f32.gmra.mrb[0].mxu0 %v5511
        %v5760 = vpop.f32.mrb[0].mxu0
        %v5761 = vadd.f32 0.0, %v5760
        %v5762 = vpop.f32.mrb[0].mxu0
        %5763 = vmatprep.mubr.f32.mxu0 0.0
        %5764 = vmatmul.mubr.f32.gmra.mrb[0].mxu0 %v5514
        %v5765 = vpop.f32.mrb[0].mxu0
        %v5766 = vadd.f32 0.0, %v5765
        %v5767 = vpop.f32.mrb[0].mxu0
        %5768 = vmatprep.mubr.f32.mxu0 0.0
        %5769 = vmatmul.mubr.f32.gmra.mrb[0].mxu0 %v5517
        %v5770 = vpop.f32.mrb[0].mxu0
        %v5771 = vadd.f32 0.0, %v5770
        %v5772 = vpop.f32.mrb[0].mxu0
        %5773 = vmatprep.mubr.f32.mxu0 0.0
        %5774 = vmatmul.mubr.f32.gmra.mrb[0].mxu0 %v5520
        %v5775 = vpop.f32.mrb[0].mxu0
        %v5776 = vadd.f32 0.0, %v5775
        %v5777 = vpop.f32.mrb[0].mxu0
        %5778 = vmatprep.mubr.f32.mxu0 0.0
        %5779 = vmatmul.mubr.f32.gmra.mrb[0].mxu0 %v5523
        %v5780 = vpop.f32.mrb[0].mxu0
        %v5781 = vadd.f32 0.0, %v5780
        %v5782 = vpop.f32.mrb[0].mxu0
        %5783 = vmatprep.mubr.f32.mxu0 0.0
        %5784 = vmatmul.mubr.f32.gmra.mrb[0].mxu0 %v5526
        %v5785 = vpop.f32.mrb[0].mxu0
        %v5786 = vadd.f32 0.0, %v5785
        %v5787 = vpop.f32.mrb[0].mxu0
        %5788 = vmatprep.mubr.f32.mxu0 0.0
        %5789 = vmatmul.mubr.f32.gmra.mrb[0].mxu0 %v5529
        %v5790 = vpop.f32.mrb[0].mxu0
        %v5791 = vadd.f32 0.0, %v5790
        %v5792 = vpop.f32.mrb[0].mxu0
        %5793 = vmatprep.mubr.f32.mxu0 0.0
        %5794 = vmatmul.mubr.f32.gmra.mrb[0].mxu0 %v5532
        %v5795 = vpop.f32.mrb[0].mxu0
        %v5796 = vadd.f32 0.0, %v5795
        %v5797 = vpop.f32.mrb[0].mxu0
        %5798 = vmatprep.mubr.f32.mxu0 0.0
        %5799 = vmatmul.mubr.f32.gmra.mrb[0].mxu0 %v5535
        %v5800 = vpop.f32.mrb[0].mxu0
        %v5801 = vadd.f32 0.0, %v5800
        %v5802 = vpop.f32.mrb[0].mxu0
        %5803 = vmatprep.mubr.f32.mxu0 0.0
        %5804 = vmatmul.mubr.f32.gmra.mrb[0].mxu0 %v5538
        %v5805 = vpop.f32.mrb[0].mxu0
        %v5806 = vadd.f32 0.0, %v5805
        %v5807 = vpop.f32.mrb[0].mxu0
        %5808 = vmatprep.mubr.f32.mxu0 0.0
        %5809 = vmatmul.mubr.f32.gmra.mrb[0].mxu0 %v5541
        %v5810 = vpop.f32.mrb[0].mxu0
        %v5811 = vadd.f32 0.0, %v5810
        %v5812 = vpop.f32.mrb[0].mxu0
        %5813 = vmatprep.mubr.f32.mxu0 0.0
        %5814 = vmatmul.mubr.f32.gmra.mrb[0].mxu0 %v5544
        %v5815 = vpop.f32.mrb[0].mxu0
        %v5816 = vadd.f32 0.0, %v5815
        %v5817 = vpop.f32.mrb[0].mxu0
        %5818 = vmatprep.mubr.f32.mxu0 0.0
        %5819 = vmatmul.mubr.f32.gmra.mrb[0].mxu0 %v5547
        %v5820 = vpop.f32.mrb[0].mxu0
        %v5821 = vadd.f32 0.0, %v5820
        %v5822 = vpop.f32.mrb[0].mxu0
        %5823 = vmatprep.mubr.f32.mxu0 0.0
        %5824 = vmatmul.mubr.f32.gmra.mrb[0].mxu0 %v5550
        %v5825 = vpop.f32.mrb[0].mxu0
        %v5826 = vadd.f32 0.0, %v5825
        %v5827 = vpop.f32.mrb[0].mxu0
        %5828 = vmatprep.mubr.f32.mxu0 0.0
        %5829 = vmatmul.mubr.f32.gmra.mrb[0].mxu0 %v5553
        %v5830 = vpop.f32.mrb[0].mxu0
        %v5831 = vadd.f32 0.0, %v5830
        %v5832 = vpop.f32.mrb[0].mxu0
        %5833 = vmatprep.mubr.f32.mxu0 0.0
        %5834 = vmatmul.mubr.f32.gmra.mrb[0].mxu0 %v5556
        %v5835 = vpop.f32.mrb[0].mxu0
        %v5836 = vadd.f32 0.0, %v5835
        %v5837 = vpop.f32.mrb[0].mxu0
        %5838 = vmatprep.mubr.f32.mxu0 0.0
        %5839 = vmatmul.mubr.f32.gmra.mrb[0].mxu0 %v5559
        %v5840 = vpop.f32.mrb[0].mxu0
        %v5841 = vadd.f32 0.0, %v5840
        %v5842 = vpop.f32.mrb[0].mxu0
        %5843 = vmatprep.mubr.f32.mxu0 0.0
        %5844 = vmatmul.mubr.f32.gmra.mrb[0].mxu0 %v5562
        %v5845 = vpop.f32.mrb[0].mxu0
        %v5846 = vadd.f32 0.0, %v5845
        %v5847 = vpop.f32.mrb[0].mxu0
        %5848 = vmatprep.mubr.f32.mxu0 0.0
        %5849 = vmatmul.mubr.f32.gmra.mrb[0].mxu0 %v5565
        %v5850 = vpop.f32.mrb[0].mxu0
        %v5851 = vadd.f32 0.0, %v5850
        %v5852 = vpop.f32.mrb[0].mxu0
        %5853 = vmatprep.mubr.f32.mxu0 0.0
        %5854 = vmatmul.mubr.f32.gmra.mrb[0].mxu0 %v5568
        %v5855 = vpop.f32.mrb[0].mxu0
        %v5856 = vadd.f32 0.0, %v5855
        %v5857 = vpop.f32.mrb[0].mxu0
        %5858 = vmatprep.mubr.f32.mxu0 0.0
        %5859 = vmatmul.mubr.f32.gmra.mrb[0].mxu0 %v5571
        %v5860 = vpop.f32.mrb[0].mxu0
        %v5861 = vadd.f32 0.0, %v5860
        %v5862 = vpop.f32.mrb[0].mxu0
        %5863 = vmatprep.mubr.f32.mxu0 0.0
        %5864 = vmatmul.mubr.f32.gmra.mrb[0].mxu0 %v5574
        %v5865 = vpop.f32.mrb[0].mxu0
        %v5866 = vadd.f32 0.0, %v5865
        %v5867 = vpop.f32.mrb[0].mxu0
        %5868 = vmatprep.mubr.f32.mxu0 0.0
        %5869 = vmatmul.mubr.f32.gmra.mrb[0].mxu0 %v5577
        %v5870 = vpop.f32.mrb[0].mxu0
        %v5871 = vadd.f32 0.0, %v5870
        %v5872 = vpop.f32.mrb[0].mxu0
        %5873 = vmatprep.mubr.f32.mxu0 0.0
        %5874 = vmatmul.mubr.f32.gmra.mrb[0].mxu0 %v5580
        %v5875 = vpop.f32.mrb[0].mxu0
        %v5876 = vadd.f32 0.0, %v5875
        %v5877 = vpop.f32.mrb[0].mxu0
        %5878 = vmatprep.mubr.f32.mxu0 0.0
        %5879 = vmatmul.mubr.f32.gmra.mrb[0].mxu0 %v5583
        %v5880 = vpop.f32.mrb[0].mxu0
        %v5881 = vadd.f32 0.0, %v5880
        %v5882 = vpop.f32.mrb[0].mxu0
        %5883 = vmatprep.mubr.f32.mxu0 0.0
        %5884 = vmatmul.mubr.f32.gmra.mrb[0].mxu0 %v5586
        %v5885 = vpop.f32.mrb[0].mxu0
        %v5886 = vadd.f32 0.0, %v5885
        %v5887 = vpop.f32.mrb[0].mxu0
        %5888 = vmatprep.mubr.f32.mxu0 0.0
        %5889 = vmatmul.mubr.f32.gmra.mrb[0].mxu0 %v5589
        %v5890 = vpop.f32.mrb[0].mxu0
        %v5891 = vadd.f32 0.0, %v5890
        %v5892 = vpop.f32.mrb[0].mxu0
        %5893 = vmatprep.mubr.f32.mxu0 0.0
        %5894 = vmatmul.mubr.f32.gmra.mrb[0].mxu0 %v5592
        %v5895 = vpop.f32.mrb[0].mxu0
        %v5896 = vadd.f32 0.0, %v5895
        %v5897 = vpop.f32.mrb[0].mxu0
        %5898 = vmatprep.mubr.f32.mxu0 0.0
        %5899 = vmatmul.mubr.f32.gmra.mrb[0].mxu0 %v5595
        %v5900 = vpop.f32.mrb[0].mxu0
        %v5901 = vadd.f32 0.0, %v5900
        %v5902 = vpop.f32.mrb[0].mxu0
        %5903 = vmatprep.mubr.f32.mxu0 0.0
        %5904 = vmatmul.mubr.f32.gmra.mrb[0].mxu0 %v5598
        %v5905 = vpop.f32.mrb[0].mxu0
        %v5906 = vadd.f32 0.0, %v5905
        %v5907 = vpop.f32.mrb[0].mxu0
        %5908 = vmatprep.mubr.f32.mxu0 0.0
        %5909 = vmatmul.mubr.f32.gmra.mrb[0].mxu0 %v5601
        %v5910 = vpop.f32.mrb[0].mxu0
        %v5911 = vadd.f32 0.0, %v5910
        %v5912 = vpop.f32.mrb[0].mxu0
        %5913 = vmatprep.mubr.f32.mxu0 0.0
        %5914 = vmatmul.mubr.f32.gmra.mrb[0].mxu0 %v5604
        %v5915 = vpop.f32.mrb[0].mxu0
        %v5916 = vadd.f32 0.0, %v5915
        %v5917 = vpop.f32.mrb[0].mxu0
        %5918 = vmatprep.mubr.f32.mxu0 0.0
        %5919 = vmatmul.mubr.f32.gmra.mrb[0].mxu0 %v5607
        %v5920 = vpop.f32.mrb[0].mxu0
        %v5921 = vadd.f32 0.0, %v5920
        %v5922 = vpop.f32.mrb[0].mxu0
        %5923 = vmatprep.mubr.f32.mxu0 0.0
        %5924 = vmatmul.mubr.f32.gmra.mrb[0].mxu0 %v5610
        %v5925 = vpop.f32.mrb[0].mxu0
        %v5926 = vadd.f32 0.0, %v5925
        %v5927 = vpop.f32.mrb[0].mxu0
        %5928 = vdwg.mxu0
        %v5929 = vadd.f32 %v5155, %v5681
        %v5930 = vadd.f32 %v5160, %v5686
        %v5931 = vadd.f32 %v5165, %v5691
        %v5932 = vadd.f32 %v5170, %v5696
        %v5933 = vadd.f32 %v5175, %v5701
        %v5934 = vadd.f32 %v5180, %v5706
        %v5935 = vadd.f32 %v5185, %v5711
        %v5936 = vadd.f32 %v5190, %v5716
        %v5937 = vadd.f32 %v5195, %v5721
        %v5938 = vadd.f32 %v5200, %v5726
        %v5939 = vadd.f32 %v5205, %v5731
        %v5940 = vadd.f32 %v5210, %v5736
        %v5941 = vadd.f32 %v5215, %v5741
        %v5942 = vadd.f32 %v5220, %v5746
        %v5943 = vadd.f32 %v5225, %v5751
        %v5944 = vadd.f32 %v5230, %v5756
        %v5945 = vadd.f32 %v5235, %v5761
        %v5946 = vadd.f32 %v5240, %v5766
        %v5947 = vadd.f32 %v5245, %v5771
        %v5948 = vadd.f32 %v5250, %v5776
        %v5949 = vadd.f32 %v5255, %v5781
        %v5950 = vadd.f32 %v5260, %v5786
        %v5951 = vadd.f32 %v5265, %v5791
        %v5952 = vadd.f32 %v5270, %v5796
        %v5953 = vadd.f32 %v5275, %v5801
        %v5954 = vadd.f32 %v5280, %v5806
        %v5955 = vadd.f32 %v5285, %v5811
        %v5956 = vadd.f32 %v5290, %v5816
        %v5957 = vadd.f32 %v5295, %v5821
        %v5958 = vadd.f32 %v5300, %v5826
        %v5959 = vadd.f32 %v5305, %v5831
        %v5960 = vadd.f32 %v5310, %v5836
        %v5961 = vadd.f32 %v5315, %v5841
        %v5962 = vadd.f32 %v5320, %v5846
        %v5963 = vadd.f32 %v5325, %v5851
        %v5964 = vadd.f32 %v5330, %v5856
        %v5965 = vadd.f32 %v5335, %v5861
        %v5966 = vadd.f32 %v5340, %v5866
        %v5967 = vadd.f32 %v5345, %v5871
        %v5968 = vadd.f32 %v5350, %v5876
        %v5969 = vadd.f32 %v5355, %v5881
        %v5970 = vadd.f32 %v5360, %v5886
        %v5971 = vadd.f32 %v5365, %v5891
        %v5972 = vadd.f32 %v5370, %v5896
        %v5973 = vadd.f32 %v5375, %v5901
        %v5974 = vadd.f32 %v5380, %v5906
        %v5975 = vadd.f32 %v5385, %v5911
        %v5976 = vadd.f32 %v5390, %v5916
        %v5977 = vadd.f32 %v5395, %v5921
        %v5978 = vadd.f32 %v5400, %v5926
        %s5979 = scalar_lea.vmem %s10, 1200
        %v5980 = vld [vmem:[%s5979] sm:$0xff]
        %v5981 = vld [vmem:[%s5979 + $0x8] sm:$0xff]
        %v5982 = vld [vmem:[%s5979 + $0x10] sm:$0xff]
        %v5983 = vld [vmem:[%s5979 + $0x18] sm:$0xff]
        %v5984 = vld [vmem:[%s5979 + $0x20] sm:$0xff]
        %v5985 = vld [vmem:[%s5979 + $0x28] sm:$0xff]
        %v5986 = vld [vmem:[%s5979 + $0x30] sm:$0xff]
        %v5987 = vld [vmem:[%s5979 + $0x38] sm:$0xff]
        %v5988 = vld [vmem:[%s5979 + $0x40] sm:$0xff]
        %v5989 = vld [vmem:[%s5979 + $0x48] sm:$0xff]
        %v5990 = vld [vmem:[%s5979 + $0x50] sm:$0xff]
        %v5991 = vld [vmem:[%s5979 + $0x58] sm:$0xff]
        %v5992 = vld [vmem:[%s5979 + $0x60] sm:$0xff]
        %v5993 = vld [vmem:[%s5979 + $0x68] sm:$0xff]
        %v5994 = vld [vmem:[%s5979 + $0x70] sm:$0xff]
        %v5995 = vld [vmem:[%s5979 + $0x78] sm:$0xff]
        %v5996 = vld [vmem:[%s5979 + $0x80] sm:$0xff]
        %v5997 = vld [vmem:[%s5979 + $0x88] sm:$0xff]
        %v5998 = vld [vmem:[%s5979 + $0x90] sm:$0xff]
        %v5999 = vld [vmem:[%s5979 + $0x98] sm:$0xff]
        %v6000 = vld [vmem:[%s5979 + $0xa0] sm:$0xff]
        %v6001 = vld [vmem:[%s5979 + $0xa8] sm:$0xff]
        %v6002 = vld [vmem:[%s5979 + $0xb0] sm:$0xff]
        %v6003 = vld [vmem:[%s5979 + $0xb8] sm:$0xff]
        %v6004 = vld [vmem:[%s5979 + $0xc0] sm:$0xff]
        %v6005 = vld [vmem:[%s5979 + $0xc8] sm:$0xff]
        %v6006 = vld [vmem:[%s5979 + $0xd0] sm:$0xff]
        %v6007 = vld [vmem:[%s5979 + $0xd8] sm:$0xff]
        %v6008 = vld [vmem:[%s5979 + $0xe0] sm:$0xff]
        %v6009 = vld [vmem:[%s5979 + $0xe8] sm:$0xff]
        %v6010 = vld [vmem:[%s5979 + $0xf0] sm:$0xff]
        %v6011 = vld [vmem:[%s5979 + $0xf8] sm:$0xff]
        %v6012 = vld [vmem:[%s5979 + $0x100] sm:$0xff]
        %v6013 = vld [vmem:[%s5979 + $0x108] sm:$0xff]
        %v6014 = vld [vmem:[%s5979 + $0x110] sm:$0xff]
        %v6015 = vld [vmem:[%s5979 + $0x118] sm:$0xff]
        %v6016 = vld [vmem:[%s5979 + $0x120] sm:$0xff]
        %v6017 = vld [vmem:[%s5979 + $0x128] sm:$0xff]
        %v6018 = vld [vmem:[%s5979 + $0x130] sm:$0xff]
        %v6019 = vld [vmem:[%s5979 + $0x138] sm:$0xff]
        %v6020 = vld [vmem:[%s5979 + $0x140] sm:$0xff]
        %v6021 = vld [vmem:[%s5979 + $0x148] sm:$0xff]
        %v6022 = vld [vmem:[%s5979 + $0x150] sm:$0xff]
        %v6023 = vld [vmem:[%s5979 + $0x158] sm:$0xff]
        %v6024 = vld [vmem:[%s5979 + $0x160] sm:$0xff]
        %v6025 = vld [vmem:[%s5979 + $0x168] sm:$0xff]
        %v6026 = vld [vmem:[%s5979 + $0x170] sm:$0xff]
        %v6027 = vld [vmem:[%s5979 + $0x178] sm:$0xff]
        %v6028 = vld [vmem:[%s5979 + $0x180] sm:$0xff]
        %v6029 = vld [vmem:[%s5979 + $0x188] sm:$0xff]
        %6030 = vrot.lane.b32.xlu0 %v4343, 116
        %v6031 = vpop.permute.xlu0 %6030
        %6032 = vrot.lane.b32.xlu0 %v4348, 116
        %v6033 = vpop.permute.xlu0 %6032
        %6034 = vrot.lane.b32.xlu0 %v4353, 116
        %v6035 = vpop.permute.xlu0 %6034
        %v6039 = vsel %vm4468, %v5980, 0
        %v6042 = vsel %vm4468, %v5981, 0
        %v6045 = vsel %vm4468, %v5982, 0
        %v6048 = vsel %vm4468, %v5983, 0
        %v6051 = vsel %vm4468, %v5984, 0
        %v6054 = vsel %vm4468, %v5985, 0
        %v6057 = vsel %vm4468, %v5986, 0
        %v6060 = vsel %vm4468, %v5987, 0
        %v6063 = vsel %vm4468, %v5988, 0
        %v6066 = vsel %vm4468, %v5989, 0
        %v6069 = vsel %vm4468, %v5990, 0
        %v6072 = vsel %vm4468, %v5991, 0
        %v6075 = vsel %vm4468, %v5992, 0
        %v6078 = vsel %vm4468, %v5993, 0
        %v6081 = vsel %vm4468, %v5994, 0
        %v6084 = vsel %vm4468, %v5995, 0
        %v6087 = vsel %vm4468, %v5996, 0
        %v6090 = vsel %vm4468, %v5997, 0
        %v6093 = vsel %vm4468, %v5998, 0
        %v6096 = vsel %vm4468, %v5999, 0
        %v6099 = vsel %vm4468, %v6000, 0
        %v6102 = vsel %vm4468, %v6001, 0
        %v6105 = vsel %vm4468, %v6002, 0
        %v6108 = vsel %vm4468, %v6003, 0
        %v6111 = vsel %vm4468, %v6004, 0
        %v6114 = vsel %vm4468, %v6005, 0
        %v6117 = vsel %vm4468, %v6006, 0
        %v6120 = vsel %vm4468, %v6007, 0
        %v6123 = vsel %vm4468, %v6008, 0
        %v6126 = vsel %vm4468, %v6009, 0
        %v6129 = vsel %vm4468, %v6010, 0
        %v6132 = vsel %vm4468, %v6011, 0
        %v6135 = vsel %vm4468, %v6012, 0
        %v6138 = vsel %vm4468, %v6013, 0
        %v6141 = vsel %vm4468, %v6014, 0
        %v6144 = vsel %vm4468, %v6015, 0
        %v6147 = vsel %vm4468, %v6016, 0
        %v6150 = vsel %vm4468, %v6017, 0
        %v6153 = vsel %vm4468, %v6018, 0
        %v6156 = vsel %vm4468, %v6019, 0
        %v6159 = vsel %vm4468, %v6020, 0
        %v6162 = vsel %vm4468, %v6021, 0
        %v6165 = vsel %vm4468, %v6022, 0
        %v6168 = vsel %vm4468, %v6023, 0
        %v6171 = vsel %vm4468, %v6024, 0
        %v6174 = vsel %vm4468, %v6025, 0
        %v6177 = vsel %vm4468, %v6026, 0
        %v6180 = vsel %vm4468, %v6027, 0
        %v6183 = vsel %vm4468, %v6028, 0
        %v6186 = vsel %vm4468, %v6029, 0
        %v6188 = vsel %vm987, %v6035, 0
        %6190 = vmatprep.subr.mxu0 0.0
        %6191 = vmatpush1.msra.mxu0 %v6031
        %6192 = vmatprep.subr.mxu0 0.0
        %6193 = vmatpush1.msra.mxu0 %v6033
        %6194 = vmatprep.subr.mxu0 0.0
        %6195 = vmatpush1.msra.mxu0 %v6188
        %6196 = vmatprep.subr.mxu0 0.0
        %6197 = vmatpush1.msra.mxu0 0.0
        %6198 = vmatprep.subr.mxu0 0.0
        %6199 = vmatpush1.msra.mxu0 0.0
        %6200 = vmatprep.subr.mxu0 0.0
        %6201 = vmatpush1.msra.mxu0 0.0
        %6202 = vmatprep.subr.mxu0 0.0
        %6203 = vmatpush1.msra.mxu0 0.0
        %6204 = vmatprep.subr.mxu0 0.0
        %6205 = vmatpush1.msra.mxu0 0.0
        %6206 = vmatprep.subr.mxu0 0.0
        %6207 = vmatpush1.msra.mxu0 0.0
        %6208 = vmatprep.subr.mxu0 0.0
        %6209 = vmatpush1.msra.mxu0 0.0
        %6210 = vmatprep.subr.mxu0 0.0
        %6211 = vmatpush1.msra.mxu0 0.0
        %6212 = vmatprep.subr.mxu0 0.0
        %6213 = vmatpush1.msra.mxu0 0.0
        %6214 = vmatprep.subr.mxu0 0.0
        %6215 = vmatpush1.msra.mxu0 0.0
        %6216 = vmatprep.subr.mxu0 0.0
        %6217 = vmatpush1.msra.mxu0 0.0
        %6218 = vmatprep.subr.mxu0 0.0
        %6219 = vmatpush1.msra.mxu0 0.0
        %6220 = vmatprep.subr.mxu0 0.0
        %6221 = vmatpush1.msra.mxu0 0.0
        %6222 = vmatprep.subr.mxu0 0.0
        %6223 = vmatpush1.msra.mxu0 0.0
        %6224 = vmatprep.subr.mxu0 0.0
        %6225 = vmatpush1.msra.mxu0 0.0
        %6226 = vmatprep.subr.mxu0 0.0
        %6227 = vmatpush1.msra.mxu0 0.0
        %6228 = vmatprep.subr.mxu0 0.0
        %6229 = vmatpush1.msra.mxu0 0.0
        %6230 = vmatprep.subr.mxu0 0.0
        %6231 = vmatpush1.msra.mxu0 0.0
        %6232 = vmatprep.subr.mxu0 0.0
        %6233 = vmatpush1.msra.mxu0 0.0
        %6234 = vmatprep.subr.mxu0 0.0
        %6235 = vmatpush1.msra.mxu0 0.0
        %6236 = vmatprep.subr.mxu0 0.0
        %6237 = vmatpush1.msra.mxu0 0.0
        %6238 = vmatprep.subr.mxu0 0.0
        %6239 = vmatpush1.msra.mxu0 0.0
        %6240 = vmatprep.subr.mxu0 0.0
        %6241 = vmatpush1.msra.mxu0 0.0
        %6242 = vmatprep.subr.mxu0 0.0
        %6243 = vmatpush1.msra.mxu0 0.0
        %6244 = vmatprep.subr.mxu0 0.0
        %6245 = vmatpush1.msra.mxu0 0.0
        %6246 = vmatprep.subr.mxu0 0.0
        %6247 = vmatpush1.msra.mxu0 0.0
        %6248 = vmatprep.subr.mxu0 0.0
        %6249 = vmatpush1.msra.mxu0 0.0
        %6250 = vmatprep.subr.mxu0 0.0
        %6251 = vmatpush1.msra.mxu0 0.0
        %6252 = vmatprep.subr.mxu0 0.0
        %6253 = vmatpush1.msra.mxu0 0.0
        %6254 = vmatprep.mubr.f32.mxu0 0.0
        %6255 = vmatmul.mubr.f32.gmra.mrb[0].mxu0 %v6039
        %v6256 = vpop.f32.mrb[0].mxu0
        %v6257 = vadd.f32 0.0, %v6256
        %v6258 = vpop.f32.mrb[0].mxu0
        %6259 = vmatprep.mubr.f32.mxu0 0.0
        %6260 = vmatmul.mubr.f32.gmra.mrb[0].mxu0 %v6042
        %v6261 = vpop.f32.mrb[0].mxu0
        %v6262 = vadd.f32 0.0, %v6261
        %v6263 = vpop.f32.mrb[0].mxu0
        %6264 = vmatprep.mubr.f32.mxu0 0.0
        %6265 = vmatmul.mubr.f32.gmra.mrb[0].mxu0 %v6045
        %v6266 = vpop.f32.mrb[0].mxu0
        %v6267 = vadd.f32 0.0, %v6266
        %v6268 = vpop.f32.mrb[0].mxu0
        %6269 = vmatprep.mubr.f32.mxu0 0.0
        %6270 = vmatmul.mubr.f32.gmra.mrb[0].mxu0 %v6048
        %v6271 = vpop.f32.mrb[0].mxu0
        %v6272 = vadd.f32 0.0, %v6271
        %v6273 = vpop.f32.mrb[0].mxu0
        %6274 = vmatprep.mubr.f32.mxu0 0.0
        %6275 = vmatmul.mubr.f32.gmra.mrb[0].mxu0 %v6051
        %v6276 = vpop.f32.mrb[0].mxu0
        %v6277 = vadd.f32 0.0, %v6276
        %v6278 = vpop.f32.mrb[0].mxu0
        %6279 = vmatprep.mubr.f32.mxu0 0.0
        %6280 = vmatmul.mubr.f32.gmra.mrb[0].mxu0 %v6054
        %v6281 = vpop.f32.mrb[0].mxu0
        %v6282 = vadd.f32 0.0, %v6281
        %v6283 = vpop.f32.mrb[0].mxu0
        %6284 = vmatprep.mubr.f32.mxu0 0.0
        %6285 = vmatmul.mubr.f32.gmra.mrb[0].mxu0 %v6057
        %v6286 = vpop.f32.mrb[0].mxu0
        %v6287 = vadd.f32 0.0, %v6286
        %v6288 = vpop.f32.mrb[0].mxu0
        %6289 = vmatprep.mubr.f32.mxu0 0.0
        %6290 = vmatmul.mubr.f32.gmra.mrb[0].mxu0 %v6060
        %v6291 = vpop.f32.mrb[0].mxu0
        %v6292 = vadd.f32 0.0, %v6291
        %v6293 = vpop.f32.mrb[0].mxu0
        %6294 = vmatprep.mubr.f32.mxu0 0.0
        %6295 = vmatmul.mubr.f32.gmra.mrb[0].mxu0 %v6063
        %v6296 = vpop.f32.mrb[0].mxu0
        %v6297 = vadd.f32 0.0, %v6296
        %v6298 = vpop.f32.mrb[0].mxu0
        %6299 = vmatprep.mubr.f32.mxu0 0.0
        %6300 = vmatmul.mubr.f32.gmra.mrb[0].mxu0 %v6066
        %v6301 = vpop.f32.mrb[0].mxu0
        %v6302 = vadd.f32 0.0, %v6301
        %v6303 = vpop.f32.mrb[0].mxu0
        %6304 = vmatprep.mubr.f32.mxu0 0.0
        %6305 = vmatmul.mubr.f32.gmra.mrb[0].mxu0 %v6069
        %v6306 = vpop.f32.mrb[0].mxu0
        %v6307 = vadd.f32 0.0, %v6306
        %v6308 = vpop.f32.mrb[0].mxu0
        %6309 = vmatprep.mubr.f32.mxu0 0.0
        %6310 = vmatmul.mubr.f32.gmra.mrb[0].mxu0 %v6072
        %v6311 = vpop.f32.mrb[0].mxu0
        %v6312 = vadd.f32 0.0, %v6311
        %v6313 = vpop.f32.mrb[0].mxu0
        %6314 = vmatprep.mubr.f32.mxu0 0.0
        %6315 = vmatmul.mubr.f32.gmra.mrb[0].mxu0 %v6075
        %v6316 = vpop.f32.mrb[0].mxu0
        %v6317 = vadd.f32 0.0, %v6316
        %v6318 = vpop.f32.mrb[0].mxu0
        %6319 = vmatprep.mubr.f32.mxu0 0.0
        %6320 = vmatmul.mubr.f32.gmra.mrb[0].mxu0 %v6078
        %v6321 = vpop.f32.mrb[0].mxu0
        %v6322 = vadd.f32 0.0, %v6321
        %v6323 = vpop.f32.mrb[0].mxu0
        %6324 = vmatprep.mubr.f32.mxu0 0.0
        %6325 = vmatmul.mubr.f32.gmra.mrb[0].mxu0 %v6081
        %v6326 = vpop.f32.mrb[0].mxu0
        %v6327 = vadd.f32 0.0, %v6326
        %v6328 = vpop.f32.mrb[0].mxu0
        %6329 = vmatprep.mubr.f32.mxu0 0.0
        %6330 = vmatmul.mubr.f32.gmra.mrb[0].mxu0 %v6084
        %v6331 = vpop.f32.mrb[0].mxu0
        %v6332 = vadd.f32 0.0, %v6331
        %v6333 = vpop.f32.mrb[0].mxu0
        %6334 = vmatprep.mubr.f32.mxu0 0.0
        %6335 = vmatmul.mubr.f32.gmra.mrb[0].mxu0 %v6087
        %v6336 = vpop.f32.mrb[0].mxu0
        %v6337 = vadd.f32 0.0, %v6336
        %v6338 = vpop.f32.mrb[0].mxu0
        %6339 = vmatprep.mubr.f32.mxu0 0.0
        %6340 = vmatmul.mubr.f32.gmra.mrb[0].mxu0 %v6090
        %v6341 = vpop.f32.mrb[0].mxu0
        %v6342 = vadd.f32 0.0, %v6341
        %v6343 = vpop.f32.mrb[0].mxu0
        %6344 = vmatprep.mubr.f32.mxu0 0.0
        %6345 = vmatmul.mubr.f32.gmra.mrb[0].mxu0 %v6093
        %v6346 = vpop.f32.mrb[0].mxu0
        %v6347 = vadd.f32 0.0, %v6346
        %v6348 = vpop.f32.mrb[0].mxu0
        %6349 = vmatprep.mubr.f32.mxu0 0.0
        %6350 = vmatmul.mubr.f32.gmra.mrb[0].mxu0 %v6096
        %v6351 = vpop.f32.mrb[0].mxu0
        %v6352 = vadd.f32 0.0, %v6351
        %v6353 = vpop.f32.mrb[0].mxu0
        %6354 = vmatprep.mubr.f32.mxu0 0.0
        %6355 = vmatmul.mubr.f32.gmra.mrb[0].mxu0 %v6099
        %v6356 = vpop.f32.mrb[0].mxu0
        %v6357 = vadd.f32 0.0, %v6356
        %v6358 = vpop.f32.mrb[0].mxu0
        %6359 = vmatprep.mubr.f32.mxu0 0.0
        %6360 = vmatmul.mubr.f32.gmra.mrb[0].mxu0 %v6102
        %v6361 = vpop.f32.mrb[0].mxu0
        %v6362 = vadd.f32 0.0, %v6361
        %v6363 = vpop.f32.mrb[0].mxu0
        %6364 = vmatprep.mubr.f32.mxu0 0.0
        %6365 = vmatmul.mubr.f32.gmra.mrb[0].mxu0 %v6105
        %v6366 = vpop.f32.mrb[0].mxu0
        %v6367 = vadd.f32 0.0, %v6366
        %v6368 = vpop.f32.mrb[0].mxu0
        %6369 = vmatprep.mubr.f32.mxu0 0.0
        %6370 = vmatmul.mubr.f32.gmra.mrb[0].mxu0 %v6108
        %v6371 = vpop.f32.mrb[0].mxu0
        %v6372 = vadd.f32 0.0, %v6371
        %v6373 = vpop.f32.mrb[0].mxu0
        %6374 = vmatprep.mubr.f32.mxu0 0.0
        %6375 = vmatmul.mubr.f32.gmra.mrb[0].mxu0 %v6111
        %v6376 = vpop.f32.mrb[0].mxu0
        %v6377 = vadd.f32 0.0, %v6376
        %v6378 = vpop.f32.mrb[0].mxu0
        %6379 = vmatprep.mubr.f32.mxu0 0.0
        %6380 = vmatmul.mubr.f32.gmra.mrb[0].mxu0 %v6114
        %v6381 = vpop.f32.mrb[0].mxu0
        %v6382 = vadd.f32 0.0, %v6381
        %v6383 = vpop.f32.mrb[0].mxu0
        %6384 = vmatprep.mubr.f32.mxu0 0.0
        %6385 = vmatmul.mubr.f32.gmra.mrb[0].mxu0 %v6117
        %v6386 = vpop.f32.mrb[0].mxu0
        %v6387 = vadd.f32 0.0, %v6386
        %v6388 = vpop.f32.mrb[0].mxu0
        %6389 = vmatprep.mubr.f32.mxu0 0.0
        %6390 = vmatmul.mubr.f32.gmra.mrb[0].mxu0 %v6120
        %v6391 = vpop.f32.mrb[0].mxu0
        %v6392 = vadd.f32 0.0, %v6391
        %v6393 = vpop.f32.mrb[0].mxu0
        %6394 = vmatprep.mubr.f32.mxu0 0.0
        %6395 = vmatmul.mubr.f32.gmra.mrb[0].mxu0 %v6123
        %v6396 = vpop.f32.mrb[0].mxu0
        %v6397 = vadd.f32 0.0, %v6396
        %v6398 = vpop.f32.mrb[0].mxu0
        %6399 = vmatprep.mubr.f32.mxu0 0.0
        %6400 = vmatmul.mubr.f32.gmra.mrb[0].mxu0 %v6126
        %v6401 = vpop.f32.mrb[0].mxu0
        %v6402 = vadd.f32 0.0, %v6401
        %v6403 = vpop.f32.mrb[0].mxu0
        %6404 = vmatprep.mubr.f32.mxu0 0.0
        %6405 = vmatmul.mubr.f32.gmra.mrb[0].mxu0 %v6129
        %v6406 = vpop.f32.mrb[0].mxu0
        %v6407 = vadd.f32 0.0, %v6406
        %v6408 = vpop.f32.mrb[0].mxu0
        %6409 = vmatprep.mubr.f32.mxu0 0.0
        %6410 = vmatmul.mubr.f32.gmra.mrb[0].mxu0 %v6132
        %v6411 = vpop.f32.mrb[0].mxu0
        %v6412 = vadd.f32 0.0, %v6411
        %v6413 = vpop.f32.mrb[0].mxu0
        %6414 = vmatprep.mubr.f32.mxu0 0.0
        %6415 = vmatmul.mubr.f32.gmra.mrb[0].mxu0 %v6135
        %v6416 = vpop.f32.mrb[0].mxu0
        %v6417 = vadd.f32 0.0, %v6416
        %v6418 = vpop.f32.mrb[0].mxu0
        %6419 = vmatprep.mubr.f32.mxu0 0.0
        %6420 = vmatmul.mubr.f32.gmra.mrb[0].mxu0 %v6138
        %v6421 = vpop.f32.mrb[0].mxu0
        %v6422 = vadd.f32 0.0, %v6421
        %v6423 = vpop.f32.mrb[0].mxu0
        %6424 = vmatprep.mubr.f32.mxu0 0.0
        %6425 = vmatmul.mubr.f32.gmra.mrb[0].mxu0 %v6141
        %v6426 = vpop.f32.mrb[0].mxu0
        %v6427 = vadd.f32 0.0, %v6426
        %v6428 = vpop.f32.mrb[0].mxu0
        %6429 = vmatprep.mubr.f32.mxu0 0.0
        %6430 = vmatmul.mubr.f32.gmra.mrb[0].mxu0 %v6144
        %v6431 = vpop.f32.mrb[0].mxu0
        %v6432 = vadd.f32 0.0, %v6431
        %v6433 = vpop.f32.mrb[0].mxu0
        %6434 = vmatprep.mubr.f32.mxu0 0.0
        %6435 = vmatmul.mubr.f32.gmra.mrb[0].mxu0 %v6147
        %v6436 = vpop.f32.mrb[0].mxu0
        %v6437 = vadd.f32 0.0, %v6436
        %v6438 = vpop.f32.mrb[0].mxu0
        %6439 = vmatprep.mubr.f32.mxu0 0.0
        %6440 = vmatmul.mubr.f32.gmra.mrb[0].mxu0 %v6150
        %v6441 = vpop.f32.mrb[0].mxu0
        %v6442 = vadd.f32 0.0, %v6441
        %v6443 = vpop.f32.mrb[0].mxu0
        %6444 = vmatprep.mubr.f32.mxu0 0.0
        %6445 = vmatmul.mubr.f32.gmra.mrb[0].mxu0 %v6153
        %v6446 = vpop.f32.mrb[0].mxu0
        %v6447 = vadd.f32 0.0, %v6446
        %v6448 = vpop.f32.mrb[0].mxu0
        %6449 = vmatprep.mubr.f32.mxu0 0.0
        %6450 = vmatmul.mubr.f32.gmra.mrb[0].mxu0 %v6156
        %v6451 = vpop.f32.mrb[0].mxu0
        %v6452 = vadd.f32 0.0, %v6451
        %v6453 = vpop.f32.mrb[0].mxu0
        %6454 = vmatprep.mubr.f32.mxu0 0.0
        %6455 = vmatmul.mubr.f32.gmra.mrb[0].mxu0 %v6159
        %v6456 = vpop.f32.mrb[0].mxu0
        %v6457 = vadd.f32 0.0, %v6456
        %v6458 = vpop.f32.mrb[0].mxu0
        %6459 = vmatprep.mubr.f32.mxu0 0.0
        %6460 = vmatmul.mubr.f32.gmra.mrb[0].mxu0 %v6162
        %v6461 = vpop.f32.mrb[0].mxu0
        %v6462 = vadd.f32 0.0, %v6461
        %v6463 = vpop.f32.mrb[0].mxu0
        %6464 = vmatprep.mubr.f32.mxu0 0.0
        %6465 = vmatmul.mubr.f32.gmra.mrb[0].mxu0 %v6165
        %v6466 = vpop.f32.mrb[0].mxu0
        %v6467 = vadd.f32 0.0, %v6466
        %v6468 = vpop.f32.mrb[0].mxu0
        %6469 = vmatprep.mubr.f32.mxu0 0.0
        %6470 = vmatmul.mubr.f32.gmra.mrb[0].mxu0 %v6168
        %v6471 = vpop.f32.mrb[0].mxu0
        %v6472 = vadd.f32 0.0, %v6471
        %v6473 = vpop.f32.mrb[0].mxu0
        %6474 = vmatprep.mubr.f32.mxu0 0.0
        %6475 = vmatmul.mubr.f32.gmra.mrb[0].mxu0 %v6171
        %v6476 = vpop.f32.mrb[0].mxu0
        %v6477 = vadd.f32 0.0, %v6476
        %v6478 = vpop.f32.mrb[0].mxu0
        %6479 = vmatprep.mubr.f32.mxu0 0.0
        %6480 = vmatmul.mubr.f32.gmra.mrb[0].mxu0 %v6174
        %v6481 = vpop.f32.mrb[0].mxu0
        %v6482 = vadd.f32 0.0, %v6481
        %v6483 = vpop.f32.mrb[0].mxu0
        %6484 = vmatprep.mubr.f32.mxu0 0.0
        %6485 = vmatmul.mubr.f32.gmra.mrb[0].mxu0 %v6177
        %v6486 = vpop.f32.mrb[0].mxu0
        %v6487 = vadd.f32 0.0, %v6486
        %v6488 = vpop.f32.mrb[0].mxu0
        %6489 = vmatprep.mubr.f32.mxu0 0.0
        %6490 = vmatmul.mubr.f32.gmra.mrb[0].mxu0 %v6180
        %v6491 = vpop.f32.mrb[0].mxu0
        %v6492 = vadd.f32 0.0, %v6491
        %v6493 = vpop.f32.mrb[0].mxu0
        %6494 = vmatprep.mubr.f32.mxu0 0.0
        %6495 = vmatmul.mubr.f32.gmra.mrb[0].mxu0 %v6183
        %v6496 = vpop.f32.mrb[0].mxu0
        %v6497 = vadd.f32 0.0, %v6496
        %v6498 = vpop.f32.mrb[0].mxu0
        %6499 = vmatprep.mubr.f32.mxu0 0.0
        %6500 = vmatmul.mubr.f32.gmra.mrb[0].mxu0 %v6186
        %v6501 = vpop.f32.mrb[0].mxu0
        %v6502 = vadd.f32 0.0, %v6501
        %v6503 = vpop.f32.mrb[0].mxu0
        %6504 = vdwg.mxu0
        %v6505 = vadd.f32 %v5929, %v6257
        %v6506 = vadd.f32 %v5930, %v6262
        %v6507 = vadd.f32 %v5931, %v6267
        %v6508 = vadd.f32 %v5932, %v6272
        %v6509 = vadd.f32 %v5933, %v6277
        %v6510 = vadd.f32 %v5934, %v6282
        %v6511 = vadd.f32 %v5935, %v6287
        %v6512 = vadd.f32 %v5936, %v6292
        %v6513 = vadd.f32 %v5937, %v6297
        %v6514 = vadd.f32 %v5938, %v6302
        %v6515 = vadd.f32 %v5939, %v6307
        %v6516 = vadd.f32 %v5940, %v6312
        %v6517 = vadd.f32 %v5941, %v6317
        %v6518 = vadd.f32 %v5942, %v6322
        %v6519 = vadd.f32 %v5943, %v6327
        %v6520 = vadd.f32 %v5944, %v6332
        %v6521 = vadd.f32 %v5945, %v6337
        %v6522 = vadd.f32 %v5946, %v6342
        %v6523 = vadd.f32 %v5947, %v6347
        %v6524 = vadd.f32 %v5948, %v6352
        %v6525 = vadd.f32 %v5949, %v6357
        %v6526 = vadd.f32 %v5950, %v6362
        %v6527 = vadd.f32 %v5951, %v6367
        %v6528 = vadd.f32 %v5952, %v6372
        %v6529 = vadd.f32 %v5953, %v6377
        %v6530 = vadd.f32 %v5954, %v6382
        %v6531 = vadd.f32 %v5955, %v6387
        %v6532 = vadd.f32 %v5956, %v6392
        %v6533 = vadd.f32 %v5957, %v6397
        %v6534 = vadd.f32 %v5958, %v6402
        %v6535 = vadd.f32 %v5959, %v6407
        %v6536 = vadd.f32 %v5960, %v6412
        %v6537 = vadd.f32 %v5961, %v6417
        %v6538 = vadd.f32 %v5962, %v6422
        %v6539 = vadd.f32 %v5963, %v6427
        %v6540 = vadd.f32 %v5964, %v6432
        %v6541 = vadd.f32 %v5965, %v6437
        %v6542 = vadd.f32 %v5966, %v6442
        %v6543 = vadd.f32 %v5967, %v6447
        %v6544 = vadd.f32 %v5968, %v6452
        %v6545 = vadd.f32 %v5969, %v6457
        %v6546 = vadd.f32 %v5970, %v6462
        %v6547 = vadd.f32 %v5971, %v6467
        %v6548 = vadd.f32 %v5972, %v6472
        %v6549 = vadd.f32 %v5973, %v6477
        %v6550 = vadd.f32 %v5974, %v6482
        %v6551 = vadd.f32 %v5975, %v6487
        %v6552 = vadd.f32 %v5976, %v6492
        %v6553 = vadd.f32 %v5977, %v6497
        %v6554 = vadd.f32 %v5978, %v6502
        %v6555 = vld [vmem:[%s11] sm:$0xff]
        %v6556 = vld [vmem:[%s11 + $0x8] sm:$0xff]
        %v6557 = vld [vmem:[%s11 + $0x10] sm:$0xff]
        %v6558 = vld [vmem:[%s11 + $0x18] sm:$0xff]
        %v6559 = vld [vmem:[%s11 + $0x20] sm:$0xff]
        %v6560 = vld [vmem:[%s11 + $0x28] sm:$0xff]
        %v6561 = vld [vmem:[%s11 + $0x30] sm:$0xff]
        %v6562 = vld [vmem:[%s11 + $0x38] sm:$0xff]
        %v6563 = vld [vmem:[%s11 + $0x40] sm:$0xff]
        %v6564 = vld [vmem:[%s11 + $0x48] sm:$0xff]
        %v6565 = vld [vmem:[%s11 + $0x50] sm:$0xff]
        %v6566 = vld [vmem:[%s11 + $0x58] sm:$0xff]
        %v6567 = vld [vmem:[%s11 + $0x60] sm:$0xff]
        %v6568 = vld [vmem:[%s11 + $0x68] sm:$0xff]
        %v6569 = vld [vmem:[%s11 + $0x70] sm:$0xff]
        %v6570 = vld [vmem:[%s11 + $0x78] sm:$0xff]
        %v6571 = vld [vmem:[%s11 + $0x80] sm:$0xff]
        %v6572 = vld [vmem:[%s11 + $0x88] sm:$0xff]
        %v6573 = vld [vmem:[%s11 + $0x90] sm:$0xff]
        %v6574 = vld [vmem:[%s11 + $0x98] sm:$0xff]
        %v6575 = vld [vmem:[%s11 + $0xa0] sm:$0xff]
        %v6576 = vld [vmem:[%s11 + $0xa8] sm:$0xff]
        %v6577 = vld [vmem:[%s11 + $0xb0] sm:$0xff]
        %v6578 = vld [vmem:[%s11 + $0xb8] sm:$0xff]
        %v6579 = vld [vmem:[%s11 + $0xc0] sm:$0xff]
        %v6580 = vld [vmem:[%s11 + $0xc8] sm:$0xff]
        %v6581 = vld [vmem:[%s11 + $0xd0] sm:$0xff]
        %v6582 = vld [vmem:[%s11 + $0xd8] sm:$0xff]
        %v6583 = vld [vmem:[%s11 + $0xe0] sm:$0xff]
        %v6584 = vld [vmem:[%s11 + $0xe8] sm:$0xff]
        %v6585 = vld [vmem:[%s11 + $0xf0] sm:$0xff]
        %v6586 = vld [vmem:[%s11 + $0xf8] sm:$0xff]
        %v6587 = vld [vmem:[%s11 + $0x100] sm:$0xff]
        %v6588 = vld [vmem:[%s11 + $0x108] sm:$0xff]
        %v6589 = vld [vmem:[%s11 + $0x110] sm:$0xff]
        %v6590 = vld [vmem:[%s11 + $0x118] sm:$0xff]
        %v6591 = vld [vmem:[%s11 + $0x120] sm:$0xff]
        %v6592 = vld [vmem:[%s11 + $0x128] sm:$0xff]
        %v6593 = vld [vmem:[%s11 + $0x130] sm:$0xff]
        %v6594 = vld [vmem:[%s11 + $0x138] sm:$0xff]
        %v6595 = vld [vmem:[%s11 + $0x140] sm:$0xff]
        %v6596 = vld [vmem:[%s11 + $0x148] sm:$0xff]
        %v6597 = vld [vmem:[%s11 + $0x150] sm:$0xff]
        %v6598 = vld [vmem:[%s11 + $0x158] sm:$0xff]
        %v6599 = vld [vmem:[%s11 + $0x160] sm:$0xff]
        %v6600 = vld [vmem:[%s11 + $0x168] sm:$0xff]
        %v6601 = vld [vmem:[%s11 + $0x170] sm:$0xff]
        %v6602 = vld [vmem:[%s11 + $0x178] sm:$0xff]
        %v6603 = vld [vmem:[%s11 + $0x180] sm:$0xff]
        %v6604 = vld [vmem:[%s11 + $0x188] sm:$0xff]
        %6606 = vset.pattern.permute.xlu0 0
        %6607 = vperm.xlu0 %6606, %v6555
        %v6608 = vpop.permute.xlu0 %6607
        %6611 = vset.pattern.permute.xlu0 0
        %6612 = vperm.xlu0 %6611, %v6556
        %v6613 = vpop.permute.xlu0 %6612
        %6616 = vset.pattern.permute.xlu0 0
        %6617 = vperm.xlu0 %6616, %v6557
        %v6618 = vpop.permute.xlu0 %6617
        %6621 = vset.pattern.permute.xlu0 0
        %6622 = vperm.xlu0 %6621, %v6558
        %v6623 = vpop.permute.xlu0 %6622
        %6626 = vset.pattern.permute.xlu0 0
        %6627 = vperm.xlu0 %6626, %v6559
        %v6628 = vpop.permute.xlu0 %6627
        %6631 = vset.pattern.permute.xlu0 0
        %6632 = vperm.xlu0 %6631, %v6560
        %v6633 = vpop.permute.xlu0 %6632
        %6636 = vset.pattern.permute.xlu0 0
        %6637 = vperm.xlu0 %6636, %v6561
        %v6638 = vpop.permute.xlu0 %6637
        %6641 = vset.pattern.permute.xlu0 0
        %6642 = vperm.xlu0 %6641, %v6562
        %v6643 = vpop.permute.xlu0 %6642
        %6646 = vset.pattern.permute.xlu0 0
        %6647 = vperm.xlu0 %6646, %v6563
        %v6648 = vpop.permute.xlu0 %6647
        %6651 = vset.pattern.permute.xlu0 0
        %6652 = vperm.xlu0 %6651, %v6564
        %v6653 = vpop.permute.xlu0 %6652
        %6656 = vset.pattern.permute.xlu0 0
        %6657 = vperm.xlu0 %6656, %v6565
        %v6658 = vpop.permute.xlu0 %6657
        %6661 = vset.pattern.permute.xlu0 0
        %6662 = vperm.xlu0 %6661, %v6566
        %v6663 = vpop.permute.xlu0 %6662
        %6666 = vset.pattern.permute.xlu0 0
        %6667 = vperm.xlu0 %6666, %v6567
        %v6668 = vpop.permute.xlu0 %6667
        %6671 = vset.pattern.permute.xlu0 0
        %6672 = vperm.xlu0 %6671, %v6568
        %v6673 = vpop.permute.xlu0 %6672
        %6676 = vset.pattern.permute.xlu0 0
        %6677 = vperm.xlu0 %6676, %v6569
        %v6678 = vpop.permute.xlu0 %6677
        %6681 = vset.pattern.permute.xlu0 0
        %6682 = vperm.xlu0 %6681, %v6570
        %v6683 = vpop.permute.xlu0 %6682
        %6686 = vset.pattern.permute.xlu0 0
        %6687 = vperm.xlu0 %6686, %v6571
        %v6688 = vpop.permute.xlu0 %6687
        %6691 = vset.pattern.permute.xlu0 0
        %6692 = vperm.xlu0 %6691, %v6572
        %v6693 = vpop.permute.xlu0 %6692
        %6696 = vset.pattern.permute.xlu0 0
        %6697 = vperm.xlu0 %6696, %v6573
        %v6698 = vpop.permute.xlu0 %6697
        %6701 = vset.pattern.permute.xlu0 0
        %6702 = vperm.xlu0 %6701, %v6574
        %v6703 = vpop.permute.xlu0 %6702
        %6706 = vset.pattern.permute.xlu0 0
        %6707 = vperm.xlu0 %6706, %v6575
        %v6708 = vpop.permute.xlu0 %6707
        %6711 = vset.pattern.permute.xlu0 0
        %6712 = vperm.xlu0 %6711, %v6576
        %v6713 = vpop.permute.xlu0 %6712
        %6716 = vset.pattern.permute.xlu0 0
        %6717 = vperm.xlu0 %6716, %v6577
        %v6718 = vpop.permute.xlu0 %6717
        %6721 = vset.pattern.permute.xlu0 0
        %6722 = vperm.xlu0 %6721, %v6578
        %v6723 = vpop.permute.xlu0 %6722
        %6726 = vset.pattern.permute.xlu0 0
        %6727 = vperm.xlu0 %6726, %v6579
        %v6728 = vpop.permute.xlu0 %6727
        %6731 = vset.pattern.permute.xlu0 0
        %6732 = vperm.xlu0 %6731, %v6580
        %v6733 = vpop.permute.xlu0 %6732
        %6736 = vset.pattern.permute.xlu0 0
        %6737 = vperm.xlu0 %6736, %v6581
        %v6738 = vpop.permute.xlu0 %6737
        %6741 = vset.pattern.permute.xlu0 0
        %6742 = vperm.xlu0 %6741, %v6582
        %v6743 = vpop.permute.xlu0 %6742
        %6746 = vset.pattern.permute.xlu0 0
        %6747 = vperm.xlu0 %6746, %v6583
        %v6748 = vpop.permute.xlu0 %6747
        %6751 = vset.pattern.permute.xlu0 0
        %6752 = vperm.xlu0 %6751, %v6584
        %v6753 = vpop.permute.xlu0 %6752
        %6756 = vset.pattern.permute.xlu0 0
        %6757 = vperm.xlu0 %6756, %v6585
        %v6758 = vpop.permute.xlu0 %6757
        %6761 = vset.pattern.permute.xlu0 0
        %6762 = vperm.xlu0 %6761, %v6586
        %v6763 = vpop.permute.xlu0 %6762
        %6766 = vset.pattern.permute.xlu0 0
        %6767 = vperm.xlu0 %6766, %v6587
        %v6768 = vpop.permute.xlu0 %6767
        %6771 = vset.pattern.permute.xlu0 0
        %6772 = vperm.xlu0 %6771, %v6588
        %v6773 = vpop.permute.xlu0 %6772
        %6776 = vset.pattern.permute.xlu0 0
        %6777 = vperm.xlu0 %6776, %v6589
        %v6778 = vpop.permute.xlu0 %6777
        %6781 = vset.pattern.permute.xlu0 0
        %6782 = vperm.xlu0 %6781, %v6590
        %v6783 = vpop.permute.xlu0 %6782
        %6786 = vset.pattern.permute.xlu0 0
        %6787 = vperm.xlu0 %6786, %v6591
        %v6788 = vpop.permute.xlu0 %6787
        %6791 = vset.pattern.permute.xlu0 0
        %6792 = vperm.xlu0 %6791, %v6592
        %v6793 = vpop.permute.xlu0 %6792
        %6796 = vset.pattern.permute.xlu0 0
        %6797 = vperm.xlu0 %6796, %v6593
        %v6798 = vpop.permute.xlu0 %6797
        %6801 = vset.pattern.permute.xlu0 0
        %6802 = vperm.xlu0 %6801, %v6594
        %v6803 = vpop.permute.xlu0 %6802
        %6806 = vset.pattern.permute.xlu0 0
        %6807 = vperm.xlu0 %6806, %v6595
        %v6808 = vpop.permute.xlu0 %6807
        %6811 = vset.pattern.permute.xlu0 0
        %6812 = vperm.xlu0 %6811, %v6596
        %v6813 = vpop.permute.xlu0 %6812
        %6816 = vset.pattern.permute.xlu0 0
        %6817 = vperm.xlu0 %6816, %v6597
        %v6818 = vpop.permute.xlu0 %6817
        %6821 = vset.pattern.permute.xlu0 0
        %6822 = vperm.xlu0 %6821, %v6598
        %v6823 = vpop.permute.xlu0 %6822
        %6826 = vset.pattern.permute.xlu0 0
        %6827 = vperm.xlu0 %6826, %v6599
        %v6828 = vpop.permute.xlu0 %6827
        %6831 = vset.pattern.permute.xlu0 0
        %6832 = vperm.xlu0 %6831, %v6600
        %v6833 = vpop.permute.xlu0 %6832
        %6836 = vset.pattern.permute.xlu0 0
        %6837 = vperm.xlu0 %6836, %v6601
        %v6838 = vpop.permute.xlu0 %6837
        %6841 = vset.pattern.permute.xlu0 0
        %6842 = vperm.xlu0 %6841, %v6602
        %v6843 = vpop.permute.xlu0 %6842
        %6846 = vset.pattern.permute.xlu0 0
        %6847 = vperm.xlu0 %6846, %v6603
        %v6848 = vpop.permute.xlu0 %6847
        %6851 = vset.pattern.permute.xlu0 0
        %6852 = vperm.xlu0 %6851, %v6604
        %v6853 = vpop.permute.xlu0 %6852
        %v6855 = vadd.f32 %v6505, %v6608
        %v6856 = vadd.f32 %v6506, %v6613
        %v6857 = vadd.f32 %v6507, %v6618
        %v6858 = vadd.f32 %v6508, %v6623
        %v6859 = vadd.f32 %v6509, %v6628
        %v6860 = vadd.f32 %v6510, %v6633
        %v6861 = vadd.f32 %v6511, %v6638
        %v6862 = vadd.f32 %v6512, %v6643
        %v6863 = vadd.f32 %v6513, %v6648
        %v6864 = vadd.f32 %v6514, %v6653
        %v6865 = vadd.f32 %v6515, %v6658
        %v6866 = vadd.f32 %v6516, %v6663
        %v6867 = vadd.f32 %v6517, %v6668
        %v6868 = vadd.f32 %v6518, %v6673
        %v6869 = vadd.f32 %v6519, %v6678
        %v6870 = vadd.f32 %v6520, %v6683
        %v6871 = vadd.f32 %v6521, %v6688
        %v6872 = vadd.f32 %v6522, %v6693
        %v6873 = vadd.f32 %v6523, %v6698
        %v6874 = vadd.f32 %v6524, %v6703
        %v6875 = vadd.f32 %v6525, %v6708
        %v6876 = vadd.f32 %v6526, %v6713
        %v6877 = vadd.f32 %v6527, %v6718
        %v6878 = vadd.f32 %v6528, %v6723
        %v6879 = vadd.f32 %v6529, %v6728
        %v6880 = vadd.f32 %v6530, %v6733
        %v6881 = vadd.f32 %v6531, %v6738
        %v6882 = vadd.f32 %v6532, %v6743
        %v6883 = vadd.f32 %v6533, %v6748
        %v6884 = vadd.f32 %v6534, %v6753
        %v6885 = vadd.f32 %v6535, %v6758
        %v6886 = vadd.f32 %v6536, %v6763
        %v6887 = vadd.f32 %v6537, %v6768
        %v6888 = vadd.f32 %v6538, %v6773
        %v6889 = vadd.f32 %v6539, %v6778
        %v6890 = vadd.f32 %v6540, %v6783
        %v6891 = vadd.f32 %v6541, %v6788
        %v6892 = vadd.f32 %v6542, %v6793
        %v6893 = vadd.f32 %v6543, %v6798
        %v6894 = vadd.f32 %v6544, %v6803
        %v6895 = vadd.f32 %v6545, %v6808
        %v6896 = vadd.f32 %v6546, %v6813
        %v6897 = vadd.f32 %v6547, %v6818
        %v6898 = vadd.f32 %v6548, %v6823
        %v6899 = vadd.f32 %v6549, %v6828
        %v6900 = vadd.f32 %v6550, %v6833
        %v6901 = vadd.f32 %v6551, %v6838
        %v6902 = vadd.f32 %v6552, %v6843
        %v6903 = vadd.f32 %v6553, %v6848
        %v6904 = vadd.f32 %v6554, %v6853
        %v6905 = vmax.f32 %v6855, 0.0
        %v6906 = vmax.f32 %v6856, 0.0
        %v6907 = vmax.f32 %v6857, 0.0
        %v6908 = vmax.f32 %v6858, 0.0
        %v6909 = vmax.f32 %v6859, 0.0
        %v6910 = vmax.f32 %v6860, 0.0
        %v6911 = vmax.f32 %v6861, 0.0
        %v6912 = vmax.f32 %v6862, 0.0
        %v6913 = vmax.f32 %v6863, 0.0
        %v6914 = vmax.f32 %v6864, 0.0
        %v6915 = vmax.f32 %v6865, 0.0
        %v6916 = vmax.f32 %v6866, 0.0
        %v6917 = vmax.f32 %v6867, 0.0
        %v6918 = vmax.f32 %v6868, 0.0
        %v6919 = vmax.f32 %v6869, 0.0
        %v6920 = vmax.f32 %v6870, 0.0
        %v6921 = vmax.f32 %v6871, 0.0
        %v6922 = vmax.f32 %v6872, 0.0
        %v6923 = vmax.f32 %v6873, 0.0
        %v6924 = vmax.f32 %v6874, 0.0
        %v6925 = vmax.f32 %v6875, 0.0
        %v6926 = vmax.f32 %v6876, 0.0
        %v6927 = vmax.f32 %v6877, 0.0
        %v6928 = vmax.f32 %v6878, 0.0
        %v6929 = vmax.f32 %v6879, 0.0
        %v6930 = vmax.f32 %v6880, 0.0
        %v6931 = vmax.f32 %v6881, 0.0
        %v6932 = vmax.f32 %v6882, 0.0
        %v6933 = vmax.f32 %v6883, 0.0
        %v6934 = vmax.f32 %v6884, 0.0
        %v6935 = vmax.f32 %v6885, 0.0
        %v6936 = vmax.f32 %v6886, 0.0
        %v6937 = vmax.f32 %v6887, 0.0
        %v6938 = vmax.f32 %v6888, 0.0
        %v6939 = vmax.f32 %v6889, 0.0
        %v6940 = vmax.f32 %v6890, 0.0
        %v6941 = vmax.f32 %v6891, 0.0
        %v6942 = vmax.f32 %v6892, 0.0
        %v6943 = vmax.f32 %v6893, 0.0
        %v6944 = vmax.f32 %v6894, 0.0
        %v6945 = vmax.f32 %v6895, 0.0
        %v6946 = vmax.f32 %v6896, 0.0
        %v6947 = vmax.f32 %v6897, 0.0
        %v6948 = vmax.f32 %v6898, 0.0
        %v6949 = vmax.f32 %v6899, 0.0
        %v6950 = vmax.f32 %v6900, 0.0
        %v6951 = vmax.f32 %v6901, 0.0
        %v6952 = vmax.f32 %v6902, 0.0
        %v6953 = vmax.f32 %v6903, 0.0
        %v6954 = vmax.f32 %v6904, 0.0
        %v6955 = vld [vmem:[%s12] sm:$0xff]
        %v6956 = vld [vmem:[%s12 + $0x8] sm:$0xff]
        %v6957 = vld [vmem:[%s12 + $0x10] sm:$0xff]
        %v6958 = vld [vmem:[%s12 + $0x18] sm:$0xff]
        %v6959 = vld [vmem:[%s12 + $0x20] sm:$0xff]
        %v6960 = vld [vmem:[%s12 + $0x28] sm:$0xff]
        %v6961 = vld [vmem:[%s12 + $0x30] sm:$0xff]
        %v6962 = vld [vmem:[%s12 + $0x38] sm:$0xff]
        %v6963 = vld [vmem:[%s12 + $0x40] sm:$0xff]
        %v6964 = vld [vmem:[%s12 + $0x48] sm:$0xff]
        %v6965 = vld [vmem:[%s12 + $0x50] sm:$0xff]
        %v6966 = vld [vmem:[%s12 + $0x58] sm:$0xff]
        %v6967 = vld [vmem:[%s12 + $0x60] sm:$0xff]
        %v6968 = vld [vmem:[%s12 + $0x68] sm:$0xff]
        %v6969 = vld [vmem:[%s12 + $0x70] sm:$0xff]
        %v6970 = vld [vmem:[%s12 + $0x78] sm:$0xff]
        %v6971 = vld [vmem:[%s12 + $0x80] sm:$0xff]
        %v6972 = vld [vmem:[%s12 + $0x88] sm:$0xff]
        %v6973 = vld [vmem:[%s12 + $0x90] sm:$0xff]
        %v6974 = vld [vmem:[%s12 + $0x98] sm:$0xff]
        %v6975 = vld [vmem:[%s12 + $0xa0] sm:$0xff]
        %v6976 = vld [vmem:[%s12 + $0xa8] sm:$0xff]
        %v6977 = vld [vmem:[%s12 + $0xb0] sm:$0xff]
        %v6978 = vld [vmem:[%s12 + $0xb8] sm:$0xff]
        %v6979 = vld [vmem:[%s12 + $0xc0] sm:$0xff]
        %v6980 = vld [vmem:[%s12 + $0xc8] sm:$0xff]
        %v6981 = vld [vmem:[%s12 + $0xd0] sm:$0xff]
        %v6982 = vld [vmem:[%s12 + $0xd8] sm:$0xff]
        %v6983 = vld [vmem:[%s12 + $0xe0] sm:$0xff]
        %v6984 = vld [vmem:[%s12 + $0xe8] sm:$0xff]
        %v6985 = vld [vmem:[%s12 + $0xf0] sm:$0xff]
        %v6986 = vld [vmem:[%s12 + $0xf8] sm:$0xff]
        %v6987 = vld [vmem:[%s12 + $0x100] sm:$0xff]
        %v6988 = vld [vmem:[%s12 + $0x108] sm:$0xff]
        %v6989 = vld [vmem:[%s12 + $0x110] sm:$0xff]
        %v6990 = vld [vmem:[%s12 + $0x118] sm:$0xff]
        %v6991 = vld [vmem:[%s12 + $0x120] sm:$0xff]
        %v6992 = vld [vmem:[%s12 + $0x128] sm:$0xff]
        %v6993 = vld [vmem:[%s12 + $0x130] sm:$0xff]
        %v6994 = vld [vmem:[%s12 + $0x138] sm:$0xff]
        %v6995 = vld [vmem:[%s12 + $0x140] sm:$0xff]
        %v6996 = vld [vmem:[%s12 + $0x148] sm:$0xff]
        %v6997 = vld [vmem:[%s12 + $0x150] sm:$0xff]
        %v6998 = vld [vmem:[%s12 + $0x158] sm:$0xff]
        %v6999 = vld [vmem:[%s12 + $0x160] sm:$0xff]
        %v7000 = vld [vmem:[%s12 + $0x168] sm:$0xff]
        %v7001 = vld [vmem:[%s12 + $0x170] sm:$0xff]
        %v7002 = vld [vmem:[%s12 + $0x178] sm:$0xff]
        %v7003 = vld [vmem:[%s12 + $0x180] sm:$0xff]
        %v7004 = vld [vmem:[%s12 + $0x188] sm:$0xff]
        %v7005 = vld [vmem:[%s12 + $0x190] sm:$0xff]
        %v7006 = vld [vmem:[%s12 + $0x198] sm:$0xff]
        %v7007 = vld [vmem:[%s12 + $0x1a0] sm:$0xff]
        %v7008 = vld [vmem:[%s12 + $0x1a8] sm:$0xff]
        %v7009 = vld [vmem:[%s12 + $0x1b0] sm:$0xff]
        %v7010 = vld [vmem:[%s12 + $0x1b8] sm:$0xff]
        %v7011 = vld [vmem:[%s12 + $0x1c0] sm:$0xff]
        %v7012 = vld [vmem:[%s12 + $0x1c8] sm:$0xff]
        %v7013 = vld [vmem:[%s12 + $0x1d0] sm:$0xff]
        %v7014 = vld [vmem:[%s12 + $0x1d8] sm:$0xff]
        %v7015 = vld [vmem:[%s12 + $0x1e0] sm:$0xff]
        %v7016 = vld [vmem:[%s12 + $0x1e8] sm:$0xff]
        %v7017 = vld [vmem:[%s12 + $0x1f0] sm:$0xff]
        %v7018 = vld [vmem:[%s12 + $0x1f8] sm:$0xff]
        %v7019 = vld [vmem:[%s12 + $0x200] sm:$0xff]
        %v7020 = vld [vmem:[%s12 + $0x208] sm:$0xff]
        %v7021 = vld [vmem:[%s12 + $0x210] sm:$0xff]
        %v7022 = vld [vmem:[%s12 + $0x218] sm:$0xff]
        %v7023 = vld [vmem:[%s12 + $0x220] sm:$0xff]
        %v7024 = vld [vmem:[%s12 + $0x228] sm:$0xff]
        %v7025 = vld [vmem:[%s12 + $0x230] sm:$0xff]
        %v7026 = vld [vmem:[%s12 + $0x238] sm:$0xff]
        %v7027 = vld [vmem:[%s12 + $0x240] sm:$0xff]
        %v7028 = vld [vmem:[%s12 + $0x248] sm:$0xff]
        %v7029 = vld [vmem:[%s12 + $0x250] sm:$0xff]
        %v7030 = vld [vmem:[%s12 + $0x258] sm:$0xff]
        %v7031 = vld [vmem:[%s12 + $0x260] sm:$0xff]
        %v7032 = vld [vmem:[%s12 + $0x268] sm:$0xff]
        %v7033 = vld [vmem:[%s12 + $0x270] sm:$0xff]
        %v7034 = vld [vmem:[%s12 + $0x278] sm:$0xff]
        %v7035 = vld [vmem:[%s12 + $0x280] sm:$0xff]
        %v7036 = vld [vmem:[%s12 + $0x288] sm:$0xff]
        %v7037 = vld [vmem:[%s12 + $0x290] sm:$0xff]
        %v7038 = vld [vmem:[%s12 + $0x298] sm:$0xff]
        %v7039 = vld [vmem:[%s12 + $0x2a0] sm:$0xff]
        %v7040 = vld [vmem:[%s12 + $0x2a8] sm:$0xff]
        %v7041 = vld [vmem:[%s12 + $0x2b0] sm:$0xff]
        %v7042 = vld [vmem:[%s12 + $0x2b8] sm:$0xff]
        %v7043 = vld [vmem:[%s12 + $0x2c0] sm:$0xff]
        %v7044 = vld [vmem:[%s12 + $0x2c8] sm:$0xff]
        %v7045 = vld [vmem:[%s12 + $0x2d0] sm:$0xff]
        %v7046 = vld [vmem:[%s12 + $0x2d8] sm:$0xff]
        %v7047 = vld [vmem:[%s12 + $0x2e0] sm:$0xff]
        %v7048 = vld [vmem:[%s12 + $0x2e8] sm:$0xff]
        %v7049 = vld [vmem:[%s12 + $0x2f0] sm:$0xff]
        %v7050 = vld [vmem:[%s12 + $0x2f8] sm:$0xff]
        %v7051 = vld [vmem:[%s12 + $0x300] sm:$0xff]
        %v7052 = vld [vmem:[%s12 + $0x308] sm:$0xff]
        %v7053 = vld [vmem:[%s12 + $0x310] sm:$0xff]
        %v7054 = vld [vmem:[%s12 + $0x318] sm:$0xff]
        %v7055 = vld [vmem:[%s13] sm:$0xff]
        %v7056 = vld [vmem:[%s13 + $0x8] sm:$0xff]
        %v7057 = vld [vmem:[%s13 + $0x10] sm:$0xff]
        %v7058 = vld [vmem:[%s13 + $0x18] sm:$0xff]
        %v7059 = vld [vmem:[%s13 + $0x20] sm:$0xff]
        %v7060 = vld [vmem:[%s13 + $0x28] sm:$0xff]
        %v7061 = vld [vmem:[%s13 + $0x30] sm:$0xff]
        %v7062 = vld [vmem:[%s13 + $0x38] sm:$0xff]
        %v7063 = vld [vmem:[%s13 + $0x40] sm:$0xff]
        %v7064 = vld [vmem:[%s13 + $0x48] sm:$0xff]
        %v7065 = vld [vmem:[%s13 + $0x50] sm:$0xff]
        %v7066 = vld [vmem:[%s13 + $0x58] sm:$0xff]
        %v7067 = vld [vmem:[%s13 + $0x60] sm:$0xff]
        %v7068 = vld [vmem:[%s13 + $0x68] sm:$0xff]
        %v7069 = vld [vmem:[%s13 + $0x70] sm:$0xff]
        %v7070 = vld [vmem:[%s13 + $0x78] sm:$0xff]
        %v7071 = vld [vmem:[%s13 + $0x80] sm:$0xff]
        %v7072 = vld [vmem:[%s13 + $0x88] sm:$0xff]
        %v7073 = vld [vmem:[%s13 + $0x90] sm:$0xff]
        %v7074 = vld [vmem:[%s13 + $0x98] sm:$0xff]
        %v7075 = vld [vmem:[%s13 + $0xa0] sm:$0xff]
        %v7076 = vld [vmem:[%s13 + $0xa8] sm:$0xff]
        %v7077 = vld [vmem:[%s13 + $0xb0] sm:$0xff]
        %v7078 = vld [vmem:[%s13 + $0xb8] sm:$0xff]
        %v7079 = vld [vmem:[%s13 + $0xc0] sm:$0xff]
        %7081 = vset.pattern.permute.xlu0 0
        %7082 = vperm.xlu0 %7081, %v7055
        %v7083 = vpop.permute.xlu0 %7082
        %7086 = vset.pattern.permute.xlu0 0
        %7087 = vperm.xlu0 %7086, %v7056
        %v7088 = vpop.permute.xlu0 %7087
        %7091 = vset.pattern.permute.xlu0 0
        %7092 = vperm.xlu0 %7091, %v7057
        %v7093 = vpop.permute.xlu0 %7092
        %7096 = vset.pattern.permute.xlu0 0
        %7097 = vperm.xlu0 %7096, %v7058
        %v7098 = vpop.permute.xlu0 %7097
        %7101 = vset.pattern.permute.xlu0 0
        %7102 = vperm.xlu0 %7101, %v7059
        %v7103 = vpop.permute.xlu0 %7102
        %7106 = vset.pattern.permute.xlu0 0
        %7107 = vperm.xlu0 %7106, %v7060
        %v7108 = vpop.permute.xlu0 %7107
        %7111 = vset.pattern.permute.xlu0 0
        %7112 = vperm.xlu0 %7111, %v7061
        %v7113 = vpop.permute.xlu0 %7112
        %7116 = vset.pattern.permute.xlu0 0
        %7117 = vperm.xlu0 %7116, %v7062
        %v7118 = vpop.permute.xlu0 %7117
        %7121 = vset.pattern.permute.xlu0 0
        %7122 = vperm.xlu0 %7121, %v7063
        %v7123 = vpop.permute.xlu0 %7122
        %7126 = vset.pattern.permute.xlu0 0
        %7127 = vperm.xlu0 %7126, %v7064
        %v7128 = vpop.permute.xlu0 %7127
        %7131 = vset.pattern.permute.xlu0 0
        %7132 = vperm.xlu0 %7131, %v7065
        %v7133 = vpop.permute.xlu0 %7132
        %7136 = vset.pattern.permute.xlu0 0
        %7137 = vperm.xlu0 %7136, %v7066
        %v7138 = vpop.permute.xlu0 %7137
        %7141 = vset.pattern.permute.xlu0 0
        %7142 = vperm.xlu0 %7141, %v7067
        %v7143 = vpop.permute.xlu0 %7142
        %7146 = vset.pattern.permute.xlu0 0
        %7147 = vperm.xlu0 %7146, %v7068
        %v7148 = vpop.permute.xlu0 %7147
        %7151 = vset.pattern.permute.xlu0 0
        %7152 = vperm.xlu0 %7151, %v7069
        %v7153 = vpop.permute.xlu0 %7152
        %7156 = vset.pattern.permute.xlu0 0
        %7157 = vperm.xlu0 %7156, %v7070
        %v7158 = vpop.permute.xlu0 %7157
        %7161 = vset.pattern.permute.xlu0 0
        %7162 = vperm.xlu0 %7161, %v7071
        %v7163 = vpop.permute.xlu0 %7162
        %7166 = vset.pattern.permute.xlu0 0
        %7167 = vperm.xlu0 %7166, %v7072
        %v7168 = vpop.permute.xlu0 %7167
        %7171 = vset.pattern.permute.xlu0 0
        %7172 = vperm.xlu0 %7171, %v7073
        %v7173 = vpop.permute.xlu0 %7172
        %7176 = vset.pattern.permute.xlu0 0
        %7177 = vperm.xlu0 %7176, %v7074
        %v7178 = vpop.permute.xlu0 %7177
        %7181 = vset.pattern.permute.xlu0 0
        %7182 = vperm.xlu0 %7181, %v7075
        %v7183 = vpop.permute.xlu0 %7182
        %7186 = vset.pattern.permute.xlu0 0
        %7187 = vperm.xlu0 %7186, %v7076
        %v7188 = vpop.permute.xlu0 %7187
        %7191 = vset.pattern.permute.xlu0 0
        %7192 = vperm.xlu0 %7191, %v7077
        %v7193 = vpop.permute.xlu0 %7192
        %7196 = vset.pattern.permute.xlu0 0
        %7197 = vperm.xlu0 %7196, %v7078
        %v7198 = vpop.permute.xlu0 %7197
        %7201 = vset.pattern.permute.xlu0 0
        %7202 = vperm.xlu0 %7201, %v7079
        %v7203 = vpop.permute.xlu0 %7202
        %vm7205 = vcmask 130048
        %v7207 = vsel %vm7205, %v6958, 0
        %v7210 = vsel %vm7205, %v6962, 0
        %v7213 = vsel %vm7205, %v6966, 0
        %v7216 = vsel %vm7205, %v6970, 0
        %v7219 = vsel %vm7205, %v6974, 0
        %v7222 = vsel %vm7205, %v6978, 0
        %v7225 = vsel %vm7205, %v6982, 0
        %v7228 = vsel %vm7205, %v6986, 0
        %v7231 = vsel %vm7205, %v6990, 0
        %v7234 = vsel %vm7205, %v6994, 0
        %v7237 = vsel %vm7205, %v6998, 0
        %v7240 = vsel %vm7205, %v7002, 0
        %v7243 = vsel %vm7205, %v7006, 0
        %v7246 = vsel %vm7205, %v7010, 0
        %v7249 = vsel %vm7205, %v7014, 0
        %v7252 = vsel %vm7205, %v7018, 0
        %v7255 = vsel %vm7205, %v7022, 0
        %v7258 = vsel %vm7205, %v7026, 0
        %v7261 = vsel %vm7205, %v7030, 0
        %v7264 = vsel %vm7205, %v7034, 0
        %v7267 = vsel %vm7205, %v7038, 0
        %v7270 = vsel %vm7205, %v7042, 0
        %v7273 = vsel %vm7205, %v7046, 0
        %v7276 = vsel %vm7205, %v7050, 0
        %v7279 = vsel %vm7205, %v7054, 0
        %7281 = vmatprep.subr.mxu0 0.0
        %7282 = vmatpush1.msra.mxu0 %v6905
        %7283 = vmatprep.subr.mxu0 0.0
        %7284 = vmatpush1.msra.mxu0 %v6906
        %7285 = vmatprep.subr.mxu0 0.0
        %7286 = vmatpush1.msra.mxu0 %v6907
        %7287 = vmatprep.subr.mxu0 0.0
        %7288 = vmatpush1.msra.mxu0 %v6908
        %7289 = vmatprep.subr.mxu0 0.0
        %7290 = vmatpush1.msra.mxu0 %v6909
        %7291 = vmatprep.subr.mxu0 0.0
        %7292 = vmatpush1.msra.mxu0 %v6910
        %7293 = vmatprep.subr.mxu0 0.0
        %7294 = vmatpush1.msra.mxu0 %v6911
        %7295 = vmatprep.subr.mxu0 0.0
        %7296 = vmatpush1.msra.mxu0 %v6912
        %7297 = vmatprep.subr.mxu0 0.0
        %7298 = vmatpush1.msra.mxu0 %v6913
        %7299 = vmatprep.subr.mxu0 0.0
        %7300 = vmatpush1.msra.mxu0 %v6914
        %7301 = vmatprep.subr.mxu0 0.0
        %7302 = vmatpush1.msra.mxu0 %v6915
        %7303 = vmatprep.subr.mxu0 0.0
        %7304 = vmatpush1.msra.mxu0 %v6916
        %7305 = vmatprep.subr.mxu0 0.0
        %7306 = vmatpush1.msra.mxu0 %v6917
        %7307 = vmatprep.subr.mxu0 0.0
        %7308 = vmatpush1.msra.mxu0 %v6918
        %7309 = vmatprep.subr.mxu0 0.0
        %7310 = vmatpush1.msra.mxu0 %v6919
        %7311 = vmatprep.subr.mxu0 0.0
        %7312 = vmatpush1.msra.mxu0 %v6920
        %7313 = vmatprep.subr.mxu0 0.0
        %7314 = vmatpush1.msra.mxu0 %v6921
        %7315 = vmatprep.subr.mxu0 0.0
        %7316 = vmatpush1.msra.mxu0 %v6922
        %7317 = vmatprep.subr.mxu0 0.0
        %7318 = vmatpush1.msra.mxu0 %v6923
        %7319 = vmatprep.subr.mxu0 0.0
        %7320 = vmatpush1.msra.mxu0 %v6924
        %7321 = vmatprep.subr.mxu0 0.0
        %7322 = vmatpush1.msra.mxu0 %v6925
        %7323 = vmatprep.subr.mxu0 0.0
        %7324 = vmatpush1.msra.mxu0 %v6926
        %7325 = vmatprep.subr.mxu0 0.0
        %7326 = vmatpush1.msra.mxu0 %v6927
        %7327 = vmatprep.subr.mxu0 0.0
        %7328 = vmatpush1.msra.mxu0 %v6928
        %7329 = vmatprep.subr.mxu0 0.0
        %7330 = vmatpush1.msra.mxu0 %v6929
        %7331 = vmatprep.subr.mxu0 0.0
        %7332 = vmatpush1.msra.mxu0 %v6930
        %7333 = vmatprep.subr.mxu0 0.0
        %7334 = vmatpush1.msra.mxu0 %v6931
        %7335 = vmatprep.subr.mxu0 0.0
        %7336 = vmatpush1.msra.mxu0 %v6932
        %7337 = vmatprep.subr.mxu0 0.0
        %7338 = vmatpush1.msra.mxu0 %v6933
        %7339 = vmatprep.subr.mxu0 0.0
        %7340 = vmatpush1.msra.mxu0 %v6934
        %7341 = vmatprep.subr.mxu0 0.0
        %7342 = vmatpush1.msra.mxu0 %v6935
        %7343 = vmatprep.subr.mxu0 0.0
        %7344 = vmatpush1.msra.mxu0 %v6936
        %7345 = vmatprep.mubr.f32.mxu0 %v6956
        %7346 = vmatmul.mubr.f32.gmra.mrb[0].mxu0 %v6955
        %v7347 = vpop.f32.mrb[0].mxu0
        %v7348 = vadd.f32 %v7083, %v7347
        %v7349 = vpop.f32.mrb[0].mxu0
        %7350 = vmatprep.mubr.f32.mxu0 %v6960
        %7351 = vmatmul.mubr.f32.gmra.mrb[0].mxu0 %v6959
        %v7352 = vpop.f32.mrb[0].mxu0
        %v7353 = vadd.f32 %v7088, %v7352
        %v7354 = vpop.f32.mrb[0].mxu0
        %7355 = vmatprep.mubr.f32.mxu0 %v6964
        %7356 = vmatmul.mubr.f32.gmra.mrb[0].mxu0 %v6963
        %v7357 = vpop.f32.mrb[0].mxu0
        %v7358 = vadd.f32 %v7093, %v7357
        %v7359 = vpop.f32.mrb[0].mxu0
        %7360 = vmatprep.mubr.f32.mxu0 %v6968
        %7361 = vmatmul.mubr.f32.gmra.mrb[0].mxu0 %v6967
        %v7362 = vpop.f32.mrb[0].mxu0
        %v7363 = vadd.f32 %v7098, %v7362
        %v7364 = vpop.f32.mrb[0].mxu0
        %7365 = vmatprep.mubr.f32.mxu0 %v6972
        %7366 = vmatmul.mubr.f32.gmra.mrb[0].mxu0 %v6971
        %v7367 = vpop.f32.mrb[0].mxu0
        %v7368 = vadd.f32 %v7103, %v7367
        %v7369 = vpop.f32.mrb[0].mxu0
        %7370 = vmatprep.mubr.f32.mxu0 %v6976
        %7371 = vmatmul.mubr.f32.gmra.mrb[0].mxu0 %v6975
        %v7372 = vpop.f32.mrb[0].mxu0
        %v7373 = vadd.f32 %v7108, %v7372
        %v7374 = vpop.f32.mrb[0].mxu0
        %7375 = vmatprep.mubr.f32.mxu0 %v6980
        %7376 = vmatmul.mubr.f32.gmra.mrb[0].mxu0 %v6979
        %v7377 = vpop.f32.mrb[0].mxu0
        %v7378 = vadd.f32 %v7113, %v7377
        %v7379 = vpop.f32.mrb[0].mxu0
        %7380 = vmatprep.mubr.f32.mxu0 %v6984
        %7381 = vmatmul.mubr.f32.gmra.mrb[0].mxu0 %v6983
        %v7382 = vpop.f32.mrb[0].mxu0
        %v7383 = vadd.f32 %v7118, %v7382
        %v7384 = vpop.f32.mrb[0].mxu0
        %7385 = vmatprep.mubr.f32.mxu0 %v6988
        %7386 = vmatmul.mubr.f32.gmra.mrb[0].mxu0 %v6987
        %v7387 = vpop.f32.mrb[0].mxu0
        %v7388 = vadd.f32 %v7123, %v7387
        %v7389 = vpop.f32.mrb[0].mxu0
        %7390 = vmatprep.mubr.f32.mxu0 %v6992
        %7391 = vmatmul.mubr.f32.gmra.mrb[0].mxu0 %v6991
        %v7392 = vpop.f32.mrb[0].mxu0
        %v7393 = vadd.f32 %v7128, %v7392
        %v7394 = vpop.f32.mrb[0].mxu0
        %7395 = vmatprep.mubr.f32.mxu0 %v6996
        %7396 = vmatmul.mubr.f32.gmra.mrb[0].mxu0 %v6995
        %v7397 = vpop.f32.mrb[0].mxu0
        %v7398 = vadd.f32 %v7133, %v7397
        %v7399 = vpop.f32.mrb[0].mxu0
        %7400 = vmatprep.mubr.f32.mxu0 %v7000
        %7401 = vmatmul.mubr.f32.gmra.mrb[0].mxu0 %v6999
        %v7402 = vpop.f32.mrb[0].mxu0
        %v7403 = vadd.f32 %v7138, %v7402
        %v7404 = vpop.f32.mrb[0].mxu0
        %7405 = vmatprep.mubr.f32.mxu0 %v7004
        %7406 = vmatmul.mubr.f32.gmra.mrb[0].mxu0 %v7003
        %v7407 = vpop.f32.mrb[0].mxu0
        %v7408 = vadd.f32 %v7143, %v7407
        %v7409 = vpop.f32.mrb[0].mxu0
        %7410 = vmatprep.mubr.f32.mxu0 %v7008
        %7411 = vmatmul.mubr.f32.gmra.mrb[0].mxu0 %v7007
        %v7412 = vpop.f32.mrb[0].mxu0
        %v7413 = vadd.f32 %v7148, %v7412
        %v7414 = vpop.f32.mrb[0].mxu0
        %7415 = vmatprep.mubr.f32.mxu0 %v7012
        %7416 = vmatmul.mubr.f32.gmra.mrb[0].mxu0 %v7011
        %v7417 = vpop.f32.mrb[0].mxu0
        %v7418 = vadd.f32 %v7153, %v7417
        %v7419 = vpop.f32.mrb[0].mxu0
        %7420 = vmatprep.mubr.f32.mxu0 %v7016
        %7421 = vmatmul.mubr.f32.gmra.mrb[0].mxu0 %v7015
        %v7422 = vpop.f32.mrb[0].mxu0
        %v7423 = vadd.f32 %v7158, %v7422
        %v7424 = vpop.f32.mrb[0].mxu0
        %7425 = vmatprep.mubr.f32.mxu0 %v7020
        %7426 = vmatmul.mubr.f32.gmra.mrb[0].mxu0 %v7019
        %v7427 = vpop.f32.mrb[0].mxu0
        %v7428 = vadd.f32 %v7163, %v7427
        %v7429 = vpop.f32.mrb[0].mxu0
        %7430 = vmatprep.mubr.f32.mxu0 %v7024
        %7431 = vmatmul.mubr.f32.gmra.mrb[0].mxu0 %v7023
        %v7432 = vpop.f32.mrb[0].mxu0
        %v7433 = vadd.f32 %v7168, %v7432
        %v7434 = vpop.f32.mrb[0].mxu0
        %7435 = vmatprep.mubr.f32.mxu0 %v7028
        %7436 = vmatmul.mubr.f32.gmra.mrb[0].mxu0 %v7027
        %v7437 = vpop.f32.mrb[0].mxu0
        %v7438 = vadd.f32 %v7173, %v7437
        %v7439 = vpop.f32.mrb[0].mxu0
        %7440 = vmatprep.mubr.f32.mxu0 %v7032
        %7441 = vmatmul.mubr.f32.gmra.mrb[0].mxu0 %v7031
        %v7442 = vpop.f32.mrb[0].mxu0
        %v7443 = vadd.f32 %v7178, %v7442
        %v7444 = vpop.f32.mrb[0].mxu0
        %7445 = vmatprep.mubr.f32.mxu0 %v7036
        %7446 = vmatmul.mubr.f32.gmra.mrb[0].mxu0 %v7035
        %v7447 = vpop.f32.mrb[0].mxu0
        %v7448 = vadd.f32 %v7183, %v7447
        %v7449 = vpop.f32.mrb[0].mxu0
        %7450 = vmatprep.mubr.f32.mxu0 %v7040
        %7451 = vmatmul.mubr.f32.gmra.mrb[0].mxu0 %v7039
        %v7452 = vpop.f32.mrb[0].mxu0
        %v7453 = vadd.f32 %v7188, %v7452
        %v7454 = vpop.f32.mrb[0].mxu0
        %7455 = vmatprep.mubr.f32.mxu0 %v7044
        %7456 = vmatmul.mubr.f32.gmra.mrb[0].mxu0 %v7043
        %v7457 = vpop.f32.mrb[0].mxu0
        %v7458 = vadd.f32 %v7193, %v7457
        %v7459 = vpop.f32.mrb[0].mxu0
        %7460 = vmatprep.mubr.f32.mxu0 %v7048
        %7461 = vmatmul.mubr.f32.gmra.mrb[0].mxu0 %v7047
        %v7462 = vpop.f32.mrb[0].mxu0
        %v7463 = vadd.f32 %v7198, %v7462
        %v7464 = vpop.f32.mrb[0].mxu0
        %7465 = vmatprep.mubr.f32.mxu0 %v7052
        %7466 = vmatmul.mubr.f32.gmra.mrb[0].mxu0 %v7051
        %v7467 = vpop.f32.mrb[0].mxu0
        %v7468 = vadd.f32 %v7203, %v7467
        %v7469 = vpop.f32.mrb[0].mxu0
        %7470 = vdwg.mxu0
        %7471 = vmatprep.subr.mxu0 0.0
        %7472 = vmatpush1.msra.mxu0 %v6937
        %7473 = vmatprep.subr.mxu0 0.0
        %7474 = vmatpush1.msra.mxu0 %v6938
        %7475 = vmatprep.subr.mxu0 0.0
        %7476 = vmatpush1.msra.mxu0 %v6939
        %7477 = vmatprep.subr.mxu0 0.0
        %7478 = vmatpush1.msra.mxu0 %v6940
        %7479 = vmatprep.subr.mxu0 0.0
        %7480 = vmatpush1.msra.mxu0 %v6941
        %7481 = vmatprep.subr.mxu0 0.0
        %7482 = vmatpush1.msra.mxu0 %v6942
        %7483 = vmatprep.subr.mxu0 0.0
        %7484 = vmatpush1.msra.mxu0 %v6943
        %7485 = vmatprep.subr.mxu0 0.0
        %7486 = vmatpush1.msra.mxu0 %v6944
        %7487 = vmatprep.subr.mxu0 0.0
        %7488 = vmatpush1.msra.mxu0 %v6945
        %7489 = vmatprep.subr.mxu0 0.0
        %7490 = vmatpush1.msra.mxu0 %v6946
        %7491 = vmatprep.subr.mxu0 0.0
        %7492 = vmatpush1.msra.mxu0 %v6947
        %7493 = vmatprep.subr.mxu0 0.0
        %7494 = vmatpush1.msra.mxu0 %v6948
        %7495 = vmatprep.subr.mxu0 0.0
        %7496 = vmatpush1.msra.mxu0 %v6949
        %7497 = vmatprep.subr.mxu0 0.0
        %7498 = vmatpush1.msra.mxu0 %v6950
        %7499 = vmatprep.subr.mxu0 0.0
        %7500 = vmatpush1.msra.mxu0 %v6951
        %7501 = vmatprep.subr.mxu0 0.0
        %7502 = vmatpush1.msra.mxu0 %v6952
        %7503 = vmatprep.subr.mxu0 0.0
        %7504 = vmatpush1.msra.mxu0 %v6953
        %7505 = vmatprep.subr.mxu0 0.0
        %7506 = vmatpush1.msra.mxu0 %v6954
        %7507 = vmatprep.subr.mxu0 0.0
        %7508 = vmatpush1.msra.mxu0 0.0
        %7509 = vmatprep.subr.mxu0 0.0
        %7510 = vmatpush1.msra.mxu0 0.0
        %7511 = vmatprep.subr.mxu0 0.0
        %7512 = vmatpush1.msra.mxu0 0.0
        %7513 = vmatprep.subr.mxu0 0.0
        %7514 = vmatpush1.msra.mxu0 0.0
        %7515 = vmatprep.subr.mxu0 0.0
        %7516 = vmatpush1.msra.mxu0 0.0
        %7517 = vmatprep.subr.mxu0 0.0
        %7518 = vmatpush1.msra.mxu0 0.0
        %7519 = vmatprep.subr.mxu0 0.0
        %7520 = vmatpush1.msra.mxu0 0.0
        %7521 = vmatprep.subr.mxu0 0.0
        %7522 = vmatpush1.msra.mxu0 0.0
        %7523 = vmatprep.subr.mxu0 0.0
        %7524 = vmatpush1.msra.mxu0 0.0
        %7525 = vmatprep.subr.mxu0 0.0
        %7526 = vmatpush1.msra.mxu0 0.0
        %7527 = vmatprep.subr.mxu0 0.0
        %7528 = vmatpush1.msra.mxu0 0.0
        %7529 = vmatprep.subr.mxu0 0.0
        %7530 = vmatpush1.msra.mxu0 0.0
        %7531 = vmatprep.subr.mxu0 0.0
        %7532 = vmatpush1.msra.mxu0 0.0
        %7533 = vmatprep.subr.mxu0 0.0
        %7534 = vmatpush1.msra.mxu0 0.0
        %7535 = vmatprep.mubr.f32.mxu0 %v7207
        %7536 = vmatmul.mubr.f32.gmra.mrb[0].mxu0 %v6957
        %v7537 = vpop.f32.mrb[0].mxu0
        %v7538 = vadd.f32 %v7348, %v7537
        %v7539 = vpop.f32.mrb[0].mxu0
        %7540 = vmatprep.mubr.f32.mxu0 %v7210
        %7541 = vmatmul.mubr.f32.gmra.mrb[0].mxu0 %v6961
        %v7542 = vpop.f32.mrb[0].mxu0
        %v7543 = vadd.f32 %v7353, %v7542
        %v7544 = vpop.f32.mrb[0].mxu0
        %7545 = vmatprep.mubr.f32.mxu0 %v7213
        %7546 = vmatmul.mubr.f32.gmra.mrb[0].mxu0 %v6965
        %v7547 = vpop.f32.mrb[0].mxu0
        %v7548 = vadd.f32 %v7358, %v7547
        %v7549 = vpop.f32.mrb[0].mxu0
        %7550 = vmatprep.mubr.f32.mxu0 %v7216
        %7551 = vmatmul.mubr.f32.gmra.mrb[0].mxu0 %v6969
        %v7552 = vpop.f32.mrb[0].mxu0
        %v7553 = vadd.f32 %v7363, %v7552
        %v7554 = vpop.f32.mrb[0].mxu0
        %7555 = vmatprep.mubr.f32.mxu0 %v7219
        %7556 = vmatmul.mubr.f32.gmra.mrb[0].mxu0 %v6973
        %v7557 = vpop.f32.mrb[0].mxu0
        %v7558 = vadd.f32 %v7368, %v7557
        %v7559 = vpop.f32.mrb[0].mxu0
        %7560 = vmatprep.mubr.f32.mxu0 %v7222
        %7561 = vmatmul.mubr.f32.gmra.mrb[0].mxu0 %v6977
        %v7562 = vpop.f32.mrb[0].mxu0
        %v7563 = vadd.f32 %v7373, %v7562
        %v7564 = vpop.f32.mrb[0].mxu0
        %7565 = vmatprep.mubr.f32.mxu0 %v7225
        %7566 = vmatmul.mubr.f32.gmra.mrb[0].mxu0 %v6981
        %v7567 = vpop.f32.mrb[0].mxu0
        %v7568 = vadd.f32 %v7378, %v7567
        %v7569 = vpop.f32.mrb[0].mxu0
        %7570 = vmatprep.mubr.f32.mxu0 %v7228
        %7571 = vmatmul.mubr.f32.gmra.mrb[0].mxu0 %v6985
        %v7572 = vpop.f32.mrb[0].mxu0
        %v7573 = vadd.f32 %v7383, %v7572
        %v7574 = vpop.f32.mrb[0].mxu0
        %7575 = vmatprep.mubr.f32.mxu0 %v7231
        %7576 = vmatmul.mubr.f32.gmra.mrb[0].mxu0 %v6989
        %v7577 = vpop.f32.mrb[0].mxu0
        %v7578 = vadd.f32 %v7388, %v7577
        %v7579 = vpop.f32.mrb[0].mxu0
        %7580 = vmatprep.mubr.f32.mxu0 %v7234
        %7581 = vmatmul.mubr.f32.gmra.mrb[0].mxu0 %v6993
        %v7582 = vpop.f32.mrb[0].mxu0
        %v7583 = vadd.f32 %v7393, %v7582
        %v7584 = vpop.f32.mrb[0].mxu0
        %7585 = vmatprep.mubr.f32.mxu0 %v7237
        %7586 = vmatmul.mubr.f32.gmra.mrb[0].mxu0 %v6997
        %v7587 = vpop.f32.mrb[0].mxu0
        %v7588 = vadd.f32 %v7398, %v7587
        %v7589 = vpop.f32.mrb[0].mxu0
        %7590 = vmatprep.mubr.f32.mxu0 %v7240
        %7591 = vmatmul.mubr.f32.gmra.mrb[0].mxu0 %v7001
        %v7592 = vpop.f32.mrb[0].mxu0
        %v7593 = vadd.f32 %v7403, %v7592
        %v7594 = vpop.f32.mrb[0].mxu0
        %7595 = vmatprep.mubr.f32.mxu0 %v7243
        %7596 = vmatmul.mubr.f32.gmra.mrb[0].mxu0 %v7005
        %v7597 = vpop.f32.mrb[0].mxu0
        %v7598 = vadd.f32 %v7408, %v7597
        %v7599 = vpop.f32.mrb[0].mxu0
        %7600 = vmatprep.mubr.f32.mxu0 %v7246
        %7601 = vmatmul.mubr.f32.gmra.mrb[0].mxu0 %v7009
        %v7602 = vpop.f32.mrb[0].mxu0
        %v7603 = vadd.f32 %v7413, %v7602
        %v7604 = vpop.f32.mrb[0].mxu0
        %7605 = vmatprep.mubr.f32.mxu0 %v7249
        %7606 = vmatmul.mubr.f32.gmra.mrb[0].mxu0 %v7013
        %v7607 = vpop.f32.mrb[0].mxu0
        %v7608 = vadd.f32 %v7418, %v7607
        %v7609 = vpop.f32.mrb[0].mxu0
        %7610 = vmatprep.mubr.f32.mxu0 %v7252
        %7611 = vmatmul.mubr.f32.gmra.mrb[0].mxu0 %v7017
        %v7612 = vpop.f32.mrb[0].mxu0
        %v7613 = vadd.f32 %v7423, %v7612
        %v7614 = vpop.f32.mrb[0].mxu0
        %7615 = vmatprep.mubr.f32.mxu0 %v7255
        %7616 = vmatmul.mubr.f32.gmra.mrb[0].mxu0 %v7021
        %v7617 = vpop.f32.mrb[0].mxu0
        %v7618 = vadd.f32 %v7428, %v7617
        %v7619 = vpop.f32.mrb[0].mxu0
        %7620 = vmatprep.mubr.f32.mxu0 %v7258
        %7621 = vmatmul.mubr.f32.gmra.mrb[0].mxu0 %v7025
        %v7622 = vpop.f32.mrb[0].mxu0
        %v7623 = vadd.f32 %v7433, %v7622
        %v7624 = vpop.f32.mrb[0].mxu0
        %7625 = vmatprep.mubr.f32.mxu0 %v7261
        %7626 = vmatmul.mubr.f32.gmra.mrb[0].mxu0 %v7029
        %v7627 = vpop.f32.mrb[0].mxu0
        %v7628 = vadd.f32 %v7438, %v7627
        %v7629 = vpop.f32.mrb[0].mxu0
        %7630 = vmatprep.mubr.f32.mxu0 %v7264
        %7631 = vmatmul.mubr.f32.gmra.mrb[0].mxu0 %v7033
        %v7632 = vpop.f32.mrb[0].mxu0
        %v7633 = vadd.f32 %v7443, %v7632
        %v7634 = vpop.f32.mrb[0].mxu0
        %7635 = vmatprep.mubr.f32.mxu0 %v7267
        %7636 = vmatmul.mubr.f32.gmra.mrb[0].mxu0 %v7037
        %v7637 = vpop.f32.mrb[0].mxu0
        %v7638 = vadd.f32 %v7448, %v7637
        %v7639 = vpop.f32.mrb[0].mxu0
        %7640 = vmatprep.mubr.f32.mxu0 %v7270
        %7641 = vmatmul.mubr.f32.gmra.mrb[0].mxu0 %v7041
        %v7642 = vpop.f32.mrb[0].mxu0
        %v7643 = vadd.f32 %v7453, %v7642
        %v7644 = vpop.f32.mrb[0].mxu0
        %7645 = vmatprep.mubr.f32.mxu0 %v7273
        %7646 = vmatmul.mubr.f32.gmra.mrb[0].mxu0 %v7045
        %v7647 = vpop.f32.mrb[0].mxu0
        %v7648 = vadd.f32 %v7458, %v7647
        %v7649 = vpop.f32.mrb[0].mxu0
        %7650 = vmatprep.mubr.f32.mxu0 %v7276
        %7651 = vmatmul.mubr.f32.gmra.mrb[0].mxu0 %v7049
        %v7652 = vpop.f32.mrb[0].mxu0
        %v7653 = vadd.f32 %v7463, %v7652
        %v7654 = vpop.f32.mrb[0].mxu0
        %7655 = vmatprep.mubr.f32.mxu0 %v7279
        %7656 = vmatmul.mubr.f32.gmra.mrb[0].mxu0 %v7053
        %v7657 = vpop.f32.mrb[0].mxu0
        %v7658 = vadd.f32 %v7468, %v7657
        %v7659 = vpop.f32.mrb[0].mxu0
        %7660 = vdwg.mxu0
        %v7661 = vmax.f32 %v7538, 0.0
        %v7662 = vmax.f32 %v7543, 0.0
        %v7663 = vmax.f32 %v7548, 0.0
        %v7664 = vmax.f32 %v7553, 0.0
        %v7665 = vmax.f32 %v7558, 0.0
        %v7666 = vmax.f32 %v7563, 0.0
        %v7667 = vmax.f32 %v7568, 0.0
        %v7668 = vmax.f32 %v7573, 0.0
        %v7669 = vmax.f32 %v7578, 0.0
        %v7670 = vmax.f32 %v7583, 0.0
        %v7671 = vmax.f32 %v7588, 0.0
        %v7672 = vmax.f32 %v7593, 0.0
        %v7673 = vmax.f32 %v7598, 0.0
        %v7674 = vmax.f32 %v7603, 0.0
        %v7675 = vmax.f32 %v7608, 0.0
        %v7676 = vmax.f32 %v7613, 0.0
        %v7677 = vmax.f32 %v7618, 0.0
        %v7678 = vmax.f32 %v7623, 0.0
        %v7679 = vmax.f32 %v7628, 0.0
        %v7680 = vmax.f32 %v7633, 0.0
        %v7681 = vmax.f32 %v7638, 0.0
        %v7682 = vmax.f32 %v7643, 0.0
        %v7683 = vmax.f32 %v7648, 0.0
        %v7684 = vmax.f32 %v7653, 0.0
        %v7685 = vmax.f32 %v7658, 0.0
        %v7686 = vld [vmem:[%s14] sm:$0xff]
        %v7687 = vld [vmem:[%s14 + $0x8] sm:$0xff]
        %v7688 = vld [vmem:[%s14 + $0x10] sm:$0xff]
        %v7689 = vld [vmem:[%s14 + $0x18] sm:$0xff]
        %v7690 = vld [vmem:[%s14 + $0x20] sm:$0xff]
        %v7691 = vld [vmem:[%s14 + $0x28] sm:$0xff]
        %v7692 = vld [vmem:[%s14 + $0x30] sm:$0xff]
        %v7693 = vld [vmem:[%s14 + $0x38] sm:$0xff]
        %v7694 = vld [vmem:[%s14 + $0x40] sm:$0xff]
        %v7695 = vld [vmem:[%s14 + $0x48] sm:$0xff]
        %v7696 = vld [vmem:[%s14 + $0x50] sm:$0xff]
        %v7697 = vld [vmem:[%s14 + $0x58] sm:$0xff]
        %v7698 = vld [vmem:[%s14 + $0x60] sm:$0xff]
        %v7699 = vld [vmem:[%s14 + $0x68] sm:$0xff]
        %v7700 = vld [vmem:[%s14 + $0x70] sm:$0xff]
        %v7701 = vld [vmem:[%s14 + $0x78] sm:$0xff]
        %v7702 = vld [vmem:[%s14 + $0x80] sm:$0xff]
        %v7703 = vld [vmem:[%s14 + $0x88] sm:$0xff]
        %v7704 = vld [vmem:[%s14 + $0x90] sm:$0xff]
        %v7705 = vld [vmem:[%s14 + $0x98] sm:$0xff]
        %v7706 = vld [vmem:[%s14 + $0xa0] sm:$0xff]
        %v7707 = vld [vmem:[%s14 + $0xa8] sm:$0xff]
        %v7708 = vld [vmem:[%s14 + $0xb0] sm:$0xff]
        %v7709 = vld [vmem:[%s14 + $0xb8] sm:$0xff]
        %v7710 = vld [vmem:[%s14 + $0xc0] sm:$0xff]
        %v7711 = vld [vmem:[%s14 + $0xc8] sm:$0xff]
        %v7712 = vld [vmem:[%s14 + $0xd0] sm:$0xff]
        %v7713 = vld [vmem:[%s14 + $0xd8] sm:$0xff]
        %v7714 = vld [vmem:[%s14 + $0xe0] sm:$0xff]
        %v7715 = vld [vmem:[%s14 + $0xe8] sm:$0xff]
        %v7716 = vld [vmem:[%s14 + $0xf0] sm:$0xff]
        %v7717 = vld [vmem:[%s14 + $0xf8] sm:$0xff]
        %v7718 = vld [vmem:[%s14 + $0x100] sm:$0xff]
        %v7719 = vld [vmem:[%s14 + $0x108] sm:$0xff]
        %v7720 = vld [vmem:[%s14 + $0x110] sm:$0xff]
        %v7721 = vld [vmem:[%s14 + $0x118] sm:$0xff]
        %v7722 = vld [vmem:[%s14 + $0x120] sm:$0xff]
        %v7723 = vld [vmem:[%s14 + $0x128] sm:$0xff]
        %v7724 = vld [vmem:[%s14 + $0x130] sm:$0xff]
        %v7725 = vld [vmem:[%s14 + $0x138] sm:$0xff]
        %v7726 = vld [vmem:[%s14 + $0x140] sm:$0xff]
        %v7727 = vld [vmem:[%s14 + $0x148] sm:$0xff]
        %v7728 = vld [vmem:[%s14 + $0x150] sm:$0xff]
        %v7729 = vld [vmem:[%s14 + $0x158] sm:$0xff]
        %v7730 = vld [vmem:[%s14 + $0x160] sm:$0xff]
        %v7731 = vld [vmem:[%s14 + $0x168] sm:$0xff]
        %v7732 = vld [vmem:[%s14 + $0x170] sm:$0xff]
        %v7733 = vld [vmem:[%s14 + $0x178] sm:$0xff]
        %v7734 = vld [vmem:[%s14 + $0x180] sm:$0xff]
        %v7735 = vld [vmem:[%s14 + $0x188] sm:$0xff]
        %v7736 = vld [vmem:[%s15] sm:$0xff]
        %v7737 = vld [vmem:[%s15 + $0x8] sm:$0xff]
        %v7738 = vld [vmem:[%s15 + $0x10] sm:$0xff]
        %v7739 = vld [vmem:[%s15 + $0x18] sm:$0xff]
        %v7740 = vld [vmem:[%s15 + $0x20] sm:$0xff]
        %v7741 = vld [vmem:[%s15 + $0x28] sm:$0xff]
        %v7742 = vld [vmem:[%s15 + $0x30] sm:$0xff]
        %v7743 = vld [vmem:[%s15 + $0x38] sm:$0xff]
        %v7744 = vld [vmem:[%s15 + $0x40] sm:$0xff]
        %v7745 = vld [vmem:[%s15 + $0x48] sm:$0xff]
        %v7746 = vld [vmem:[%s15 + $0x50] sm:$0xff]
        %v7747 = vld [vmem:[%s15 + $0x58] sm:$0xff]
        %v7748 = vld [vmem:[%s15 + $0x60] sm:$0xff]
        %v7749 = vld [vmem:[%s15 + $0x68] sm:$0xff]
        %v7750 = vld [vmem:[%s15 + $0x70] sm:$0xff]
        %v7751 = vld [vmem:[%s15 + $0x78] sm:$0xff]
        %v7752 = vld [vmem:[%s15 + $0x80] sm:$0xff]
        %v7753 = vld [vmem:[%s15 + $0x88] sm:$0xff]
        %v7754 = vld [vmem:[%s15 + $0x90] sm:$0xff]
        %v7755 = vld [vmem:[%s15 + $0x98] sm:$0xff]
        %v7756 = vld [vmem:[%s15 + $0xa0] sm:$0xff]
        %v7757 = vld [vmem:[%s15 + $0xa8] sm:$0xff]
        %v7758 = vld [vmem:[%s15 + $0xb0] sm:$0xff]
        %v7759 = vld [vmem:[%s15 + $0xb8] sm:$0xff]
        %v7760 = vld [vmem:[%s15 + $0xc0] sm:$0xff]
        %7762 = vset.pattern.permute.xlu0 0
        %7763 = vperm.xlu0 %7762, %v7736
        %v7764 = vpop.permute.xlu0 %7763
        %7767 = vset.pattern.permute.xlu0 0
        %7768 = vperm.xlu0 %7767, %v7737
        %v7769 = vpop.permute.xlu0 %7768
        %7772 = vset.pattern.permute.xlu0 0
        %7773 = vperm.xlu0 %7772, %v7738
        %v7774 = vpop.permute.xlu0 %7773
        %7777 = vset.pattern.permute.xlu0 0
        %7778 = vperm.xlu0 %7777, %v7739
        %v7779 = vpop.permute.xlu0 %7778
        %7782 = vset.pattern.permute.xlu0 0
        %7783 = vperm.xlu0 %7782, %v7740
        %v7784 = vpop.permute.xlu0 %7783
        %7787 = vset.pattern.permute.xlu0 0
        %7788 = vperm.xlu0 %7787, %v7741
        %v7789 = vpop.permute.xlu0 %7788
        %7792 = vset.pattern.permute.xlu0 0
        %7793 = vperm.xlu0 %7792, %v7742
        %v7794 = vpop.permute.xlu0 %7793
        %7797 = vset.pattern.permute.xlu0 0
        %7798 = vperm.xlu0 %7797, %v7743
        %v7799 = vpop.permute.xlu0 %7798
        %7802 = vset.pattern.permute.xlu0 0
        %7803 = vperm.xlu0 %7802, %v7744
        %v7804 = vpop.permute.xlu0 %7803
        %7807 = vset.pattern.permute.xlu0 0
        %7808 = vperm.xlu0 %7807, %v7745
        %v7809 = vpop.permute.xlu0 %7808
        %7812 = vset.pattern.permute.xlu0 0
        %7813 = vperm.xlu0 %7812, %v7746
        %v7814 = vpop.permute.xlu0 %7813
        %7817 = vset.pattern.permute.xlu0 0
        %7818 = vperm.xlu0 %7817, %v7747
        %v7819 = vpop.permute.xlu0 %7818
        %7822 = vset.pattern.permute.xlu0 0
        %7823 = vperm.xlu0 %7822, %v7748
        %v7824 = vpop.permute.xlu0 %7823
        %7827 = vset.pattern.permute.xlu0 0
        %7828 = vperm.xlu0 %7827, %v7749
        %v7829 = vpop.permute.xlu0 %7828
        %7832 = vset.pattern.permute.xlu0 0
        %7833 = vperm.xlu0 %7832, %v7750
        %v7834 = vpop.permute.xlu0 %7833
        %7837 = vset.pattern.permute.xlu0 0
        %7838 = vperm.xlu0 %7837, %v7751
        %v7839 = vpop.permute.xlu0 %7838
        %7842 = vset.pattern.permute.xlu0 0
        %7843 = vperm.xlu0 %7842, %v7752
        %v7844 = vpop.permute.xlu0 %7843
        %7847 = vset.pattern.permute.xlu0 0
        %7848 = vperm.xlu0 %7847, %v7753
        %v7849 = vpop.permute.xlu0 %7848
        %7852 = vset.pattern.permute.xlu0 0
        %7853 = vperm.xlu0 %7852, %v7754
        %v7854 = vpop.permute.xlu0 %7853
        %7857 = vset.pattern.permute.xlu0 0
        %7858 = vperm.xlu0 %7857, %v7755
        %v7859 = vpop.permute.xlu0 %7858
        %7862 = vset.pattern.permute.xlu0 0
        %7863 = vperm.xlu0 %7862, %v7756
        %v7864 = vpop.permute.xlu0 %7863
        %7867 = vset.pattern.permute.xlu0 0
        %7868 = vperm.xlu0 %7867, %v7757
        %v7869 = vpop.permute.xlu0 %7868
        %7872 = vset.pattern.permute.xlu0 0
        %7873 = vperm.xlu0 %7872, %v7758
        %v7874 = vpop.permute.xlu0 %7873
        %7877 = vset.pattern.permute.xlu0 0
        %7878 = vperm.xlu0 %7877, %v7759
        %v7879 = vpop.permute.xlu0 %7878
        %7882 = vset.pattern.permute.xlu0 0
        %7883 = vperm.xlu0 %7882, %v7760
        %v7884 = vpop.permute.xlu0 %7883
        %vm7886 = vcmask 588800
        %v7888 = vsel %vm7886, %v7687, 0
        %v7891 = vsel %vm7886, %v7689, 0
        %v7894 = vsel %vm7886, %v7691, 0
        %v7897 = vsel %vm7886, %v7693, 0
        %v7900 = vsel %vm7886, %v7695, 0
        %v7903 = vsel %vm7886, %v7697, 0
        %v7906 = vsel %vm7886, %v7699, 0
        %v7909 = vsel %vm7886, %v7701, 0
        %v7912 = vsel %vm7886, %v7703, 0
        %v7915 = vsel %vm7886, %v7705, 0
        %v7918 = vsel %vm7886, %v7707, 0
        %v7921 = vsel %vm7886, %v7709, 0
        %v7924 = vsel %vm7886, %v7711, 0
        %v7927 = vsel %vm7886, %v7713, 0
        %v7930 = vsel %vm7886, %v7715, 0
        %v7933 = vsel %vm7886, %v7717, 0
        %v7936 = vsel %vm7886, %v7719, 0
        %v7939 = vsel %vm7886, %v7721, 0
        %v7942 = vsel %vm7886, %v7723, 0
        %v7945 = vsel %vm7886, %v7725, 0
        %v7948 = vsel %vm7886, %v7727, 0
        %v7951 = vsel %vm7886, %v7729, 0
        %v7954 = vsel %vm7886, %v7731, 0
        %v7957 = vsel %vm7886, %v7733, 0
        %v7960 = vsel %vm7886, %v7735, 0
        %7962 = vmatprep.subr.mxu0 0.0
        %7963 = vmatpush1.msra.mxu0 %v7661
        %7964 = vmatprep.subr.mxu0 0.0
        %7965 = vmatpush1.msra.mxu0 %v7662
        %7966 = vmatprep.subr.mxu0 0.0
        %7967 = vmatpush1.msra.mxu0 %v7663
        %7968 = vmatprep.subr.mxu0 0.0
        %7969 = vmatpush1.msra.mxu0 %v7664
        %7970 = vmatprep.subr.mxu0 0.0
        %7971 = vmatpush1.msra.mxu0 %v7665
        %7972 = vmatprep.subr.mxu0 0.0
        %7973 = vmatpush1.msra.mxu0 %v7666
        %7974 = vmatprep.subr.mxu0 0.0
        %7975 = vmatpush1.msra.mxu0 %v7667
        %7976 = vmatprep.subr.mxu0 0.0
        %7977 = vmatpush1.msra.mxu0 %v7668
        %7978 = vmatprep.subr.mxu0 0.0
        %7979 = vmatpush1.msra.mxu0 %v7669
        %7980 = vmatprep.subr.mxu0 0.0
        %7981 = vmatpush1.msra.mxu0 %v7670
        %7982 = vmatprep.subr.mxu0 0.0
        %7983 = vmatpush1.msra.mxu0 %v7671
        %7984 = vmatprep.subr.mxu0 0.0
        %7985 = vmatpush1.msra.mxu0 %v7672
        %7986 = vmatprep.subr.mxu0 0.0
        %7987 = vmatpush1.msra.mxu0 %v7673
        %7988 = vmatprep.subr.mxu0 0.0
        %7989 = vmatpush1.msra.mxu0 %v7674
        %7990 = vmatprep.subr.mxu0 0.0
        %7991 = vmatpush1.msra.mxu0 %v7675
        %7992 = vmatprep.subr.mxu0 0.0
        %7993 = vmatpush1.msra.mxu0 %v7676
        %7994 = vmatprep.subr.mxu0 0.0
        %7995 = vmatpush1.msra.mxu0 %v7677
        %7996 = vmatprep.subr.mxu0 0.0
        %7997 = vmatpush1.msra.mxu0 %v7678
        %7998 = vmatprep.subr.mxu0 0.0
        %7999 = vmatpush1.msra.mxu0 %v7679
        %8000 = vmatprep.subr.mxu0 0.0
        %8001 = vmatpush1.msra.mxu0 %v7680
        %8002 = vmatprep.subr.mxu0 0.0
        %8003 = vmatpush1.msra.mxu0 %v7681
        %8004 = vmatprep.subr.mxu0 0.0
        %8005 = vmatpush1.msra.mxu0 %v7682
        %8006 = vmatprep.subr.mxu0 0.0
        %8007 = vmatpush1.msra.mxu0 %v7683
        %8008 = vmatprep.subr.mxu0 0.0
        %8009 = vmatpush1.msra.mxu0 %v7684
        %8010 = vmatprep.subr.mxu0 0.0
        %8011 = vmatpush1.msra.mxu0 %v7685
        %8012 = vmatprep.subr.mxu0 0.0
        %8013 = vmatpush1.msra.mxu0 0.0
        %8014 = vmatprep.subr.mxu0 0.0
        %8015 = vmatpush1.msra.mxu0 0.0
        %8016 = vmatprep.subr.mxu0 0.0
        %8017 = vmatpush1.msra.mxu0 0.0
        %8018 = vmatprep.subr.mxu0 0.0
        %8019 = vmatpush1.msra.mxu0 0.0
        %8020 = vmatprep.subr.mxu0 0.0
        %8021 = vmatpush1.msra.mxu0 0.0
        %8022 = vmatprep.subr.mxu0 0.0
        %8023 = vmatpush1.msra.mxu0 0.0
        %8024 = vmatprep.subr.mxu0 0.0
        %8025 = vmatpush1.msra.mxu0 0.0
        %8026 = vmatprep.mubr.f32.mxu0 %v7888
        %8027 = vmatmul.mubr.f32.gmra.mrb[0].mxu0 %v7686
        %v8028 = vpop.f32.mrb[0].mxu0
        %v8029 = vadd.f32 %v7764, %v8028
        %v8030 = vpop.f32.mrb[0].mxu0
        %8031 = vmatprep.mubr.f32.mxu0 %v7891
        %8032 = vmatmul.mubr.f32.gmra.mrb[0].mxu0 %v7688
        %v8033 = vpop.f32.mrb[0].mxu0
        %v8034 = vadd.f32 %v7769, %v8033
        %v8035 = vpop.f32.mrb[0].mxu0
        %8036 = vmatprep.mubr.f32.mxu0 %v7894
        %8037 = vmatmul.mubr.f32.gmra.mrb[0].mxu0 %v7690
        %v8038 = vpop.f32.mrb[0].mxu0
        %v8039 = vadd.f32 %v7774, %v8038
        %v8040 = vpop.f32.mrb[0].mxu0
        %8041 = vmatprep.mubr.f32.mxu0 %v7897
        %8042 = vmatmul.mubr.f32.gmra.mrb[0].mxu0 %v7692
        %v8043 = vpop.f32.mrb[0].mxu0
        %v8044 = vadd.f32 %v7779, %v8043
        %v8045 = vpop.f32.mrb[0].mxu0
        %8046 = vmatprep.mubr.f32.mxu0 %v7900
        %8047 = vmatmul.mubr.f32.gmra.mrb[0].mxu0 %v7694
        %v8048 = vpop.f32.mrb[0].mxu0
        %v8049 = vadd.f32 %v7784, %v8048
        %v8050 = vpop.f32.mrb[0].mxu0
        %8051 = vmatprep.mubr.f32.mxu0 %v7903
        %8052 = vmatmul.mubr.f32.gmra.mrb[0].mxu0 %v7696
        %v8053 = vpop.f32.mrb[0].mxu0
        %v8054 = vadd.f32 %v7789, %v8053
        %v8055 = vpop.f32.mrb[0].mxu0
        %8056 = vmatprep.mubr.f32.mxu0 %v7906
        %8057 = vmatmul.mubr.f32.gmra.mrb[0].mxu0 %v7698
        %v8058 = vpop.f32.mrb[0].mxu0
        %v8059 = vadd.f32 %v7794, %v8058
        %v8060 = vpop.f32.mrb[0].mxu0
        %8061 = vmatprep.mubr.f32.mxu0 %v7909
        %8062 = vmatmul.mubr.f32.gmra.mrb[0].mxu0 %v7700
        %v8063 = vpop.f32.mrb[0].mxu0
        %v8064 = vadd.f32 %v7799, %v8063
        %v8065 = vpop.f32.mrb[0].mxu0
        %8066 = vmatprep.mubr.f32.mxu0 %v7912
        %8067 = vmatmul.mubr.f32.gmra.mrb[0].mxu0 %v7702
        %v8068 = vpop.f32.mrb[0].mxu0
        %v8069 = vadd.f32 %v7804, %v8068
        %v8070 = vpop.f32.mrb[0].mxu0
        %8071 = vmatprep.mubr.f32.mxu0 %v7915
        %8072 = vmatmul.mubr.f32.gmra.mrb[0].mxu0 %v7704
        %v8073 = vpop.f32.mrb[0].mxu0
        %v8074 = vadd.f32 %v7809, %v8073
        %v8075 = vpop.f32.mrb[0].mxu0
        %8076 = vmatprep.mubr.f32.mxu0 %v7918
        %8077 = vmatmul.mubr.f32.gmra.mrb[0].mxu0 %v7706
        %v8078 = vpop.f32.mrb[0].mxu0
        %v8079 = vadd.f32 %v7814, %v8078
        %v8080 = vpop.f32.mrb[0].mxu0
        %8081 = vmatprep.mubr.f32.mxu0 %v7921
        %8082 = vmatmul.mubr.f32.gmra.mrb[0].mxu0 %v7708
        %v8083 = vpop.f32.mrb[0].mxu0
        %v8084 = vadd.f32 %v7819, %v8083
        %v8085 = vpop.f32.mrb[0].mxu0
        %8086 = vmatprep.mubr.f32.mxu0 %v7924
        %8087 = vmatmul.mubr.f32.gmra.mrb[0].mxu0 %v7710
        %v8088 = vpop.f32.mrb[0].mxu0
        %v8089 = vadd.f32 %v7824, %v8088
        %v8090 = vpop.f32.mrb[0].mxu0
        %8091 = vmatprep.mubr.f32.mxu0 %v7927
        %8092 = vmatmul.mubr.f32.gmra.mrb[0].mxu0 %v7712
        %v8093 = vpop.f32.mrb[0].mxu0
        %v8094 = vadd.f32 %v7829, %v8093
        %v8095 = vpop.f32.mrb[0].mxu0
        %8096 = vmatprep.mubr.f32.mxu0 %v7930
        %8097 = vmatmul.mubr.f32.gmra.mrb[0].mxu0 %v7714
        %v8098 = vpop.f32.mrb[0].mxu0
        %v8099 = vadd.f32 %v7834, %v8098
        %v8100 = vpop.f32.mrb[0].mxu0
        %8101 = vmatprep.mubr.f32.mxu0 %v7933
        %8102 = vmatmul.mubr.f32.gmra.mrb[0].mxu0 %v7716
        %v8103 = vpop.f32.mrb[0].mxu0
        %v8104 = vadd.f32 %v7839, %v8103
        %v8105 = vpop.f32.mrb[0].mxu0
        %8106 = vmatprep.mubr.f32.mxu0 %v7936
        %8107 = vmatmul.mubr.f32.gmra.mrb[0].mxu0 %v7718
        %v8108 = vpop.f32.mrb[0].mxu0
        %v8109 = vadd.f32 %v7844, %v8108
        %v8110 = vpop.f32.mrb[0].mxu0
        %8111 = vmatprep.mubr.f32.mxu0 %v7939
        %8112 = vmatmul.mubr.f32.gmra.mrb[0].mxu0 %v7720
        %v8113 = vpop.f32.mrb[0].mxu0
        %v8114 = vadd.f32 %v7849, %v8113
        %v8115 = vpop.f32.mrb[0].mxu0
        %8116 = vmatprep.mubr.f32.mxu0 %v7942
        %8117 = vmatmul.mubr.f32.gmra.mrb[0].mxu0 %v7722
        %v8118 = vpop.f32.mrb[0].mxu0
        %v8119 = vadd.f32 %v7854, %v8118
        %v8120 = vpop.f32.mrb[0].mxu0
        %8121 = vmatprep.mubr.f32.mxu0 %v7945
        %8122 = vmatmul.mubr.f32.gmra.mrb[0].mxu0 %v7724
        %v8123 = vpop.f32.mrb[0].mxu0
        %v8124 = vadd.f32 %v7859, %v8123
        %v8125 = vpop.f32.mrb[0].mxu0
        %8126 = vmatprep.mubr.f32.mxu0 %v7948
        %8127 = vmatmul.mubr.f32.gmra.mrb[0].mxu0 %v7726
        %v8128 = vpop.f32.mrb[0].mxu0
        %v8129 = vadd.f32 %v7864, %v8128
        %v8130 = vpop.f32.mrb[0].mxu0
        %8131 = vmatprep.mubr.f32.mxu0 %v7951
        %8132 = vmatmul.mubr.f32.gmra.mrb[0].mxu0 %v7728
        %v8133 = vpop.f32.mrb[0].mxu0
        %v8134 = vadd.f32 %v7869, %v8133
        %v8135 = vpop.f32.mrb[0].mxu0
        %8136 = vmatprep.mubr.f32.mxu0 %v7954
        %8137 = vmatmul.mubr.f32.gmra.mrb[0].mxu0 %v7730
        %v8138 = vpop.f32.mrb[0].mxu0
        %v8139 = vadd.f32 %v7874, %v8138
        %v8140 = vpop.f32.mrb[0].mxu0
        %8141 = vmatprep.mubr.f32.mxu0 %v7957
        %8142 = vmatmul.mubr.f32.gmra.mrb[0].mxu0 %v7732
        %v8143 = vpop.f32.mrb[0].mxu0
        %v8144 = vadd.f32 %v7879, %v8143
        %v8145 = vpop.f32.mrb[0].mxu0
        %8146 = vmatprep.mubr.f32.mxu0 %v7960
        %8147 = vmatmul.mubr.f32.gmra.mrb[0].mxu0 %v7734
        %v8148 = vpop.f32.mrb[0].mxu0
        %v8149 = vadd.f32 %v7884, %v8148
        %v8150 = vpop.f32.mrb[0].mxu0
        %8151 = vdwg.mxu0
        %v8152 = vmax.f32 %v8029, 0.0
        %v8153 = vmax.f32 %v8034, 0.0
        %v8154 = vmax.f32 %v8039, 0.0
        %v8155 = vmax.f32 %v8044, 0.0
        %v8156 = vmax.f32 %v8049, 0.0
        %v8157 = vmax.f32 %v8054, 0.0
        %v8158 = vmax.f32 %v8059, 0.0
        %v8159 = vmax.f32 %v8064, 0.0
        %v8160 = vmax.f32 %v8069, 0.0
        %v8161 = vmax.f32 %v8074, 0.0
        %v8162 = vmax.f32 %v8079, 0.0
        %v8163 = vmax.f32 %v8084, 0.0
        %v8164 = vmax.f32 %v8089, 0.0
        %v8165 = vmax.f32 %v8094, 0.0
        %v8166 = vmax.f32 %v8099, 0.0
        %v8167 = vmax.f32 %v8104, 0.0
        %v8168 = vmax.f32 %v8109, 0.0
        %v8169 = vmax.f32 %v8114, 0.0
        %v8170 = vmax.f32 %v8119, 0.0
        %v8171 = vmax.f32 %v8124, 0.0
        %v8172 = vmax.f32 %v8129, 0.0
        %v8173 = vmax.f32 %v8134, 0.0
        %v8174 = vmax.f32 %v8139, 0.0
        %v8175 = vmax.f32 %v8144, 0.0
        %v8176 = vmax.f32 %v8149, 0.0
        %v8177 = vld [vmem:[%s16] sm:$0xff]
        %v8178 = vld [vmem:[%s16 + $0x8] sm:$0xff]
        %v8179 = vld [vmem:[%s16 + $0x10] sm:$0xff]
        %v8180 = vld [vmem:[%s16 + $0x18] sm:$0xff]
        %v8181 = vld [vmem:[%s16 + $0x20] sm:$0xff]
        %v8182 = vld [vmem:[%s16 + $0x28] sm:$0xff]
        %v8183 = vld [vmem:[%s16 + $0x30] sm:$0xff]
        %v8184 = vld [vmem:[%s16 + $0x38] sm:$0xff]
        %v8185 = vld [vmem:[%s16 + $0x40] sm:$0xff]
        %v8186 = vld [vmem:[%s16 + $0x48] sm:$0xff]
        %v8187 = vld [vmem:[%s16 + $0x50] sm:$0xff]
        %v8188 = vld [vmem:[%s16 + $0x58] sm:$0xff]
        %v8189 = vld [vmem:[%s16 + $0x60] sm:$0xff]
        %v8190 = vld [vmem:[%s16 + $0x68] sm:$0xff]
        %v8191 = vld [vmem:[%s16 + $0x70] sm:$0xff]
        %v8192 = vld [vmem:[%s16 + $0x78] sm:$0xff]
        %v8193 = vld [vmem:[%s16 + $0x80] sm:$0xff]
        %v8194 = vld [vmem:[%s16 + $0x88] sm:$0xff]
        %v8195 = vld [vmem:[%s16 + $0x90] sm:$0xff]
        %v8196 = vld [vmem:[%s16 + $0x98] sm:$0xff]
        %v8197 = vld [vmem:[%s16 + $0xa0] sm:$0xff]
        %v8198 = vld [vmem:[%s16 + $0xa8] sm:$0xff]
        %v8199 = vld [vmem:[%s16 + $0xb0] sm:$0xff]
        %v8200 = vld [vmem:[%s16 + $0xb8] sm:$0xff]
        %v8201 = vld [vmem:[%s16 + $0xc0] sm:$0xff]
        %8203 = vset.pattern.permute.xlu0 0
        %8204 = vperm.xlu0 %8203, %v8177
        %v8205 = vpop.permute.xlu0 %8204
        %8208 = vset.pattern.permute.xlu0 0
        %8209 = vperm.xlu0 %8208, %v8178
        %v8210 = vpop.permute.xlu0 %8209
        %8213 = vset.pattern.permute.xlu0 0
        %8214 = vperm.xlu0 %8213, %v8179
        %v8215 = vpop.permute.xlu0 %8214
        %8218 = vset.pattern.permute.xlu0 0
        %8219 = vperm.xlu0 %8218, %v8180
        %v8220 = vpop.permute.xlu0 %8219
        %8223 = vset.pattern.permute.xlu0 0
        %8224 = vperm.xlu0 %8223, %v8181
        %v8225 = vpop.permute.xlu0 %8224
        %8228 = vset.pattern.permute.xlu0 0
        %8229 = vperm.xlu0 %8228, %v8182
        %v8230 = vpop.permute.xlu0 %8229
        %8233 = vset.pattern.permute.xlu0 0
        %8234 = vperm.xlu0 %8233, %v8183
        %v8235 = vpop.permute.xlu0 %8234
        %8238 = vset.pattern.permute.xlu0 0
        %8239 = vperm.xlu0 %8238, %v8184
        %v8240 = vpop.permute.xlu0 %8239
        %8243 = vset.pattern.permute.xlu0 0
        %8244 = vperm.xlu0 %8243, %v8185
        %v8245 = vpop.permute.xlu0 %8244
        %8248 = vset.pattern.permute.xlu0 0
        %8249 = vperm.xlu0 %8248, %v8186
        %v8250 = vpop.permute.xlu0 %8249
        %8253 = vset.pattern.permute.xlu0 0
        %8254 = vperm.xlu0 %8253, %v8187
        %v8255 = vpop.permute.xlu0 %8254
        %8258 = vset.pattern.permute.xlu0 0
        %8259 = vperm.xlu0 %8258, %v8188
        %v8260 = vpop.permute.xlu0 %8259
        %8263 = vset.pattern.permute.xlu0 0
        %8264 = vperm.xlu0 %8263, %v8189
        %v8265 = vpop.permute.xlu0 %8264
        %8268 = vset.pattern.permute.xlu0 0
        %8269 = vperm.xlu0 %8268, %v8190
        %v8270 = vpop.permute.xlu0 %8269
        %8273 = vset.pattern.permute.xlu0 0
        %8274 = vperm.xlu0 %8273, %v8191
        %v8275 = vpop.permute.xlu0 %8274
        %8278 = vset.pattern.permute.xlu0 0
        %8279 = vperm.xlu0 %8278, %v8192
        %v8280 = vpop.permute.xlu0 %8279
        %8283 = vset.pattern.permute.xlu0 0
        %8284 = vperm.xlu0 %8283, %v8193
        %v8285 = vpop.permute.xlu0 %8284
        %8288 = vset.pattern.permute.xlu0 0
        %8289 = vperm.xlu0 %8288, %v8194
        %v8290 = vpop.permute.xlu0 %8289
        %8293 = vset.pattern.permute.xlu0 0
        %8294 = vperm.xlu0 %8293, %v8195
        %v8295 = vpop.permute.xlu0 %8294
        %8298 = vset.pattern.permute.xlu0 0
        %8299 = vperm.xlu0 %8298, %v8196
        %v8300 = vpop.permute.xlu0 %8299
        %8303 = vset.pattern.permute.xlu0 0
        %8304 = vperm.xlu0 %8303, %v8197
        %v8305 = vpop.permute.xlu0 %8304
        %8308 = vset.pattern.permute.xlu0 0
        %8309 = vperm.xlu0 %8308, %v8198
        %v8310 = vpop.permute.xlu0 %8309
        %8313 = vset.pattern.permute.xlu0 0
        %8314 = vperm.xlu0 %8313, %v8199
        %v8315 = vpop.permute.xlu0 %8314
        %8318 = vset.pattern.permute.xlu0 0
        %8319 = vperm.xlu0 %8318, %v8200
        %v8320 = vpop.permute.xlu0 %8319
        %8323 = vset.pattern.permute.xlu0 0
        %8324 = vperm.xlu0 %8323, %v8201
        %v8325 = vpop.permute.xlu0 %8324
        %v8327 = vmul.f32 %v8205, %v8152
        %v8328 = vmul.f32 %v8210, %v8153
        %v8329 = vmul.f32 %v8215, %v8154
        %v8330 = vmul.f32 %v8220, %v8155
        %v8331 = vmul.f32 %v8225, %v8156
        %v8332 = vmul.f32 %v8230, %v8157
        %v8333 = vmul.f32 %v8235, %v8158
        %v8334 = vmul.f32 %v8240, %v8159
        %v8335 = vmul.f32 %v8245, %v8160
        %v8336 = vmul.f32 %v8250, %v8161
        %v8337 = vmul.f32 %v8255, %v8162
        %v8338 = vmul.f32 %v8260, %v8163
        %v8339 = vmul.f32 %v8265, %v8164
        %v8340 = vmul.f32 %v8270, %v8165
        %v8341 = vmul.f32 %v8275, %v8166
        %v8342 = vmul.f32 %v8280, %v8167
        %v8343 = vmul.f32 %v8285, %v8168
        %v8344 = vmul.f32 %v8290, %v8169
        %v8345 = vmul.f32 %v8295, %v8170
        %v8346 = vmul.f32 %v8300, %v8171
        %v8347 = vmul.f32 %v8305, %v8172
        %v8348 = vmul.f32 %v8310, %v8173
        %v8349 = vmul.f32 %v8315, %v8174
        %v8350 = vmul.f32 %v8320, %v8175
        %v8351 = vmul.f32 %v8325, %v8176
        %vm8352 = vcmask 31744
        %v8353 = vsel %vm8352, %v8327, 0.0
        %v8354 = vsel %vm8352, %v8328, 0.0
        %v8355 = vadd.f32 %v8353, %v8354
        %v8356 = vsel %vm8352, %v8329, 0.0
        %v8357 = vadd.f32 %v8355, %v8356
        %v8358 = vsel %vm8352, %v8330, 0.0
        %v8359 = vadd.f32 %v8357, %v8358
        %v8360 = vsel %vm8352, %v8331, 0.0
        %v8361 = vadd.f32 %v8359, %v8360
        %v8362 = vsel %vm8352, %v8332, 0.0
        %v8363 = vadd.f32 %v8361, %v8362
        %v8364 = vsel %vm8352, %v8333, 0.0
        %v8365 = vadd.f32 %v8363, %v8364
        %v8366 = vsel %vm8352, %v8334, 0.0
        %v8367 = vadd.f32 %v8365, %v8366
        %v8368 = vsel %vm8352, %v8335, 0.0
        %v8369 = vadd.f32 %v8367, %v8368
        %v8370 = vsel %vm8352, %v8336, 0.0
        %v8371 = vadd.f32 %v8369, %v8370
        %v8372 = vsel %vm8352, %v8337, 0.0
        %v8373 = vadd.f32 %v8371, %v8372
        %v8374 = vsel %vm8352, %v8338, 0.0
        %v8375 = vadd.f32 %v8373, %v8374
        %v8376 = vsel %vm8352, %v8339, 0.0
        %v8377 = vadd.f32 %v8375, %v8376
        %v8378 = vsel %vm8352, %v8340, 0.0
        %v8379 = vadd.f32 %v8377, %v8378
        %v8380 = vsel %vm8352, %v8341, 0.0
        %v8381 = vadd.f32 %v8379, %v8380
        %v8382 = vsel %vm8352, %v8342, 0.0
        %v8383 = vadd.f32 %v8381, %v8382
        %v8384 = vsel %vm8352, %v8343, 0.0
        %v8385 = vadd.f32 %v8383, %v8384
        %v8386 = vsel %vm8352, %v8344, 0.0
        %v8387 = vadd.f32 %v8385, %v8386
        %v8388 = vsel %vm8352, %v8345, 0.0
        %v8389 = vadd.f32 %v8387, %v8388
        %v8390 = vsel %vm8352, %v8346, 0.0
        %v8391 = vadd.f32 %v8389, %v8390
        %v8392 = vsel %vm8352, %v8347, 0.0
        %v8393 = vadd.f32 %v8391, %v8392
        %v8394 = vsel %vm8352, %v8348, 0.0
        %v8395 = vadd.f32 %v8393, %v8394
        %v8396 = vsel %vm8352, %v8349, 0.0
        %v8397 = vadd.f32 %v8395, %v8396
        %v8398 = vsel %vm8352, %v8350, 0.0
        %v8399 = vadd.f32 %v8397, %v8398
        %v8400 = vsel %vm8352, %v8351, 0.0
        %v8401 = vadd.f32 %v8399, %v8400
        %v8402 = vrot.slane %v8401, 4
        %v8403 = vadd.f32 %v8401, %v8402
        %v8404 = vrot.slane %v8403, 2
        %v8405 = vadd.f32 %v8403, %v8404
        %v8406 = vrot.slane %v8405, 1
        %v8407 = vadd.f32 %v8405, %v8406
        %v8408 = vld [vmem:[#allocation3] sm:$0x1]
        %8410 = vset.pattern.permute.xlu0 0
        %8411 = vperm.xlu0 %8410, %v8408
        %v8412 = vpop.permute.xlu0 %8411
        %v8414 = vlaneseq
        %v8415 = vshrl.u32 %v8414, 7
        %v8416 = vsub.s32 0, %v8415
        %v8417 = vrot.slane %v8412, %v8416
        %v8418 = vadd.f32 %v8407, %v8417
        %vm8419 = vcmask 24576
        %8420 = vst.msk [vmem:[%s567] sm:$0x1] %vm8419, %v8418
        %s8421 = sand.u32 %s425, 1
        %s8422 = scalar_lea.sflag [#allocation5], %s8421
        %s8423 = sand.u32 %s425, 1
        %s8424 = scalar_lea.vmem [#allocation4], %s8423
        // Predicated region
        $region93: #{tpu_custom_call.1} parent=91 // pred_check
          %p8425 = pneg %p435
        $region94: #{tpu_custom_call.1} parent=91 // pred_check_branch
          %8427 = sbr.rel (%p8425) target = $region96
        $region95: #{tpu_custom_call.1} parent=91 // pred_region
          %s8429 = ssub.s32 16, 16
          %8430 = vsyncadd %s8422, %s8429
          %s8431 = smul.addr %s34, 16
          %s8432 = scalar_lea.hbm %s18, %s8431
          %s8434 = sshll.u32 %s8424, 4
          %s8435 = int_to_ptr.vmem [resolvable:$true] %s8434
          %8437 = dma.vmem_to_hbm [thread:$0]  %s8435, 16, %s8432, %s8422
        $region96: #{tpu_custom_call.1} parent=91 // pred_fallthru
          _
      $region92: #{tpu_custom_call.1} parent=5 // pred_fallthru
        _
      %p8438 = scmp.le.s32.totalorder 2, %s29
      // Predicated region
      $region97: #{tpu_custom_call.1} parent=5 // pred_check
        %p8439 = pneg %p8438
      $region98: #{tpu_custom_call.1} parent=5 // pred_check_branch
        %8441 = sbr.rel (%p8439) target = $region100
      $region99: #{tpu_custom_call.1} parent=5 // pred_region
        %s8442 = ssub.s32 %s29, 2
        // Predicated region
        $region101: #{tpu_custom_call.1} parent=99 // pred_check
          %p8443 = pneg %p441
        $region102: #{tpu_custom_call.1} parent=99 // pred_check_branch
          %8445 = sbr.rel (%p8443) target = $region104
        $region103: #{tpu_custom_call.1} parent=99 // pred_region
          %s8446 = sand.u32 %s426, 1
          %s8447 = scalar_lea.sflag [#allocation5], %s8446
          %s8448 = sand.u32 %s426, 1
          %s8449 = scalar_lea.vmem [#allocation4], %s8448
          %8450 = dma.done %s8447, 16
        $region104: #{tpu_custom_call.1} parent=99 // pred_fallthru
          _
      $region100: #{tpu_custom_call.1} parent=5 // pred_fallthru
        _
    $region6: #{tpu_custom_call.1} parent=1 // loop_footer
      %s33 = sadd.s32 1, %s29
    $region7: #{tpu_custom_call.1} parent=1 // loop_footer_branch
      %28 = sbr.rel target = $region3
    $region8: #{tpu_custom_call.1} parent=1 // loop_exit
      _
    %8451 = vsyncpa [#allocation5], 1
    %s8452 = scalar_lea.sflag [#allocation5], 1
    %8453 = vsyncpa %s8452, 1

</llo_original>
